<compile_context>
chip_gen: v7x
topology: tpu7x:2x2x1
jax: 0.10.0
libtpu: 0.0.40
codegen_flags: <defaults>
</compile_context>

<pallas_src>
import functools

import jax
import jax.numpy as jnp
from jax.experimental import pallas as pl
from jax.experimental.pallas import tpu as pltpu


C = 128  # lane-padded channel width used throughout the kernel


# ----------------------------- Pallas kernel -----------------------------

def _pool2x2_relu(src, mid, dst, hh, hw):
    """relu(max_pool2d(src, 2)) in channels-last layout.

    src: (nb, 2*hh, 2*hw, C) VMEM ref with the conv output.
    mid: (nb, 2*hh,   hw, C) VMEM scratch (W-pooled intermediate).
    dst: (nb,   hh,   hw, C) VMEM ref receiving pooled+ReLU result.
    """
    # pool along W (strided read on the sublane axis)
    mid[...] = jnp.maximum(src[:, :, pl.ds(0, hw, 2), :],
                           src[:, :, pl.ds(1, hw, 2), :])
    # pool along H (strided read on a leading axis) + ReLU
    dst[...] = jnp.maximum(
        jnp.maximum(mid[:, pl.ds(0, hh, 2), :, :],
                    mid[:, pl.ds(1, hh, 2), :, :]),
        0.0)


def _fused_net_kernel(p1_ref, w1_ref, b1_ref, w2_ref, b2_ref,
                      fc1w_ref, fc1b_ref, fc2w_ref, fc2b_ref,
                      out_ref,
                      h1_scr, m1_scr, p1_scr, h2_scr, m2_scr, p2_scr,
                      *, nb):
    f32 = jnp.float32

    # ---- conv1: one im2col matmul (K padded 25->32, Cout padded 10->128) ---
    a1 = jnp.dot(p1_ref[...], w1_ref[...], preferred_element_type=f32)
    a1 = a1 + b1_ref[...]                          # (nb*576, 128)
    h1_scr[...] = a1.reshape(nb, 24, 24, C)

    # ---- maxpool(2) + relu -> (nb, 12, 12, 128) ----------------------------
    _pool2x2_relu(h1_scr, m1_scr, p1_scr, 12, 12)

    # ---- conv2: 25 shifted channels-last matmuls accumulated in f32 --------
    a2 = jnp.zeros((nb * 64, C), f32)
    for i in range(5):
        for j in range(5):
            xs = p1_scr[:, i:i + 8, j:j + 8, :]    # (nb, 8, 8, 128)
            a2 = a2 + jnp.dot(xs.reshape(nb * 64, C), w2_ref[i, j, :, :],
                              preferred_element_type=f32)
    a2 = a2 + b2_ref[...]
    h2_scr[...] = a2.reshape(nb, 8, 8, C)
    # conv2_drop (Dropout2d) in eval mode == identity.

    # ---- maxpool(2) + relu -> (nb, 4, 4, 128) ------------------------------
    _pool2x2_relu(h2_scr, m2_scr, p2_scr, 4, 4)

    # ---- fc1 + relu: 16 per-position matmuls (no 320-wide in-kernel flatten)
    z1 = jnp.zeros((nb, C), f32)
    for h in range(4):
        for w in range(4):
            z1 = z1 + jnp.dot(p2_scr[:, h, w, :], fc1w_ref[h, w, :, :],
                              preferred_element_type=f32)
    z1 = jnp.maximum(z1 + fc1b_ref[...], 0.0)
    # F.dropout in eval mode == identity.

    # ---- fc2 + log_softmax over the 10 valid lanes -------------------------
    z2 = jnp.dot(z1, fc2w_ref[...], preferred_element_type=f32) + fc2b_ref[...]
    lane = jax.lax.broadcasted_iota(jnp.int32, (nb, C), 1)
    z2 = jnp.where(lane < 10, z2, jnp.float32(-1e30))   # mask padded lanes
    m = jnp.max(z2, axis=1, keepdims=True)
    lse = jnp.log(jnp.sum(jnp.exp(z2 - m), axis=1, keepdims=True))
    out_ref[...] = (z2 - m - lse).astype(out_ref.dtype)


# ----------------------------- wrappers -----------------------------

def _conv1_im2col(x):
    """(N,1,28,28) NCHW -> (N*576, 32) lane-padded conv1 im2col patches."""
    n = x.shape[0]
    img = x[:, 0]                                            # (N, 28, 28)
    cols = [img[:, i:i + 24, j:j + 24] for i in range(5) for j in range(5)]
    p = jnp.stack(cols, axis=-1).reshape(n * 576, 25)        # rows = (n, ho, wo)
    return jnp.pad(p, ((0, 0), (0, 7)))                      # K: 25 -> 32


def net_forward(padded_params, x):
    """x: (N, 1, 28, 28) float32 NCHW -> (N, 10) log-probabilities."""
    n = x.shape[0]
    nb = n if n <= 8 else 8                    # batch rows per grid step
    assert n % nb == 0, "batch must be <= 8 or a multiple of 8"
    patches = _conv1_im2col(x.astype(jnp.float32))

    pp = padded_params
    out_pad = pl.pallas_call(
        functools.partial(_fused_net_kernel, nb=nb),
        out_shape=jax.ShapeDtypeStruct((n, C), jnp.float32),
        grid_spec=pltpu.PrefetchScalarGridSpec(
            num_scalar_prefetch=0,
            grid=(n // nb,),
            in_specs=[
                pl.BlockSpec((nb * 576, 32), lambda b: (b, 0)),       # patches
                pl.BlockSpec((32, C), lambda b: (0, 0)),              # w1
                pl.BlockSpec((1, C), lambda b: (0, 0)),               # b1
                pl.BlockSpec((5, 5, C, C), lambda b: (0, 0, 0, 0)),   # w2
                pl.BlockSpec((1, C), lambda b: (0, 0)),               # b2
                pl.BlockSpec((4, 4, C, C), lambda b: (0, 0, 0, 0)),   # fc1w
                pl.BlockSpec((1, C), lambda b: (0, 0)),               # fc1b
                pl.BlockSpec((C, C), lambda b: (0, 0)),               # fc2w
                pl.BlockSpec((1, C), lambda b: (0, 0)),               # fc2b
            ],
            out_specs=pl.BlockSpec((nb, C), lambda b: (b, 0)),
            scratch_shapes=[
                pltpu.VMEM((nb, 24, 24, C), jnp.float32),   # conv1 out
                pltpu.VMEM((nb, 24, 12, C), jnp.float32),   # pool1 W-stage
                pltpu.VMEM((nb, 12, 12, C), jnp.float32),   # pool1 out
                pltpu.VMEM((nb, 8, 8, C), jnp.float32),     # conv2 out
                pltpu.VMEM((nb, 8, 4, C), jnp.float32),     # pool2 W-stage
                pltpu.VMEM((nb, 4, 4, C), jnp.float32),     # pool2 out
            ],
        ),
        compiler_params=pltpu.CompilerParams(
            dimension_semantics=("parallel",),
            vmem_limit_bytes=32 * 1024 * 1024,
        ),
    )(patches, pp["w1"], pp["b1"], pp["w2"], pp["b2"],
      pp["fc1w"], pp["fc1b"], pp["fc2w"], pp["fc2b"])
    return out_pad[:, :10]


# ----------------------------- params -----------------------------

def init_params(key):
    # Synthetic parameters with PyTorch-default-style uniform scales.
    ks = jax.random.split(key, 8)

    def u(k, shape, fan_in):
        lim = 1.0 / jnp.sqrt(float(fan_in))
        return jax.random.uniform(k, shape, jnp.float32, -lim, lim)

    return {
        "conv1_w": u(ks[0], (10, 1, 5, 5), 25),
        "conv1_b": u(ks[1], (10,), 25),
        "conv2_w": u(ks[2], (20, 10, 5, 5), 250),
        "conv2_b": u(ks[3], (20,), 250),
        "fc1_w": u(ks[4], (50, 320), 320),   # PyTorch Linear layout: (out, in)
        "fc1_b": u(ks[5], (50,), 320),
        "fc2_w": u(ks[6], (10, 50), 50),
        "fc2_b": u(ks[7], (10,), 50),
    }


def prepare_padded_params(params):
    """One-time conversion of PyTorch-layout params to the kernel's padded,
    channels-last layout (hoisted out of the per-forward path)."""
    f32 = jnp.float32
    # conv1: (10,1,5,5) -> (25,10) -> zero-pad to (32,128)
    w1 = params["conv1_w"].reshape(10, 25).T
    w1p = jnp.zeros((32, C), f32).at[:25, :10].set(w1)
    b1p = jnp.zeros((1, C), f32).at[0, :10].set(params["conv1_b"])
    # conv2: (20,10,5,5) -> per-tap (5,5,Cin,Cout) -> pad to (5,5,128,128)
    w2 = jnp.transpose(params["conv2_w"], (2, 3, 1, 0))
    w2p = jnp.zeros((5, 5, C, C), f32).at[:, :, :10, :20].set(w2)
    b2p = jnp.zeros((1, C), f32).at[0, :20].set(params["conv2_b"])
    # fc1: (50, 320) with 320 = c*16 + h*4 + w  ->  (4,4,Cin_pad,Cout_pad)
    f1 = params["fc1_w"].T.reshape(20, 4, 4, 50)        # (c, h, w, o)
    f1 = jnp.transpose(f1, (1, 2, 0, 3))                # (h, w, c, o)
    fc1wp = jnp.zeros((4, 4, C, C), f32).at[:, :, :20, :50].set(f1)
    fc1bp = jnp.zeros((1, C), f32).at[0, :50].set(params["fc1_b"])
    # fc2: (10, 50) -> (50,10) -> pad to (128,128)
    fc2wp = jnp.zeros((C, C), f32).at[:50, :10].set(params["fc2_w"].T)
    fc2bp = jnp.zeros((1, C), f32).at[0, :10].set(params["fc2_b"])
    return {"w1": w1p, "b1": b1p, "w2": w2p, "b2": b2p,
            "fc1w": fc1wp, "fc1b": fc1bp, "fc2w": fc2wp, "fc2b": fc2bp}


# ----------------------------- pure-JAX reference -----------------------------

def _maxpool2(v):
    return jax.lax.reduce_window(v, -jnp.inf, jax.lax.max,
                                 (1, 1, 2, 2), (1, 1, 2, 2), "VALID")


def reference_forward(params, x):
    """Pure-JAX reference matching the PyTorch module in eval mode."""
    dn = ("NCHW", "OIHW", "NCHW")
    hp = jax.lax.Precision.HIGHEST
    h = jax.lax.conv_general_dilated(x, params["conv1_w"], (1, 1), "VALID",
                                     dimension_numbers=dn, precision=hp)
    h = h + params["conv1_b"][None, :, None, None]
    h = jax.nn.relu(_maxpool2(h))
    h = jax.lax.conv_general_dilated(h, params["conv2_w"], (1, 1), "VALID",
                                     dimension_numbers=dn, precision=hp)
    h = h + params["conv2_b"][None, :, None, None]
    h = jax.nn.relu(_maxpool2(h))
    h = h.reshape(h.shape[0], 320)
    h = jax.nn.relu(jnp.dot(h, params["fc1_w"].T, precision=hp) + params["fc1_b"])
    h = jnp.dot(h, params["fc2_w"].T, precision=hp) + params["fc2_b"]
    return jax.nn.log_softmax(h, axis=1)


# ----------------------------- main -----------------------------

if __name__ == "__main__":
    key = jax.random.PRNGKey(0)
    pkey, xkey = jax.random.split(key)
    params = init_params(pkey)
    padded = prepare_padded_params(params)

    # batch=2, 1 channel, 28x28 (MNIST size is required: 320 = 20 * 4 * 4)
    x = jax.random.normal(xkey, (2, 1, 28, 28), dtype=jnp.float32)

    out = jax.block_until_ready(jax.jit(net_forward)(padded, x))
    assert out.shape == (2, 10), out.shape

    # log_softmax rows exponentiate-and-sum to 1
    row_sums = jnp.exp(out).sum(axis=1)
    assert jnp.allclose(row_sums, 1.0, atol=1e-4), row_sums

    # match the pure-JAX reference of the PyTorch module (eval mode)
    ref = reference_forward(params, x)
    assert jnp.allclose(out, ref, atol=2e-2, rtol=2e-2), float(jnp.abs(out - ref).max())

    print("KERNEL_OK")
</pallas_src>

<mosaic_0001>
module attributes {stable_mosaic.version = 11 : i64} {
  func.func @_fused_net_kernel(%arg0: i32, %arg1: memref<1152x32xf32, #tpu.memory_space<vmem>>, %arg2: memref<32x128xf32, #tpu.memory_space<vmem>>, %arg3: memref<1x128xf32, #tpu.memory_space<vmem>>, %arg4: memref<5x5x128x128xf32, #tpu.memory_space<vmem>>, %arg5: memref<1x128xf32, #tpu.memory_space<vmem>>, %arg6: memref<4x4x128x128xf32, #tpu.memory_space<vmem>>, %arg7: memref<1x128xf32, #tpu.memory_space<vmem>>, %arg8: memref<128x128xf32, #tpu.memory_space<vmem>>, %arg9: memref<1x128xf32, #tpu.memory_space<vmem>>, %arg10: memref<2x128xf32, #tpu.memory_space<vmem>>, %arg11: memref<2x24x24x128xf32, #tpu.memory_space<vmem>>, %arg12: memref<2x24x12x128xf32, #tpu.memory_space<vmem>>, %arg13: memref<2x12x12x128xf32, #tpu.memory_space<vmem>>, %arg14: memref<2x8x8x128xf32, #tpu.memory_space<vmem>>, %arg15: memref<2x8x4x128xf32, #tpu.memory_space<vmem>>, %arg16: memref<2x4x4x128xf32, #tpu.memory_space<vmem>>) attributes {dimension_semantics = [#tpu.dimension_semantics<parallel>], iteration_bounds = array<i64: 1>, scalar_prefetch = 0 : i64, scratch_operands = 6 : i64, tpu.core_type = #tpu.core_type<tc>, window_params = [{transform_indices = @transform_0, window_bounds = array<i64: 1152, 32>}, {pipeline_mode = #tpu.pipeline_mode<synchronous>, transform_indices = @transform_1, window_bounds = array<i64: 32, 128>}, {pipeline_mode = #tpu.pipeline_mode<synchronous>, transform_indices = @transform_2, window_bounds = array<i64: 1, 128>}, {pipeline_mode = #tpu.pipeline_mode<synchronous>, transform_indices = @transform_3, window_bounds = array<i64: 5, 5, 128, 128>}, {pipeline_mode = #tpu.pipeline_mode<synchronous>, transform_indices = @transform_4, window_bounds = array<i64: 1, 128>}, {pipeline_mode = #tpu.pipeline_mode<synchronous>, transform_indices = @transform_5, window_bounds = array<i64: 4, 4, 128, 128>}, {pipeline_mode = #tpu.pipeline_mode<synchronous>, transform_indices = @transform_6, window_bounds = array<i64: 1, 128>}, {pipeline_mode = #tpu.pipeline_mode<synchronous>, transform_indices = @transform_7, window_bounds = array<i64: 128, 128>}, {pipeline_mode = #tpu.pipeline_mode<synchronous>, transform_indices = @transform_8, window_bounds = array<i64: 1, 128>}, {transform_indices = @transform_9, window_bounds = array<i64: 2, 128>}]} {
    %c0 = arith.constant 0 : index
    %c0_0 = arith.constant 0 : index
    %0 = vector.load %arg1[%c0, %c0_0] : memref<1152x32xf32, #tpu.memory_space<vmem>>, vector<1152x32xf32>
    %c0_1 = arith.constant 0 : index
    %c0_2 = arith.constant 0 : index
    %1 = vector.load %arg2[%c0_1, %c0_2] : memref<32x128xf32, #tpu.memory_space<vmem>>, vector<32x128xf32>
    %cst = arith.constant dense<0.000000e+00> : vector<1152x128xf32>
    %2 = tpu.matmul %0, %1, %cst {dimension_numbers = #tpu.dot_dimension_numbers<[1], [0], [0], [1], [0, 0, 1, 1], [], []>} : vector<1152x32xf32>, vector<32x128xf32>, vector<1152x128xf32> -> vector<1152x128xf32>
    %c0_3 = arith.constant 0 : index
    %c0_4 = arith.constant 0 : index
    %3 = vector.load %arg3[%c0_3, %c0_4] : memref<1x128xf32, #tpu.memory_space<vmem>>, vector<1x128xf32>
    %4 = vector.broadcast %3 : vector<1x128xf32> to vector<1152x128xf32>
    %5 = arith.addf %2, %4 : vector<1152x128xf32>
    %6 = vector.shape_cast %5 : vector<1152x128xf32> to vector<2x24x24x128xf32>
    %c0_5 = arith.constant 0 : index
    %c0_6 = arith.constant 0 : index
    %c0_7 = arith.constant 0 : index
    %c0_8 = arith.constant 0 : index
    %7 = vector.load %arg11[%c0_5, %c0_6, %c0_7, %c0_8] : memref<2x24x24x128xf32, #tpu.memory_space<vmem>>, vector<2x24x24x128xf32>
    tpu.vector_store %arg11[%c0_5, %c0_6, %c0_7, %c0_8], %6 {strides = array<i32>} : memref<2x24x24x128xf32, #tpu.memory_space<vmem>>, vector<2x24x24x128xf32>,
    %c0_9 = arith.constant 0 : index
    %c0_10 = arith.constant 0 : index
    %c0_11 = arith.constant 0 : index
    %c0_12 = arith.constant 0 : index
    %8 = tpu.strided_load %arg11[%c0_9, %c0_10, %c0_11, %c0_12] {strides = array<i32: 1, 1, 2, 1>} : memref<2x24x24x128xf32, #tpu.memory_space<vmem>>, vector<2x24x12x128xf32>
    %c0_13 = arith.constant 0 : index
    %c0_14 = arith.constant 0 : index
    %c1 = arith.constant 1 : index
    %c0_15 = arith.constant 0 : index
    %9 = tpu.strided_load %arg11[%c0_13, %c0_14, %c1, %c0_15] {strides = array<i32: 1, 1, 2, 1>} : memref<2x24x24x128xf32, #tpu.memory_space<vmem>>, vector<2x24x12x128xf32>
    %10 = arith.maximumf %8, %9 : vector<2x24x12x128xf32>
    %c0_16 = arith.constant 0 : index
    %c0_17 = arith.constant 0 : index
    %c0_18 = arith.constant 0 : index
    %c0_19 = arith.constant 0 : index
    %11 = vector.load %arg12[%c0_16, %c0_17, %c0_18, %c0_19] : memref<2x24x12x128xf32, #tpu.memory_space<vmem>>, vector<2x24x12x128xf32>
    tpu.vector_store %arg12[%c0_16, %c0_17, %c0_18, %c0_19], %10 {strides = array<i32>} : memref<2x24x12x128xf32, #tpu.memory_space<vmem>>, vector<2x24x12x128xf32>,
    %c0_20 = arith.constant 0 : index
    %c0_21 = arith.constant 0 : index
    %c0_22 = arith.constant 0 : index
    %c0_23 = arith.constant 0 : index
    %12 = tpu.strided_load %arg12[%c0_20, %c0_21, %c0_22, %c0_23] {strides = array<i32: 1, 2, 1, 1>} : memref<2x24x12x128xf32, #tpu.memory_space<vmem>>, vector<2x12x12x128xf32>
    %c0_24 = arith.constant 0 : index
    %c1_25 = arith.constant 1 : index
    %c0_26 = arith.constant 0 : index
    %c0_27 = arith.constant 0 : index
    %13 = tpu.strided_load %arg12[%c0_24, %c1_25, %c0_26, %c0_27] {strides = array<i32: 1, 2, 1, 1>} : memref<2x24x12x128xf32, #tpu.memory_space<vmem>>, vector<2x12x12x128xf32>
    %14 = arith.maximumf %12, %13 : vector<2x12x12x128xf32>
    %cst_28 = arith.constant 0.000000e+00 : f32
    %15 = vector.broadcast %cst_28 : f32 to vector<2x12x12x128xf32>
    %16 = arith.maximumf %14, %15 : vector<2x12x12x128xf32>
    %c0_29 = arith.constant 0 : index
    %c0_30 = arith.constant 0 : index
    %c0_31 = arith.constant 0 : index
    %c0_32 = arith.constant 0 : index
    %17 = vector.load %arg13[%c0_29, %c0_30, %c0_31, %c0_32] : memref<2x12x12x128xf32, #tpu.memory_space<vmem>>, vector<2x12x12x128xf32>
    tpu.vector_store %arg13[%c0_29, %c0_30, %c0_31, %c0_32], %16 {strides = array<i32>} : memref<2x12x12x128xf32, #tpu.memory_space<vmem>>, vector<2x12x12x128xf32>,
    %cst_33 = arith.constant 0.000000e+00 : f32
    %18 = vector.broadcast %cst_33 : f32 to vector<128x128xf32>
    %c0_34 = arith.constant 0 : index
    %c0_35 = arith.constant 0 : index
    %c0_36 = arith.constant 0 : index
    %c0_37 = arith.constant 0 : index
    %19 = vector.load %arg13[%c0_34, %c0_35, %c0_36, %c0_37] : memref<2x12x12x128xf32, #tpu.memory_space<vmem>>, vector<2x8x8x128xf32>
    %20 = vector.shape_cast %19 : vector<2x8x8x128xf32> to vector<128x128xf32>
    %c0_38 = arith.constant 0 : index
    %c0_39 = arith.constant 0 : index
    %c0_40 = arith.constant 0 : index
    %c0_41 = arith.constant 0 : index
    %21 = vector.load %arg4[%c0_38, %c0_39, %c0_40, %c0_41] : memref<5x5x128x128xf32, #tpu.memory_space<vmem>>, vector<1x1x128x128xf32>
    %22 = vector.shape_cast %21 : vector<1x1x128x128xf32> to vector<128x128xf32>
    %cst_42 = arith.constant dense<0.000000e+00> : vector<128x128xf32>
    %23 = tpu.matmul %20, %22, %cst_42 {dimension_numbers = #tpu.dot_dimension_numbers<[1], [0], [0], [1], [0, 0, 1, 1], [], []>} : vector<128x128xf32>, vector<128x128xf32>, vector<128x128xf32> -> vector<128x128xf32>
    %24 = arith.addf %18, %23 : vector<128x128xf32>
    %c0_43 = arith.constant 0 : index
    %c0_44 = arith.constant 0 : index
    %c1_45 = arith.constant 1 : index
    %c0_46 = arith.constant 0 : index
    %25 = vector.load %arg13[%c0_43, %c0_44, %c1_45, %c0_46] : memref<2x12x12x128xf32, #tpu.memory_space<vmem>>, vector<2x8x8x128xf32>
    %26 = vector.shape_cast %25 : vector<2x8x8x128xf32> to vector<128x128xf32>
    %c0_47 = arith.constant 0 : index
    %c1_48 = arith.constant 1 : index
    %c0_49 = arith.constant 0 : index
    %c0_50 = arith.constant 0 : index
    %27 = vector.load %arg4[%c0_47, %c1_48, %c0_49, %c0_50] : memref<5x5x128x128xf32, #tpu.memory_space<vmem>>, vector<1x1x128x128xf32>
    %28 = vector.shape_cast %27 : vector<1x1x128x128xf32> to vector<128x128xf32>
    %cst_51 = arith.constant dense<0.000000e+00> : vector<128x128xf32>
    %29 = tpu.matmul %26, %28, %cst_51 {dimension_numbers = #tpu.dot_dimension_numbers<[1], [0], [0], [1], [0, 0, 1, 1], [], []>} : vector<128x128xf32>, vector<128x128xf32>, vector<128x128xf32> -> vector<128x128xf32>
    %30 = arith.addf %24, %29 : vector<128x128xf32>
    %c0_52 = arith.constant 0 : index
    %c0_53 = arith.constant 0 : index
    %c2 = arith.constant 2 : index
    %c0_54 = arith.constant 0 : index
    %31 = vector.load %arg13[%c0_52, %c0_53, %c2, %c0_54] : memref<2x12x12x128xf32, #tpu.memory_space<vmem>>, vector<2x8x8x128xf32>
    %32 = vector.shape_cast %31 : vector<2x8x8x128xf32> to vector<128x128xf32>
    %c0_55 = arith.constant 0 : index
    %c2_56 = arith.constant 2 : index
    %c0_57 = arith.constant 0 : index
    %c0_58 = arith.constant 0 : index
    %33 = vector.load %arg4[%c0_55, %c2_56, %c0_57, %c0_58] : memref<5x5x128x128xf32, #tpu.memory_space<vmem>>, vector<1x1x128x128xf32>
    %34 = vector.shape_cast %33 : vector<1x1x128x128xf32> to vector<128x128xf32>
    %cst_59 = arith.constant dense<0.000000e+00> : vector<128x128xf32>
    %35 = tpu.matmul %32, %34, %cst_59 {dimension_numbers = #tpu.dot_dimension_numbers<[1], [0], [0], [1], [0, 0, 1, 1], [], []>} : vector<128x128xf32>, vector<128x128xf32>, vector<128x128xf32> -> vector<128x128xf32>
    %36 = arith.addf %30, %35 : vector<128x128xf32>
    %c0_60 = arith.constant 0 : index
    %c0_61 = arith.constant 0 : index
    %c3 = arith.constant 3 : index
    %c0_62 = arith.constant 0 : index
    %37 = vector.load %arg13[%c0_60, %c0_61, %c3, %c0_62] : memref<2x12x12x128xf32, #tpu.memory_space<vmem>>, vector<2x8x8x128xf32>
    %38 = vector.shape_cast %37 : vector<2x8x8x128xf32> to vector<128x128xf32>
    %c0_63 = arith.constant 0 : index
    %c3_64 = arith.constant 3 : index
    %c0_65 = arith.constant 0 : index
    %c0_66 = arith.constant 0 : index
    %39 = vector.load %arg4[%c0_63, %c3_64, %c0_65, %c0_66] : memref<5x5x128x128xf32, #tpu.memory_space<vmem>>, vector<1x1x128x128xf32>
    %40 = vector.shape_cast %39 : vector<1x1x128x128xf32> to vector<128x128xf32>
    %cst_67 = arith.constant dense<0.000000e+00> : vector<128x128xf32>
    %41 = tpu.matmul %38, %40, %cst_67 {dimension_numbers = #tpu.dot_dimension_numbers<[1], [0], [0], [1], [0, 0, 1, 1], [], []>} : vector<128x128xf32>, vector<128x128xf32>, vector<128x128xf32> -> vector<128x128xf32>
    %42 = arith.addf %36, %41 : vector<128x128xf32>
    %c0_68 = arith.constant 0 : index
    %c0_69 = arith.constant 0 : index
    %c4 = arith.constant 4 : index
    %c0_70 = arith.constant 0 : index
    %43 = vector.load %arg13[%c0_68, %c0_69, %c4, %c0_70] : memref<2x12x12x128xf32, #tpu.memory_space<vmem>>, vector<2x8x8x128xf32>
    %44 = vector.shape_cast %43 : vector<2x8x8x128xf32> to vector<128x128xf32>
    %c0_71 = arith.constant 0 : index
    %c4_72 = arith.constant 4 : index
    %c0_73 = arith.constant 0 : index
    %c0_74 = arith.constant 0 : index
    %45 = vector.load %arg4[%c0_71, %c4_72, %c0_73, %c0_74] : memref<5x5x128x128xf32, #tpu.memory_space<vmem>>, vector<1x1x128x128xf32>
    %46 = vector.shape_cast %45 : vector<1x1x128x128xf32> to vector<128x128xf32>
    %cst_75 = arith.constant dense<0.000000e+00> : vector<128x128xf32>
    %47 = tpu.matmul %44, %46, %cst_75 {dimension_numbers = #tpu.dot_dimension_numbers<[1], [0], [0], [1], [0, 0, 1, 1], [], []>} : vector<128x128xf32>, vector<128x128xf32>, vector<128x128xf32> -> vector<128x128xf32>
    %48 = arith.addf %42, %47 : vector<128x128xf32>
    %c0_76 = arith.constant 0 : index
    %c1_77 = arith.constant 1 : index
    %c0_78 = arith.constant 0 : index
    %c0_79 = arith.constant 0 : index
    %49 = vector.load %arg13[%c0_76, %c1_77, %c0_78, %c0_79] : memref<2x12x12x128xf32, #tpu.memory_space<vmem>>, vector<2x8x8x128xf32>
    %50 = vector.shape_cast %49 : vector<2x8x8x128xf32> to vector<128x128xf32>
    %c1_80 = arith.constant 1 : index
    %c0_81 = arith.constant 0 : index
    %c0_82 = arith.constant 0 : index
    %c0_83 = arith.constant 0 : index
    %51 = vector.load %arg4[%c1_80, %c0_81, %c0_82, %c0_83] : memref<5x5x128x128xf32, #tpu.memory_space<vmem>>, vector<1x1x128x128xf32>
    %52 = vector.shape_cast %51 : vector<1x1x128x128xf32> to vector<128x128xf32>
    %cst_84 = arith.constant dense<0.000000e+00> : vector<128x128xf32>
    %53 = tpu.matmul %50, %52, %cst_84 {dimension_numbers = #tpu.dot_dimension_numbers<[1], [0], [0], [1], [0, 0, 1, 1], [], []>} : vector<128x128xf32>, vector<128x128xf32>, vector<128x128xf32> -> vector<128x128xf32>
    %54 = arith.addf %48, %53 : vector<128x128xf32>
    %c0_85 = arith.constant 0 : index
    %c1_86 = arith.constant 1 : index
    %c1_87 = arith.constant 1 : index
    %c0_88 = arith.constant 0 : index
    %55 = vector.load %arg13[%c0_85, %c1_86, %c1_87, %c0_88] : memref<2x12x12x128xf32, #tpu.memory_space<vmem>>, vector<2x8x8x128xf32>
    %56 = vector.shape_cast %55 : vector<2x8x8x128xf32> to vector<128x128xf32>
    %c1_89 = arith.constant 1 : index
    %c1_90 = arith.constant 1 : index
    %c0_91 = arith.constant 0 : index
    %c0_92 = arith.constant 0 : index
    %57 = vector.load %arg4[%c1_89, %c1_90, %c0_91, %c0_92] : memref<5x5x128x128xf32, #tpu.memory_space<vmem>>, vector<1x1x128x128xf32>
    %58 = vector.shape_cast %57 : vector<1x1x128x128xf32> to vector<128x128xf32>
    %cst_93 = arith.constant dense<0.000000e+00> : vector<128x128xf32>
    %59 = tpu.matmul %56, %58, %cst_93 {dimension_numbers = #tpu.dot_dimension_numbers<[1], [0], [0], [1], [0, 0, 1, 1], [], []>} : vector<128x128xf32>, vector<128x128xf32>, vector<128x128xf32> -> vector<128x128xf32>
    %60 = arith.addf %54, %59 : vector<128x128xf32>
    %c0_94 = arith.constant 0 : index
    %c1_95 = arith.constant 1 : index
    %c2_96 = arith.constant 2 : index
    %c0_97 = arith.constant 0 : index
    %61 = vector.load %arg13[%c0_94, %c1_95, %c2_96, %c0_97] : memref<2x12x12x128xf32, #tpu.memory_space<vmem>>, vector<2x8x8x128xf32>
    %62 = vector.shape_cast %61 : vector<2x8x8x128xf32> to vector<128x128xf32>
    %c1_98 = arith.constant 1 : index
    %c2_99 = arith.constant 2 : index
    %c0_100 = arith.constant 0 : index
    %c0_101 = arith.constant 0 : index
    %63 = vector.load %arg4[%c1_98, %c2_99, %c0_100, %c0_101] : memref<5x5x128x128xf32, #tpu.memory_space<vmem>>, vector<1x1x128x128xf32>
    %64 = vector.shape_cast %63 : vector<1x1x128x128xf32> to vector<128x128xf32>
    %cst_102 = arith.constant dense<0.000000e+00> : vector<128x128xf32>
    %65 = tpu.matmul %62, %64, %cst_102 {dimension_numbers = #tpu.dot_dimension_numbers<[1], [0], [0], [1], [0, 0, 1, 1], [], []>} : vector<128x128xf32>, vector<128x128xf32>, vector<128x128xf32> -> vector<128x128xf32>
    %66 = arith.addf %60, %65 : vector<128x128xf32>
    %c0_103 = arith.constant 0 : index
    %c1_104 = arith.constant 1 : index
    %c3_105 = arith.constant 3 : index
    %c0_106 = arith.constant 0 : index
    %67 = vector.load %arg13[%c0_103, %c1_104, %c3_105, %c0_106] : memref<2x12x12x128xf32, #tpu.memory_space<vmem>>, vector<2x8x8x128xf32>
    %68 = vector.shape_cast %67 : vector<2x8x8x128xf32> to vector<128x128xf32>
    %c1_107 = arith.constant 1 : index
    %c3_108 = arith.constant 3 : index
    %c0_109 = arith.constant 0 : index
    %c0_110 = arith.constant 0 : index
    %69 = vector.load %arg4[%c1_107, %c3_108, %c0_109, %c0_110] : memref<5x5x128x128xf32, #tpu.memory_space<vmem>>, vector<1x1x128x128xf32>
    %70 = vector.shape_cast %69 : vector<1x1x128x128xf32> to vector<128x128xf32>
    %cst_111 = arith.constant dense<0.000000e+00> : vector<128x128xf32>
    %71 = tpu.matmul %68, %70, %cst_111 {dimension_numbers = #tpu.dot_dimension_numbers<[1], [0], [0], [1], [0, 0, 1, 1], [], []>} : vector<128x128xf32>, vector<128x128xf32>, vector<128x128xf32> -> vector<128x128xf32>
    %72 = arith.addf %66, %71 : vector<128x128xf32>
    %c0_112 = arith.constant 0 : index
    %c1_113 = arith.constant 1 : index
    %c4_114 = arith.constant 4 : index
    %c0_115 = arith.constant 0 : index
    %73 = vector.load %arg13[%c0_112, %c1_113, %c4_114, %c0_115] : memref<2x12x12x128xf32, #tpu.memory_space<vmem>>, vector<2x8x8x128xf32>
    %74 = vector.shape_cast %73 : vector<2x8x8x128xf32> to vector<128x128xf32>
    %c1_116 = arith.constant 1 : index
    %c4_117 = arith.constant 4 : index
    %c0_118 = arith.constant 0 : index
    %c0_119 = arith.constant 0 : index
    %75 = vector.load %arg4[%c1_116, %c4_117, %c0_118, %c0_119] : memref<5x5x128x128xf32, #tpu.memory_space<vmem>>, vector<1x1x128x128xf32>
    %76 = vector.shape_cast %75 : vector<1x1x128x128xf32> to vector<128x128xf32>
    %cst_120 = arith.constant dense<0.000000e+00> : vector<128x128xf32>
    %77 = tpu.matmul %74, %76, %cst_120 {dimension_numbers = #tpu.dot_dimension_numbers<[1], [0], [0], [1], [0, 0, 1, 1], [], []>} : vector<128x128xf32>, vector<128x128xf32>, vector<128x128xf32> -> vector<128x128xf32>
    %78 = arith.addf %72, %77 : vector<128x128xf32>
    %c0_121 = arith.constant 0 : index
    %c2_122 = arith.constant 2 : index
    %c0_123 = arith.constant 0 : index
    %c0_124 = arith.constant 0 : index
    %79 = vector.load %arg13[%c0_121, %c2_122, %c0_123, %c0_124] : memref<2x12x12x128xf32, #tpu.memory_space<vmem>>, vector<2x8x8x128xf32>
    %80 = vector.shape_cast %79 : vector<2x8x8x128xf32> to vector<128x128xf32>
    %c2_125 = arith.constant 2 : index
    %c0_126 = arith.constant 0 : index
    %c0_127 = arith.constant 0 : index
    %c0_128 = arith.constant 0 : index
    %81 = vector.load %arg4[%c2_125, %c0_126, %c0_127, %c0_128] : memref<5x5x128x128xf32, #tpu.memory_space<vmem>>, vector<1x1x128x128xf32>
    %82 = vector.shape_cast %81 : vector<1x1x128x128xf32> to vector<128x128xf32>
    %cst_129 = arith.constant dense<0.000000e+00> : vector<128x128xf32>
    %83 = tpu.matmul %80, %82, %cst_129 {dimension_numbers = #tpu.dot_dimension_numbers<[1], [0], [0], [1], [0, 0, 1, 1], [], []>} : vector<128x128xf32>, vector<128x128xf32>, vector<128x128xf32> -> vector<128x128xf32>
    %84 = arith.addf %78, %83 : vector<128x128xf32>
    %c0_130 = arith.constant 0 : index
    %c2_131 = arith.constant 2 : index
    %c1_132 = arith.constant 1 : index
    %c0_133 = arith.constant 0 : index
    %85 = vector.load %arg13[%c0_130, %c2_131, %c1_132, %c0_133] : memref<2x12x12x128xf32, #tpu.memory_space<vmem>>, vector<2x8x8x128xf32>
    %86 = vector.shape_cast %85 : vector<2x8x8x128xf32> to vector<128x128xf32>
    %c2_134 = arith.constant 2 : index
    %c1_135 = arith.constant 1 : index
    %c0_136 = arith.constant 0 : index
    %c0_137 = arith.constant 0 : index
    %87 = vector.load %arg4[%c2_134, %c1_135, %c0_136, %c0_137] : memref<5x5x128x128xf32, #tpu.memory_space<vmem>>, vector<1x1x128x128xf32>
    %88 = vector.shape_cast %87 : vector<1x1x128x128xf32> to vector<128x128xf32>
    %cst_138 = arith.constant dense<0.000000e+00> : vector<128x128xf32>
    %89 = tpu.matmul %86, %88, %cst_138 {dimension_numbers = #tpu.dot_dimension_numbers<[1], [0], [0], [1], [0, 0, 1, 1], [], []>} : vector<128x128xf32>, vector<128x128xf32>, vector<128x128xf32> -> vector<128x128xf32>
    %90 = arith.addf %84, %89 : vector<128x128xf32>
    %c0_139 = arith.constant 0 : index
    %c2_140 = arith.constant 2 : index
    %c2_141 = arith.constant 2 : index
    %c0_142 = arith.constant 0 : index
    %91 = vector.load %arg13[%c0_139, %c2_140, %c2_141, %c0_142] : memref<2x12x12x128xf32, #tpu.memory_space<vmem>>, vector<2x8x8x128xf32>
    %92 = vector.shape_cast %91 : vector<2x8x8x128xf32> to vector<128x128xf32>
    %c2_143 = arith.constant 2 : index
    %c2_144 = arith.constant 2 : index
    %c0_145 = arith.constant 0 : index
    %c0_146 = arith.constant 0 : index
    %93 = vector.load %arg4[%c2_143, %c2_144, %c0_145, %c0_146] : memref<5x5x128x128xf32, #tpu.memory_space<vmem>>, vector<1x1x128x128xf32>
    %94 = vector.shape_cast %93 : vector<1x1x128x128xf32> to vector<128x128xf32>
    %cst_147 = arith.constant dense<0.000000e+00> : vector<128x128xf32>
    %95 = tpu.matmul %92, %94, %cst_147 {dimension_numbers = #tpu.dot_dimension_numbers<[1], [0], [0], [1], [0, 0, 1, 1], [], []>} : vector<128x128xf32>, vector<128x128xf32>, vector<128x128xf32> -> vector<128x128xf32>
    %96 = arith.addf %90, %95 : vector<128x128xf32>
    %c0_148 = arith.constant 0 : index
    %c2_149 = arith.constant 2 : index
    %c3_150 = arith.constant 3 : index
    %c0_151 = arith.constant 0 : index
    %97 = vector.load %arg13[%c0_148, %c2_149, %c3_150, %c0_151] : memref<2x12x12x128xf32, #tpu.memory_space<vmem>>, vector<2x8x8x128xf32>
    %98 = vector.shape_cast %97 : vector<2x8x8x128xf32> to vector<128x128xf32>
    %c2_152 = arith.constant 2 : index
    %c3_153 = arith.constant 3 : index
    %c0_154 = arith.constant 0 : index
    %c0_155 = arith.constant 0 : index
    %99 = vector.load %arg4[%c2_152, %c3_153, %c0_154, %c0_155] : memref<5x5x128x128xf32, #tpu.memory_space<vmem>>, vector<1x1x128x128xf32>
    %100 = vector.shape_cast %99 : vector<1x1x128x128xf32> to vector<128x128xf32>
    %cst_156 = arith.constant dense<0.000000e+00> : vector<128x128xf32>
    %101 = tpu.matmul %98, %100, %cst_156 {dimension_numbers = #tpu.dot_dimension_numbers<[1], [0], [0], [1], [0, 0, 1, 1], [], []>} : vector<128x128xf32>, vector<128x128xf32>, vector<128x128xf32> -> vector<128x128xf32>
    %102 = arith.addf %96, %101 : vector<128x128xf32>
    %c0_157 = arith.constant 0 : index
    %c2_158 = arith.constant 2 : index
    %c4_159 = arith.constant 4 : index
    %c0_160 = arith.constant 0 : index
    %103 = vector.load %arg13[%c0_157, %c2_158, %c4_159, %c0_160] : memref<2x12x12x128xf32, #tpu.memory_space<vmem>>, vector<2x8x8x128xf32>
    %104 = vector.shape_cast %103 : vector<2x8x8x128xf32> to vector<128x128xf32>
    %c2_161 = arith.constant 2 : index
    %c4_162 = arith.constant 4 : index
    %c0_163 = arith.constant 0 : index
    %c0_164 = arith.constant 0 : index
    %105 = vector.load %arg4[%c2_161, %c4_162, %c0_163, %c0_164] : memref<5x5x128x128xf32, #tpu.memory_space<vmem>>, vector<1x1x128x128xf32>
    %106 = vector.shape_cast %105 : vector<1x1x128x128xf32> to vector<128x128xf32>
    %cst_165 = arith.constant dense<0.000000e+00> : vector<128x128xf32>
    %107 = tpu.matmul %104, %106, %cst_165 {dimension_numbers = #tpu.dot_dimension_numbers<[1], [0], [0], [1], [0, 0, 1, 1], [], []>} : vector<128x128xf32>, vector<128x128xf32>, vector<128x128xf32> -> vector<128x128xf32>
    %108 = arith.addf %102, %107 : vector<128x128xf32>
    %c0_166 = arith.constant 0 : index
    %c3_167 = arith.constant 3 : index
    %c0_168 = arith.constant 0 : index
    %c0_169 = arith.constant 0 : index
    %109 = vector.load %arg13[%c0_166, %c3_167, %c0_168, %c0_169] : memref<2x12x12x128xf32, #tpu.memory_space<vmem>>, vector<2x8x8x128xf32>
    %110 = vector.shape_cast %109 : vector<2x8x8x128xf32> to vector<128x128xf32>
    %c3_170 = arith.constant 3 : index
    %c0_171 = arith.constant 0 : index
    %c0_172 = arith.constant 0 : index
    %c0_173 = arith.constant 0 : index
    %111 = vector.load %arg4[%c3_170, %c0_171, %c0_172, %c0_173] : memref<5x5x128x128xf32, #tpu.memory_space<vmem>>, vector<1x1x128x128xf32>
    %112 = vector.shape_cast %111 : vector<1x1x128x128xf32> to vector<128x128xf32>
    %cst_174 = arith.constant dense<0.000000e+00> : vector<128x128xf32>
    %113 = tpu.matmul %110, %112, %cst_174 {dimension_numbers = #tpu.dot_dimension_numbers<[1], [0], [0], [1], [0, 0, 1, 1], [], []>} : vector<128x128xf32>, vector<128x128xf32>, vector<128x128xf32> -> vector<128x128xf32>
    %114 = arith.addf %108, %113 : vector<128x128xf32>
    %c0_175 = arith.constant 0 : index
    %c3_176 = arith.constant 3 : index
    %c1_177 = arith.constant 1 : index
    %c0_178 = arith.constant 0 : index
    %115 = vector.load %arg13[%c0_175, %c3_176, %c1_177, %c0_178] : memref<2x12x12x128xf32, #tpu.memory_space<vmem>>, vector<2x8x8x128xf32>
    %116 = vector.shape_cast %115 : vector<2x8x8x128xf32> to vector<128x128xf32>
    %c3_179 = arith.constant 3 : index
    %c1_180 = arith.constant 1 : index
    %c0_181 = arith.constant 0 : index
    %c0_182 = arith.constant 0 : index
    %117 = vector.load %arg4[%c3_179, %c1_180, %c0_181, %c0_182] : memref<5x5x128x128xf32, #tpu.memory_space<vmem>>, vector<1x1x128x128xf32>
    %118 = vector.shape_cast %117 : vector<1x1x128x128xf32> to vector<128x128xf32>
    %cst_183 = arith.constant dense<0.000000e+00> : vector<128x128xf32>
    %119 = tpu.matmul %116, %118, %cst_183 {dimension_numbers = #tpu.dot_dimension_numbers<[1], [0], [0], [1], [0, 0, 1, 1], [], []>} : vector<128x128xf32>, vector<128x128xf32>, vector<128x128xf32> -> vector<128x128xf32>
    %120 = arith.addf %114, %119 : vector<128x128xf32>
    %c0_184 = arith.constant 0 : index
    %c3_185 = arith.constant 3 : index
    %c2_186 = arith.constant 2 : index
    %c0_187 = arith.constant 0 : index
    %121 = vector.load %arg13[%c0_184, %c3_185, %c2_186, %c0_187] : memref<2x12x12x128xf32, #tpu.memory_space<vmem>>, vector<2x8x8x128xf32>
    %122 = vector.shape_cast %121 : vector<2x8x8x128xf32> to vector<128x128xf32>
    %c3_188 = arith.constant 3 : index
    %c2_189 = arith.constant 2 : index
    %c0_190 = arith.constant 0 : index
    %c0_191 = arith.constant 0 : index
    %123 = vector.load %arg4[%c3_188, %c2_189, %c0_190, %c0_191] : memref<5x5x128x128xf32, #tpu.memory_space<vmem>>, vector<1x1x128x128xf32>
    %124 = vector.shape_cast %123 : vector<1x1x128x128xf32> to vector<128x128xf32>
    %cst_192 = arith.constant dense<0.000000e+00> : vector<128x128xf32>
    %125 = tpu.matmul %122, %124, %cst_192 {dimension_numbers = #tpu.dot_dimension_numbers<[1], [0], [0], [1], [0, 0, 1, 1], [], []>} : vector<128x128xf32>, vector<128x128xf32>, vector<128x128xf32> -> vector<128x128xf32>
    %126 = arith.addf %120, %125 : vector<128x128xf32>
    %c0_193 = arith.constant 0 : index
    %c3_194 = arith.constant 3 : index
    %c3_195 = arith.constant 3 : index
    %c0_196 = arith.constant 0 : index
    %127 = vector.load %arg13[%c0_193, %c3_194, %c3_195, %c0_196] : memref<2x12x12x128xf32, #tpu.memory_space<vmem>>, vector<2x8x8x128xf32>
    %128 = vector.shape_cast %127 : vector<2x8x8x128xf32> to vector<128x128xf32>
    %c3_197 = arith.constant 3 : index
    %c3_198 = arith.constant 3 : index
    %c0_199 = arith.constant 0 : index
    %c0_200 = arith.constant 0 : index
    %129 = vector.load %arg4[%c3_197, %c3_198, %c0_199, %c0_200] : memref<5x5x128x128xf32, #tpu.memory_space<vmem>>, vector<1x1x128x128xf32>
    %130 = vector.shape_cast %129 : vector<1x1x128x128xf32> to vector<128x128xf32>
    %cst_201 = arith.constant dense<0.000000e+00> : vector<128x128xf32>
    %131 = tpu.matmul %128, %130, %cst_201 {dimension_numbers = #tpu.dot_dimension_numbers<[1], [0], [0], [1], [0, 0, 1, 1], [], []>} : vector<128x128xf32>, vector<128x128xf32>, vector<128x128xf32> -> vector<128x128xf32>
    %132 = arith.addf %126, %131 : vector<128x128xf32>
    %c0_202 = arith.constant 0 : index
    %c3_203 = arith.constant 3 : index
    %c4_204 = arith.constant 4 : index
    %c0_205 = arith.constant 0 : index
    %133 = vector.load %arg13[%c0_202, %c3_203, %c4_204, %c0_205] : memref<2x12x12x128xf32, #tpu.memory_space<vmem>>, vector<2x8x8x128xf32>
    %134 = vector.shape_cast %133 : vector<2x8x8x128xf32> to vector<128x128xf32>
    %c3_206 = arith.constant 3 : index
    %c4_207 = arith.constant 4 : index
    %c0_208 = arith.constant 0 : index
    %c0_209 = arith.constant 0 : index
    %135 = vector.load %arg4[%c3_206, %c4_207, %c0_208, %c0_209] : memref<5x5x128x128xf32, #tpu.memory_space<vmem>>, vector<1x1x128x128xf32>
    %136 = vector.shape_cast %135 : vector<1x1x128x128xf32> to vector<128x128xf32>
    %cst_210 = arith.constant dense<0.000000e+00> : vector<128x128xf32>
    %137 = tpu.matmul %134, %136, %cst_210 {dimension_numbers = #tpu.dot_dimension_numbers<[1], [0], [0], [1], [0, 0, 1, 1], [], []>} : vector<128x128xf32>, vector<128x128xf32>, vector<128x128xf32> -> vector<128x128xf32>
    %138 = arith.addf %132, %137 : vector<128x128xf32>
    %c0_211 = arith.constant 0 : index
    %c4_212 = arith.constant 4 : index
    %c0_213 = arith.constant 0 : index
    %c0_214 = arith.constant 0 : index
    %139 = vector.load %arg13[%c0_211, %c4_212, %c0_213, %c0_214] : memref<2x12x12x128xf32, #tpu.memory_space<vmem>>, vector<2x8x8x128xf32>
    %140 = vector.shape_cast %139 : vector<2x8x8x128xf32> to vector<128x128xf32>
    %c4_215 = arith.constant 4 : index
    %c0_216 = arith.constant 0 : index
    %c0_217 = arith.constant 0 : index
    %c0_218 = arith.constant 0 : index
    %141 = vector.load %arg4[%c4_215, %c0_216, %c0_217, %c0_218] : memref<5x5x128x128xf32, #tpu.memory_space<vmem>>, vector<1x1x128x128xf32>
    %142 = vector.shape_cast %141 : vector<1x1x128x128xf32> to vector<128x128xf32>
    %cst_219 = arith.constant dense<0.000000e+00> : vector<128x128xf32>
    %143 = tpu.matmul %140, %142, %cst_219 {dimension_numbers = #tpu.dot_dimension_numbers<[1], [0], [0], [1], [0, 0, 1, 1], [], []>} : vector<128x128xf32>, vector<128x128xf32>, vector<128x128xf32> -> vector<128x128xf32>
    %144 = arith.addf %138, %143 : vector<128x128xf32>
    %c0_220 = arith.constant 0 : index
    %c4_221 = arith.constant 4 : index
    %c1_222 = arith.constant 1 : index
    %c0_223 = arith.constant 0 : index
    %145 = vector.load %arg13[%c0_220, %c4_221, %c1_222, %c0_223] : memref<2x12x12x128xf32, #tpu.memory_space<vmem>>, vector<2x8x8x128xf32>
    %146 = vector.shape_cast %145 : vector<2x8x8x128xf32> to vector<128x128xf32>
    %c4_224 = arith.constant 4 : index
    %c1_225 = arith.constant 1 : index
    %c0_226 = arith.constant 0 : index
    %c0_227 = arith.constant 0 : index
    %147 = vector.load %arg4[%c4_224, %c1_225, %c0_226, %c0_227] : memref<5x5x128x128xf32, #tpu.memory_space<vmem>>, vector<1x1x128x128xf32>
    %148 = vector.shape_cast %147 : vector<1x1x128x128xf32> to vector<128x128xf32>
    %cst_228 = arith.constant dense<0.000000e+00> : vector<128x128xf32>
    %149 = tpu.matmul %146, %148, %cst_228 {dimension_numbers = #tpu.dot_dimension_numbers<[1], [0], [0], [1], [0, 0, 1, 1], [], []>} : vector<128x128xf32>, vector<128x128xf32>, vector<128x128xf32> -> vector<128x128xf32>
    %150 = arith.addf %144, %149 : vector<128x128xf32>
    %c0_229 = arith.constant 0 : index
    %c4_230 = arith.constant 4 : index
    %c2_231 = arith.constant 2 : index
    %c0_232 = arith.constant 0 : index
    %151 = vector.load %arg13[%c0_229, %c4_230, %c2_231, %c0_232] : memref<2x12x12x128xf32, #tpu.memory_space<vmem>>, vector<2x8x8x128xf32>
    %152 = vector.shape_cast %151 : vector<2x8x8x128xf32> to vector<128x128xf32>
    %c4_233 = arith.constant 4 : index
    %c2_234 = arith.constant 2 : index
    %c0_235 = arith.constant 0 : index
    %c0_236 = arith.constant 0 : index
    %153 = vector.load %arg4[%c4_233, %c2_234, %c0_235, %c0_236] : memref<5x5x128x128xf32, #tpu.memory_space<vmem>>, vector<1x1x128x128xf32>
    %154 = vector.shape_cast %153 : vector<1x1x128x128xf32> to vector<128x128xf32>
    %cst_237 = arith.constant dense<0.000000e+00> : vector<128x128xf32>
    %155 = tpu.matmul %152, %154, %cst_237 {dimension_numbers = #tpu.dot_dimension_numbers<[1], [0], [0], [1], [0, 0, 1, 1], [], []>} : vector<128x128xf32>, vector<128x128xf32>, vector<128x128xf32> -> vector<128x128xf32>
    %156 = arith.addf %150, %155 : vector<128x128xf32>
    %c0_238 = arith.constant 0 : index
    %c4_239 = arith.constant 4 : index
    %c3_240 = arith.constant 3 : index
    %c0_241 = arith.constant 0 : index
    %157 = vector.load %arg13[%c0_238, %c4_239, %c3_240, %c0_241] : memref<2x12x12x128xf32, #tpu.memory_space<vmem>>, vector<2x8x8x128xf32>
    %158 = vector.shape_cast %157 : vector<2x8x8x128xf32> to vector<128x128xf32>
    %c4_242 = arith.constant 4 : index
    %c3_243 = arith.constant 3 : index
    %c0_244 = arith.constant 0 : index
    %c0_245 = arith.constant 0 : index
    %159 = vector.load %arg4[%c4_242, %c3_243, %c0_244, %c0_245] : memref<5x5x128x128xf32, #tpu.memory_space<vmem>>, vector<1x1x128x128xf32>
    %160 = vector.shape_cast %159 : vector<1x1x128x128xf32> to vector<128x128xf32>
    %cst_246 = arith.constant dense<0.000000e+00> : vector<128x128xf32>
    %161 = tpu.matmul %158, %160, %cst_246 {dimension_numbers = #tpu.dot_dimension_numbers<[1], [0], [0], [1], [0, 0, 1, 1], [], []>} : vector<128x128xf32>, vector<128x128xf32>, vector<128x128xf32> -> vector<128x128xf32>
    %162 = arith.addf %156, %161 : vector<128x128xf32>
    %c0_247 = arith.constant 0 : index
    %c4_248 = arith.constant 4 : index
    %c4_249 = arith.constant 4 : index
    %c0_250 = arith.constant 0 : index
    %163 = vector.load %arg13[%c0_247, %c4_248, %c4_249, %c0_250] : memref<2x12x12x128xf32, #tpu.memory_space<vmem>>, vector<2x8x8x128xf32>
    %164 = vector.shape_cast %163 : vector<2x8x8x128xf32> to vector<128x128xf32>
    %c4_251 = arith.constant 4 : index
    %c4_252 = arith.constant 4 : index
    %c0_253 = arith.constant 0 : index
    %c0_254 = arith.constant 0 : index
    %165 = vector.load %arg4[%c4_251, %c4_252, %c0_253, %c0_254] : memref<5x5x128x128xf32, #tpu.memory_space<vmem>>, vector<1x1x128x128xf32>
    %166 = vector.shape_cast %165 : vector<1x1x128x128xf32> to vector<128x128xf32>
    %cst_255 = arith.constant dense<0.000000e+00> : vector<128x128xf32>
    %167 = tpu.matmul %164, %166, %cst_255 {dimension_numbers = #tpu.dot_dimension_numbers<[1], [0], [0], [1], [0, 0, 1, 1], [], []>} : vector<128x128xf32>, vector<128x128xf32>, vector<128x128xf32> -> vector<128x128xf32>
    %168 = arith.addf %162, %167 : vector<128x128xf32>
    %c0_256 = arith.constant 0 : index
    %c0_257 = arith.constant 0 : index
    %169 = vector.load %arg5[%c0_256, %c0_257] : memref<1x128xf32, #tpu.memory_space<vmem>>, vector<1x128xf32>
    %170 = vector.broadcast %169 : vector<1x128xf32> to vector<128x128xf32>
    %171 = arith.addf %168, %170 : vector<128x128xf32>
    %172 = vector.shape_cast %171 : vector<128x128xf32> to vector<2x8x8x128xf32>
    %c0_258 = arith.constant 0 : index
    %c0_259 = arith.constant 0 : index
    %c0_260 = arith.constant 0 : index
    %c0_261 = arith.constant 0 : index
    %173 = vector.load %arg14[%c0_258, %c0_259, %c0_260, %c0_261] : memref<2x8x8x128xf32, #tpu.memory_space<vmem>>, vector<2x8x8x128xf32>
    tpu.vector_store %arg14[%c0_258, %c0_259, %c0_260, %c0_261], %172 {strides = array<i32>} : memref<2x8x8x128xf32, #tpu.memory_space<vmem>>, vector<2x8x8x128xf32>,
    %c0_262 = arith.constant 0 : index
    %c0_263 = arith.constant 0 : index
    %c0_264 = arith.constant 0 : index
    %c0_265 = arith.constant 0 : index
    %174 = tpu.strided_load %arg14[%c0_262, %c0_263, %c0_264, %c0_265] {strides = array<i32: 1, 1, 2, 1>} : memref<2x8x8x128xf32, #tpu.memory_space<vmem>>, vector<2x8x4x128xf32>
    %c0_266 = arith.constant 0 : index
    %c0_267 = arith.constant 0 : index
    %c1_268 = arith.constant 1 : index
    %c0_269 = arith.constant 0 : index
    %175 = tpu.strided_load %arg14[%c0_266, %c0_267, %c1_268, %c0_269] {strides = array<i32: 1, 1, 2, 1>} : memref<2x8x8x128xf32, #tpu.memory_space<vmem>>, vector<2x8x4x128xf32>
    %176 = arith.maximumf %174, %175 : vector<2x8x4x128xf32>
    %c0_270 = arith.constant 0 : index
    %c0_271 = arith.constant 0 : index
    %c0_272 = arith.constant 0 : index
    %c0_273 = arith.constant 0 : index
    %177 = vector.load %arg15[%c0_270, %c0_271, %c0_272, %c0_273] : memref<2x8x4x128xf32, #tpu.memory_space<vmem>>, vector<2x8x4x128xf32>
    tpu.vector_store %arg15[%c0_270, %c0_271, %c0_272, %c0_273], %176 {strides = array<i32>} : memref<2x8x4x128xf32, #tpu.memory_space<vmem>>, vector<2x8x4x128xf32>,
    %c0_274 = arith.constant 0 : index
    %c0_275 = arith.constant 0 : index
    %c0_276 = arith.constant 0 : index
    %c0_277 = arith.constant 0 : index
    %178 = tpu.strided_load %arg15[%c0_274, %c0_275, %c0_276, %c0_277] {strides = array<i32: 1, 2, 1, 1>} : memref<2x8x4x128xf32, #tpu.memory_space<vmem>>, vector<2x4x4x128xf32>
    %c0_278 = arith.constant 0 : index
    %c1_279 = arith.constant 1 : index
    %c0_280 = arith.constant 0 : index
    %c0_281 = arith.constant 0 : index
    %179 = tpu.strided_load %arg15[%c0_278, %c1_279, %c0_280, %c0_281] {strides = array<i32: 1, 2, 1, 1>} : memref<2x8x4x128xf32, #tpu.memory_space<vmem>>, vector<2x4x4x128xf32>
    %180 = arith.maximumf %178, %179 : vector<2x4x4x128xf32>
    %cst_282 = arith.constant 0.000000e+00 : f32
    %181 = vector.broadcast %cst_282 : f32 to vector<2x4x4x128xf32>
    %182 = arith.maximumf %180, %181 : vector<2x4x4x128xf32>
    %c0_283 = arith.constant 0 : index
    %c0_284 = arith.constant 0 : index
    %c0_285 = arith.constant 0 : index
    %c0_286 = arith.constant 0 : index
    %183 = vector.load %arg16[%c0_283, %c0_284, %c0_285, %c0_286] : memref<2x4x4x128xf32, #tpu.memory_space<vmem>>, vector<2x4x4x128xf32>
    tpu.vector_store %arg16[%c0_283, %c0_284, %c0_285, %c0_286], %182 {strides = array<i32>} : memref<2x4x4x128xf32, #tpu.memory_space<vmem>>, vector<2x4x4x128xf32>,
    %cst_287 = arith.constant 0.000000e+00 : f32
    %184 = vector.broadcast %cst_287 : f32 to vector<2x128xf32>
    %c0_288 = arith.constant 0 : index
    %c0_289 = arith.constant 0 : index
    %c0_290 = arith.constant 0 : index
    %c0_291 = arith.constant 0 : index
    %185 = vector.load %arg16[%c0_288, %c0_289, %c0_290, %c0_291] : memref<2x4x4x128xf32, #tpu.memory_space<vmem>>, vector<2x1x1x128xf32>
    %186 = vector.shape_cast %185 : vector<2x1x1x128xf32> to vector<2x128xf32>
    %c0_292 = arith.constant 0 : index
    %c0_293 = arith.constant 0 : index
    %c0_294 = arith.constant 0 : index
    %c0_295 = arith.constant 0 : index
    %187 = vector.load %arg6[%c0_292, %c0_293, %c0_294, %c0_295] : memref<4x4x128x128xf32, #tpu.memory_space<vmem>>, vector<1x1x128x128xf32>
    %188 = vector.shape_cast %187 : vector<1x1x128x128xf32> to vector<128x128xf32>
    %cst_296 = arith.constant dense<0.000000e+00> : vector<2x128xf32>
    %189 = tpu.matmul %186, %188, %cst_296 {dimension_numbers = #tpu.dot_dimension_numbers<[1], [0], [0], [1], [0, 0, 1, 1], [], []>} : vector<2x128xf32>, vector<128x128xf32>, vector<2x128xf32> -> vector<2x128xf32>
    %190 = arith.addf %184, %189 : vector<2x128xf32>
    %c0_297 = arith.constant 0 : index
    %c0_298 = arith.constant 0 : index
    %c1_299 = arith.constant 1 : index
    %c0_300 = arith.constant 0 : index
    %191 = vector.load %arg16[%c0_297, %c0_298, %c1_299, %c0_300] : memref<2x4x4x128xf32, #tpu.memory_space<vmem>>, vector<2x1x1x128xf32>
    %192 = vector.shape_cast %191 : vector<2x1x1x128xf32> to vector<2x128xf32>
    %c0_301 = arith.constant 0 : index
    %c1_302 = arith.constant 1 : index
    %c0_303 = arith.constant 0 : index
    %c0_304 = arith.constant 0 : index
    %193 = vector.load %arg6[%c0_301, %c1_302, %c0_303, %c0_304] : memref<4x4x128x128xf32, #tpu.memory_space<vmem>>, vector<1x1x128x128xf32>
    %194 = vector.shape_cast %193 : vector<1x1x128x128xf32> to vector<128x128xf32>
    %cst_305 = arith.constant dense<0.000000e+00> : vector<2x128xf32>
    %195 = tpu.matmul %192, %194, %cst_305 {dimension_numbers = #tpu.dot_dimension_numbers<[1], [0], [0], [1], [0, 0, 1, 1], [], []>} : vector<2x128xf32>, vector<128x128xf32>, vector<2x128xf32> -> vector<2x128xf32>
    %196 = arith.addf %190, %195 : vector<2x128xf32>
    %c0_306 = arith.constant 0 : index
    %c0_307 = arith.constant 0 : index
    %c2_308 = arith.constant 2 : index
    %c0_309 = arith.constant 0 : index
    %197 = vector.load %arg16[%c0_306, %c0_307, %c2_308, %c0_309] : memref<2x4x4x128xf32, #tpu.memory_space<vmem>>, vector<2x1x1x128xf32>
    %198 = vector.shape_cast %197 : vector<2x1x1x128xf32> to vector<2x128xf32>
    %c0_310 = arith.constant 0 : index
    %c2_311 = arith.constant 2 : index
    %c0_312 = arith.constant 0 : index
    %c0_313 = arith.constant 0 : index
    %199 = vector.load %arg6[%c0_310, %c2_311, %c0_312, %c0_313] : memref<4x4x128x128xf32, #tpu.memory_space<vmem>>, vector<1x1x128x128xf32>
    %200 = vector.shape_cast %199 : vector<1x1x128x128xf32> to vector<128x128xf32>
    %cst_314 = arith.constant dense<0.000000e+00> : vector<2x128xf32>
    %201 = tpu.matmul %198, %200, %cst_314 {dimension_numbers = #tpu.dot_dimension_numbers<[1], [0], [0], [1], [0, 0, 1, 1], [], []>} : vector<2x128xf32>, vector<128x128xf32>, vector<2x128xf32> -> vector<2x128xf32>
    %202 = arith.addf %196, %201 : vector<2x128xf32>
    %c0_315 = arith.constant 0 : index
    %c0_316 = arith.constant 0 : index
    %c3_317 = arith.constant 3 : index
    %c0_318 = arith.constant 0 : index
    %203 = vector.load %arg16[%c0_315, %c0_316, %c3_317, %c0_318] : memref<2x4x4x128xf32, #tpu.memory_space<vmem>>, vector<2x1x1x128xf32>
    %204 = vector.shape_cast %203 : vector<2x1x1x128xf32> to vector<2x128xf32>
    %c0_319 = arith.constant 0 : index
    %c3_320 = arith.constant 3 : index
    %c0_321 = arith.constant 0 : index
    %c0_322 = arith.constant 0 : index
    %205 = vector.load %arg6[%c0_319, %c3_320, %c0_321, %c0_322] : memref<4x4x128x128xf32, #tpu.memory_space<vmem>>, vector<1x1x128x128xf32>
    %206 = vector.shape_cast %205 : vector<1x1x128x128xf32> to vector<128x128xf32>
    %cst_323 = arith.constant dense<0.000000e+00> : vector<2x128xf32>
    %207 = tpu.matmul %204, %206, %cst_323 {dimension_numbers = #tpu.dot_dimension_numbers<[1], [0], [0], [1], [0, 0, 1, 1], [], []>} : vector<2x128xf32>, vector<128x128xf32>, vector<2x128xf32> -> vector<2x128xf32>
    %208 = arith.addf %202, %207 : vector<2x128xf32>
    %c0_324 = arith.constant 0 : index
    %c1_325 = arith.constant 1 : index
    %c0_326 = arith.constant 0 : index
    %c0_327 = arith.constant 0 : index
    %209 = vector.load %arg16[%c0_324, %c1_325, %c0_326, %c0_327] : memref<2x4x4x128xf32, #tpu.memory_space<vmem>>, vector<2x1x1x128xf32>
    %210 = vector.shape_cast %209 : vector<2x1x1x128xf32> to vector<2x128xf32>
    %c1_328 = arith.constant 1 : index
    %c0_329 = arith.constant 0 : index
    %c0_330 = arith.constant 0 : index
    %c0_331 = arith.constant 0 : index
    %211 = vector.load %arg6[%c1_328, %c0_329, %c0_330, %c0_331] : memref<4x4x128x128xf32, #tpu.memory_space<vmem>>, vector<1x1x128x128xf32>
    %212 = vector.shape_cast %211 : vector<1x1x128x128xf32> to vector<128x128xf32>
    %cst_332 = arith.constant dense<0.000000e+00> : vector<2x128xf32>
    %213 = tpu.matmul %210, %212, %cst_332 {dimension_numbers = #tpu.dot_dimension_numbers<[1], [0], [0], [1], [0, 0, 1, 1], [], []>} : vector<2x128xf32>, vector<128x128xf32>, vector<2x128xf32> -> vector<2x128xf32>
    %214 = arith.addf %208, %213 : vector<2x128xf32>
    %c0_333 = arith.constant 0 : index
    %c1_334 = arith.constant 1 : index
    %c1_335 = arith.constant 1 : index
    %c0_336 = arith.constant 0 : index
    %215 = vector.load %arg16[%c0_333, %c1_334, %c1_335, %c0_336] : memref<2x4x4x128xf32, #tpu.memory_space<vmem>>, vector<2x1x1x128xf32>
    %216 = vector.shape_cast %215 : vector<2x1x1x128xf32> to vector<2x128xf32>
    %c1_337 = arith.constant 1 : index
    %c1_338 = arith.constant 1 : index
    %c0_339 = arith.constant 0 : index
    %c0_340 = arith.constant 0 : index
    %217 = vector.load %arg6[%c1_337, %c1_338, %c0_339, %c0_340] : memref<4x4x128x128xf32, #tpu.memory_space<vmem>>, vector<1x1x128x128xf32>
    %218 = vector.shape_cast %217 : vector<1x1x128x128xf32> to vector<128x128xf32>
    %cst_341 = arith.constant dense<0.000000e+00> : vector<2x128xf32>
    %219 = tpu.matmul %216, %218, %cst_341 {dimension_numbers = #tpu.dot_dimension_numbers<[1], [0], [0], [1], [0, 0, 1, 1], [], []>} : vector<2x128xf32>, vector<128x128xf32>, vector<2x128xf32> -> vector<2x128xf32>
    %220 = arith.addf %214, %219 : vector<2x128xf32>
    %c0_342 = arith.constant 0 : index
    %c1_343 = arith.constant 1 : index
    %c2_344 = arith.constant 2 : index
    %c0_345 = arith.constant 0 : index
    %221 = vector.load %arg16[%c0_342, %c1_343, %c2_344, %c0_345] : memref<2x4x4x128xf32, #tpu.memory_space<vmem>>, vector<2x1x1x128xf32>
    %222 = vector.shape_cast %221 : vector<2x1x1x128xf32> to vector<2x128xf32>
    %c1_346 = arith.constant 1 : index
    %c2_347 = arith.constant 2 : index
    %c0_348 = arith.constant 0 : index
    %c0_349 = arith.constant 0 : index
    %223 = vector.load %arg6[%c1_346, %c2_347, %c0_348, %c0_349] : memref<4x4x128x128xf32, #tpu.memory_space<vmem>>, vector<1x1x128x128xf32>
    %224 = vector.shape_cast %223 : vector<1x1x128x128xf32> to vector<128x128xf32>
    %cst_350 = arith.constant dense<0.000000e+00> : vector<2x128xf32>
    %225 = tpu.matmul %222, %224, %cst_350 {dimension_numbers = #tpu.dot_dimension_numbers<[1], [0], [0], [1], [0, 0, 1, 1], [], []>} : vector<2x128xf32>, vector<128x128xf32>, vector<2x128xf32> -> vector<2x128xf32>
    %226 = arith.addf %220, %225 : vector<2x128xf32>
    %c0_351 = arith.constant 0 : index
    %c1_352 = arith.constant 1 : index
    %c3_353 = arith.constant 3 : index
    %c0_354 = arith.constant 0 : index
    %227 = vector.load %arg16[%c0_351, %c1_352, %c3_353, %c0_354] : memref<2x4x4x128xf32, #tpu.memory_space<vmem>>, vector<2x1x1x128xf32>
    %228 = vector.shape_cast %227 : vector<2x1x1x128xf32> to vector<2x128xf32>
    %c1_355 = arith.constant 1 : index
    %c3_356 = arith.constant 3 : index
    %c0_357 = arith.constant 0 : index
    %c0_358 = arith.constant 0 : index
    %229 = vector.load %arg6[%c1_355, %c3_356, %c0_357, %c0_358] : memref<4x4x128x128xf32, #tpu.memory_space<vmem>>, vector<1x1x128x128xf32>
    %230 = vector.shape_cast %229 : vector<1x1x128x128xf32> to vector<128x128xf32>
    %cst_359 = arith.constant dense<0.000000e+00> : vector<2x128xf32>
    %231 = tpu.matmul %228, %230, %cst_359 {dimension_numbers = #tpu.dot_dimension_numbers<[1], [0], [0], [1], [0, 0, 1, 1], [], []>} : vector<2x128xf32>, vector<128x128xf32>, vector<2x128xf32> -> vector<2x128xf32>
    %232 = arith.addf %226, %231 : vector<2x128xf32>
    %c0_360 = arith.constant 0 : index
    %c2_361 = arith.constant 2 : index
    %c0_362 = arith.constant 0 : index
    %c0_363 = arith.constant 0 : index
    %233 = vector.load %arg16[%c0_360, %c2_361, %c0_362, %c0_363] : memref<2x4x4x128xf32, #tpu.memory_space<vmem>>, vector<2x1x1x128xf32>
    %234 = vector.shape_cast %233 : vector<2x1x1x128xf32> to vector<2x128xf32>
    %c2_364 = arith.constant 2 : index
    %c0_365 = arith.constant 0 : index
    %c0_366 = arith.constant 0 : index
    %c0_367 = arith.constant 0 : index
    %235 = vector.load %arg6[%c2_364, %c0_365, %c0_366, %c0_367] : memref<4x4x128x128xf32, #tpu.memory_space<vmem>>, vector<1x1x128x128xf32>
    %236 = vector.shape_cast %235 : vector<1x1x128x128xf32> to vector<128x128xf32>
    %cst_368 = arith.constant dense<0.000000e+00> : vector<2x128xf32>
    %237 = tpu.matmul %234, %236, %cst_368 {dimension_numbers = #tpu.dot_dimension_numbers<[1], [0], [0], [1], [0, 0, 1, 1], [], []>} : vector<2x128xf32>, vector<128x128xf32>, vector<2x128xf32> -> vector<2x128xf32>
    %238 = arith.addf %232, %237 : vector<2x128xf32>
    %c0_369 = arith.constant 0 : index
    %c2_370 = arith.constant 2 : index
    %c1_371 = arith.constant 1 : index
    %c0_372 = arith.constant 0 : index
    %239 = vector.load %arg16[%c0_369, %c2_370, %c1_371, %c0_372] : memref<2x4x4x128xf32, #tpu.memory_space<vmem>>, vector<2x1x1x128xf32>
    %240 = vector.shape_cast %239 : vector<2x1x1x128xf32> to vector<2x128xf32>
    %c2_373 = arith.constant 2 : index
    %c1_374 = arith.constant 1 : index
    %c0_375 = arith.constant 0 : index
    %c0_376 = arith.constant 0 : index
    %241 = vector.load %arg6[%c2_373, %c1_374, %c0_375, %c0_376] : memref<4x4x128x128xf32, #tpu.memory_space<vmem>>, vector<1x1x128x128xf32>
    %242 = vector.shape_cast %241 : vector<1x1x128x128xf32> to vector<128x128xf32>
    %cst_377 = arith.constant dense<0.000000e+00> : vector<2x128xf32>
    %243 = tpu.matmul %240, %242, %cst_377 {dimension_numbers = #tpu.dot_dimension_numbers<[1], [0], [0], [1], [0, 0, 1, 1], [], []>} : vector<2x128xf32>, vector<128x128xf32>, vector<2x128xf32> -> vector<2x128xf32>
    %244 = arith.addf %238, %243 : vector<2x128xf32>
    %c0_378 = arith.constant 0 : index
    %c2_379 = arith.constant 2 : index
    %c2_380 = arith.constant 2 : index
    %c0_381 = arith.constant 0 : index
    %245 = vector.load %arg16[%c0_378, %c2_379, %c2_380, %c0_381] : memref<2x4x4x128xf32, #tpu.memory_space<vmem>>, vector<2x1x1x128xf32>
    %246 = vector.shape_cast %245 : vector<2x1x1x128xf32> to vector<2x128xf32>
    %c2_382 = arith.constant 2 : index
    %c2_383 = arith.constant 2 : index
    %c0_384 = arith.constant 0 : index
    %c0_385 = arith.constant 0 : index
    %247 = vector.load %arg6[%c2_382, %c2_383, %c0_384, %c0_385] : memref<4x4x128x128xf32, #tpu.memory_space<vmem>>, vector<1x1x128x128xf32>
    %248 = vector.shape_cast %247 : vector<1x1x128x128xf32> to vector<128x128xf32>
    %cst_386 = arith.constant dense<0.000000e+00> : vector<2x128xf32>
    %249 = tpu.matmul %246, %248, %cst_386 {dimension_numbers = #tpu.dot_dimension_numbers<[1], [0], [0], [1], [0, 0, 1, 1], [], []>} : vector<2x128xf32>, vector<128x128xf32>, vector<2x128xf32> -> vector<2x128xf32>
    %250 = arith.addf %244, %249 : vector<2x128xf32>
    %c0_387 = arith.constant 0 : index
    %c2_388 = arith.constant 2 : index
    %c3_389 = arith.constant 3 : index
    %c0_390 = arith.constant 0 : index
    %251 = vector.load %arg16[%c0_387, %c2_388, %c3_389, %c0_390] : memref<2x4x4x128xf32, #tpu.memory_space<vmem>>, vector<2x1x1x128xf32>
    %252 = vector.shape_cast %251 : vector<2x1x1x128xf32> to vector<2x128xf32>
    %c2_391 = arith.constant 2 : index
    %c3_392 = arith.constant 3 : index
    %c0_393 = arith.constant 0 : index
    %c0_394 = arith.constant 0 : index
    %253 = vector.load %arg6[%c2_391, %c3_392, %c0_393, %c0_394] : memref<4x4x128x128xf32, #tpu.memory_space<vmem>>, vector<1x1x128x128xf32>
    %254 = vector.shape_cast %253 : vector<1x1x128x128xf32> to vector<128x128xf32>
    %cst_395 = arith.constant dense<0.000000e+00> : vector<2x128xf32>
    %255 = tpu.matmul %252, %254, %cst_395 {dimension_numbers = #tpu.dot_dimension_numbers<[1], [0], [0], [1], [0, 0, 1, 1], [], []>} : vector<2x128xf32>, vector<128x128xf32>, vector<2x128xf32> -> vector<2x128xf32>
    %256 = arith.addf %250, %255 : vector<2x128xf32>
    %c0_396 = arith.constant 0 : index
    %c3_397 = arith.constant 3 : index
    %c0_398 = arith.constant 0 : index
    %c0_399 = arith.constant 0 : index
    %257 = vector.load %arg16[%c0_396, %c3_397, %c0_398, %c0_399] : memref<2x4x4x128xf32, #tpu.memory_space<vmem>>, vector<2x1x1x128xf32>
    %258 = vector.shape_cast %257 : vector<2x1x1x128xf32> to vector<2x128xf32>
    %c3_400 = arith.constant 3 : index
    %c0_401 = arith.constant 0 : index
    %c0_402 = arith.constant 0 : index
    %c0_403 = arith.constant 0 : index
    %259 = vector.load %arg6[%c3_400, %c0_401, %c0_402, %c0_403] : memref<4x4x128x128xf32, #tpu.memory_space<vmem>>, vector<1x1x128x128xf32>
    %260 = vector.shape_cast %259 : vector<1x1x128x128xf32> to vector<128x128xf32>
    %cst_404 = arith.constant dense<0.000000e+00> : vector<2x128xf32>
    %261 = tpu.matmul %258, %260, %cst_404 {dimension_numbers = #tpu.dot_dimension_numbers<[1], [0], [0], [1], [0, 0, 1, 1], [], []>} : vector<2x128xf32>, vector<128x128xf32>, vector<2x128xf32> -> vector<2x128xf32>
    %262 = arith.addf %256, %261 : vector<2x128xf32>
    %c0_405 = arith.constant 0 : index
    %c3_406 = arith.constant 3 : index
    %c1_407 = arith.constant 1 : index
    %c0_408 = arith.constant 0 : index
    %263 = vector.load %arg16[%c0_405, %c3_406, %c1_407, %c0_408] : memref<2x4x4x128xf32, #tpu.memory_space<vmem>>, vector<2x1x1x128xf32>
    %264 = vector.shape_cast %263 : vector<2x1x1x128xf32> to vector<2x128xf32>
    %c3_409 = arith.constant 3 : index
    %c1_410 = arith.constant 1 : index
    %c0_411 = arith.constant 0 : index
    %c0_412 = arith.constant 0 : index
    %265 = vector.load %arg6[%c3_409, %c1_410, %c0_411, %c0_412] : memref<4x4x128x128xf32, #tpu.memory_space<vmem>>, vector<1x1x128x128xf32>
    %266 = vector.shape_cast %265 : vector<1x1x128x128xf32> to vector<128x128xf32>
    %cst_413 = arith.constant dense<0.000000e+00> : vector<2x128xf32>
    %267 = tpu.matmul %264, %266, %cst_413 {dimension_numbers = #tpu.dot_dimension_numbers<[1], [0], [0], [1], [0, 0, 1, 1], [], []>} : vector<2x128xf32>, vector<128x128xf32>, vector<2x128xf32> -> vector<2x128xf32>
    %268 = arith.addf %262, %267 : vector<2x128xf32>
    %c0_414 = arith.constant 0 : index
    %c3_415 = arith.constant 3 : index
    %c2_416 = arith.constant 2 : index
    %c0_417 = arith.constant 0 : index
    %269 = vector.load %arg16[%c0_414, %c3_415, %c2_416, %c0_417] : memref<2x4x4x128xf32, #tpu.memory_space<vmem>>, vector<2x1x1x128xf32>
    %270 = vector.shape_cast %269 : vector<2x1x1x128xf32> to vector<2x128xf32>
    %c3_418 = arith.constant 3 : index
    %c2_419 = arith.constant 2 : index
    %c0_420 = arith.constant 0 : index
    %c0_421 = arith.constant 0 : index
    %271 = vector.load %arg6[%c3_418, %c2_419, %c0_420, %c0_421] : memref<4x4x128x128xf32, #tpu.memory_space<vmem>>, vector<1x1x128x128xf32>
    %272 = vector.shape_cast %271 : vector<1x1x128x128xf32> to vector<128x128xf32>
    %cst_422 = arith.constant dense<0.000000e+00> : vector<2x128xf32>
    %273 = tpu.matmul %270, %272, %cst_422 {dimension_numbers = #tpu.dot_dimension_numbers<[1], [0], [0], [1], [0, 0, 1, 1], [], []>} : vector<2x128xf32>, vector<128x128xf32>, vector<2x128xf32> -> vector<2x128xf32>
    %274 = arith.addf %268, %273 : vector<2x128xf32>
    %c0_423 = arith.constant 0 : index
    %c3_424 = arith.constant 3 : index
    %c3_425 = arith.constant 3 : index
    %c0_426 = arith.constant 0 : index
    %275 = vector.load %arg16[%c0_423, %c3_424, %c3_425, %c0_426] : memref<2x4x4x128xf32, #tpu.memory_space<vmem>>, vector<2x1x1x128xf32>
    %276 = vector.shape_cast %275 : vector<2x1x1x128xf32> to vector<2x128xf32>
    %c3_427 = arith.constant 3 : index
    %c3_428 = arith.constant 3 : index
    %c0_429 = arith.constant 0 : index
    %c0_430 = arith.constant 0 : index
    %277 = vector.load %arg6[%c3_427, %c3_428, %c0_429, %c0_430] : memref<4x4x128x128xf32, #tpu.memory_space<vmem>>, vector<1x1x128x128xf32>
    %278 = vector.shape_cast %277 : vector<1x1x128x128xf32> to vector<128x128xf32>
    %cst_431 = arith.constant dense<0.000000e+00> : vector<2x128xf32>
    %279 = tpu.matmul %276, %278, %cst_431 {dimension_numbers = #tpu.dot_dimension_numbers<[1], [0], [0], [1], [0, 0, 1, 1], [], []>} : vector<2x128xf32>, vector<128x128xf32>, vector<2x128xf32> -> vector<2x128xf32>
    %280 = arith.addf %274, %279 : vector<2x128xf32>
    %c0_432 = arith.constant 0 : index
    %c0_433 = arith.constant 0 : index
    %281 = vector.load %arg7[%c0_432, %c0_433] : memref<1x128xf32, #tpu.memory_space<vmem>>, vector<1x128xf32>
    %282 = vector.broadcast %281 : vector<1x128xf32> to vector<2x128xf32>
    %283 = arith.addf %280, %282 : vector<2x128xf32>
    %cst_434 = arith.constant 0.000000e+00 : f32
    %284 = vector.broadcast %cst_434 : f32 to vector<2x128xf32>
    %285 = arith.maximumf %283, %284 : vector<2x128xf32>
    %c0_435 = arith.constant 0 : index
    %c0_436 = arith.constant 0 : index
    %286 = vector.load %arg8[%c0_435, %c0_436] : memref<128x128xf32, #tpu.memory_space<vmem>>, vector<128x128xf32>
    %cst_437 = arith.constant dense<0.000000e+00> : vector<2x128xf32>
    %287 = tpu.matmul %285, %286, %cst_437 {dimension_numbers = #tpu.dot_dimension_numbers<[1], [0], [0], [1], [0, 0, 1, 1], [], []>} : vector<2x128xf32>, vector<128x128xf32>, vector<2x128xf32> -> vector<2x128xf32>
    %c0_438 = arith.constant 0 : index
    %c0_439 = arith.constant 0 : index
    %288 = vector.load %arg9[%c0_438, %c0_439] : memref<1x128xf32, #tpu.memory_space<vmem>>, vector<1x128xf32>
    %289 = vector.broadcast %288 : vector<1x128xf32> to vector<2x128xf32>
    %290 = arith.addf %287, %289 : vector<2x128xf32>
    %291 = tpu.iota {dimensions = array<i32: 1>} : vector<2x128xi32>
    %c10_i32 = arith.constant 10 : i32
    %292 = vector.broadcast %c10_i32 : i32 to vector<2x128xi32>
    %293 = arith.cmpi slt, %291, %292 : vector<2x128xi32>
    %cst_440 = arith.constant -1.000000e+30 : f32
    %294 = vector.broadcast %cst_440 : f32 to vector<2x128xf32>
    %295 = arith.select %293, %290, %294 : vector<2x128xi1>, vector<2x128xf32>
    %cst_441 = arith.constant dense<0xFF800000> : vector<2xf32>
    %296 = vector.multi_reduction <maximumf>, %295, %cst_441 [1] : vector<2x128xf32> to vector<2xf32>
    %297 = vector.shape_cast %296 : vector<2xf32> to vector<2x1xf32>
    %298 = vector.broadcast %297 : vector<2x1xf32> to vector<2x128xf32>
    %299 = arith.subf %295, %298 : vector<2x128xf32>
    %300 = math.exp %299 : vector<2x128xf32>
    %cst_442 = arith.constant dense<0.000000e+00> : vector<2xf32>
    %301 = vector.multi_reduction <add>, %300, %cst_442 [1] : vector<2x128xf32> to vector<2xf32>
    %302 = vector.shape_cast %301 : vector<2xf32> to vector<2x1xf32>
    %303 = math.log %302 : vector<2x1xf32>
    %304 = vector.broadcast %297 : vector<2x1xf32> to vector<2x128xf32>
    %305 = arith.subf %295, %304 : vector<2x128xf32>
    %306 = vector.broadcast %303 : vector<2x1xf32> to vector<2x128xf32>
    %307 = arith.subf %305, %306 : vector<2x128xf32>
    %c0_443 = arith.constant 0 : index
    %c0_444 = arith.constant 0 : index
    %308 = vector.load %arg10[%c0_443, %c0_444] : memref<2x128xf32, #tpu.memory_space<vmem>>, vector<2x128xf32>
    tpu.vector_store %arg10[%c0_443, %c0_444], %307 {strides = array<i32>} : memref<2x128xf32, #tpu.memory_space<vmem>>, vector<2x128xf32>,
    return
  }
  func.func @transform_0(%arg0: i32) -> (i32, i32) {
    %c0_i32 = arith.constant 0 : i32
    %c0_i32_0 = arith.constant 0 : i32
    return %arg0, %c0_i32 : i32, i32
  }
  func.func @transform_1(%arg0: i32) -> (i32, i32) {
    %c0_i32 = arith.constant 0 : i32
    %c0_i32_0 = arith.constant 0 : i32
    %c0_i32_1 = arith.constant 0 : i32
    return %c0_i32, %c0_i32_0 : i32, i32
  }
  func.func @transform_2(%arg0: i32) -> (i32, i32) {
    %c0_i32 = arith.constant 0 : i32
    %c0_i32_0 = arith.constant 0 : i32
    %c0_i32_1 = arith.constant 0 : i32
    return %c0_i32, %c0_i32_0 : i32, i32
  }
  func.func @transform_3(%arg0: i32) -> (i32, i32, i32, i32) {
    %c0_i32 = arith.constant 0 : i32
    %c0_i32_0 = arith.constant 0 : i32
    %c0_i32_1 = arith.constant 0 : i32
    %c0_i32_2 = arith.constant 0 : i32
    %c0_i32_3 = arith.constant 0 : i32
    return %c0_i32, %c0_i32_0, %c0_i32_1, %c0_i32_2 : i32, i32, i32, i32
  }
  func.func @transform_4(%arg0: i32) -> (i32, i32) {
    %c0_i32 = arith.constant 0 : i32
    %c0_i32_0 = arith.constant 0 : i32
    %c0_i32_1 = arith.constant 0 : i32
    return %c0_i32, %c0_i32_0 : i32, i32
  }
  func.func @transform_5(%arg0: i32) -> (i32, i32, i32, i32) {
    %c0_i32 = arith.constant 0 : i32
    %c0_i32_0 = arith.constant 0 : i32
    %c0_i32_1 = arith.constant 0 : i32
    %c0_i32_2 = arith.constant 0 : i32
    %c0_i32_3 = arith.constant 0 : i32
    return %c0_i32, %c0_i32_0, %c0_i32_1, %c0_i32_2 : i32, i32, i32, i32
  }
  func.func @transform_6(%arg0: i32) -> (i32, i32) {
    %c0_i32 = arith.constant 0 : i32
    %c0_i32_0 = arith.constant 0 : i32
    %c0_i32_1 = arith.constant 0 : i32
    return %c0_i32, %c0_i32_0 : i32, i32
  }
  func.func @transform_7(%arg0: i32) -> (i32, i32) {
    %c0_i32 = arith.constant 0 : i32
    %c0_i32_0 = arith.constant 0 : i32
    %c0_i32_1 = arith.constant 0 : i32
    return %c0_i32, %c0_i32_0 : i32, i32
  }
  func.func @transform_8(%arg0: i32) -> (i32, i32) {
    %c0_i32 = arith.constant 0 : i32
    %c0_i32_0 = arith.constant 0 : i32
    %c0_i32_1 = arith.constant 0 : i32
    return %c0_i32, %c0_i32_0 : i32, i32
  }
  func.func @transform_9(%arg0: i32) -> (i32, i32) {
    %c0_i32 = arith.constant 0 : i32
    %c0_i32_0 = arith.constant 0 : i32
    return %arg0, %c0_i32 : i32, i32
  }
}

</mosaic_0001>

<llo_original>
// kernel: net_forward.1
$region0: #{net_forward.1}
  #allocation0 [shape = 'u32[]', space=smem, size = 0x4, offset = 0x4, fixed_abs, tag = 'smem constant byte address 0x4 - core index']
  #allocation1 [shape = 'u32[144,128]{1,0:T(1,128)}', space=vmem, size = 0x12000, scoped, tag = 'internal scratch']
  #allocation2 [shape = 'f32[2,24,24,128]{3,2,1,0:T(8,128)}', space=vmem, size = 0x90000, scoped, tag = 'scratch operand']
  #allocation3 [shape = 'f32[2,24,12,128]{3,2,1,0:T(8,128)}', space=vmem, size = 0x60000, scoped, tag = 'scratch operand']
  #allocation4 [shape = 'f32[2,12,12,128]{3,2,1,0:T(8,128)}', space=vmem, size = 0x30000, scoped, tag = 'scratch operand']
  #allocation5 [shape = 'f32[2,8,8,128]{3,2,1,0:T(8,128)}', space=vmem, size = 0x10000, scoped, tag = 'scratch operand']
  #allocation6 [shape = 'f32[2,8,4,128]{3,2,1,0:T(4,128)}', space=vmem, size = 0x8000, scoped, tag = 'scratch operand']
  #allocation7 [shape = 'f32[2,4,4,128]{3,2,1,0:T(4,128)}', space=vmem, size = 0x4000, scoped, tag = 'scratch operand']
  %s0 = inlined_call_operand.vmem [shape: f32[1152,32], index: 0, kind: input, shape index: {}]
  %s1 = inlined_call_operand.vmem [shape: f32[32,128], index: 1, kind: input, shape index: {}]
  %s2 = inlined_call_operand.vmem [shape: f32[1,128], index: 2, kind: input, shape index: {}]
  %s3 = inlined_call_operand.vmem [shape: f32[5,5,128,128], index: 3, kind: input, shape index: {}]
  %s4 = inlined_call_operand.vmem [shape: f32[1,128], index: 4, kind: input, shape index: {}]
  %s5 = inlined_call_operand.vmem [shape: f32[4,4,128,128], index: 5, kind: input, shape index: {}]
  %s6 = inlined_call_operand.vmem [shape: f32[1,128], index: 6, kind: input, shape index: {}]
  %s7 = inlined_call_operand.vmem [shape: f32[128,128], index: 7, kind: input, shape index: {}]
  %s8 = inlined_call_operand.vmem [shape: f32[1,128], index: 8, kind: input, shape index: {}]
  %s9 = inlined_call_operand.hbm [shape: f32[2,128], index: 9, kind: output, shape index: {}]
  %s10 = sld [smem:[#allocation0]]
  $region46: #{net_forward.1} parent=0
    _
  %s12 = ssub.s32 1, %s10
  %s13 = scalar_select 0, %s12, %s10
  $region1: #{net_forward.1} parent=0
    #allocation8 [shape = 'u8[1024]{0}', space=vmem, size = 0x400, scoped, tag = 'output window, operand 0, single buffered']
    #allocation9 [shape = 's32[1]{0}', space=sflag, size = 0x4, scoped, tag = 'scoped memory for net_forward.1']
    %14 = vsyncpa [#allocation9], 0
    // Predicated region
    $region2: #{net_forward.1} parent=1 // pred_check
      _
    $region3: #{net_forward.1} parent=1 // pred_check_branch
      %16 = sbr.rel (0) target = $region5
    $region4: #{net_forward.1} parent=1 // pred_region
      _
    $region5: #{net_forward.1} parent=1 // pred_fallthru
      _
    // Predicated region
    $region6: #{net_forward.1} parent=1 // pred_check
      _
    $region7: #{net_forward.1} parent=1 // pred_check_branch
      %18 = sbr.rel (0) target = $region9
    $region8: #{net_forward.1} parent=1 // pred_region
      _
    $region9: #{net_forward.1} parent=1 // pred_fallthru
      _
    // Predicated region
    $region10: #{net_forward.1} parent=1 // pred_check
      _
    $region11: #{net_forward.1} parent=1 // pred_check_branch
      %20 = sbr.rel (0) target = $region13
    $region12: #{net_forward.1} parent=1 // pred_region
      _
    $region13: #{net_forward.1} parent=1 // pred_fallthru
      _
    // Predicated region
    $region14: #{net_forward.1} parent=1 // pred_check
      _
    $region15: #{net_forward.1} parent=1 // pred_check_branch
      %22 = sbr.rel (0) target = $region17
    $region16: #{net_forward.1} parent=1 // pred_region
      _
    $region17: #{net_forward.1} parent=1 // pred_fallthru
      _
    // Predicated region
    $region18: #{net_forward.1} parent=1 // pred_check
      _
    $region19: #{net_forward.1} parent=1 // pred_check_branch
      %24 = sbr.rel (0) target = $region21
    $region20: #{net_forward.1} parent=1 // pred_region
      _
    $region21: #{net_forward.1} parent=1 // pred_fallthru
      _
    // Predicated region
    $region22: #{net_forward.1} parent=1 // pred_check
      _
    $region23: #{net_forward.1} parent=1 // pred_check_branch
      %26 = sbr.rel (0) target = $region25
    $region24: #{net_forward.1} parent=1 // pred_region
      _
    $region25: #{net_forward.1} parent=1 // pred_fallthru
      _
    // Predicated region
    $region26: #{net_forward.1} parent=1 // pred_check
      _
    $region27: #{net_forward.1} parent=1 // pred_check_branch
      %28 = sbr.rel (0) target = $region29
    $region28: #{net_forward.1} parent=1 // pred_region
      _
    $region29: #{net_forward.1} parent=1 // pred_fallthru
      _
    // Predicated region
    $region30: #{net_forward.1} parent=1 // pred_check
      _
    $region31: #{net_forward.1} parent=1 // pred_check_branch
      %30 = sbr.rel (0) target = $region33
    $region32: #{net_forward.1} parent=1 // pred_region
      _
    $region33: #{net_forward.1} parent=1 // pred_fallthru
      _
    // Predicated region
    $region34: #{net_forward.1} parent=1 // pred_check
      _
    $region35: #{net_forward.1} parent=1 // pred_check_branch
      %32 = sbr.rel (0) target = $region37
    $region36: #{net_forward.1} parent=1 // pred_region
      _
    $region37: #{net_forward.1} parent=1 // pred_fallthru
      _
    %v33 = vld [vmem:[%s0] sm:$0xff]
    %v34 = vld [vmem:[%s0 + $0x8] sm:$0xff]
    %v35 = vld [vmem:[%s0 + $0x10] sm:$0xff]
    %v36 = vld [vmem:[%s0 + $0x18] sm:$0xff]
    %v37 = vld [vmem:[%s0 + $0x20] sm:$0xff]
    %v38 = vld [vmem:[%s0 + $0x28] sm:$0xff]
    %v39 = vld [vmem:[%s0 + $0x30] sm:$0xff]
    %v40 = vld [vmem:[%s0 + $0x38] sm:$0xff]
    %v41 = vld [vmem:[%s0 + $0x40] sm:$0xff]
    %v42 = vld [vmem:[%s0 + $0x48] sm:$0xff]
    %v43 = vld [vmem:[%s0 + $0x50] sm:$0xff]
    %v44 = vld [vmem:[%s0 + $0x58] sm:$0xff]
    %v45 = vld [vmem:[%s0 + $0x60] sm:$0xff]
    %v46 = vld [vmem:[%s0 + $0x68] sm:$0xff]
    %v47 = vld [vmem:[%s0 + $0x70] sm:$0xff]
    %v48 = vld [vmem:[%s0 + $0x78] sm:$0xff]
    %v49 = vld [vmem:[%s0 + $0x80] sm:$0xff]
    %v50 = vld [vmem:[%s0 + $0x88] sm:$0xff]
    %v51 = vld [vmem:[%s0 + $0x90] sm:$0xff]
    %v52 = vld [vmem:[%s0 + $0x98] sm:$0xff]
    %v53 = vld [vmem:[%s0 + $0xa0] sm:$0xff]
    %v54 = vld [vmem:[%s0 + $0xa8] sm:$0xff]
    %v55 = vld [vmem:[%s0 + $0xb0] sm:$0xff]
    %v56 = vld [vmem:[%s0 + $0xb8] sm:$0xff]
    %v57 = vld [vmem:[%s0 + $0xc0] sm:$0xff]
    %v58 = vld [vmem:[%s0 + $0xc8] sm:$0xff]
    %v59 = vld [vmem:[%s0 + $0xd0] sm:$0xff]
    %v60 = vld [vmem:[%s0 + $0xd8] sm:$0xff]
    %v61 = vld [vmem:[%s0 + $0xe0] sm:$0xff]
    %v62 = vld [vmem:[%s0 + $0xe8] sm:$0xff]
    %v63 = vld [vmem:[%s0 + $0xf0] sm:$0xff]
    %v64 = vld [vmem:[%s0 + $0xf8] sm:$0xff]
    %v65 = vld [vmem:[%s0 + $0x100] sm:$0xff]
    %v66 = vld [vmem:[%s0 + $0x108] sm:$0xff]
    %v67 = vld [vmem:[%s0 + $0x110] sm:$0xff]
    %v68 = vld [vmem:[%s0 + $0x118] sm:$0xff]
    %v69 = vld [vmem:[%s0 + $0x120] sm:$0xff]
    %v70 = vld [vmem:[%s0 + $0x128] sm:$0xff]
    %v71 = vld [vmem:[%s0 + $0x130] sm:$0xff]
    %v72 = vld [vmem:[%s0 + $0x138] sm:$0xff]
    %v73 = vld [vmem:[%s0 + $0x140] sm:$0xff]
    %v74 = vld [vmem:[%s0 + $0x148] sm:$0xff]
    %v75 = vld [vmem:[%s0 + $0x150] sm:$0xff]
    %v76 = vld [vmem:[%s0 + $0x158] sm:$0xff]
    %v77 = vld [vmem:[%s0 + $0x160] sm:$0xff]
    %v78 = vld [vmem:[%s0 + $0x168] sm:$0xff]
    %v79 = vld [vmem:[%s0 + $0x170] sm:$0xff]
    %v80 = vld [vmem:[%s0 + $0x178] sm:$0xff]
    %v81 = vld [vmem:[%s0 + $0x180] sm:$0xff]
    %v82 = vld [vmem:[%s0 + $0x188] sm:$0xff]
    %v83 = vld [vmem:[%s0 + $0x190] sm:$0xff]
    %v84 = vld [vmem:[%s0 + $0x198] sm:$0xff]
    %v85 = vld [vmem:[%s0 + $0x1a0] sm:$0xff]
    %v86 = vld [vmem:[%s0 + $0x1a8] sm:$0xff]
    %v87 = vld [vmem:[%s0 + $0x1b0] sm:$0xff]
    %v88 = vld [vmem:[%s0 + $0x1b8] sm:$0xff]
    %v89 = vld [vmem:[%s0 + $0x1c0] sm:$0xff]
    %v90 = vld [vmem:[%s0 + $0x1c8] sm:$0xff]
    %v91 = vld [vmem:[%s0 + $0x1d0] sm:$0xff]
    %v92 = vld [vmem:[%s0 + $0x1d8] sm:$0xff]
    %v93 = vld [vmem:[%s0 + $0x1e0] sm:$0xff]
    %v94 = vld [vmem:[%s0 + $0x1e8] sm:$0xff]
    %v95 = vld [vmem:[%s0 + $0x1f0] sm:$0xff]
    %v96 = vld [vmem:[%s0 + $0x1f8] sm:$0xff]
    %v97 = vld [vmem:[%s0 + $0x200] sm:$0xff]
    %v98 = vld [vmem:[%s0 + $0x208] sm:$0xff]
    %v99 = vld [vmem:[%s0 + $0x210] sm:$0xff]
    %v100 = vld [vmem:[%s0 + $0x218] sm:$0xff]
    %v101 = vld [vmem:[%s0 + $0x220] sm:$0xff]
    %v102 = vld [vmem:[%s0 + $0x228] sm:$0xff]
    %v103 = vld [vmem:[%s0 + $0x230] sm:$0xff]
    %v104 = vld [vmem:[%s0 + $0x238] sm:$0xff]
    %v105 = vld [vmem:[%s0 + $0x240] sm:$0xff]
    %v106 = vld [vmem:[%s0 + $0x248] sm:$0xff]
    %v107 = vld [vmem:[%s0 + $0x250] sm:$0xff]
    %v108 = vld [vmem:[%s0 + $0x258] sm:$0xff]
    %v109 = vld [vmem:[%s0 + $0x260] sm:$0xff]
    %v110 = vld [vmem:[%s0 + $0x268] sm:$0xff]
    %v111 = vld [vmem:[%s0 + $0x270] sm:$0xff]
    %v112 = vld [vmem:[%s0 + $0x278] sm:$0xff]
    %v113 = vld [vmem:[%s0 + $0x280] sm:$0xff]
    %v114 = vld [vmem:[%s0 + $0x288] sm:$0xff]
    %v115 = vld [vmem:[%s0 + $0x290] sm:$0xff]
    %v116 = vld [vmem:[%s0 + $0x298] sm:$0xff]
    %v117 = vld [vmem:[%s0 + $0x2a0] sm:$0xff]
    %v118 = vld [vmem:[%s0 + $0x2a8] sm:$0xff]
    %v119 = vld [vmem:[%s0 + $0x2b0] sm:$0xff]
    %v120 = vld [vmem:[%s0 + $0x2b8] sm:$0xff]
    %v121 = vld [vmem:[%s0 + $0x2c0] sm:$0xff]
    %v122 = vld [vmem:[%s0 + $0x2c8] sm:$0xff]
    %v123 = vld [vmem:[%s0 + $0x2d0] sm:$0xff]
    %v124 = vld [vmem:[%s0 + $0x2d8] sm:$0xff]
    %v125 = vld [vmem:[%s0 + $0x2e0] sm:$0xff]
    %v126 = vld [vmem:[%s0 + $0x2e8] sm:$0xff]
    %v127 = vld [vmem:[%s0 + $0x2f0] sm:$0xff]
    %v128 = vld [vmem:[%s0 + $0x2f8] sm:$0xff]
    %v129 = vld [vmem:[%s0 + $0x300] sm:$0xff]
    %v130 = vld [vmem:[%s0 + $0x308] sm:$0xff]
    %v131 = vld [vmem:[%s0 + $0x310] sm:$0xff]
    %v132 = vld [vmem:[%s0 + $0x318] sm:$0xff]
    %v133 = vld [vmem:[%s0 + $0x320] sm:$0xff]
    %v134 = vld [vmem:[%s0 + $0x328] sm:$0xff]
    %v135 = vld [vmem:[%s0 + $0x330] sm:$0xff]
    %v136 = vld [vmem:[%s0 + $0x338] sm:$0xff]
    %v137 = vld [vmem:[%s0 + $0x340] sm:$0xff]
    %v138 = vld [vmem:[%s0 + $0x348] sm:$0xff]
    %v139 = vld [vmem:[%s0 + $0x350] sm:$0xff]
    %v140 = vld [vmem:[%s0 + $0x358] sm:$0xff]
    %v141 = vld [vmem:[%s0 + $0x360] sm:$0xff]
    %v142 = vld [vmem:[%s0 + $0x368] sm:$0xff]
    %v143 = vld [vmem:[%s0 + $0x370] sm:$0xff]
    %v144 = vld [vmem:[%s0 + $0x378] sm:$0xff]
    %v145 = vld [vmem:[%s0 + $0x380] sm:$0xff]
    %v146 = vld [vmem:[%s0 + $0x388] sm:$0xff]
    %v147 = vld [vmem:[%s0 + $0x390] sm:$0xff]
    %v148 = vld [vmem:[%s0 + $0x398] sm:$0xff]
    %v149 = vld [vmem:[%s0 + $0x3a0] sm:$0xff]
    %v150 = vld [vmem:[%s0 + $0x3a8] sm:$0xff]
    %v151 = vld [vmem:[%s0 + $0x3b0] sm:$0xff]
    %v152 = vld [vmem:[%s0 + $0x3b8] sm:$0xff]
    %v153 = vld [vmem:[%s0 + $0x3c0] sm:$0xff]
    %v154 = vld [vmem:[%s0 + $0x3c8] sm:$0xff]
    %v155 = vld [vmem:[%s0 + $0x3d0] sm:$0xff]
    %v156 = vld [vmem:[%s0 + $0x3d8] sm:$0xff]
    %v157 = vld [vmem:[%s0 + $0x3e0] sm:$0xff]
    %v158 = vld [vmem:[%s0 + $0x3e8] sm:$0xff]
    %v159 = vld [vmem:[%s0 + $0x3f0] sm:$0xff]
    %v160 = vld [vmem:[%s0 + $0x3f8] sm:$0xff]
    %v161 = vld [vmem:[%s0 + $0x400] sm:$0xff]
    %v162 = vld [vmem:[%s0 + $0x408] sm:$0xff]
    %v163 = vld [vmem:[%s0 + $0x410] sm:$0xff]
    %v164 = vld [vmem:[%s0 + $0x418] sm:$0xff]
    %v165 = vld [vmem:[%s0 + $0x420] sm:$0xff]
    %v166 = vld [vmem:[%s0 + $0x428] sm:$0xff]
    %v167 = vld [vmem:[%s0 + $0x430] sm:$0xff]
    %v168 = vld [vmem:[%s0 + $0x438] sm:$0xff]
    %v169 = vld [vmem:[%s0 + $0x440] sm:$0xff]
    %v170 = vld [vmem:[%s0 + $0x448] sm:$0xff]
    %v171 = vld [vmem:[%s0 + $0x450] sm:$0xff]
    %v172 = vld [vmem:[%s0 + $0x458] sm:$0xff]
    %v173 = vld [vmem:[%s0 + $0x460] sm:$0xff]
    %v174 = vld [vmem:[%s0 + $0x468] sm:$0xff]
    %v175 = vld [vmem:[%s0 + $0x470] sm:$0xff]
    %v176 = vld [vmem:[%s0 + $0x478] sm:$0xff]
    %v177 = vld [vmem:[%s1] sm:$0xff]
    %v178 = vld [vmem:[%s1 + $0x8] sm:$0xff]
    %v179 = vld [vmem:[%s1 + $0x10] sm:$0xff]
    %v180 = vld [vmem:[%s1 + $0x18] sm:$0xff]
    %v181 = vld [vmem:[%s2] sm:$0x1]
    %v183 = vlaneseq
    %v184 = vshrl.u32 %v183, 7
    %v185 = vsub.s32 0, %v184
    %v186 = vrot.slane %v181, %v185
    %vm188 = vcmask 261120
    %v190 = vsel %vm188, %v33, 0
    %v193 = vsel %vm188, %v34, 0
    %v196 = vsel %vm188, %v35, 0
    %v199 = vsel %vm188, %v36, 0
    %v202 = vsel %vm188, %v37, 0
    %v205 = vsel %vm188, %v38, 0
    %v208 = vsel %vm188, %v39, 0
    %v211 = vsel %vm188, %v40, 0
    %v214 = vsel %vm188, %v41, 0
    %v217 = vsel %vm188, %v42, 0
    %v220 = vsel %vm188, %v43, 0
    %v223 = vsel %vm188, %v44, 0
    %v226 = vsel %vm188, %v45, 0
    %v229 = vsel %vm188, %v46, 0
    %v232 = vsel %vm188, %v47, 0
    %v235 = vsel %vm188, %v48, 0
    %v238 = vsel %vm188, %v49, 0
    %v241 = vsel %vm188, %v50, 0
    %v244 = vsel %vm188, %v51, 0
    %v247 = vsel %vm188, %v52, 0
    %v250 = vsel %vm188, %v53, 0
    %v253 = vsel %vm188, %v54, 0
    %v256 = vsel %vm188, %v55, 0
    %v259 = vsel %vm188, %v56, 0
    %v262 = vsel %vm188, %v57, 0
    %v265 = vsel %vm188, %v58, 0
    %v268 = vsel %vm188, %v59, 0
    %v271 = vsel %vm188, %v60, 0
    %v274 = vsel %vm188, %v61, 0
    %v277 = vsel %vm188, %v62, 0
    %v280 = vsel %vm188, %v63, 0
    %v283 = vsel %vm188, %v64, 0
    %v286 = vsel %vm188, %v65, 0
    %v289 = vsel %vm188, %v66, 0
    %v292 = vsel %vm188, %v67, 0
    %v295 = vsel %vm188, %v68, 0
    %v298 = vsel %vm188, %v69, 0
    %v301 = vsel %vm188, %v70, 0
    %v304 = vsel %vm188, %v71, 0
    %v307 = vsel %vm188, %v72, 0
    %v310 = vsel %vm188, %v73, 0
    %v313 = vsel %vm188, %v74, 0
    %v316 = vsel %vm188, %v75, 0
    %v319 = vsel %vm188, %v76, 0
    %v322 = vsel %vm188, %v77, 0
    %v325 = vsel %vm188, %v78, 0
    %v328 = vsel %vm188, %v79, 0
    %v331 = vsel %vm188, %v80, 0
    %v334 = vsel %vm188, %v81, 0
    %v337 = vsel %vm188, %v82, 0
    %v340 = vsel %vm188, %v83, 0
    %v343 = vsel %vm188, %v84, 0
    %v346 = vsel %vm188, %v85, 0
    %v349 = vsel %vm188, %v86, 0
    %v352 = vsel %vm188, %v87, 0
    %v355 = vsel %vm188, %v88, 0
    %v358 = vsel %vm188, %v89, 0
    %v361 = vsel %vm188, %v90, 0
    %v364 = vsel %vm188, %v91, 0
    %v367 = vsel %vm188, %v92, 0
    %v370 = vsel %vm188, %v93, 0
    %v373 = vsel %vm188, %v94, 0
    %v376 = vsel %vm188, %v95, 0
    %v379 = vsel %vm188, %v96, 0
    %v382 = vsel %vm188, %v97, 0
    %v385 = vsel %vm188, %v98, 0
    %v388 = vsel %vm188, %v99, 0
    %v391 = vsel %vm188, %v100, 0
    %v394 = vsel %vm188, %v101, 0
    %v397 = vsel %vm188, %v102, 0
    %v400 = vsel %vm188, %v103, 0
    %v403 = vsel %vm188, %v104, 0
    %v406 = vsel %vm188, %v105, 0
    %v409 = vsel %vm188, %v106, 0
    %v412 = vsel %vm188, %v107, 0
    %v415 = vsel %vm188, %v108, 0
    %v418 = vsel %vm188, %v109, 0
    %v421 = vsel %vm188, %v110, 0
    %v424 = vsel %vm188, %v111, 0
    %v427 = vsel %vm188, %v112, 0
    %v430 = vsel %vm188, %v113, 0
    %v433 = vsel %vm188, %v114, 0
    %v436 = vsel %vm188, %v115, 0
    %v439 = vsel %vm188, %v116, 0
    %v442 = vsel %vm188, %v117, 0
    %v445 = vsel %vm188, %v118, 0
    %v448 = vsel %vm188, %v119, 0
    %v451 = vsel %vm188, %v120, 0
    %v454 = vsel %vm188, %v121, 0
    %v457 = vsel %vm188, %v122, 0
    %v460 = vsel %vm188, %v123, 0
    %v463 = vsel %vm188, %v124, 0
    %v466 = vsel %vm188, %v125, 0
    %v469 = vsel %vm188, %v126, 0
    %v472 = vsel %vm188, %v127, 0
    %v475 = vsel %vm188, %v128, 0
    %v478 = vsel %vm188, %v129, 0
    %v481 = vsel %vm188, %v130, 0
    %v484 = vsel %vm188, %v131, 0
    %v487 = vsel %vm188, %v132, 0
    %v490 = vsel %vm188, %v133, 0
    %v493 = vsel %vm188, %v134, 0
    %v496 = vsel %vm188, %v135, 0
    %v499 = vsel %vm188, %v136, 0
    %v502 = vsel %vm188, %v137, 0
    %v505 = vsel %vm188, %v138, 0
    %v508 = vsel %vm188, %v139, 0
    %v511 = vsel %vm188, %v140, 0
    %v514 = vsel %vm188, %v141, 0
    %v517 = vsel %vm188, %v142, 0
    %v520 = vsel %vm188, %v143, 0
    %v523 = vsel %vm188, %v144, 0
    %v526 = vsel %vm188, %v145, 0
    %v529 = vsel %vm188, %v146, 0
    %v532 = vsel %vm188, %v147, 0
    %v535 = vsel %vm188, %v148, 0
    %v538 = vsel %vm188, %v149, 0
    %v541 = vsel %vm188, %v150, 0
    %v544 = vsel %vm188, %v151, 0
    %v547 = vsel %vm188, %v152, 0
    %v550 = vsel %vm188, %v153, 0
    %v553 = vsel %vm188, %v154, 0
    %v556 = vsel %vm188, %v155, 0
    %v559 = vsel %vm188, %v156, 0
    %v562 = vsel %vm188, %v157, 0
    %v565 = vsel %vm188, %v158, 0
    %v568 = vsel %vm188, %v159, 0
    %v571 = vsel %vm188, %v160, 0
    %v574 = vsel %vm188, %v161, 0
    %v577 = vsel %vm188, %v162, 0
    %v580 = vsel %vm188, %v163, 0
    %v583 = vsel %vm188, %v164, 0
    %v586 = vsel %vm188, %v165, 0
    %v589 = vsel %vm188, %v166, 0
    %v592 = vsel %vm188, %v167, 0
    %v595 = vsel %vm188, %v168, 0
    %v598 = vsel %vm188, %v169, 0
    %v601 = vsel %vm188, %v170, 0
    %v604 = vsel %vm188, %v171, 0
    %v607 = vsel %vm188, %v172, 0
    %v610 = vsel %vm188, %v173, 0
    %v613 = vsel %vm188, %v174, 0
    %v616 = vsel %vm188, %v175, 0
    %v619 = vsel %vm188, %v176, 0
    %621 = vmatprep.subr.mxu0 0.0
    %622 = vmatpush1.msra.mxu0 %v177
    %623 = vmatprep.subr.mxu0 0.0
    %624 = vmatpush1.msra.mxu0 %v178
    %625 = vmatprep.subr.mxu0 0.0
    %626 = vmatpush1.msra.mxu0 %v179
    %627 = vmatprep.subr.mxu0 0.0
    %628 = vmatpush1.msra.mxu0 %v180
    %629 = vmatprep.subr.mxu0 0.0
    %630 = vmatpush1.msra.mxu0 0.0
    %631 = vmatprep.subr.mxu0 0.0
    %632 = vmatpush1.msra.mxu0 0.0
    %633 = vmatprep.subr.mxu0 0.0
    %634 = vmatpush1.msra.mxu0 0.0
    %635 = vmatprep.subr.mxu0 0.0
    %636 = vmatpush1.msra.mxu0 0.0
    %637 = vmatprep.subr.mxu0 0.0
    %638 = vmatpush1.msra.mxu0 0.0
    %639 = vmatprep.subr.mxu0 0.0
    %640 = vmatpush1.msra.mxu0 0.0
    %641 = vmatprep.subr.mxu0 0.0
    %642 = vmatpush1.msra.mxu0 0.0
    %643 = vmatprep.subr.mxu0 0.0
    %644 = vmatpush1.msra.mxu0 0.0
    %645 = vmatprep.subr.mxu0 0.0
    %646 = vmatpush1.msra.mxu0 0.0
    %647 = vmatprep.subr.mxu0 0.0
    %648 = vmatpush1.msra.mxu0 0.0
    %649 = vmatprep.subr.mxu0 0.0
    %650 = vmatpush1.msra.mxu0 0.0
    %651 = vmatprep.subr.mxu0 0.0
    %652 = vmatpush1.msra.mxu0 0.0
    %653 = vmatprep.subr.mxu0 0.0
    %654 = vmatpush1.msra.mxu0 0.0
    %655 = vmatprep.subr.mxu0 0.0
    %656 = vmatpush1.msra.mxu0 0.0
    %657 = vmatprep.subr.mxu0 0.0
    %658 = vmatpush1.msra.mxu0 0.0
    %659 = vmatprep.subr.mxu0 0.0
    %660 = vmatpush1.msra.mxu0 0.0
    %661 = vmatprep.subr.mxu0 0.0
    %662 = vmatpush1.msra.mxu0 0.0
    %663 = vmatprep.subr.mxu0 0.0
    %664 = vmatpush1.msra.mxu0 0.0
    %665 = vmatprep.subr.mxu0 0.0
    %666 = vmatpush1.msra.mxu0 0.0
    %667 = vmatprep.subr.mxu0 0.0
    %668 = vmatpush1.msra.mxu0 0.0
    %669 = vmatprep.subr.mxu0 0.0
    %670 = vmatpush1.msra.mxu0 0.0
    %671 = vmatprep.subr.mxu0 0.0
    %672 = vmatpush1.msra.mxu0 0.0
    %673 = vmatprep.subr.mxu0 0.0
    %674 = vmatpush1.msra.mxu0 0.0
    %675 = vmatprep.subr.mxu0 0.0
    %676 = vmatpush1.msra.mxu0 0.0
    %677 = vmatprep.subr.mxu0 0.0
    %678 = vmatpush1.msra.mxu0 0.0
    %679 = vmatprep.subr.mxu0 0.0
    %680 = vmatpush1.msra.mxu0 0.0
    %681 = vmatprep.subr.mxu0 0.0
    %682 = vmatpush1.msra.mxu0 0.0
    %683 = vmatprep.subr.mxu0 0.0
    %684 = vmatpush1.msra.mxu0 0.0
    %685 = vmatprep.mubr.f32.mxu0 0.0
    %686 = vmatmul.mubr.f32.gmra.mrb[0].mxu0 %v190
    %v687 = vpop.f32.mrb[0].mxu0
    %v688 = vadd.f32 %v186, %v687
    %v689 = vpop.f32.mrb[0].mxu0
    %690 = vmatprep.mubr.f32.mxu0 0.0
    %691 = vmatmul.mubr.f32.gmra.mrb[0].mxu0 %v193
    %v692 = vpop.f32.mrb[0].mxu0
    %v693 = vadd.f32 %v186, %v692
    %v694 = vpop.f32.mrb[0].mxu0
    %695 = vmatprep.mubr.f32.mxu0 0.0
    %696 = vmatmul.mubr.f32.gmra.mrb[0].mxu0 %v196
    %v697 = vpop.f32.mrb[0].mxu0
    %v698 = vadd.f32 %v186, %v697
    %v699 = vpop.f32.mrb[0].mxu0
    %700 = vmatprep.mubr.f32.mxu0 0.0
    %701 = vmatmul.mubr.f32.gmra.mrb[0].mxu0 %v199
    %v702 = vpop.f32.mrb[0].mxu0
    %v703 = vadd.f32 %v186, %v702
    %v704 = vpop.f32.mrb[0].mxu0
    %705 = vmatprep.mubr.f32.mxu0 0.0
    %706 = vmatmul.mubr.f32.gmra.mrb[0].mxu0 %v202
    %v707 = vpop.f32.mrb[0].mxu0
    %v708 = vadd.f32 %v186, %v707
    %v709 = vpop.f32.mrb[0].mxu0
    %710 = vmatprep.mubr.f32.mxu0 0.0
    %711 = vmatmul.mubr.f32.gmra.mrb[0].mxu0 %v205
    %v712 = vpop.f32.mrb[0].mxu0
    %v713 = vadd.f32 %v186, %v712
    %v714 = vpop.f32.mrb[0].mxu0
    %715 = vmatprep.mubr.f32.mxu0 0.0
    %716 = vmatmul.mubr.f32.gmra.mrb[0].mxu0 %v208
    %v717 = vpop.f32.mrb[0].mxu0
    %v718 = vadd.f32 %v186, %v717
    %v719 = vpop.f32.mrb[0].mxu0
    %720 = vmatprep.mubr.f32.mxu0 0.0
    %721 = vmatmul.mubr.f32.gmra.mrb[0].mxu0 %v211
    %v722 = vpop.f32.mrb[0].mxu0
    %v723 = vadd.f32 %v186, %v722
    %v724 = vpop.f32.mrb[0].mxu0
    %725 = vmatprep.mubr.f32.mxu0 0.0
    %726 = vmatmul.mubr.f32.gmra.mrb[0].mxu0 %v214
    %v727 = vpop.f32.mrb[0].mxu0
    %v728 = vadd.f32 %v186, %v727
    %v729 = vpop.f32.mrb[0].mxu0
    %730 = vmatprep.mubr.f32.mxu0 0.0
    %731 = vmatmul.mubr.f32.gmra.mrb[0].mxu0 %v217
    %v732 = vpop.f32.mrb[0].mxu0
    %v733 = vadd.f32 %v186, %v732
    %v734 = vpop.f32.mrb[0].mxu0
    %735 = vmatprep.mubr.f32.mxu0 0.0
    %736 = vmatmul.mubr.f32.gmra.mrb[0].mxu0 %v220
    %v737 = vpop.f32.mrb[0].mxu0
    %v738 = vadd.f32 %v186, %v737
    %v739 = vpop.f32.mrb[0].mxu0
    %740 = vmatprep.mubr.f32.mxu0 0.0
    %741 = vmatmul.mubr.f32.gmra.mrb[0].mxu0 %v223
    %v742 = vpop.f32.mrb[0].mxu0
    %v743 = vadd.f32 %v186, %v742
    %v744 = vpop.f32.mrb[0].mxu0
    %745 = vmatprep.mubr.f32.mxu0 0.0
    %746 = vmatmul.mubr.f32.gmra.mrb[0].mxu0 %v226
    %v747 = vpop.f32.mrb[0].mxu0
    %v748 = vadd.f32 %v186, %v747
    %v749 = vpop.f32.mrb[0].mxu0
    %750 = vmatprep.mubr.f32.mxu0 0.0
    %751 = vmatmul.mubr.f32.gmra.mrb[0].mxu0 %v229
    %v752 = vpop.f32.mrb[0].mxu0
    %v753 = vadd.f32 %v186, %v752
    %v754 = vpop.f32.mrb[0].mxu0
    %755 = vmatprep.mubr.f32.mxu0 0.0
    %756 = vmatmul.mubr.f32.gmra.mrb[0].mxu0 %v232
    %v757 = vpop.f32.mrb[0].mxu0
    %v758 = vadd.f32 %v186, %v757
    %v759 = vpop.f32.mrb[0].mxu0
    %760 = vmatprep.mubr.f32.mxu0 0.0
    %761 = vmatmul.mubr.f32.gmra.mrb[0].mxu0 %v235
    %v762 = vpop.f32.mrb[0].mxu0
    %v763 = vadd.f32 %v186, %v762
    %v764 = vpop.f32.mrb[0].mxu0
    %765 = vmatprep.mubr.f32.mxu0 0.0
    %766 = vmatmul.mubr.f32.gmra.mrb[0].mxu0 %v238
    %v767 = vpop.f32.mrb[0].mxu0
    %v768 = vadd.f32 %v186, %v767
    %v769 = vpop.f32.mrb[0].mxu0
    %770 = vmatprep.mubr.f32.mxu0 0.0
    %771 = vmatmul.mubr.f32.gmra.mrb[0].mxu0 %v241
    %v772 = vpop.f32.mrb[0].mxu0
    %v773 = vadd.f32 %v186, %v772
    %v774 = vpop.f32.mrb[0].mxu0
    %775 = vmatprep.mubr.f32.mxu0 0.0
    %776 = vmatmul.mubr.f32.gmra.mrb[0].mxu0 %v244
    %v777 = vpop.f32.mrb[0].mxu0
    %v778 = vadd.f32 %v186, %v777
    %v779 = vpop.f32.mrb[0].mxu0
    %780 = vmatprep.mubr.f32.mxu0 0.0
    %781 = vmatmul.mubr.f32.gmra.mrb[0].mxu0 %v247
    %v782 = vpop.f32.mrb[0].mxu0
    %v783 = vadd.f32 %v186, %v782
    %v784 = vpop.f32.mrb[0].mxu0
    %785 = vmatprep.mubr.f32.mxu0 0.0
    %786 = vmatmul.mubr.f32.gmra.mrb[0].mxu0 %v250
    %v787 = vpop.f32.mrb[0].mxu0
    %v788 = vadd.f32 %v186, %v787
    %v789 = vpop.f32.mrb[0].mxu0
    %790 = vmatprep.mubr.f32.mxu0 0.0
    %791 = vmatmul.mubr.f32.gmra.mrb[0].mxu0 %v253
    %v792 = vpop.f32.mrb[0].mxu0
    %v793 = vadd.f32 %v186, %v792
    %v794 = vpop.f32.mrb[0].mxu0
    %795 = vmatprep.mubr.f32.mxu0 0.0
    %796 = vmatmul.mubr.f32.gmra.mrb[0].mxu0 %v256
    %v797 = vpop.f32.mrb[0].mxu0
    %v798 = vadd.f32 %v186, %v797
    %v799 = vpop.f32.mrb[0].mxu0
    %800 = vmatprep.mubr.f32.mxu0 0.0
    %801 = vmatmul.mubr.f32.gmra.mrb[0].mxu0 %v259
    %v802 = vpop.f32.mrb[0].mxu0
    %v803 = vadd.f32 %v186, %v802
    %v804 = vpop.f32.mrb[0].mxu0
    %805 = vmatprep.mubr.f32.mxu0 0.0
    %806 = vmatmul.mubr.f32.gmra.mrb[0].mxu0 %v262
    %v807 = vpop.f32.mrb[0].mxu0
    %v808 = vadd.f32 %v186, %v807
    %v809 = vpop.f32.mrb[0].mxu0
    %810 = vmatprep.mubr.f32.mxu0 0.0
    %811 = vmatmul.mubr.f32.gmra.mrb[0].mxu0 %v265
    %v812 = vpop.f32.mrb[0].mxu0
    %v813 = vadd.f32 %v186, %v812
    %v814 = vpop.f32.mrb[0].mxu0
    %815 = vmatprep.mubr.f32.mxu0 0.0
    %816 = vmatmul.mubr.f32.gmra.mrb[0].mxu0 %v268
    %v817 = vpop.f32.mrb[0].mxu0
    %v818 = vadd.f32 %v186, %v817
    %v819 = vpop.f32.mrb[0].mxu0
    %820 = vmatprep.mubr.f32.mxu0 0.0
    %821 = vmatmul.mubr.f32.gmra.mrb[0].mxu0 %v271
    %v822 = vpop.f32.mrb[0].mxu0
    %v823 = vadd.f32 %v186, %v822
    %v824 = vpop.f32.mrb[0].mxu0
    %825 = vmatprep.mubr.f32.mxu0 0.0
    %826 = vmatmul.mubr.f32.gmra.mrb[0].mxu0 %v274
    %v827 = vpop.f32.mrb[0].mxu0
    %v828 = vadd.f32 %v186, %v827
    %v829 = vpop.f32.mrb[0].mxu0
    %830 = vmatprep.mubr.f32.mxu0 0.0
    %831 = vmatmul.mubr.f32.gmra.mrb[0].mxu0 %v277
    %v832 = vpop.f32.mrb[0].mxu0
    %v833 = vadd.f32 %v186, %v832
    %v834 = vpop.f32.mrb[0].mxu0
    %835 = vmatprep.mubr.f32.mxu0 0.0
    %836 = vmatmul.mubr.f32.gmra.mrb[0].mxu0 %v280
    %v837 = vpop.f32.mrb[0].mxu0
    %v838 = vadd.f32 %v186, %v837
    %v839 = vpop.f32.mrb[0].mxu0
    %840 = vmatprep.mubr.f32.mxu0 0.0
    %841 = vmatmul.mubr.f32.gmra.mrb[0].mxu0 %v283
    %v842 = vpop.f32.mrb[0].mxu0
    %v843 = vadd.f32 %v186, %v842
    %v844 = vpop.f32.mrb[0].mxu0
    %845 = vmatprep.mubr.f32.mxu0 0.0
    %846 = vmatmul.mubr.f32.gmra.mrb[0].mxu0 %v286
    %v847 = vpop.f32.mrb[0].mxu0
    %v848 = vadd.f32 %v186, %v847
    %v849 = vpop.f32.mrb[0].mxu0
    %850 = vmatprep.mubr.f32.mxu0 0.0
    %851 = vmatmul.mubr.f32.gmra.mrb[0].mxu0 %v289
    %v852 = vpop.f32.mrb[0].mxu0
    %v853 = vadd.f32 %v186, %v852
    %v854 = vpop.f32.mrb[0].mxu0
    %855 = vmatprep.mubr.f32.mxu0 0.0
    %856 = vmatmul.mubr.f32.gmra.mrb[0].mxu0 %v292
    %v857 = vpop.f32.mrb[0].mxu0
    %v858 = vadd.f32 %v186, %v857
    %v859 = vpop.f32.mrb[0].mxu0
    %860 = vmatprep.mubr.f32.mxu0 0.0
    %861 = vmatmul.mubr.f32.gmra.mrb[0].mxu0 %v295
    %v862 = vpop.f32.mrb[0].mxu0
    %v863 = vadd.f32 %v186, %v862
    %v864 = vpop.f32.mrb[0].mxu0
    %865 = vmatprep.mubr.f32.mxu0 0.0
    %866 = vmatmul.mubr.f32.gmra.mrb[0].mxu0 %v298
    %v867 = vpop.f32.mrb[0].mxu0
    %v868 = vadd.f32 %v186, %v867
    %v869 = vpop.f32.mrb[0].mxu0
    %870 = vmatprep.mubr.f32.mxu0 0.0
    %871 = vmatmul.mubr.f32.gmra.mrb[0].mxu0 %v301
    %v872 = vpop.f32.mrb[0].mxu0
    %v873 = vadd.f32 %v186, %v872
    %v874 = vpop.f32.mrb[0].mxu0
    %875 = vmatprep.mubr.f32.mxu0 0.0
    %876 = vmatmul.mubr.f32.gmra.mrb[0].mxu0 %v304
    %v877 = vpop.f32.mrb[0].mxu0
    %v878 = vadd.f32 %v186, %v877
    %v879 = vpop.f32.mrb[0].mxu0
    %880 = vmatprep.mubr.f32.mxu0 0.0
    %881 = vmatmul.mubr.f32.gmra.mrb[0].mxu0 %v307
    %v882 = vpop.f32.mrb[0].mxu0
    %v883 = vadd.f32 %v186, %v882
    %v884 = vpop.f32.mrb[0].mxu0
    %885 = vmatprep.mubr.f32.mxu0 0.0
    %886 = vmatmul.mubr.f32.gmra.mrb[0].mxu0 %v310
    %v887 = vpop.f32.mrb[0].mxu0
    %v888 = vadd.f32 %v186, %v887
    %v889 = vpop.f32.mrb[0].mxu0
    %890 = vmatprep.mubr.f32.mxu0 0.0
    %891 = vmatmul.mubr.f32.gmra.mrb[0].mxu0 %v313
    %v892 = vpop.f32.mrb[0].mxu0
    %v893 = vadd.f32 %v186, %v892
    %v894 = vpop.f32.mrb[0].mxu0
    %895 = vmatprep.mubr.f32.mxu0 0.0
    %896 = vmatmul.mubr.f32.gmra.mrb[0].mxu0 %v316
    %v897 = vpop.f32.mrb[0].mxu0
    %v898 = vadd.f32 %v186, %v897
    %v899 = vpop.f32.mrb[0].mxu0
    %900 = vmatprep.mubr.f32.mxu0 0.0
    %901 = vmatmul.mubr.f32.gmra.mrb[0].mxu0 %v319
    %v902 = vpop.f32.mrb[0].mxu0
    %v903 = vadd.f32 %v186, %v902
    %v904 = vpop.f32.mrb[0].mxu0
    %905 = vmatprep.mubr.f32.mxu0 0.0
    %906 = vmatmul.mubr.f32.gmra.mrb[0].mxu0 %v322
    %v907 = vpop.f32.mrb[0].mxu0
    %v908 = vadd.f32 %v186, %v907
    %v909 = vpop.f32.mrb[0].mxu0
    %910 = vmatprep.mubr.f32.mxu0 0.0
    %911 = vmatmul.mubr.f32.gmra.mrb[0].mxu0 %v325
    %v912 = vpop.f32.mrb[0].mxu0
    %v913 = vadd.f32 %v186, %v912
    %v914 = vpop.f32.mrb[0].mxu0
    %915 = vmatprep.mubr.f32.mxu0 0.0
    %916 = vmatmul.mubr.f32.gmra.mrb[0].mxu0 %v328
    %v917 = vpop.f32.mrb[0].mxu0
    %v918 = vadd.f32 %v186, %v917
    %v919 = vpop.f32.mrb[0].mxu0
    %920 = vmatprep.mubr.f32.mxu0 0.0
    %921 = vmatmul.mubr.f32.gmra.mrb[0].mxu0 %v331
    %v922 = vpop.f32.mrb[0].mxu0
    %v923 = vadd.f32 %v186, %v922
    %v924 = vpop.f32.mrb[0].mxu0
    %925 = vmatprep.mubr.f32.mxu0 0.0
    %926 = vmatmul.mubr.f32.gmra.mrb[0].mxu0 %v334
    %v927 = vpop.f32.mrb[0].mxu0
    %v928 = vadd.f32 %v186, %v927
    %v929 = vpop.f32.mrb[0].mxu0
    %930 = vmatprep.mubr.f32.mxu0 0.0
    %931 = vmatmul.mubr.f32.gmra.mrb[0].mxu0 %v337
    %v932 = vpop.f32.mrb[0].mxu0
    %v933 = vadd.f32 %v186, %v932
    %v934 = vpop.f32.mrb[0].mxu0
    %935 = vmatprep.mubr.f32.mxu0 0.0
    %936 = vmatmul.mubr.f32.gmra.mrb[0].mxu0 %v340
    %v937 = vpop.f32.mrb[0].mxu0
    %v938 = vadd.f32 %v186, %v937
    %v939 = vpop.f32.mrb[0].mxu0
    %940 = vmatprep.mubr.f32.mxu0 0.0
    %941 = vmatmul.mubr.f32.gmra.mrb[0].mxu0 %v343
    %v942 = vpop.f32.mrb[0].mxu0
    %v943 = vadd.f32 %v186, %v942
    %v944 = vpop.f32.mrb[0].mxu0
    %945 = vmatprep.mubr.f32.mxu0 0.0
    %946 = vmatmul.mubr.f32.gmra.mrb[0].mxu0 %v346
    %v947 = vpop.f32.mrb[0].mxu0
    %v948 = vadd.f32 %v186, %v947
    %v949 = vpop.f32.mrb[0].mxu0
    %950 = vmatprep.mubr.f32.mxu0 0.0
    %951 = vmatmul.mubr.f32.gmra.mrb[0].mxu0 %v349
    %v952 = vpop.f32.mrb[0].mxu0
    %v953 = vadd.f32 %v186, %v952
    %v954 = vpop.f32.mrb[0].mxu0
    %955 = vmatprep.mubr.f32.mxu0 0.0
    %956 = vmatmul.mubr.f32.gmra.mrb[0].mxu0 %v352
    %v957 = vpop.f32.mrb[0].mxu0
    %v958 = vadd.f32 %v186, %v957
    %v959 = vpop.f32.mrb[0].mxu0
    %960 = vmatprep.mubr.f32.mxu0 0.0
    %961 = vmatmul.mubr.f32.gmra.mrb[0].mxu0 %v355
    %v962 = vpop.f32.mrb[0].mxu0
    %v963 = vadd.f32 %v186, %v962
    %v964 = vpop.f32.mrb[0].mxu0
    %965 = vmatprep.mubr.f32.mxu0 0.0
    %966 = vmatmul.mubr.f32.gmra.mrb[0].mxu0 %v358
    %v967 = vpop.f32.mrb[0].mxu0
    %v968 = vadd.f32 %v186, %v967
    %v969 = vpop.f32.mrb[0].mxu0
    %970 = vmatprep.mubr.f32.mxu0 0.0
    %971 = vmatmul.mubr.f32.gmra.mrb[0].mxu0 %v361
    %v972 = vpop.f32.mrb[0].mxu0
    %v973 = vadd.f32 %v186, %v972
    %v974 = vpop.f32.mrb[0].mxu0
    %975 = vmatprep.mubr.f32.mxu0 0.0
    %976 = vmatmul.mubr.f32.gmra.mrb[0].mxu0 %v364
    %v977 = vpop.f32.mrb[0].mxu0
    %v978 = vadd.f32 %v186, %v977
    %v979 = vpop.f32.mrb[0].mxu0
    %980 = vmatprep.mubr.f32.mxu0 0.0
    %981 = vmatmul.mubr.f32.gmra.mrb[0].mxu0 %v367
    %v982 = vpop.f32.mrb[0].mxu0
    %v983 = vadd.f32 %v186, %v982
    %v984 = vpop.f32.mrb[0].mxu0
    %985 = vmatprep.mubr.f32.mxu0 0.0
    %986 = vmatmul.mubr.f32.gmra.mrb[0].mxu0 %v370
    %v987 = vpop.f32.mrb[0].mxu0
    %v988 = vadd.f32 %v186, %v987
    %v989 = vpop.f32.mrb[0].mxu0
    %990 = vmatprep.mubr.f32.mxu0 0.0
    %991 = vmatmul.mubr.f32.gmra.mrb[0].mxu0 %v373
    %v992 = vpop.f32.mrb[0].mxu0
    %v993 = vadd.f32 %v186, %v992
    %v994 = vpop.f32.mrb[0].mxu0
    %995 = vmatprep.mubr.f32.mxu0 0.0
    %996 = vmatmul.mubr.f32.gmra.mrb[0].mxu0 %v376
    %v997 = vpop.f32.mrb[0].mxu0
    %v998 = vadd.f32 %v186, %v997
    %v999 = vpop.f32.mrb[0].mxu0
    %1000 = vmatprep.mubr.f32.mxu0 0.0
    %1001 = vmatmul.mubr.f32.gmra.mrb[0].mxu0 %v379
    %v1002 = vpop.f32.mrb[0].mxu0
    %v1003 = vadd.f32 %v186, %v1002
    %v1004 = vpop.f32.mrb[0].mxu0
    %1005 = vmatprep.mubr.f32.mxu0 0.0
    %1006 = vmatmul.mubr.f32.gmra.mrb[0].mxu0 %v382
    %v1007 = vpop.f32.mrb[0].mxu0
    %v1008 = vadd.f32 %v186, %v1007
    %v1009 = vpop.f32.mrb[0].mxu0
    %1010 = vmatprep.mubr.f32.mxu0 0.0
    %1011 = vmatmul.mubr.f32.gmra.mrb[0].mxu0 %v385
    %v1012 = vpop.f32.mrb[0].mxu0
    %v1013 = vadd.f32 %v186, %v1012
    %v1014 = vpop.f32.mrb[0].mxu0
    %1015 = vmatprep.mubr.f32.mxu0 0.0
    %1016 = vmatmul.mubr.f32.gmra.mrb[0].mxu0 %v388
    %v1017 = vpop.f32.mrb[0].mxu0
    %v1018 = vadd.f32 %v186, %v1017
    %v1019 = vpop.f32.mrb[0].mxu0
    %1020 = vmatprep.mubr.f32.mxu0 0.0
    %1021 = vmatmul.mubr.f32.gmra.mrb[0].mxu0 %v391
    %v1022 = vpop.f32.mrb[0].mxu0
    %v1023 = vadd.f32 %v186, %v1022
    %v1024 = vpop.f32.mrb[0].mxu0
    %1025 = vmatprep.mubr.f32.mxu0 0.0
    %1026 = vmatmul.mubr.f32.gmra.mrb[0].mxu0 %v394
    %v1027 = vpop.f32.mrb[0].mxu0
    %v1028 = vadd.f32 %v186, %v1027
    %v1029 = vpop.f32.mrb[0].mxu0
    %1030 = vmatprep.mubr.f32.mxu0 0.0
    %1031 = vmatmul.mubr.f32.gmra.mrb[0].mxu0 %v397
    %v1032 = vpop.f32.mrb[0].mxu0
    %v1033 = vadd.f32 %v186, %v1032
    %v1034 = vpop.f32.mrb[0].mxu0
    %1035 = vmatprep.mubr.f32.mxu0 0.0
    %1036 = vmatmul.mubr.f32.gmra.mrb[0].mxu0 %v400
    %v1037 = vpop.f32.mrb[0].mxu0
    %v1038 = vadd.f32 %v186, %v1037
    %v1039 = vpop.f32.mrb[0].mxu0
    %1040 = vmatprep.mubr.f32.mxu0 0.0
    %1041 = vmatmul.mubr.f32.gmra.mrb[0].mxu0 %v403
    %v1042 = vpop.f32.mrb[0].mxu0
    %v1043 = vadd.f32 %v186, %v1042
    %v1044 = vpop.f32.mrb[0].mxu0
    %1045 = vmatprep.mubr.f32.mxu0 0.0
    %1046 = vmatmul.mubr.f32.gmra.mrb[0].mxu0 %v406
    %v1047 = vpop.f32.mrb[0].mxu0
    %v1048 = vadd.f32 %v186, %v1047
    %v1049 = vpop.f32.mrb[0].mxu0
    %1050 = vmatprep.mubr.f32.mxu0 0.0
    %1051 = vmatmul.mubr.f32.gmra.mrb[0].mxu0 %v409
    %v1052 = vpop.f32.mrb[0].mxu0
    %v1053 = vadd.f32 %v186, %v1052
    %v1054 = vpop.f32.mrb[0].mxu0
    %1055 = vmatprep.mubr.f32.mxu0 0.0
    %1056 = vmatmul.mubr.f32.gmra.mrb[0].mxu0 %v412
    %v1057 = vpop.f32.mrb[0].mxu0
    %v1058 = vadd.f32 %v186, %v1057
    %v1059 = vpop.f32.mrb[0].mxu0
    %1060 = vmatprep.mubr.f32.mxu0 0.0
    %1061 = vmatmul.mubr.f32.gmra.mrb[0].mxu0 %v415
    %v1062 = vpop.f32.mrb[0].mxu0
    %v1063 = vadd.f32 %v186, %v1062
    %v1064 = vpop.f32.mrb[0].mxu0
    %1065 = vmatprep.mubr.f32.mxu0 0.0
    %1066 = vmatmul.mubr.f32.gmra.mrb[0].mxu0 %v418
    %v1067 = vpop.f32.mrb[0].mxu0
    %v1068 = vadd.f32 %v186, %v1067
    %v1069 = vpop.f32.mrb[0].mxu0
    %1070 = vmatprep.mubr.f32.mxu0 0.0
    %1071 = vmatmul.mubr.f32.gmra.mrb[0].mxu0 %v421
    %v1072 = vpop.f32.mrb[0].mxu0
    %v1073 = vadd.f32 %v186, %v1072
    %v1074 = vpop.f32.mrb[0].mxu0
    %1075 = vmatprep.mubr.f32.mxu0 0.0
    %1076 = vmatmul.mubr.f32.gmra.mrb[0].mxu0 %v424
    %v1077 = vpop.f32.mrb[0].mxu0
    %v1078 = vadd.f32 %v186, %v1077
    %v1079 = vpop.f32.mrb[0].mxu0
    %1080 = vmatprep.mubr.f32.mxu0 0.0
    %1081 = vmatmul.mubr.f32.gmra.mrb[0].mxu0 %v427
    %v1082 = vpop.f32.mrb[0].mxu0
    %v1083 = vadd.f32 %v186, %v1082
    %v1084 = vpop.f32.mrb[0].mxu0
    %1085 = vmatprep.mubr.f32.mxu0 0.0
    %1086 = vmatmul.mubr.f32.gmra.mrb[0].mxu0 %v430
    %v1087 = vpop.f32.mrb[0].mxu0
    %v1088 = vadd.f32 %v186, %v1087
    %v1089 = vpop.f32.mrb[0].mxu0
    %1090 = vmatprep.mubr.f32.mxu0 0.0
    %1091 = vmatmul.mubr.f32.gmra.mrb[0].mxu0 %v433
    %v1092 = vpop.f32.mrb[0].mxu0
    %v1093 = vadd.f32 %v186, %v1092
    %v1094 = vpop.f32.mrb[0].mxu0
    %1095 = vmatprep.mubr.f32.mxu0 0.0
    %1096 = vmatmul.mubr.f32.gmra.mrb[0].mxu0 %v436
    %v1097 = vpop.f32.mrb[0].mxu0
    %v1098 = vadd.f32 %v186, %v1097
    %v1099 = vpop.f32.mrb[0].mxu0
    %1100 = vmatprep.mubr.f32.mxu0 0.0
    %1101 = vmatmul.mubr.f32.gmra.mrb[0].mxu0 %v439
    %v1102 = vpop.f32.mrb[0].mxu0
    %v1103 = vadd.f32 %v186, %v1102
    %v1104 = vpop.f32.mrb[0].mxu0
    %1105 = vmatprep.mubr.f32.mxu0 0.0
    %1106 = vmatmul.mubr.f32.gmra.mrb[0].mxu0 %v442
    %v1107 = vpop.f32.mrb[0].mxu0
    %v1108 = vadd.f32 %v186, %v1107
    %v1109 = vpop.f32.mrb[0].mxu0
    %1110 = vmatprep.mubr.f32.mxu0 0.0
    %1111 = vmatmul.mubr.f32.gmra.mrb[0].mxu0 %v445
    %v1112 = vpop.f32.mrb[0].mxu0
    %v1113 = vadd.f32 %v186, %v1112
    %v1114 = vpop.f32.mrb[0].mxu0
    %1115 = vmatprep.mubr.f32.mxu0 0.0
    %1116 = vmatmul.mubr.f32.gmra.mrb[0].mxu0 %v448
    %v1117 = vpop.f32.mrb[0].mxu0
    %v1118 = vadd.f32 %v186, %v1117
    %v1119 = vpop.f32.mrb[0].mxu0
    %1120 = vmatprep.mubr.f32.mxu0 0.0
    %1121 = vmatmul.mubr.f32.gmra.mrb[0].mxu0 %v451
    %v1122 = vpop.f32.mrb[0].mxu0
    %v1123 = vadd.f32 %v186, %v1122
    %v1124 = vpop.f32.mrb[0].mxu0
    %1125 = vmatprep.mubr.f32.mxu0 0.0
    %1126 = vmatmul.mubr.f32.gmra.mrb[0].mxu0 %v454
    %v1127 = vpop.f32.mrb[0].mxu0
    %v1128 = vadd.f32 %v186, %v1127
    %v1129 = vpop.f32.mrb[0].mxu0
    %1130 = vmatprep.mubr.f32.mxu0 0.0
    %1131 = vmatmul.mubr.f32.gmra.mrb[0].mxu0 %v457
    %v1132 = vpop.f32.mrb[0].mxu0
    %v1133 = vadd.f32 %v186, %v1132
    %v1134 = vpop.f32.mrb[0].mxu0
    %1135 = vmatprep.mubr.f32.mxu0 0.0
    %1136 = vmatmul.mubr.f32.gmra.mrb[0].mxu0 %v460
    %v1137 = vpop.f32.mrb[0].mxu0
    %v1138 = vadd.f32 %v186, %v1137
    %v1139 = vpop.f32.mrb[0].mxu0
    %1140 = vmatprep.mubr.f32.mxu0 0.0
    %1141 = vmatmul.mubr.f32.gmra.mrb[0].mxu0 %v463
    %v1142 = vpop.f32.mrb[0].mxu0
    %v1143 = vadd.f32 %v186, %v1142
    %v1144 = vpop.f32.mrb[0].mxu0
    %1145 = vmatprep.mubr.f32.mxu0 0.0
    %1146 = vmatmul.mubr.f32.gmra.mrb[0].mxu0 %v466
    %v1147 = vpop.f32.mrb[0].mxu0
    %v1148 = vadd.f32 %v186, %v1147
    %v1149 = vpop.f32.mrb[0].mxu0
    %1150 = vmatprep.mubr.f32.mxu0 0.0
    %1151 = vmatmul.mubr.f32.gmra.mrb[0].mxu0 %v469
    %v1152 = vpop.f32.mrb[0].mxu0
    %v1153 = vadd.f32 %v186, %v1152
    %v1154 = vpop.f32.mrb[0].mxu0
    %1155 = vmatprep.mubr.f32.mxu0 0.0
    %1156 = vmatmul.mubr.f32.gmra.mrb[0].mxu0 %v472
    %v1157 = vpop.f32.mrb[0].mxu0
    %v1158 = vadd.f32 %v186, %v1157
    %v1159 = vpop.f32.mrb[0].mxu0
    %1160 = vmatprep.mubr.f32.mxu0 0.0
    %1161 = vmatmul.mubr.f32.gmra.mrb[0].mxu0 %v475
    %v1162 = vpop.f32.mrb[0].mxu0
    %v1163 = vadd.f32 %v186, %v1162
    %v1164 = vpop.f32.mrb[0].mxu0
    %1165 = vmatprep.mubr.f32.mxu0 0.0
    %1166 = vmatmul.mubr.f32.gmra.mrb[0].mxu0 %v478
    %v1167 = vpop.f32.mrb[0].mxu0
    %v1168 = vadd.f32 %v186, %v1167
    %v1169 = vpop.f32.mrb[0].mxu0
    %1170 = vmatprep.mubr.f32.mxu0 0.0
    %1171 = vmatmul.mubr.f32.gmra.mrb[0].mxu0 %v481
    %v1172 = vpop.f32.mrb[0].mxu0
    %v1173 = vadd.f32 %v186, %v1172
    %v1174 = vpop.f32.mrb[0].mxu0
    %1175 = vmatprep.mubr.f32.mxu0 0.0
    %1176 = vmatmul.mubr.f32.gmra.mrb[0].mxu0 %v484
    %v1177 = vpop.f32.mrb[0].mxu0
    %v1178 = vadd.f32 %v186, %v1177
    %v1179 = vpop.f32.mrb[0].mxu0
    %1180 = vmatprep.mubr.f32.mxu0 0.0
    %1181 = vmatmul.mubr.f32.gmra.mrb[0].mxu0 %v487
    %v1182 = vpop.f32.mrb[0].mxu0
    %v1183 = vadd.f32 %v186, %v1182
    %v1184 = vpop.f32.mrb[0].mxu0
    %1185 = vmatprep.mubr.f32.mxu0 0.0
    %1186 = vmatmul.mubr.f32.gmra.mrb[0].mxu0 %v490
    %v1187 = vpop.f32.mrb[0].mxu0
    %v1188 = vadd.f32 %v186, %v1187
    %v1189 = vpop.f32.mrb[0].mxu0
    %1190 = vmatprep.mubr.f32.mxu0 0.0
    %1191 = vmatmul.mubr.f32.gmra.mrb[0].mxu0 %v493
    %v1192 = vpop.f32.mrb[0].mxu0
    %v1193 = vadd.f32 %v186, %v1192
    %v1194 = vpop.f32.mrb[0].mxu0
    %1195 = vmatprep.mubr.f32.mxu0 0.0
    %1196 = vmatmul.mubr.f32.gmra.mrb[0].mxu0 %v496
    %v1197 = vpop.f32.mrb[0].mxu0
    %v1198 = vadd.f32 %v186, %v1197
    %v1199 = vpop.f32.mrb[0].mxu0
    %1200 = vmatprep.mubr.f32.mxu0 0.0
    %1201 = vmatmul.mubr.f32.gmra.mrb[0].mxu0 %v499
    %v1202 = vpop.f32.mrb[0].mxu0
    %v1203 = vadd.f32 %v186, %v1202
    %v1204 = vpop.f32.mrb[0].mxu0
    %1205 = vmatprep.mubr.f32.mxu0 0.0
    %1206 = vmatmul.mubr.f32.gmra.mrb[0].mxu0 %v502
    %v1207 = vpop.f32.mrb[0].mxu0
    %v1208 = vadd.f32 %v186, %v1207
    %v1209 = vpop.f32.mrb[0].mxu0
    %1210 = vmatprep.mubr.f32.mxu0 0.0
    %1211 = vmatmul.mubr.f32.gmra.mrb[0].mxu0 %v505
    %v1212 = vpop.f32.mrb[0].mxu0
    %v1213 = vadd.f32 %v186, %v1212
    %v1214 = vpop.f32.mrb[0].mxu0
    %1215 = vmatprep.mubr.f32.mxu0 0.0
    %1216 = vmatmul.mubr.f32.gmra.mrb[0].mxu0 %v508
    %v1217 = vpop.f32.mrb[0].mxu0
    %v1218 = vadd.f32 %v186, %v1217
    %v1219 = vpop.f32.mrb[0].mxu0
    %1220 = vmatprep.mubr.f32.mxu0 0.0
    %1221 = vmatmul.mubr.f32.gmra.mrb[0].mxu0 %v511
    %v1222 = vpop.f32.mrb[0].mxu0
    %v1223 = vadd.f32 %v186, %v1222
    %v1224 = vpop.f32.mrb[0].mxu0
    %1225 = vmatprep.mubr.f32.mxu0 0.0
    %1226 = vmatmul.mubr.f32.gmra.mrb[0].mxu0 %v514
    %v1227 = vpop.f32.mrb[0].mxu0
    %v1228 = vadd.f32 %v186, %v1227
    %v1229 = vpop.f32.mrb[0].mxu0
    %1230 = vmatprep.mubr.f32.mxu0 0.0
    %1231 = vmatmul.mubr.f32.gmra.mrb[0].mxu0 %v517
    %v1232 = vpop.f32.mrb[0].mxu0
    %v1233 = vadd.f32 %v186, %v1232
    %v1234 = vpop.f32.mrb[0].mxu0
    %1235 = vmatprep.mubr.f32.mxu0 0.0
    %1236 = vmatmul.mubr.f32.gmra.mrb[0].mxu0 %v520
    %v1237 = vpop.f32.mrb[0].mxu0
    %v1238 = vadd.f32 %v186, %v1237
    %v1239 = vpop.f32.mrb[0].mxu0
    %1240 = vmatprep.mubr.f32.mxu0 0.0
    %1241 = vmatmul.mubr.f32.gmra.mrb[0].mxu0 %v523
    %v1242 = vpop.f32.mrb[0].mxu0
    %v1243 = vadd.f32 %v186, %v1242
    %v1244 = vpop.f32.mrb[0].mxu0
    %1245 = vmatprep.mubr.f32.mxu0 0.0
    %1246 = vmatmul.mubr.f32.gmra.mrb[0].mxu0 %v526
    %v1247 = vpop.f32.mrb[0].mxu0
    %v1248 = vadd.f32 %v186, %v1247
    %v1249 = vpop.f32.mrb[0].mxu0
    %1250 = vmatprep.mubr.f32.mxu0 0.0
    %1251 = vmatmul.mubr.f32.gmra.mrb[0].mxu0 %v529
    %v1252 = vpop.f32.mrb[0].mxu0
    %v1253 = vadd.f32 %v186, %v1252
    %v1254 = vpop.f32.mrb[0].mxu0
    %1255 = vmatprep.mubr.f32.mxu0 0.0
    %1256 = vmatmul.mubr.f32.gmra.mrb[0].mxu0 %v532
    %v1257 = vpop.f32.mrb[0].mxu0
    %v1258 = vadd.f32 %v186, %v1257
    %v1259 = vpop.f32.mrb[0].mxu0
    %1260 = vmatprep.mubr.f32.mxu0 0.0
    %1261 = vmatmul.mubr.f32.gmra.mrb[0].mxu0 %v535
    %v1262 = vpop.f32.mrb[0].mxu0
    %v1263 = vadd.f32 %v186, %v1262
    %v1264 = vpop.f32.mrb[0].mxu0
    %1265 = vmatprep.mubr.f32.mxu0 0.0
    %1266 = vmatmul.mubr.f32.gmra.mrb[0].mxu0 %v538
    %v1267 = vpop.f32.mrb[0].mxu0
    %v1268 = vadd.f32 %v186, %v1267
    %v1269 = vpop.f32.mrb[0].mxu0
    %1270 = vmatprep.mubr.f32.mxu0 0.0
    %1271 = vmatmul.mubr.f32.gmra.mrb[0].mxu0 %v541
    %v1272 = vpop.f32.mrb[0].mxu0
    %v1273 = vadd.f32 %v186, %v1272
    %v1274 = vpop.f32.mrb[0].mxu0
    %1275 = vmatprep.mubr.f32.mxu0 0.0
    %1276 = vmatmul.mubr.f32.gmra.mrb[0].mxu0 %v544
    %v1277 = vpop.f32.mrb[0].mxu0
    %v1278 = vadd.f32 %v186, %v1277
    %v1279 = vpop.f32.mrb[0].mxu0
    %1280 = vmatprep.mubr.f32.mxu0 0.0
    %1281 = vmatmul.mubr.f32.gmra.mrb[0].mxu0 %v547
    %v1282 = vpop.f32.mrb[0].mxu0
    %v1283 = vadd.f32 %v186, %v1282
    %v1284 = vpop.f32.mrb[0].mxu0
    %1285 = vmatprep.mubr.f32.mxu0 0.0
    %1286 = vmatmul.mubr.f32.gmra.mrb[0].mxu0 %v550
    %v1287 = vpop.f32.mrb[0].mxu0
    %v1288 = vadd.f32 %v186, %v1287
    %v1289 = vpop.f32.mrb[0].mxu0
    %1290 = vmatprep.mubr.f32.mxu0 0.0
    %1291 = vmatmul.mubr.f32.gmra.mrb[0].mxu0 %v553
    %v1292 = vpop.f32.mrb[0].mxu0
    %v1293 = vadd.f32 %v186, %v1292
    %v1294 = vpop.f32.mrb[0].mxu0
    %1295 = vmatprep.mubr.f32.mxu0 0.0
    %1296 = vmatmul.mubr.f32.gmra.mrb[0].mxu0 %v556
    %v1297 = vpop.f32.mrb[0].mxu0
    %v1298 = vadd.f32 %v186, %v1297
    %v1299 = vpop.f32.mrb[0].mxu0
    %1300 = vmatprep.mubr.f32.mxu0 0.0
    %1301 = vmatmul.mubr.f32.gmra.mrb[0].mxu0 %v559
    %v1302 = vpop.f32.mrb[0].mxu0
    %v1303 = vadd.f32 %v186, %v1302
    %v1304 = vpop.f32.mrb[0].mxu0
    %1305 = vmatprep.mubr.f32.mxu0 0.0
    %1306 = vmatmul.mubr.f32.gmra.mrb[0].mxu0 %v562
    %v1307 = vpop.f32.mrb[0].mxu0
    %v1308 = vadd.f32 %v186, %v1307
    %v1309 = vpop.f32.mrb[0].mxu0
    %1310 = vmatprep.mubr.f32.mxu0 0.0
    %1311 = vmatmul.mubr.f32.gmra.mrb[0].mxu0 %v565
    %v1312 = vpop.f32.mrb[0].mxu0
    %v1313 = vadd.f32 %v186, %v1312
    %v1314 = vpop.f32.mrb[0].mxu0
    %1315 = vmatprep.mubr.f32.mxu0 0.0
    %1316 = vmatmul.mubr.f32.gmra.mrb[0].mxu0 %v568
    %v1317 = vpop.f32.mrb[0].mxu0
    %v1318 = vadd.f32 %v186, %v1317
    %v1319 = vpop.f32.mrb[0].mxu0
    %1320 = vmatprep.mubr.f32.mxu0 0.0
    %1321 = vmatmul.mubr.f32.gmra.mrb[0].mxu0 %v571
    %v1322 = vpop.f32.mrb[0].mxu0
    %v1323 = vadd.f32 %v186, %v1322
    %v1324 = vpop.f32.mrb[0].mxu0
    %1325 = vmatprep.mubr.f32.mxu0 0.0
    %1326 = vmatmul.mubr.f32.gmra.mrb[0].mxu0 %v574
    %v1327 = vpop.f32.mrb[0].mxu0
    %v1328 = vadd.f32 %v186, %v1327
    %v1329 = vpop.f32.mrb[0].mxu0
    %1330 = vmatprep.mubr.f32.mxu0 0.0
    %1331 = vmatmul.mubr.f32.gmra.mrb[0].mxu0 %v577
    %v1332 = vpop.f32.mrb[0].mxu0
    %v1333 = vadd.f32 %v186, %v1332
    %v1334 = vpop.f32.mrb[0].mxu0
    %1335 = vmatprep.mubr.f32.mxu0 0.0
    %1336 = vmatmul.mubr.f32.gmra.mrb[0].mxu0 %v580
    %v1337 = vpop.f32.mrb[0].mxu0
    %v1338 = vadd.f32 %v186, %v1337
    %v1339 = vpop.f32.mrb[0].mxu0
    %1340 = vmatprep.mubr.f32.mxu0 0.0
    %1341 = vmatmul.mubr.f32.gmra.mrb[0].mxu0 %v583
    %v1342 = vpop.f32.mrb[0].mxu0
    %v1343 = vadd.f32 %v186, %v1342
    %v1344 = vpop.f32.mrb[0].mxu0
    %1345 = vmatprep.mubr.f32.mxu0 0.0
    %1346 = vmatmul.mubr.f32.gmra.mrb[0].mxu0 %v586
    %v1347 = vpop.f32.mrb[0].mxu0
    %v1348 = vadd.f32 %v186, %v1347
    %v1349 = vpop.f32.mrb[0].mxu0
    %1350 = vmatprep.mubr.f32.mxu0 0.0
    %1351 = vmatmul.mubr.f32.gmra.mrb[0].mxu0 %v589
    %v1352 = vpop.f32.mrb[0].mxu0
    %v1353 = vadd.f32 %v186, %v1352
    %v1354 = vpop.f32.mrb[0].mxu0
    %1355 = vmatprep.mubr.f32.mxu0 0.0
    %1356 = vmatmul.mubr.f32.gmra.mrb[0].mxu0 %v592
    %v1357 = vpop.f32.mrb[0].mxu0
    %v1358 = vadd.f32 %v186, %v1357
    %v1359 = vpop.f32.mrb[0].mxu0
    %1360 = vmatprep.mubr.f32.mxu0 0.0
    %1361 = vmatmul.mubr.f32.gmra.mrb[0].mxu0 %v595
    %v1362 = vpop.f32.mrb[0].mxu0
    %v1363 = vadd.f32 %v186, %v1362
    %v1364 = vpop.f32.mrb[0].mxu0
    %1365 = vmatprep.mubr.f32.mxu0 0.0
    %1366 = vmatmul.mubr.f32.gmra.mrb[0].mxu0 %v598
    %v1367 = vpop.f32.mrb[0].mxu0
    %v1368 = vadd.f32 %v186, %v1367
    %v1369 = vpop.f32.mrb[0].mxu0
    %1370 = vmatprep.mubr.f32.mxu0 0.0
    %1371 = vmatmul.mubr.f32.gmra.mrb[0].mxu0 %v601
    %v1372 = vpop.f32.mrb[0].mxu0
    %v1373 = vadd.f32 %v186, %v1372
    %v1374 = vpop.f32.mrb[0].mxu0
    %1375 = vmatprep.mubr.f32.mxu0 0.0
    %1376 = vmatmul.mubr.f32.gmra.mrb[0].mxu0 %v604
    %v1377 = vpop.f32.mrb[0].mxu0
    %v1378 = vadd.f32 %v186, %v1377
    %v1379 = vpop.f32.mrb[0].mxu0
    %1380 = vmatprep.mubr.f32.mxu0 0.0
    %1381 = vmatmul.mubr.f32.gmra.mrb[0].mxu0 %v607
    %v1382 = vpop.f32.mrb[0].mxu0
    %v1383 = vadd.f32 %v186, %v1382
    %v1384 = vpop.f32.mrb[0].mxu0
    %1385 = vmatprep.mubr.f32.mxu0 0.0
    %1386 = vmatmul.mubr.f32.gmra.mrb[0].mxu0 %v610
    %v1387 = vpop.f32.mrb[0].mxu0
    %v1388 = vadd.f32 %v186, %v1387
    %v1389 = vpop.f32.mrb[0].mxu0
    %1390 = vmatprep.mubr.f32.mxu0 0.0
    %1391 = vmatmul.mubr.f32.gmra.mrb[0].mxu0 %v613
    %v1392 = vpop.f32.mrb[0].mxu0
    %v1393 = vadd.f32 %v186, %v1392
    %v1394 = vpop.f32.mrb[0].mxu0
    %1395 = vmatprep.mubr.f32.mxu0 0.0
    %1396 = vmatmul.mubr.f32.gmra.mrb[0].mxu0 %v616
    %v1397 = vpop.f32.mrb[0].mxu0
    %v1398 = vadd.f32 %v186, %v1397
    %v1399 = vpop.f32.mrb[0].mxu0
    %1400 = vmatprep.mubr.f32.mxu0 0.0
    %1401 = vmatmul.mubr.f32.gmra.mrb[0].mxu0 %v619
    %v1402 = vpop.f32.mrb[0].mxu0
    %v1403 = vadd.f32 %v186, %v1402
    %v1404 = vpop.f32.mrb[0].mxu0
    %1405 = vdwg.mxu0
    %1406 = vst [vmem:[#allocation2] sm:$0xff] %v688
    %1407 = vst [vmem:[#allocation2 + $0x8] sm:$0xff] %v693
    %1408 = vst [vmem:[#allocation2 + $0x10] sm:$0xff] %v698
    %1409 = vst [vmem:[#allocation2 + $0x18] sm:$0xff] %v703
    %1410 = vst [vmem:[#allocation2 + $0x20] sm:$0xff] %v708
    %1411 = vst [vmem:[#allocation2 + $0x28] sm:$0xff] %v713
    %1412 = vst [vmem:[#allocation2 + $0x30] sm:$0xff] %v718
    %1413 = vst [vmem:[#allocation2 + $0x38] sm:$0xff] %v723
    %1414 = vst [vmem:[#allocation2 + $0x40] sm:$0xff] %v728
    %1415 = vst [vmem:[#allocation2 + $0x48] sm:$0xff] %v733
    %1416 = vst [vmem:[#allocation2 + $0x50] sm:$0xff] %v738
    %1417 = vst [vmem:[#allocation2 + $0x58] sm:$0xff] %v743
    %1418 = vst [vmem:[#allocation2 + $0x60] sm:$0xff] %v748
    %1419 = vst [vmem:[#allocation2 + $0x68] sm:$0xff] %v753
    %1420 = vst [vmem:[#allocation2 + $0x70] sm:$0xff] %v758
    %1421 = vst [vmem:[#allocation2 + $0x78] sm:$0xff] %v763
    %1422 = vst [vmem:[#allocation2 + $0x80] sm:$0xff] %v768
    %1423 = vst [vmem:[#allocation2 + $0x88] sm:$0xff] %v773
    %1424 = vst [vmem:[#allocation2 + $0x90] sm:$0xff] %v778
    %1425 = vst [vmem:[#allocation2 + $0x98] sm:$0xff] %v783
    %1426 = vst [vmem:[#allocation2 + $0xa0] sm:$0xff] %v788
    %1427 = vst [vmem:[#allocation2 + $0xa8] sm:$0xff] %v793
    %1428 = vst [vmem:[#allocation2 + $0xb0] sm:$0xff] %v798
    %1429 = vst [vmem:[#allocation2 + $0xb8] sm:$0xff] %v803
    %1430 = vst [vmem:[#allocation2 + $0xc0] sm:$0xff] %v808
    %1431 = vst [vmem:[#allocation2 + $0xc8] sm:$0xff] %v813
    %1432 = vst [vmem:[#allocation2 + $0xd0] sm:$0xff] %v818
    %1433 = vst [vmem:[#allocation2 + $0xd8] sm:$0xff] %v823
    %1434 = vst [vmem:[#allocation2 + $0xe0] sm:$0xff] %v828
    %1435 = vst [vmem:[#allocation2 + $0xe8] sm:$0xff] %v833
    %1436 = vst [vmem:[#allocation2 + $0xf0] sm:$0xff] %v838
    %1437 = vst [vmem:[#allocation2 + $0xf8] sm:$0xff] %v843
    %1438 = vst [vmem:[#allocation2 + $0x100] sm:$0xff] %v848
    %1439 = vst [vmem:[#allocation2 + $0x108] sm:$0xff] %v853
    %1440 = vst [vmem:[#allocation2 + $0x110] sm:$0xff] %v858
    %1441 = vst [vmem:[#allocation2 + $0x118] sm:$0xff] %v863
    %1442 = vst [vmem:[#allocation2 + $0x120] sm:$0xff] %v868
    %1443 = vst [vmem:[#allocation2 + $0x128] sm:$0xff] %v873
    %1444 = vst [vmem:[#allocation2 + $0x130] sm:$0xff] %v878
    %1445 = vst [vmem:[#allocation2 + $0x138] sm:$0xff] %v883
    %1446 = vst [vmem:[#allocation2 + $0x140] sm:$0xff] %v888
    %1447 = vst [vmem:[#allocation2 + $0x148] sm:$0xff] %v893
    %1448 = vst [vmem:[#allocation2 + $0x150] sm:$0xff] %v898
    %1449 = vst [vmem:[#allocation2 + $0x158] sm:$0xff] %v903
    %1450 = vst [vmem:[#allocation2 + $0x160] sm:$0xff] %v908
    %1451 = vst [vmem:[#allocation2 + $0x168] sm:$0xff] %v913
    %1452 = vst [vmem:[#allocation2 + $0x170] sm:$0xff] %v918
    %1453 = vst [vmem:[#allocation2 + $0x178] sm:$0xff] %v923
    %1454 = vst [vmem:[#allocation2 + $0x180] sm:$0xff] %v928
    %1455 = vst [vmem:[#allocation2 + $0x188] sm:$0xff] %v933
    %1456 = vst [vmem:[#allocation2 + $0x190] sm:$0xff] %v938
    %1457 = vst [vmem:[#allocation2 + $0x198] sm:$0xff] %v943
    %1458 = vst [vmem:[#allocation2 + $0x1a0] sm:$0xff] %v948
    %1459 = vst [vmem:[#allocation2 + $0x1a8] sm:$0xff] %v953
    %1460 = vst [vmem:[#allocation2 + $0x1b0] sm:$0xff] %v958
    %1461 = vst [vmem:[#allocation2 + $0x1b8] sm:$0xff] %v963
    %1462 = vst [vmem:[#allocation2 + $0x1c0] sm:$0xff] %v968
    %1463 = vst [vmem:[#allocation2 + $0x1c8] sm:$0xff] %v973
    %1464 = vst [vmem:[#allocation2 + $0x1d0] sm:$0xff] %v978
    %1465 = vst [vmem:[#allocation2 + $0x1d8] sm:$0xff] %v983
    %1466 = vst [vmem:[#allocation2 + $0x1e0] sm:$0xff] %v988
    %1467 = vst [vmem:[#allocation2 + $0x1e8] sm:$0xff] %v993
    %1468 = vst [vmem:[#allocation2 + $0x1f0] sm:$0xff] %v998
    %1469 = vst [vmem:[#allocation2 + $0x1f8] sm:$0xff] %v1003
    %1470 = vst [vmem:[#allocation2 + $0x200] sm:$0xff] %v1008
    %1471 = vst [vmem:[#allocation2 + $0x208] sm:$0xff] %v1013
    %1472 = vst [vmem:[#allocation2 + $0x210] sm:$0xff] %v1018
    %1473 = vst [vmem:[#allocation2 + $0x218] sm:$0xff] %v1023
    %1474 = vst [vmem:[#allocation2 + $0x220] sm:$0xff] %v1028
    %1475 = vst [vmem:[#allocation2 + $0x228] sm:$0xff] %v1033
    %1476 = vst [vmem:[#allocation2 + $0x230] sm:$0xff] %v1038
    %1477 = vst [vmem:[#allocation2 + $0x238] sm:$0xff] %v1043
    %1478 = vst [vmem:[#allocation2 + $0x240] sm:$0xff] %v1048
    %1479 = vst [vmem:[#allocation2 + $0x248] sm:$0xff] %v1053
    %1480 = vst [vmem:[#allocation2 + $0x250] sm:$0xff] %v1058
    %1481 = vst [vmem:[#allocation2 + $0x258] sm:$0xff] %v1063
    %1482 = vst [vmem:[#allocation2 + $0x260] sm:$0xff] %v1068
    %1483 = vst [vmem:[#allocation2 + $0x268] sm:$0xff] %v1073
    %1484 = vst [vmem:[#allocation2 + $0x270] sm:$0xff] %v1078
    %1485 = vst [vmem:[#allocation2 + $0x278] sm:$0xff] %v1083
    %1486 = vst [vmem:[#allocation2 + $0x280] sm:$0xff] %v1088
    %1487 = vst [vmem:[#allocation2 + $0x288] sm:$0xff] %v1093
    %1488 = vst [vmem:[#allocation2 + $0x290] sm:$0xff] %v1098
    %1489 = vst [vmem:[#allocation2 + $0x298] sm:$0xff] %v1103
    %1490 = vst [vmem:[#allocation2 + $0x2a0] sm:$0xff] %v1108
    %1491 = vst [vmem:[#allocation2 + $0x2a8] sm:$0xff] %v1113
    %1492 = vst [vmem:[#allocation2 + $0x2b0] sm:$0xff] %v1118
    %1493 = vst [vmem:[#allocation2 + $0x2b8] sm:$0xff] %v1123
    %1494 = vst [vmem:[#allocation2 + $0x2c0] sm:$0xff] %v1128
    %1495 = vst [vmem:[#allocation2 + $0x2c8] sm:$0xff] %v1133
    %1496 = vst [vmem:[#allocation2 + $0x2d0] sm:$0xff] %v1138
    %1497 = vst [vmem:[#allocation2 + $0x2d8] sm:$0xff] %v1143
    %1498 = vst [vmem:[#allocation2 + $0x2e0] sm:$0xff] %v1148
    %1499 = vst [vmem:[#allocation2 + $0x2e8] sm:$0xff] %v1153
    %1500 = vst [vmem:[#allocation2 + $0x2f0] sm:$0xff] %v1158
    %1501 = vst [vmem:[#allocation2 + $0x2f8] sm:$0xff] %v1163
    %1502 = vst [vmem:[#allocation2 + $0x300] sm:$0xff] %v1168
    %1503 = vst [vmem:[#allocation2 + $0x308] sm:$0xff] %v1173
    %1504 = vst [vmem:[#allocation2 + $0x310] sm:$0xff] %v1178
    %1505 = vst [vmem:[#allocation2 + $0x318] sm:$0xff] %v1183
    %1506 = vst [vmem:[#allocation2 + $0x320] sm:$0xff] %v1188
    %1507 = vst [vmem:[#allocation2 + $0x328] sm:$0xff] %v1193
    %1508 = vst [vmem:[#allocation2 + $0x330] sm:$0xff] %v1198
    %1509 = vst [vmem:[#allocation2 + $0x338] sm:$0xff] %v1203
    %1510 = vst [vmem:[#allocation2 + $0x340] sm:$0xff] %v1208
    %1511 = vst [vmem:[#allocation2 + $0x348] sm:$0xff] %v1213
    %1512 = vst [vmem:[#allocation2 + $0x350] sm:$0xff] %v1218
    %1513 = vst [vmem:[#allocation2 + $0x358] sm:$0xff] %v1223
    %1514 = vst [vmem:[#allocation2 + $0x360] sm:$0xff] %v1228
    %1515 = vst [vmem:[#allocation2 + $0x368] sm:$0xff] %v1233
    %1516 = vst [vmem:[#allocation2 + $0x370] sm:$0xff] %v1238
    %1517 = vst [vmem:[#allocation2 + $0x378] sm:$0xff] %v1243
    %1518 = vst [vmem:[#allocation2 + $0x380] sm:$0xff] %v1248
    %1519 = vst [vmem:[#allocation2 + $0x388] sm:$0xff] %v1253
    %1520 = vst [vmem:[#allocation2 + $0x390] sm:$0xff] %v1258
    %1521 = vst [vmem:[#allocation2 + $0x398] sm:$0xff] %v1263
    %1522 = vst [vmem:[#allocation2 + $0x3a0] sm:$0xff] %v1268
    %1523 = vst [vmem:[#allocation2 + $0x3a8] sm:$0xff] %v1273
    %1524 = vst [vmem:[#allocation2 + $0x3b0] sm:$0xff] %v1278
    %1525 = vst [vmem:[#allocation2 + $0x3b8] sm:$0xff] %v1283
    %1526 = vst [vmem:[#allocation2 + $0x3c0] sm:$0xff] %v1288
    %1527 = vst [vmem:[#allocation2 + $0x3c8] sm:$0xff] %v1293
    %1528 = vst [vmem:[#allocation2 + $0x3d0] sm:$0xff] %v1298
    %1529 = vst [vmem:[#allocation2 + $0x3d8] sm:$0xff] %v1303
    %1530 = vst [vmem:[#allocation2 + $0x3e0] sm:$0xff] %v1308
    %1531 = vst [vmem:[#allocation2 + $0x3e8] sm:$0xff] %v1313
    %1532 = vst [vmem:[#allocation2 + $0x3f0] sm:$0xff] %v1318
    %1533 = vst [vmem:[#allocation2 + $0x3f8] sm:$0xff] %v1323
    %1534 = vst [vmem:[#allocation2 + $0x400] sm:$0xff] %v1328
    %1535 = vst [vmem:[#allocation2 + $0x408] sm:$0xff] %v1333
    %1536 = vst [vmem:[#allocation2 + $0x410] sm:$0xff] %v1338
    %1537 = vst [vmem:[#allocation2 + $0x418] sm:$0xff] %v1343
    %1538 = vst [vmem:[#allocation2 + $0x420] sm:$0xff] %v1348
    %1539 = vst [vmem:[#allocation2 + $0x428] sm:$0xff] %v1353
    %1540 = vst [vmem:[#allocation2 + $0x430] sm:$0xff] %v1358
    %1541 = vst [vmem:[#allocation2 + $0x438] sm:$0xff] %v1363
    %1542 = vst [vmem:[#allocation2 + $0x440] sm:$0xff] %v1368
    %1543 = vst [vmem:[#allocation2 + $0x448] sm:$0xff] %v1373
    %1544 = vst [vmem:[#allocation2 + $0x450] sm:$0xff] %v1378
    %1545 = vst [vmem:[#allocation2 + $0x458] sm:$0xff] %v1383
    %1546 = vst [vmem:[#allocation2 + $0x460] sm:$0xff] %v1388
    %1547 = vst [vmem:[#allocation2 + $0x468] sm:$0xff] %v1393
    %1548 = vst [vmem:[#allocation2 + $0x470] sm:$0xff] %v1398
    %1549 = vst [vmem:[#allocation2 + $0x478] sm:$0xff] %v1403
    %v1550 = vld [vmem:[#allocation2] ss:$2 sm:$0xff]
    %s1551 = scalar_lea.vmem [#allocation2], 16
    %v1552 = vld [vmem:[%s1551] ss:$2 sm:$0xf]
    %s1553 = scalar_lea.vmem [#allocation2], 24
    %v1554 = vld [vmem:[%s1553] ss:$2 sm:$0xff]
    %s1555 = scalar_lea.vmem [#allocation2], 40
    %v1556 = vld [vmem:[%s1555] ss:$2 sm:$0xf]
    %s1557 = scalar_lea.vmem [#allocation2], 48
    %v1558 = vld [vmem:[%s1557] ss:$2 sm:$0xff]
    %s1559 = scalar_lea.vmem [#allocation2], 64
    %v1560 = vld [vmem:[%s1559] ss:$2 sm:$0xf]
    %s1561 = scalar_lea.vmem [#allocation2], 72
    %v1562 = vld [vmem:[%s1561] ss:$2 sm:$0xff]
    %s1563 = scalar_lea.vmem [#allocation2], 88
    %v1564 = vld [vmem:[%s1563] ss:$2 sm:$0xf]
    %s1565 = scalar_lea.vmem [#allocation2], 96
    %v1566 = vld [vmem:[%s1565] ss:$2 sm:$0xff]
    %s1567 = scalar_lea.vmem [#allocation2], 112
    %v1568 = vld [vmem:[%s1567] ss:$2 sm:$0xf]
    %s1569 = scalar_lea.vmem [#allocation2], 120
    %v1570 = vld [vmem:[%s1569] ss:$2 sm:$0xff]
    %s1571 = scalar_lea.vmem [#allocation2], 136
    %v1572 = vld [vmem:[%s1571] ss:$2 sm:$0xf]
    %s1573 = scalar_lea.vmem [#allocation2], 144
    %v1574 = vld [vmem:[%s1573] ss:$2 sm:$0xff]
    %s1575 = scalar_lea.vmem [#allocation2], 160
    %v1576 = vld [vmem:[%s1575] ss:$2 sm:$0xf]
    %s1577 = scalar_lea.vmem [#allocation2], 168
    %v1578 = vld [vmem:[%s1577] ss:$2 sm:$0xff]
    %s1579 = scalar_lea.vmem [#allocation2], 184
    %v1580 = vld [vmem:[%s1579] ss:$2 sm:$0xf]
    %s1581 = scalar_lea.vmem [#allocation2], 192
    %v1582 = vld [vmem:[%s1581] ss:$2 sm:$0xff]
    %s1583 = scalar_lea.vmem [#allocation2], 208
    %v1584 = vld [vmem:[%s1583] ss:$2 sm:$0xf]
    %s1585 = scalar_lea.vmem [#allocation2], 216
    %v1586 = vld [vmem:[%s1585] ss:$2 sm:$0xff]
    %s1587 = scalar_lea.vmem [#allocation2], 232
    %v1588 = vld [vmem:[%s1587] ss:$2 sm:$0xf]
    %s1589 = scalar_lea.vmem [#allocation2], 240
    %v1590 = vld [vmem:[%s1589] ss:$2 sm:$0xff]
    %s1591 = scalar_lea.vmem [#allocation2], 256
    %v1592 = vld [vmem:[%s1591] ss:$2 sm:$0xf]
    %s1593 = scalar_lea.vmem [#allocation2], 264
    %v1594 = vld [vmem:[%s1593] ss:$2 sm:$0xff]
    %s1595 = scalar_lea.vmem [#allocation2], 280
    %v1596 = vld [vmem:[%s1595] ss:$2 sm:$0xf]
    %s1597 = scalar_lea.vmem [#allocation2], 288
    %v1598 = vld [vmem:[%s1597] ss:$2 sm:$0xff]
    %s1599 = scalar_lea.vmem [#allocation2], 304
    %v1600 = vld [vmem:[%s1599] ss:$2 sm:$0xf]
    %s1601 = scalar_lea.vmem [#allocation2], 312
    %v1602 = vld [vmem:[%s1601] ss:$2 sm:$0xff]
    %s1603 = scalar_lea.vmem [#allocation2], 328
    %v1604 = vld [vmem:[%s1603] ss:$2 sm:$0xf]
    %s1605 = scalar_lea.vmem [#allocation2], 336
    %v1606 = vld [vmem:[%s1605] ss:$2 sm:$0xff]
    %s1607 = scalar_lea.vmem [#allocation2], 352
    %v1608 = vld [vmem:[%s1607] ss:$2 sm:$0xf]
    %s1609 = scalar_lea.vmem [#allocation2], 360
    %v1610 = vld [vmem:[%s1609] ss:$2 sm:$0xff]
    %s1611 = scalar_lea.vmem [#allocation2], 376
    %v1612 = vld [vmem:[%s1611] ss:$2 sm:$0xf]
    %s1613 = scalar_lea.vmem [#allocation2], 384
    %v1614 = vld [vmem:[%s1613] ss:$2 sm:$0xff]
    %s1615 = scalar_lea.vmem [#allocation2], 400
    %v1616 = vld [vmem:[%s1615] ss:$2 sm:$0xf]
    %s1617 = scalar_lea.vmem [#allocation2], 408
    %v1618 = vld [vmem:[%s1617] ss:$2 sm:$0xff]
    %s1619 = scalar_lea.vmem [#allocation2], 424
    %v1620 = vld [vmem:[%s1619] ss:$2 sm:$0xf]
    %s1621 = scalar_lea.vmem [#allocation2], 432
    %v1622 = vld [vmem:[%s1621] ss:$2 sm:$0xff]
    %s1623 = scalar_lea.vmem [#allocation2], 448
    %v1624 = vld [vmem:[%s1623] ss:$2 sm:$0xf]
    %s1625 = scalar_lea.vmem [#allocation2], 456
    %v1626 = vld [vmem:[%s1625] ss:$2 sm:$0xff]
    %s1627 = scalar_lea.vmem [#allocation2], 472
    %v1628 = vld [vmem:[%s1627] ss:$2 sm:$0xf]
    %s1629 = scalar_lea.vmem [#allocation2], 480
    %v1630 = vld [vmem:[%s1629] ss:$2 sm:$0xff]
    %s1631 = scalar_lea.vmem [#allocation2], 496
    %v1632 = vld [vmem:[%s1631] ss:$2 sm:$0xf]
    %s1633 = scalar_lea.vmem [#allocation2], 504
    %v1634 = vld [vmem:[%s1633] ss:$2 sm:$0xff]
    %s1635 = scalar_lea.vmem [#allocation2], 520
    %v1636 = vld [vmem:[%s1635] ss:$2 sm:$0xf]
    %s1637 = scalar_lea.vmem [#allocation2], 528
    %v1638 = vld [vmem:[%s1637] ss:$2 sm:$0xff]
    %s1639 = scalar_lea.vmem [#allocation2], 544
    %v1640 = vld [vmem:[%s1639] ss:$2 sm:$0xf]
    %s1641 = scalar_lea.vmem [#allocation2], 552
    %v1642 = vld [vmem:[%s1641] ss:$2 sm:$0xff]
    %s1643 = scalar_lea.vmem [#allocation2], 568
    %v1644 = vld [vmem:[%s1643] ss:$2 sm:$0xf]
    %s1645 = scalar_lea.vmem [#allocation2], 576
    %v1646 = vld [vmem:[%s1645] ss:$2 sm:$0xff]
    %s1647 = scalar_lea.vmem [#allocation2], 592
    %v1648 = vld [vmem:[%s1647] ss:$2 sm:$0xf]
    %s1649 = scalar_lea.vmem [#allocation2], 600
    %v1650 = vld [vmem:[%s1649] ss:$2 sm:$0xff]
    %s1651 = scalar_lea.vmem [#allocation2], 616
    %v1652 = vld [vmem:[%s1651] ss:$2 sm:$0xf]
    %s1653 = scalar_lea.vmem [#allocation2], 624
    %v1654 = vld [vmem:[%s1653] ss:$2 sm:$0xff]
    %s1655 = scalar_lea.vmem [#allocation2], 640
    %v1656 = vld [vmem:[%s1655] ss:$2 sm:$0xf]
    %s1657 = scalar_lea.vmem [#allocation2], 648
    %v1658 = vld [vmem:[%s1657] ss:$2 sm:$0xff]
    %s1659 = scalar_lea.vmem [#allocation2], 664
    %v1660 = vld [vmem:[%s1659] ss:$2 sm:$0xf]
    %s1661 = scalar_lea.vmem [#allocation2], 672
    %v1662 = vld [vmem:[%s1661] ss:$2 sm:$0xff]
    %s1663 = scalar_lea.vmem [#allocation2], 688
    %v1664 = vld [vmem:[%s1663] ss:$2 sm:$0xf]
    %s1665 = scalar_lea.vmem [#allocation2], 696
    %v1666 = vld [vmem:[%s1665] ss:$2 sm:$0xff]
    %s1667 = scalar_lea.vmem [#allocation2], 712
    %v1668 = vld [vmem:[%s1667] ss:$2 sm:$0xf]
    %s1669 = scalar_lea.vmem [#allocation2], 720
    %v1670 = vld [vmem:[%s1669] ss:$2 sm:$0xff]
    %s1671 = scalar_lea.vmem [#allocation2], 736
    %v1672 = vld [vmem:[%s1671] ss:$2 sm:$0xf]
    %s1673 = scalar_lea.vmem [#allocation2], 744
    %v1674 = vld [vmem:[%s1673] ss:$2 sm:$0xff]
    %s1675 = scalar_lea.vmem [#allocation2], 760
    %v1676 = vld [vmem:[%s1675] ss:$2 sm:$0xf]
    %s1677 = scalar_lea.vmem [#allocation2], 768
    %v1678 = vld [vmem:[%s1677] ss:$2 sm:$0xff]
    %s1679 = scalar_lea.vmem [#allocation2], 784
    %v1680 = vld [vmem:[%s1679] ss:$2 sm:$0xf]
    %s1681 = scalar_lea.vmem [#allocation2], 792
    %v1682 = vld [vmem:[%s1681] ss:$2 sm:$0xff]
    %s1683 = scalar_lea.vmem [#allocation2], 808
    %v1684 = vld [vmem:[%s1683] ss:$2 sm:$0xf]
    %s1685 = scalar_lea.vmem [#allocation2], 816
    %v1686 = vld [vmem:[%s1685] ss:$2 sm:$0xff]
    %s1687 = scalar_lea.vmem [#allocation2], 832
    %v1688 = vld [vmem:[%s1687] ss:$2 sm:$0xf]
    %s1689 = scalar_lea.vmem [#allocation2], 840
    %v1690 = vld [vmem:[%s1689] ss:$2 sm:$0xff]
    %s1691 = scalar_lea.vmem [#allocation2], 856
    %v1692 = vld [vmem:[%s1691] ss:$2 sm:$0xf]
    %s1693 = scalar_lea.vmem [#allocation2], 864
    %v1694 = vld [vmem:[%s1693] ss:$2 sm:$0xff]
    %s1695 = scalar_lea.vmem [#allocation2], 880
    %v1696 = vld [vmem:[%s1695] ss:$2 sm:$0xf]
    %s1697 = scalar_lea.vmem [#allocation2], 888
    %v1698 = vld [vmem:[%s1697] ss:$2 sm:$0xff]
    %s1699 = scalar_lea.vmem [#allocation2], 904
    %v1700 = vld [vmem:[%s1699] ss:$2 sm:$0xf]
    %s1701 = scalar_lea.vmem [#allocation2], 912
    %v1702 = vld [vmem:[%s1701] ss:$2 sm:$0xff]
    %s1703 = scalar_lea.vmem [#allocation2], 928
    %v1704 = vld [vmem:[%s1703] ss:$2 sm:$0xf]
    %s1705 = scalar_lea.vmem [#allocation2], 936
    %v1706 = vld [vmem:[%s1705] ss:$2 sm:$0xff]
    %s1707 = scalar_lea.vmem [#allocation2], 952
    %v1708 = vld [vmem:[%s1707] ss:$2 sm:$0xf]
    %s1709 = scalar_lea.vmem [#allocation2], 960
    %v1710 = vld [vmem:[%s1709] ss:$2 sm:$0xff]
    %s1711 = scalar_lea.vmem [#allocation2], 976
    %v1712 = vld [vmem:[%s1711] ss:$2 sm:$0xf]
    %s1713 = scalar_lea.vmem [#allocation2], 984
    %v1714 = vld [vmem:[%s1713] ss:$2 sm:$0xff]
    %s1715 = scalar_lea.vmem [#allocation2], 1000
    %v1716 = vld [vmem:[%s1715] ss:$2 sm:$0xf]
    %s1717 = scalar_lea.vmem [#allocation2], 1008
    %v1718 = vld [vmem:[%s1717] ss:$2 sm:$0xff]
    %s1719 = scalar_lea.vmem [#allocation2], 1024
    %v1720 = vld [vmem:[%s1719] ss:$2 sm:$0xf]
    %s1721 = scalar_lea.vmem [#allocation2], 1032
    %v1722 = vld [vmem:[%s1721] ss:$2 sm:$0xff]
    %s1723 = scalar_lea.vmem [#allocation2], 1048
    %v1724 = vld [vmem:[%s1723] ss:$2 sm:$0xf]
    %s1725 = scalar_lea.vmem [#allocation2], 1056
    %v1726 = vld [vmem:[%s1725] ss:$2 sm:$0xff]
    %s1727 = scalar_lea.vmem [#allocation2], 1072
    %v1728 = vld [vmem:[%s1727] ss:$2 sm:$0xf]
    %s1729 = scalar_lea.vmem [#allocation2], 1080
    %v1730 = vld [vmem:[%s1729] ss:$2 sm:$0xff]
    %s1731 = scalar_lea.vmem [#allocation2], 1096
    %v1732 = vld [vmem:[%s1731] ss:$2 sm:$0xf]
    %s1733 = scalar_lea.vmem [#allocation2], 1104
    %v1734 = vld [vmem:[%s1733] ss:$2 sm:$0xff]
    %s1735 = scalar_lea.vmem [#allocation2], 1120
    %v1736 = vld [vmem:[%s1735] ss:$2 sm:$0xf]
    %s1737 = scalar_lea.vmem [#allocation2], 1128
    %v1738 = vld [vmem:[%s1737] ss:$2 sm:$0xff]
    %s1739 = scalar_lea.vmem [#allocation2], 1144
    %v1740 = vld [vmem:[%s1739] ss:$2 sm:$0xf]
    %s1741 = scalar_lea.vmem [#allocation2], 1
    %v1742 = vld [vmem:[%s1741] ss:$2 sm:$0xff]
    %s1743 = scalar_lea.vmem [#allocation2], 17
    %v1744 = vld [vmem:[%s1743] ss:$2 sm:$0xf]
    %s1745 = scalar_lea.vmem [#allocation2], 25
    %v1746 = vld [vmem:[%s1745] ss:$2 sm:$0xff]
    %s1747 = scalar_lea.vmem [#allocation2], 41
    %v1748 = vld [vmem:[%s1747] ss:$2 sm:$0xf]
    %s1749 = scalar_lea.vmem [#allocation2], 49
    %v1750 = vld [vmem:[%s1749] ss:$2 sm:$0xff]
    %s1751 = scalar_lea.vmem [#allocation2], 65
    %v1752 = vld [vmem:[%s1751] ss:$2 sm:$0xf]
    %s1753 = scalar_lea.vmem [#allocation2], 73
    %v1754 = vld [vmem:[%s1753] ss:$2 sm:$0xff]
    %s1755 = scalar_lea.vmem [#allocation2], 89
    %v1756 = vld [vmem:[%s1755] ss:$2 sm:$0xf]
    %s1757 = scalar_lea.vmem [#allocation2], 97
    %v1758 = vld [vmem:[%s1757] ss:$2 sm:$0xff]
    %s1759 = scalar_lea.vmem [#allocation2], 113
    %v1760 = vld [vmem:[%s1759] ss:$2 sm:$0xf]
    %s1761 = scalar_lea.vmem [#allocation2], 121
    %v1762 = vld [vmem:[%s1761] ss:$2 sm:$0xff]
    %s1763 = scalar_lea.vmem [#allocation2], 137
    %v1764 = vld [vmem:[%s1763] ss:$2 sm:$0xf]
    %s1765 = scalar_lea.vmem [#allocation2], 145
    %v1766 = vld [vmem:[%s1765] ss:$2 sm:$0xff]
    %s1767 = scalar_lea.vmem [#allocation2], 161
    %v1768 = vld [vmem:[%s1767] ss:$2 sm:$0xf]
    %s1769 = scalar_lea.vmem [#allocation2], 169
    %v1770 = vld [vmem:[%s1769] ss:$2 sm:$0xff]
    %s1771 = scalar_lea.vmem [#allocation2], 185
    %v1772 = vld [vmem:[%s1771] ss:$2 sm:$0xf]
    %s1773 = scalar_lea.vmem [#allocation2], 193
    %v1774 = vld [vmem:[%s1773] ss:$2 sm:$0xff]
    %s1775 = scalar_lea.vmem [#allocation2], 209
    %v1776 = vld [vmem:[%s1775] ss:$2 sm:$0xf]
    %s1777 = scalar_lea.vmem [#allocation2], 217
    %v1778 = vld [vmem:[%s1777] ss:$2 sm:$0xff]
    %s1779 = scalar_lea.vmem [#allocation2], 233
    %v1780 = vld [vmem:[%s1779] ss:$2 sm:$0xf]
    %s1781 = scalar_lea.vmem [#allocation2], 241
    %v1782 = vld [vmem:[%s1781] ss:$2 sm:$0xff]
    %s1783 = scalar_lea.vmem [#allocation2], 257
    %v1784 = vld [vmem:[%s1783] ss:$2 sm:$0xf]
    %s1785 = scalar_lea.vmem [#allocation2], 265
    %v1786 = vld [vmem:[%s1785] ss:$2 sm:$0xff]
    %s1787 = scalar_lea.vmem [#allocation2], 281
    %v1788 = vld [vmem:[%s1787] ss:$2 sm:$0xf]
    %s1789 = scalar_lea.vmem [#allocation2], 289
    %v1790 = vld [vmem:[%s1789] ss:$2 sm:$0xff]
    %s1791 = scalar_lea.vmem [#allocation2], 305
    %v1792 = vld [vmem:[%s1791] ss:$2 sm:$0xf]
    %s1793 = scalar_lea.vmem [#allocation2], 313
    %v1794 = vld [vmem:[%s1793] ss:$2 sm:$0xff]
    %s1795 = scalar_lea.vmem [#allocation2], 329
    %v1796 = vld [vmem:[%s1795] ss:$2 sm:$0xf]
    %s1797 = scalar_lea.vmem [#allocation2], 337
    %v1798 = vld [vmem:[%s1797] ss:$2 sm:$0xff]
    %s1799 = scalar_lea.vmem [#allocation2], 353
    %v1800 = vld [vmem:[%s1799] ss:$2 sm:$0xf]
    %s1801 = scalar_lea.vmem [#allocation2], 361
    %v1802 = vld [vmem:[%s1801] ss:$2 sm:$0xff]
    %s1803 = scalar_lea.vmem [#allocation2], 377
    %v1804 = vld [vmem:[%s1803] ss:$2 sm:$0xf]
    %s1805 = scalar_lea.vmem [#allocation2], 385
    %v1806 = vld [vmem:[%s1805] ss:$2 sm:$0xff]
    %s1807 = scalar_lea.vmem [#allocation2], 401
    %v1808 = vld [vmem:[%s1807] ss:$2 sm:$0xf]
    %s1809 = scalar_lea.vmem [#allocation2], 409
    %v1810 = vld [vmem:[%s1809] ss:$2 sm:$0xff]
    %s1811 = scalar_lea.vmem [#allocation2], 425
    %v1812 = vld [vmem:[%s1811] ss:$2 sm:$0xf]
    %s1813 = scalar_lea.vmem [#allocation2], 433
    %v1814 = vld [vmem:[%s1813] ss:$2 sm:$0xff]
    %s1815 = scalar_lea.vmem [#allocation2], 449
    %v1816 = vld [vmem:[%s1815] ss:$2 sm:$0xf]
    %s1817 = scalar_lea.vmem [#allocation2], 457
    %v1818 = vld [vmem:[%s1817] ss:$2 sm:$0xff]
    %s1819 = scalar_lea.vmem [#allocation2], 473
    %v1820 = vld [vmem:[%s1819] ss:$2 sm:$0xf]
    %s1821 = scalar_lea.vmem [#allocation2], 481
    %v1822 = vld [vmem:[%s1821] ss:$2 sm:$0xff]
    %s1823 = scalar_lea.vmem [#allocation2], 497
    %v1824 = vld [vmem:[%s1823] ss:$2 sm:$0xf]
    %s1825 = scalar_lea.vmem [#allocation2], 505
    %v1826 = vld [vmem:[%s1825] ss:$2 sm:$0xff]
    %s1827 = scalar_lea.vmem [#allocation2], 521
    %v1828 = vld [vmem:[%s1827] ss:$2 sm:$0xf]
    %s1829 = scalar_lea.vmem [#allocation2], 529
    %v1830 = vld [vmem:[%s1829] ss:$2 sm:$0xff]
    %s1831 = scalar_lea.vmem [#allocation2], 545
    %v1832 = vld [vmem:[%s1831] ss:$2 sm:$0xf]
    %s1833 = scalar_lea.vmem [#allocation2], 553
    %v1834 = vld [vmem:[%s1833] ss:$2 sm:$0xff]
    %s1835 = scalar_lea.vmem [#allocation2], 569
    %v1836 = vld [vmem:[%s1835] ss:$2 sm:$0xf]
    %s1837 = scalar_lea.vmem [#allocation2], 577
    %v1838 = vld [vmem:[%s1837] ss:$2 sm:$0xff]
    %s1839 = scalar_lea.vmem [#allocation2], 593
    %v1840 = vld [vmem:[%s1839] ss:$2 sm:$0xf]
    %s1841 = scalar_lea.vmem [#allocation2], 601
    %v1842 = vld [vmem:[%s1841] ss:$2 sm:$0xff]
    %s1843 = scalar_lea.vmem [#allocation2], 617
    %v1844 = vld [vmem:[%s1843] ss:$2 sm:$0xf]
    %s1845 = scalar_lea.vmem [#allocation2], 625
    %v1846 = vld [vmem:[%s1845] ss:$2 sm:$0xff]
    %s1847 = scalar_lea.vmem [#allocation2], 641
    %v1848 = vld [vmem:[%s1847] ss:$2 sm:$0xf]
    %s1849 = scalar_lea.vmem [#allocation2], 649
    %v1850 = vld [vmem:[%s1849] ss:$2 sm:$0xff]
    %s1851 = scalar_lea.vmem [#allocation2], 665
    %v1852 = vld [vmem:[%s1851] ss:$2 sm:$0xf]
    %s1853 = scalar_lea.vmem [#allocation2], 673
    %v1854 = vld [vmem:[%s1853] ss:$2 sm:$0xff]
    %s1855 = scalar_lea.vmem [#allocation2], 689
    %v1856 = vld [vmem:[%s1855] ss:$2 sm:$0xf]
    %s1857 = scalar_lea.vmem [#allocation2], 697
    %v1858 = vld [vmem:[%s1857] ss:$2 sm:$0xff]
    %s1859 = scalar_lea.vmem [#allocation2], 713
    %v1860 = vld [vmem:[%s1859] ss:$2 sm:$0xf]
    %s1861 = scalar_lea.vmem [#allocation2], 721
    %v1862 = vld [vmem:[%s1861] ss:$2 sm:$0xff]
    %s1863 = scalar_lea.vmem [#allocation2], 737
    %v1864 = vld [vmem:[%s1863] ss:$2 sm:$0xf]
    %s1865 = scalar_lea.vmem [#allocation2], 745
    %v1866 = vld [vmem:[%s1865] ss:$2 sm:$0xff]
    %s1867 = scalar_lea.vmem [#allocation2], 761
    %v1868 = vld [vmem:[%s1867] ss:$2 sm:$0xf]
    %s1869 = scalar_lea.vmem [#allocation2], 769
    %v1870 = vld [vmem:[%s1869] ss:$2 sm:$0xff]
    %s1871 = scalar_lea.vmem [#allocation2], 785
    %v1872 = vld [vmem:[%s1871] ss:$2 sm:$0xf]
    %s1873 = scalar_lea.vmem [#allocation2], 793
    %v1874 = vld [vmem:[%s1873] ss:$2 sm:$0xff]
    %s1875 = scalar_lea.vmem [#allocation2], 809
    %v1876 = vld [vmem:[%s1875] ss:$2 sm:$0xf]
    %s1877 = scalar_lea.vmem [#allocation2], 817
    %v1878 = vld [vmem:[%s1877] ss:$2 sm:$0xff]
    %s1879 = scalar_lea.vmem [#allocation2], 833
    %v1880 = vld [vmem:[%s1879] ss:$2 sm:$0xf]
    %s1881 = scalar_lea.vmem [#allocation2], 841
    %v1882 = vld [vmem:[%s1881] ss:$2 sm:$0xff]
    %s1883 = scalar_lea.vmem [#allocation2], 857
    %v1884 = vld [vmem:[%s1883] ss:$2 sm:$0xf]
    %s1885 = scalar_lea.vmem [#allocation2], 865
    %v1886 = vld [vmem:[%s1885] ss:$2 sm:$0xff]
    %s1887 = scalar_lea.vmem [#allocation2], 881
    %v1888 = vld [vmem:[%s1887] ss:$2 sm:$0xf]
    %s1889 = scalar_lea.vmem [#allocation2], 889
    %v1890 = vld [vmem:[%s1889] ss:$2 sm:$0xff]
    %s1891 = scalar_lea.vmem [#allocation2], 905
    %v1892 = vld [vmem:[%s1891] ss:$2 sm:$0xf]
    %s1893 = scalar_lea.vmem [#allocation2], 913
    %v1894 = vld [vmem:[%s1893] ss:$2 sm:$0xff]
    %s1895 = scalar_lea.vmem [#allocation2], 929
    %v1896 = vld [vmem:[%s1895] ss:$2 sm:$0xf]
    %s1897 = scalar_lea.vmem [#allocation2], 937
    %v1898 = vld [vmem:[%s1897] ss:$2 sm:$0xff]
    %s1899 = scalar_lea.vmem [#allocation2], 953
    %v1900 = vld [vmem:[%s1899] ss:$2 sm:$0xf]
    %s1901 = scalar_lea.vmem [#allocation2], 961
    %v1902 = vld [vmem:[%s1901] ss:$2 sm:$0xff]
    %s1903 = scalar_lea.vmem [#allocation2], 977
    %v1904 = vld [vmem:[%s1903] ss:$2 sm:$0xf]
    %s1905 = scalar_lea.vmem [#allocation2], 985
    %v1906 = vld [vmem:[%s1905] ss:$2 sm:$0xff]
    %s1907 = scalar_lea.vmem [#allocation2], 1001
    %v1908 = vld [vmem:[%s1907] ss:$2 sm:$0xf]
    %s1909 = scalar_lea.vmem [#allocation2], 1009
    %v1910 = vld [vmem:[%s1909] ss:$2 sm:$0xff]
    %s1911 = scalar_lea.vmem [#allocation2], 1025
    %v1912 = vld [vmem:[%s1911] ss:$2 sm:$0xf]
    %s1913 = scalar_lea.vmem [#allocation2], 1033
    %v1914 = vld [vmem:[%s1913] ss:$2 sm:$0xff]
    %s1915 = scalar_lea.vmem [#allocation2], 1049
    %v1916 = vld [vmem:[%s1915] ss:$2 sm:$0xf]
    %s1917 = scalar_lea.vmem [#allocation2], 1057
    %v1918 = vld [vmem:[%s1917] ss:$2 sm:$0xff]
    %s1919 = scalar_lea.vmem [#allocation2], 1073
    %v1920 = vld [vmem:[%s1919] ss:$2 sm:$0xf]
    %s1921 = scalar_lea.vmem [#allocation2], 1081
    %v1922 = vld [vmem:[%s1921] ss:$2 sm:$0xff]
    %s1923 = scalar_lea.vmem [#allocation2], 1097
    %v1924 = vld [vmem:[%s1923] ss:$2 sm:$0xf]
    %s1925 = scalar_lea.vmem [#allocation2], 1105
    %v1926 = vld [vmem:[%s1925] ss:$2 sm:$0xff]
    %s1927 = scalar_lea.vmem [#allocation2], 1121
    %v1928 = vld [vmem:[%s1927] ss:$2 sm:$0xf]
    %s1929 = scalar_lea.vmem [#allocation2], 1129
    %v1930 = vld [vmem:[%s1929] ss:$2 sm:$0xff]
    %s1931 = scalar_lea.vmem [#allocation2], 1145
    %v1932 = vld [vmem:[%s1931] ss:$2 sm:$0xf]
    %v1933 = vmax.f32 %v1550, %v1742
    %v1934 = vmax.f32 %v1552, %v1744
    %v1935 = vmax.f32 %v1554, %v1746
    %v1936 = vmax.f32 %v1556, %v1748
    %v1937 = vmax.f32 %v1558, %v1750
    %v1938 = vmax.f32 %v1560, %v1752
    %v1939 = vmax.f32 %v1562, %v1754
    %v1940 = vmax.f32 %v1564, %v1756
    %v1941 = vmax.f32 %v1566, %v1758
    %v1942 = vmax.f32 %v1568, %v1760
    %v1943 = vmax.f32 %v1570, %v1762
    %v1944 = vmax.f32 %v1572, %v1764
    %v1945 = vmax.f32 %v1574, %v1766
    %v1946 = vmax.f32 %v1576, %v1768
    %v1947 = vmax.f32 %v1578, %v1770
    %v1948 = vmax.f32 %v1580, %v1772
    %v1949 = vmax.f32 %v1582, %v1774
    %v1950 = vmax.f32 %v1584, %v1776
    %v1951 = vmax.f32 %v1586, %v1778
    %v1952 = vmax.f32 %v1588, %v1780
    %v1953 = vmax.f32 %v1590, %v1782
    %v1954 = vmax.f32 %v1592, %v1784
    %v1955 = vmax.f32 %v1594, %v1786
    %v1956 = vmax.f32 %v1596, %v1788
    %v1957 = vmax.f32 %v1598, %v1790
    %v1958 = vmax.f32 %v1600, %v1792
    %v1959 = vmax.f32 %v1602, %v1794
    %v1960 = vmax.f32 %v1604, %v1796
    %v1961 = vmax.f32 %v1606, %v1798
    %v1962 = vmax.f32 %v1608, %v1800
    %v1963 = vmax.f32 %v1610, %v1802
    %v1964 = vmax.f32 %v1612, %v1804
    %v1965 = vmax.f32 %v1614, %v1806
    %v1966 = vmax.f32 %v1616, %v1808
    %v1967 = vmax.f32 %v1618, %v1810
    %v1968 = vmax.f32 %v1620, %v1812
    %v1969 = vmax.f32 %v1622, %v1814
    %v1970 = vmax.f32 %v1624, %v1816
    %v1971 = vmax.f32 %v1626, %v1818
    %v1972 = vmax.f32 %v1628, %v1820
    %v1973 = vmax.f32 %v1630, %v1822
    %v1974 = vmax.f32 %v1632, %v1824
    %v1975 = vmax.f32 %v1634, %v1826
    %v1976 = vmax.f32 %v1636, %v1828
    %v1977 = vmax.f32 %v1638, %v1830
    %v1978 = vmax.f32 %v1640, %v1832
    %v1979 = vmax.f32 %v1642, %v1834
    %v1980 = vmax.f32 %v1644, %v1836
    %v1981 = vmax.f32 %v1646, %v1838
    %v1982 = vmax.f32 %v1648, %v1840
    %v1983 = vmax.f32 %v1650, %v1842
    %v1984 = vmax.f32 %v1652, %v1844
    %v1985 = vmax.f32 %v1654, %v1846
    %v1986 = vmax.f32 %v1656, %v1848
    %v1987 = vmax.f32 %v1658, %v1850
    %v1988 = vmax.f32 %v1660, %v1852
    %v1989 = vmax.f32 %v1662, %v1854
    %v1990 = vmax.f32 %v1664, %v1856
    %v1991 = vmax.f32 %v1666, %v1858
    %v1992 = vmax.f32 %v1668, %v1860
    %v1993 = vmax.f32 %v1670, %v1862
    %v1994 = vmax.f32 %v1672, %v1864
    %v1995 = vmax.f32 %v1674, %v1866
    %v1996 = vmax.f32 %v1676, %v1868
    %v1997 = vmax.f32 %v1678, %v1870
    %v1998 = vmax.f32 %v1680, %v1872
    %v1999 = vmax.f32 %v1682, %v1874
    %v2000 = vmax.f32 %v1684, %v1876
    %v2001 = vmax.f32 %v1686, %v1878
    %v2002 = vmax.f32 %v1688, %v1880
    %v2003 = vmax.f32 %v1690, %v1882
    %v2004 = vmax.f32 %v1692, %v1884
    %v2005 = vmax.f32 %v1694, %v1886
    %v2006 = vmax.f32 %v1696, %v1888
    %v2007 = vmax.f32 %v1698, %v1890
    %v2008 = vmax.f32 %v1700, %v1892
    %v2009 = vmax.f32 %v1702, %v1894
    %v2010 = vmax.f32 %v1704, %v1896
    %v2011 = vmax.f32 %v1706, %v1898
    %v2012 = vmax.f32 %v1708, %v1900
    %v2013 = vmax.f32 %v1710, %v1902
    %v2014 = vmax.f32 %v1712, %v1904
    %v2015 = vmax.f32 %v1714, %v1906
    %v2016 = vmax.f32 %v1716, %v1908
    %v2017 = vmax.f32 %v1718, %v1910
    %v2018 = vmax.f32 %v1720, %v1912
    %v2019 = vmax.f32 %v1722, %v1914
    %v2020 = vmax.f32 %v1724, %v1916
    %v2021 = vmax.f32 %v1726, %v1918
    %v2022 = vmax.f32 %v1728, %v1920
    %v2023 = vmax.f32 %v1730, %v1922
    %v2024 = vmax.f32 %v1732, %v1924
    %v2025 = vmax.f32 %v1734, %v1926
    %v2026 = vmax.f32 %v1736, %v1928
    %v2027 = vmax.f32 %v1738, %v1930
    %v2028 = vmax.f32 %v1740, %v1932
    %2029 = vst [vmem:[#allocation3] sm:$0xff] %v1933
    %2030 = vst [vmem:[#allocation3 + $0x8] sm:$0xf] %v1934
    %2031 = vst [vmem:[#allocation3 + $0x10] sm:$0xff] %v1935
    %2032 = vst [vmem:[#allocation3 + $0x18] sm:$0xf] %v1936
    %2033 = vst [vmem:[#allocation3 + $0x20] sm:$0xff] %v1937
    %2034 = vst [vmem:[#allocation3 + $0x28] sm:$0xf] %v1938
    %2035 = vst [vmem:[#allocation3 + $0x30] sm:$0xff] %v1939
    %2036 = vst [vmem:[#allocation3 + $0x38] sm:$0xf] %v1940
    %2037 = vst [vmem:[#allocation3 + $0x40] sm:$0xff] %v1941
    %2038 = vst [vmem:[#allocation3 + $0x48] sm:$0xf] %v1942
    %2039 = vst [vmem:[#allocation3 + $0x50] sm:$0xff] %v1943
    %2040 = vst [vmem:[#allocation3 + $0x58] sm:$0xf] %v1944
    %2041 = vst [vmem:[#allocation3 + $0x60] sm:$0xff] %v1945
    %2042 = vst [vmem:[#allocation3 + $0x68] sm:$0xf] %v1946
    %2043 = vst [vmem:[#allocation3 + $0x70] sm:$0xff] %v1947
    %2044 = vst [vmem:[#allocation3 + $0x78] sm:$0xf] %v1948
    %2045 = vst [vmem:[#allocation3 + $0x80] sm:$0xff] %v1949
    %2046 = vst [vmem:[#allocation3 + $0x88] sm:$0xf] %v1950
    %2047 = vst [vmem:[#allocation3 + $0x90] sm:$0xff] %v1951
    %2048 = vst [vmem:[#allocation3 + $0x98] sm:$0xf] %v1952
    %2049 = vst [vmem:[#allocation3 + $0xa0] sm:$0xff] %v1953
    %2050 = vst [vmem:[#allocation3 + $0xa8] sm:$0xf] %v1954
    %2051 = vst [vmem:[#allocation3 + $0xb0] sm:$0xff] %v1955
    %2052 = vst [vmem:[#allocation3 + $0xb8] sm:$0xf] %v1956
    %2053 = vst [vmem:[#allocation3 + $0xc0] sm:$0xff] %v1957
    %2054 = vst [vmem:[#allocation3 + $0xc8] sm:$0xf] %v1958
    %2055 = vst [vmem:[#allocation3 + $0xd0] sm:$0xff] %v1959
    %2056 = vst [vmem:[#allocation3 + $0xd8] sm:$0xf] %v1960
    %2057 = vst [vmem:[#allocation3 + $0xe0] sm:$0xff] %v1961
    %2058 = vst [vmem:[#allocation3 + $0xe8] sm:$0xf] %v1962
    %2059 = vst [vmem:[#allocation3 + $0xf0] sm:$0xff] %v1963
    %2060 = vst [vmem:[#allocation3 + $0xf8] sm:$0xf] %v1964
    %2061 = vst [vmem:[#allocation3 + $0x100] sm:$0xff] %v1965
    %2062 = vst [vmem:[#allocation3 + $0x108] sm:$0xf] %v1966
    %2063 = vst [vmem:[#allocation3 + $0x110] sm:$0xff] %v1967
    %2064 = vst [vmem:[#allocation3 + $0x118] sm:$0xf] %v1968
    %2065 = vst [vmem:[#allocation3 + $0x120] sm:$0xff] %v1969
    %2066 = vst [vmem:[#allocation3 + $0x128] sm:$0xf] %v1970
    %2067 = vst [vmem:[#allocation3 + $0x130] sm:$0xff] %v1971
    %2068 = vst [vmem:[#allocation3 + $0x138] sm:$0xf] %v1972
    %2069 = vst [vmem:[#allocation3 + $0x140] sm:$0xff] %v1973
    %2070 = vst [vmem:[#allocation3 + $0x148] sm:$0xf] %v1974
    %2071 = vst [vmem:[#allocation3 + $0x150] sm:$0xff] %v1975
    %2072 = vst [vmem:[#allocation3 + $0x158] sm:$0xf] %v1976
    %2073 = vst [vmem:[#allocation3 + $0x160] sm:$0xff] %v1977
    %2074 = vst [vmem:[#allocation3 + $0x168] sm:$0xf] %v1978
    %2075 = vst [vmem:[#allocation3 + $0x170] sm:$0xff] %v1979
    %2076 = vst [vmem:[#allocation3 + $0x178] sm:$0xf] %v1980
    %2077 = vst [vmem:[#allocation3 + $0x180] sm:$0xff] %v1981
    %2078 = vst [vmem:[#allocation3 + $0x188] sm:$0xf] %v1982
    %2079 = vst [vmem:[#allocation3 + $0x190] sm:$0xff] %v1983
    %2080 = vst [vmem:[#allocation3 + $0x198] sm:$0xf] %v1984
    %2081 = vst [vmem:[#allocation3 + $0x1a0] sm:$0xff] %v1985
    %2082 = vst [vmem:[#allocation3 + $0x1a8] sm:$0xf] %v1986
    %2083 = vst [vmem:[#allocation3 + $0x1b0] sm:$0xff] %v1987
    %2084 = vst [vmem:[#allocation3 + $0x1b8] sm:$0xf] %v1988
    %2085 = vst [vmem:[#allocation3 + $0x1c0] sm:$0xff] %v1989
    %2086 = vst [vmem:[#allocation3 + $0x1c8] sm:$0xf] %v1990
    %2087 = vst [vmem:[#allocation3 + $0x1d0] sm:$0xff] %v1991
    %2088 = vst [vmem:[#allocation3 + $0x1d8] sm:$0xf] %v1992
    %2089 = vst [vmem:[#allocation3 + $0x1e0] sm:$0xff] %v1993
    %2090 = vst [vmem:[#allocation3 + $0x1e8] sm:$0xf] %v1994
    %2091 = vst [vmem:[#allocation3 + $0x1f0] sm:$0xff] %v1995
    %2092 = vst [vmem:[#allocation3 + $0x1f8] sm:$0xf] %v1996
    %2093 = vst [vmem:[#allocation3 + $0x200] sm:$0xff] %v1997
    %2094 = vst [vmem:[#allocation3 + $0x208] sm:$0xf] %v1998
    %2095 = vst [vmem:[#allocation3 + $0x210] sm:$0xff] %v1999
    %2096 = vst [vmem:[#allocation3 + $0x218] sm:$0xf] %v2000
    %2097 = vst [vmem:[#allocation3 + $0x220] sm:$0xff] %v2001
    %2098 = vst [vmem:[#allocation3 + $0x228] sm:$0xf] %v2002
    %2099 = vst [vmem:[#allocation3 + $0x230] sm:$0xff] %v2003
    %2100 = vst [vmem:[#allocation3 + $0x238] sm:$0xf] %v2004
    %2101 = vst [vmem:[#allocation3 + $0x240] sm:$0xff] %v2005
    %2102 = vst [vmem:[#allocation3 + $0x248] sm:$0xf] %v2006
    %2103 = vst [vmem:[#allocation3 + $0x250] sm:$0xff] %v2007
    %2104 = vst [vmem:[#allocation3 + $0x258] sm:$0xf] %v2008
    %2105 = vst [vmem:[#allocation3 + $0x260] sm:$0xff] %v2009
    %2106 = vst [vmem:[#allocation3 + $0x268] sm:$0xf] %v2010
    %2107 = vst [vmem:[#allocation3 + $0x270] sm:$0xff] %v2011
    %2108 = vst [vmem:[#allocation3 + $0x278] sm:$0xf] %v2012
    %2109 = vst [vmem:[#allocation3 + $0x280] sm:$0xff] %v2013
    %2110 = vst [vmem:[#allocation3 + $0x288] sm:$0xf] %v2014
    %2111 = vst [vmem:[#allocation3 + $0x290] sm:$0xff] %v2015
    %2112 = vst [vmem:[#allocation3 + $0x298] sm:$0xf] %v2016
    %2113 = vst [vmem:[#allocation3 + $0x2a0] sm:$0xff] %v2017
    %2114 = vst [vmem:[#allocation3 + $0x2a8] sm:$0xf] %v2018
    %2115 = vst [vmem:[#allocation3 + $0x2b0] sm:$0xff] %v2019
    %2116 = vst [vmem:[#allocation3 + $0x2b8] sm:$0xf] %v2020
    %2117 = vst [vmem:[#allocation3 + $0x2c0] sm:$0xff] %v2021
    %2118 = vst [vmem:[#allocation3 + $0x2c8] sm:$0xf] %v2022
    %2119 = vst [vmem:[#allocation3 + $0x2d0] sm:$0xff] %v2023
    %2120 = vst [vmem:[#allocation3 + $0x2d8] sm:$0xf] %v2024
    %2121 = vst [vmem:[#allocation3 + $0x2e0] sm:$0xff] %v2025
    %2122 = vst [vmem:[#allocation3 + $0x2e8] sm:$0xf] %v2026
    %2123 = vst [vmem:[#allocation3 + $0x2f0] sm:$0xff] %v2027
    %2124 = vst [vmem:[#allocation3 + $0x2f8] sm:$0xf] %v2028
    %v2125 = vld [vmem:[#allocation3] sm:$0xff]
    %v2126 = vld [vmem:[#allocation3 + $0x8] sm:$0xf]
    %v2127 = vld [vmem:[#allocation3 + $0x20] sm:$0xff]
    %v2128 = vld [vmem:[#allocation3 + $0x28] sm:$0xf]
    %v2129 = vld [vmem:[#allocation3 + $0x40] sm:$0xff]
    %v2130 = vld [vmem:[#allocation3 + $0x48] sm:$0xf]
    %v2131 = vld [vmem:[#allocation3 + $0x60] sm:$0xff]
    %v2132 = vld [vmem:[#allocation3 + $0x68] sm:$0xf]
    %v2133 = vld [vmem:[#allocation3 + $0x80] sm:$0xff]
    %v2134 = vld [vmem:[#allocation3 + $0x88] sm:$0xf]
    %v2135 = vld [vmem:[#allocation3 + $0xa0] sm:$0xff]
    %v2136 = vld [vmem:[#allocation3 + $0xa8] sm:$0xf]
    %v2137 = vld [vmem:[#allocation3 + $0xc0] sm:$0xff]
    %v2138 = vld [vmem:[#allocation3 + $0xc8] sm:$0xf]
    %v2139 = vld [vmem:[#allocation3 + $0xe0] sm:$0xff]
    %v2140 = vld [vmem:[#allocation3 + $0xe8] sm:$0xf]
    %v2141 = vld [vmem:[#allocation3 + $0x100] sm:$0xff]
    %v2142 = vld [vmem:[#allocation3 + $0x108] sm:$0xf]
    %v2143 = vld [vmem:[#allocation3 + $0x120] sm:$0xff]
    %v2144 = vld [vmem:[#allocation3 + $0x128] sm:$0xf]
    %v2145 = vld [vmem:[#allocation3 + $0x140] sm:$0xff]
    %v2146 = vld [vmem:[#allocation3 + $0x148] sm:$0xf]
    %v2147 = vld [vmem:[#allocation3 + $0x160] sm:$0xff]
    %v2148 = vld [vmem:[#allocation3 + $0x168] sm:$0xf]
    %v2149 = vld [vmem:[#allocation3 + $0x180] sm:$0xff]
    %v2150 = vld [vmem:[#allocation3 + $0x188] sm:$0xf]
    %v2151 = vld [vmem:[#allocation3 + $0x1a0] sm:$0xff]
    %v2152 = vld [vmem:[#allocation3 + $0x1a8] sm:$0xf]
    %v2153 = vld [vmem:[#allocation3 + $0x1c0] sm:$0xff]
    %v2154 = vld [vmem:[#allocation3 + $0x1c8] sm:$0xf]
    %v2155 = vld [vmem:[#allocation3 + $0x1e0] sm:$0xff]
    %v2156 = vld [vmem:[#allocation3 + $0x1e8] sm:$0xf]
    %v2157 = vld [vmem:[#allocation3 + $0x200] sm:$0xff]
    %v2158 = vld [vmem:[#allocation3 + $0x208] sm:$0xf]
    %v2159 = vld [vmem:[#allocation3 + $0x220] sm:$0xff]
    %v2160 = vld [vmem:[#allocation3 + $0x228] sm:$0xf]
    %v2161 = vld [vmem:[#allocation3 + $0x240] sm:$0xff]
    %v2162 = vld [vmem:[#allocation3 + $0x248] sm:$0xf]
    %v2163 = vld [vmem:[#allocation3 + $0x260] sm:$0xff]
    %v2164 = vld [vmem:[#allocation3 + $0x268] sm:$0xf]
    %v2165 = vld [vmem:[#allocation3 + $0x280] sm:$0xff]
    %v2166 = vld [vmem:[#allocation3 + $0x288] sm:$0xf]
    %v2167 = vld [vmem:[#allocation3 + $0x2a0] sm:$0xff]
    %v2168 = vld [vmem:[#allocation3 + $0x2a8] sm:$0xf]
    %v2169 = vld [vmem:[#allocation3 + $0x2c0] sm:$0xff]
    %v2170 = vld [vmem:[#allocation3 + $0x2c8] sm:$0xf]
    %v2171 = vld [vmem:[#allocation3 + $0x2e0] sm:$0xff]
    %v2172 = vld [vmem:[#allocation3 + $0x2e8] sm:$0xf]
    %s2173 = scalar_lea.vmem [#allocation3], 16
    %v2174 = vld [vmem:[%s2173] sm:$0xff]
    %v2175 = vld [vmem:[%s2173 + $0x8] sm:$0xf]
    %v2176 = vld [vmem:[%s2173 + $0x20] sm:$0xff]
    %v2177 = vld [vmem:[%s2173 + $0x28] sm:$0xf]
    %v2178 = vld [vmem:[%s2173 + $0x40] sm:$0xff]
    %v2179 = vld [vmem:[%s2173 + $0x48] sm:$0xf]
    %v2180 = vld [vmem:[%s2173 + $0x60] sm:$0xff]
    %v2181 = vld [vmem:[%s2173 + $0x68] sm:$0xf]
    %v2182 = vld [vmem:[%s2173 + $0x80] sm:$0xff]
    %v2183 = vld [vmem:[%s2173 + $0x88] sm:$0xf]
    %v2184 = vld [vmem:[%s2173 + $0xa0] sm:$0xff]
    %v2185 = vld [vmem:[%s2173 + $0xa8] sm:$0xf]
    %v2186 = vld [vmem:[%s2173 + $0xc0] sm:$0xff]
    %v2187 = vld [vmem:[%s2173 + $0xc8] sm:$0xf]
    %v2188 = vld [vmem:[%s2173 + $0xe0] sm:$0xff]
    %v2189 = vld [vmem:[%s2173 + $0xe8] sm:$0xf]
    %v2190 = vld [vmem:[%s2173 + $0x100] sm:$0xff]
    %v2191 = vld [vmem:[%s2173 + $0x108] sm:$0xf]
    %v2192 = vld [vmem:[%s2173 + $0x120] sm:$0xff]
    %v2193 = vld [vmem:[%s2173 + $0x128] sm:$0xf]
    %v2194 = vld [vmem:[%s2173 + $0x140] sm:$0xff]
    %v2195 = vld [vmem:[%s2173 + $0x148] sm:$0xf]
    %v2196 = vld [vmem:[%s2173 + $0x160] sm:$0xff]
    %v2197 = vld [vmem:[%s2173 + $0x168] sm:$0xf]
    %v2198 = vld [vmem:[%s2173 + $0x180] sm:$0xff]
    %v2199 = vld [vmem:[%s2173 + $0x188] sm:$0xf]
    %v2200 = vld [vmem:[%s2173 + $0x1a0] sm:$0xff]
    %v2201 = vld [vmem:[%s2173 + $0x1a8] sm:$0xf]
    %v2202 = vld [vmem:[%s2173 + $0x1c0] sm:$0xff]
    %v2203 = vld [vmem:[%s2173 + $0x1c8] sm:$0xf]
    %v2204 = vld [vmem:[%s2173 + $0x1e0] sm:$0xff]
    %v2205 = vld [vmem:[%s2173 + $0x1e8] sm:$0xf]
    %v2206 = vld [vmem:[%s2173 + $0x200] sm:$0xff]
    %v2207 = vld [vmem:[%s2173 + $0x208] sm:$0xf]
    %v2208 = vld [vmem:[%s2173 + $0x220] sm:$0xff]
    %v2209 = vld [vmem:[%s2173 + $0x228] sm:$0xf]
    %v2210 = vld [vmem:[%s2173 + $0x240] sm:$0xff]
    %v2211 = vld [vmem:[%s2173 + $0x248] sm:$0xf]
    %v2212 = vld [vmem:[%s2173 + $0x260] sm:$0xff]
    %v2213 = vld [vmem:[%s2173 + $0x268] sm:$0xf]
    %v2214 = vld [vmem:[%s2173 + $0x280] sm:$0xff]
    %v2215 = vld [vmem:[%s2173 + $0x288] sm:$0xf]
    %v2216 = vld [vmem:[%s2173 + $0x2a0] sm:$0xff]
    %v2217 = vld [vmem:[%s2173 + $0x2a8] sm:$0xf]
    %v2218 = vld [vmem:[%s2173 + $0x2c0] sm:$0xff]
    %v2219 = vld [vmem:[%s2173 + $0x2c8] sm:$0xf]
    %v2220 = vld [vmem:[%s2173 + $0x2e0] sm:$0xff]
    %v2221 = vld [vmem:[%s2173 + $0x2e8] sm:$0xf]
    %v2222 = vmax.f32 %v2125, %v2174
    %v2223 = vmax.f32 %v2126, %v2175
    %v2224 = vmax.f32 %v2127, %v2176
    %v2225 = vmax.f32 %v2128, %v2177
    %v2226 = vmax.f32 %v2129, %v2178
    %v2227 = vmax.f32 %v2130, %v2179
    %v2228 = vmax.f32 %v2131, %v2180
    %v2229 = vmax.f32 %v2132, %v2181
    %v2230 = vmax.f32 %v2133, %v2182
    %v2231 = vmax.f32 %v2134, %v2183
    %v2232 = vmax.f32 %v2135, %v2184
    %v2233 = vmax.f32 %v2136, %v2185
    %v2234 = vmax.f32 %v2137, %v2186
    %v2235 = vmax.f32 %v2138, %v2187
    %v2236 = vmax.f32 %v2139, %v2188
    %v2237 = vmax.f32 %v2140, %v2189
    %v2238 = vmax.f32 %v2141, %v2190
    %v2239 = vmax.f32 %v2142, %v2191
    %v2240 = vmax.f32 %v2143, %v2192
    %v2241 = vmax.f32 %v2144, %v2193
    %v2242 = vmax.f32 %v2145, %v2194
    %v2243 = vmax.f32 %v2146, %v2195
    %v2244 = vmax.f32 %v2147, %v2196
    %v2245 = vmax.f32 %v2148, %v2197
    %v2246 = vmax.f32 %v2149, %v2198
    %v2247 = vmax.f32 %v2150, %v2199
    %v2248 = vmax.f32 %v2151, %v2200
    %v2249 = vmax.f32 %v2152, %v2201
    %v2250 = vmax.f32 %v2153, %v2202
    %v2251 = vmax.f32 %v2154, %v2203
    %v2252 = vmax.f32 %v2155, %v2204
    %v2253 = vmax.f32 %v2156, %v2205
    %v2254 = vmax.f32 %v2157, %v2206
    %v2255 = vmax.f32 %v2158, %v2207
    %v2256 = vmax.f32 %v2159, %v2208
    %v2257 = vmax.f32 %v2160, %v2209
    %v2258 = vmax.f32 %v2161, %v2210
    %v2259 = vmax.f32 %v2162, %v2211
    %v2260 = vmax.f32 %v2163, %v2212
    %v2261 = vmax.f32 %v2164, %v2213
    %v2262 = vmax.f32 %v2165, %v2214
    %v2263 = vmax.f32 %v2166, %v2215
    %v2264 = vmax.f32 %v2167, %v2216
    %v2265 = vmax.f32 %v2168, %v2217
    %v2266 = vmax.f32 %v2169, %v2218
    %v2267 = vmax.f32 %v2170, %v2219
    %v2268 = vmax.f32 %v2171, %v2220
    %v2269 = vmax.f32 %v2172, %v2221
    %v2270 = vmax.f32 %v2222, 0.0
    %v2271 = vmax.f32 %v2223, 0.0
    %v2272 = vmax.f32 %v2224, 0.0
    %v2273 = vmax.f32 %v2225, 0.0
    %v2274 = vmax.f32 %v2226, 0.0
    %v2275 = vmax.f32 %v2227, 0.0
    %v2276 = vmax.f32 %v2228, 0.0
    %v2277 = vmax.f32 %v2229, 0.0
    %v2278 = vmax.f32 %v2230, 0.0
    %v2279 = vmax.f32 %v2231, 0.0
    %v2280 = vmax.f32 %v2232, 0.0
    %v2281 = vmax.f32 %v2233, 0.0
    %v2282 = vmax.f32 %v2234, 0.0
    %v2283 = vmax.f32 %v2235, 0.0
    %v2284 = vmax.f32 %v2236, 0.0
    %v2285 = vmax.f32 %v2237, 0.0
    %v2286 = vmax.f32 %v2238, 0.0
    %v2287 = vmax.f32 %v2239, 0.0
    %v2288 = vmax.f32 %v2240, 0.0
    %v2289 = vmax.f32 %v2241, 0.0
    %v2290 = vmax.f32 %v2242, 0.0
    %v2291 = vmax.f32 %v2243, 0.0
    %v2292 = vmax.f32 %v2244, 0.0
    %v2293 = vmax.f32 %v2245, 0.0
    %v2294 = vmax.f32 %v2246, 0.0
    %v2295 = vmax.f32 %v2247, 0.0
    %v2296 = vmax.f32 %v2248, 0.0
    %v2297 = vmax.f32 %v2249, 0.0
    %v2298 = vmax.f32 %v2250, 0.0
    %v2299 = vmax.f32 %v2251, 0.0
    %v2300 = vmax.f32 %v2252, 0.0
    %v2301 = vmax.f32 %v2253, 0.0
    %v2302 = vmax.f32 %v2254, 0.0
    %v2303 = vmax.f32 %v2255, 0.0
    %v2304 = vmax.f32 %v2256, 0.0
    %v2305 = vmax.f32 %v2257, 0.0
    %v2306 = vmax.f32 %v2258, 0.0
    %v2307 = vmax.f32 %v2259, 0.0
    %v2308 = vmax.f32 %v2260, 0.0
    %v2309 = vmax.f32 %v2261, 0.0
    %v2310 = vmax.f32 %v2262, 0.0
    %v2311 = vmax.f32 %v2263, 0.0
    %v2312 = vmax.f32 %v2264, 0.0
    %v2313 = vmax.f32 %v2265, 0.0
    %v2314 = vmax.f32 %v2266, 0.0
    %v2315 = vmax.f32 %v2267, 0.0
    %v2316 = vmax.f32 %v2268, 0.0
    %v2317 = vmax.f32 %v2269, 0.0
    %2318 = vst [vmem:[#allocation4] sm:$0xff] %v2270
    %2319 = vst [vmem:[#allocation4 + $0x8] sm:$0xf] %v2271
    %2320 = vst [vmem:[#allocation4 + $0x10] sm:$0xff] %v2272
    %2321 = vst [vmem:[#allocation4 + $0x18] sm:$0xf] %v2273
    %2322 = vst [vmem:[#allocation4 + $0x20] sm:$0xff] %v2274
    %2323 = vst [vmem:[#allocation4 + $0x28] sm:$0xf] %v2275
    %2324 = vst [vmem:[#allocation4 + $0x30] sm:$0xff] %v2276
    %2325 = vst [vmem:[#allocation4 + $0x38] sm:$0xf] %v2277
    %2326 = vst [vmem:[#allocation4 + $0x40] sm:$0xff] %v2278
    %2327 = vst [vmem:[#allocation4 + $0x48] sm:$0xf] %v2279
    %2328 = vst [vmem:[#allocation4 + $0x50] sm:$0xff] %v2280
    %2329 = vst [vmem:[#allocation4 + $0x58] sm:$0xf] %v2281
    %2330 = vst [vmem:[#allocation4 + $0x60] sm:$0xff] %v2282
    %2331 = vst [vmem:[#allocation4 + $0x68] sm:$0xf] %v2283
    %2332 = vst [vmem:[#allocation4 + $0x70] sm:$0xff] %v2284
    %2333 = vst [vmem:[#allocation4 + $0x78] sm:$0xf] %v2285
    %2334 = vst [vmem:[#allocation4 + $0x80] sm:$0xff] %v2286
    %2335 = vst [vmem:[#allocation4 + $0x88] sm:$0xf] %v2287
    %2336 = vst [vmem:[#allocation4 + $0x90] sm:$0xff] %v2288
    %2337 = vst [vmem:[#allocation4 + $0x98] sm:$0xf] %v2289
    %2338 = vst [vmem:[#allocation4 + $0xa0] sm:$0xff] %v2290
    %2339 = vst [vmem:[#allocation4 + $0xa8] sm:$0xf] %v2291
    %2340 = vst [vmem:[#allocation4 + $0xb0] sm:$0xff] %v2292
    %2341 = vst [vmem:[#allocation4 + $0xb8] sm:$0xf] %v2293
    %2342 = vst [vmem:[#allocation4 + $0xc0] sm:$0xff] %v2294
    %2343 = vst [vmem:[#allocation4 + $0xc8] sm:$0xf] %v2295
    %2344 = vst [vmem:[#allocation4 + $0xd0] sm:$0xff] %v2296
    %2345 = vst [vmem:[#allocation4 + $0xd8] sm:$0xf] %v2297
    %2346 = vst [vmem:[#allocation4 + $0xe0] sm:$0xff] %v2298
    %2347 = vst [vmem:[#allocation4 + $0xe8] sm:$0xf] %v2299
    %2348 = vst [vmem:[#allocation4 + $0xf0] sm:$0xff] %v2300
    %2349 = vst [vmem:[#allocation4 + $0xf8] sm:$0xf] %v2301
    %2350 = vst [vmem:[#allocation4 + $0x100] sm:$0xff] %v2302
    %2351 = vst [vmem:[#allocation4 + $0x108] sm:$0xf] %v2303
    %2352 = vst [vmem:[#allocation4 + $0x110] sm:$0xff] %v2304
    %2353 = vst [vmem:[#allocation4 + $0x118] sm:$0xf] %v2305
    %2354 = vst [vmem:[#allocation4 + $0x120] sm:$0xff] %v2306
    %2355 = vst [vmem:[#allocation4 + $0x128] sm:$0xf] %v2307
    %2356 = vst [vmem:[#allocation4 + $0x130] sm:$0xff] %v2308
    %2357 = vst [vmem:[#allocation4 + $0x138] sm:$0xf] %v2309
    %2358 = vst [vmem:[#allocation4 + $0x140] sm:$0xff] %v2310
    %2359 = vst [vmem:[#allocation4 + $0x148] sm:$0xf] %v2311
    %2360 = vst [vmem:[#allocation4 + $0x150] sm:$0xff] %v2312
    %2361 = vst [vmem:[#allocation4 + $0x158] sm:$0xf] %v2313
    %2362 = vst [vmem:[#allocation4 + $0x160] sm:$0xff] %v2314
    %2363 = vst [vmem:[#allocation4 + $0x168] sm:$0xf] %v2315
    %2364 = vst [vmem:[#allocation4 + $0x170] sm:$0xff] %v2316
    %2365 = vst [vmem:[#allocation4 + $0x178] sm:$0xf] %v2317
    %v2366 = vld [vmem:[#allocation4] sm:$0xff]
    %v2367 = vld [vmem:[#allocation4 + $0x10] sm:$0xff]
    %v2368 = vld [vmem:[#allocation4 + $0x20] sm:$0xff]
    %v2369 = vld [vmem:[#allocation4 + $0x30] sm:$0xff]
    %v2370 = vld [vmem:[#allocation4 + $0x40] sm:$0xff]
    %v2371 = vld [vmem:[#allocation4 + $0x50] sm:$0xff]
    %v2372 = vld [vmem:[#allocation4 + $0x60] sm:$0xff]
    %v2373 = vld [vmem:[#allocation4 + $0x70] sm:$0xff]
    %v2374 = vld [vmem:[#allocation4 + $0xc0] sm:$0xff]
    %v2375 = vld [vmem:[#allocation4 + $0xd0] sm:$0xff]
    %v2376 = vld [vmem:[#allocation4 + $0xe0] sm:$0xff]
    %v2377 = vld [vmem:[#allocation4 + $0xf0] sm:$0xff]
    %v2378 = vld [vmem:[#allocation4 + $0x100] sm:$0xff]
    %v2379 = vld [vmem:[#allocation4 + $0x110] sm:$0xff]
    %v2380 = vld [vmem:[#allocation4 + $0x120] sm:$0xff]
    %v2381 = vld [vmem:[#allocation4 + $0x130] sm:$0xff]
    %v2382 = vld [vmem:[%s3] sm:$0xff]
    %v2383 = vld [vmem:[%s3 + $0x8] sm:$0xff]
    %v2384 = vld [vmem:[%s3 + $0x10] sm:$0xff]
    %v2385 = vld [vmem:[%s3 + $0x18] sm:$0xff]
    %v2386 = vld [vmem:[%s3 + $0x20] sm:$0xff]
    %v2387 = vld [vmem:[%s3 + $0x28] sm:$0xff]
    %v2388 = vld [vmem:[%s3 + $0x30] sm:$0xff]
    %v2389 = vld [vmem:[%s3 + $0x38] sm:$0xff]
    %v2390 = vld [vmem:[%s3 + $0x40] sm:$0xff]
    %v2391 = vld [vmem:[%s3 + $0x48] sm:$0xff]
    %v2392 = vld [vmem:[%s3 + $0x50] sm:$0xff]
    %v2393 = vld [vmem:[%s3 + $0x58] sm:$0xff]
    %v2394 = vld [vmem:[%s3 + $0x60] sm:$0xff]
    %v2395 = vld [vmem:[%s3 + $0x68] sm:$0xff]
    %v2396 = vld [vmem:[%s3 + $0x70] sm:$0xff]
    %v2397 = vld [vmem:[%s3 + $0x78] sm:$0xff]
    %v2398 = vld [vmem:[#allocation4 + $0x1] sm:$0xff]
    %v2399 = vld [vmem:[#allocation4 + $0x11] sm:$0xff]
    %v2400 = vld [vmem:[#allocation4 + $0x21] sm:$0xff]
    %v2401 = vld [vmem:[#allocation4 + $0x31] sm:$0xff]
    %v2402 = vld [vmem:[#allocation4 + $0x41] sm:$0xff]
    %v2403 = vld [vmem:[#allocation4 + $0x51] sm:$0xff]
    %v2404 = vld [vmem:[#allocation4 + $0x61] sm:$0xff]
    %v2405 = vld [vmem:[#allocation4 + $0x71] sm:$0xff]
    %v2406 = vld [vmem:[#allocation4 + $0xc1] sm:$0xff]
    %v2407 = vld [vmem:[#allocation4 + $0xd1] sm:$0xff]
    %v2408 = vld [vmem:[#allocation4 + $0xe1] sm:$0xff]
    %v2409 = vld [vmem:[#allocation4 + $0xf1] sm:$0xff]
    %v2410 = vld [vmem:[#allocation4 + $0x101] sm:$0xff]
    %v2411 = vld [vmem:[#allocation4 + $0x111] sm:$0xff]
    %v2412 = vld [vmem:[#allocation4 + $0x121] sm:$0xff]
    %v2413 = vld [vmem:[#allocation4 + $0x131] sm:$0xff]
    %s2414 = scalar_lea.vmem %s3, 128
    %v2415 = vld [vmem:[%s2414] sm:$0xff]
    %v2416 = vld [vmem:[%s2414 + $0x8] sm:$0xff]
    %v2417 = vld [vmem:[%s2414 + $0x10] sm:$0xff]
    %v2418 = vld [vmem:[%s2414 + $0x18] sm:$0xff]
    %v2419 = vld [vmem:[%s2414 + $0x20] sm:$0xff]
    %v2420 = vld [vmem:[%s2414 + $0x28] sm:$0xff]
    %v2421 = vld [vmem:[%s2414 + $0x30] sm:$0xff]
    %v2422 = vld [vmem:[%s2414 + $0x38] sm:$0xff]
    %v2423 = vld [vmem:[%s2414 + $0x40] sm:$0xff]
    %v2424 = vld [vmem:[%s2414 + $0x48] sm:$0xff]
    %v2425 = vld [vmem:[%s2414 + $0x50] sm:$0xff]
    %v2426 = vld [vmem:[%s2414 + $0x58] sm:$0xff]
    %v2427 = vld [vmem:[%s2414 + $0x60] sm:$0xff]
    %v2428 = vld [vmem:[%s2414 + $0x68] sm:$0xff]
    %v2429 = vld [vmem:[%s2414 + $0x70] sm:$0xff]
    %v2430 = vld [vmem:[%s2414 + $0x78] sm:$0xff]
    %2431 = vmatprep.subr.mxu0 0.0
    %2432 = vmatpush1.msra.mxu0 %v2415
    %2433 = vmatprep.subr.mxu0 0.0
    %2434 = vmatpush1.msra.mxu0 %v2416
    %2435 = vmatprep.subr.mxu0 0.0
    %2436 = vmatpush1.msra.mxu0 %v2417
    %2437 = vmatprep.subr.mxu0 0.0
    %2438 = vmatpush1.msra.mxu0 %v2418
    %2439 = vmatprep.subr.mxu0 0.0
    %2440 = vmatpush1.msra.mxu0 %v2419
    %2441 = vmatprep.subr.mxu0 0.0
    %2442 = vmatpush1.msra.mxu0 %v2420
    %2443 = vmatprep.subr.mxu0 0.0
    %2444 = vmatpush1.msra.mxu0 %v2421
    %2445 = vmatprep.subr.mxu0 0.0
    %2446 = vmatpush1.msra.mxu0 %v2422
    %2447 = vmatprep.subr.mxu0 0.0
    %2448 = vmatpush1.msra.mxu0 %v2423
    %2449 = vmatprep.subr.mxu0 0.0
    %2450 = vmatpush1.msra.mxu0 %v2424
    %2451 = vmatprep.subr.mxu0 0.0
    %2452 = vmatpush1.msra.mxu0 %v2425
    %2453 = vmatprep.subr.mxu0 0.0
    %2454 = vmatpush1.msra.mxu0 %v2426
    %2455 = vmatprep.subr.mxu0 0.0
    %2456 = vmatpush1.msra.mxu0 %v2427
    %2457 = vmatprep.subr.mxu0 0.0
    %2458 = vmatpush1.msra.mxu0 %v2428
    %2459 = vmatprep.subr.mxu0 0.0
    %2460 = vmatpush1.msra.mxu0 %v2429
    %2461 = vmatprep.subr.mxu0 0.0
    %2462 = vmatpush1.msra.mxu0 %v2430
    %2463 = vmatprep.subr.mxu0 0.0
    %2464 = vmatpush1.msra.mxu0 0.0
    %2465 = vmatprep.subr.mxu0 0.0
    %2466 = vmatpush1.msra.mxu0 0.0
    %2467 = vmatprep.subr.mxu0 0.0
    %2468 = vmatpush1.msra.mxu0 0.0
    %2469 = vmatprep.subr.mxu0 0.0
    %2470 = vmatpush1.msra.mxu0 0.0
    %2471 = vmatprep.subr.mxu0 0.0
    %2472 = vmatpush1.msra.mxu0 0.0
    %2473 = vmatprep.subr.mxu0 0.0
    %2474 = vmatpush1.msra.mxu0 0.0
    %2475 = vmatprep.subr.mxu0 0.0
    %2476 = vmatpush1.msra.mxu0 0.0
    %2477 = vmatprep.subr.mxu0 0.0
    %2478 = vmatpush1.msra.mxu0 0.0
    %2479 = vmatprep.subr.mxu0 0.0
    %2480 = vmatpush1.msra.mxu0 0.0
    %2481 = vmatprep.subr.mxu0 0.0
    %2482 = vmatpush1.msra.mxu0 0.0
    %2483 = vmatprep.subr.mxu0 0.0
    %2484 = vmatpush1.msra.mxu0 0.0
    %2485 = vmatprep.subr.mxu0 0.0
    %2486 = vmatpush1.msra.mxu0 0.0
    %2487 = vmatprep.subr.mxu0 0.0
    %2488 = vmatpush1.msra.mxu0 0.0
    %2489 = vmatprep.subr.mxu0 0.0
    %2490 = vmatpush1.msra.mxu0 0.0
    %2491 = vmatprep.subr.mxu0 0.0
    %2492 = vmatpush1.msra.mxu0 0.0
    %2493 = vmatprep.subr.mxu0 0.0
    %2494 = vmatpush1.msra.mxu0 0.0
    %2495 = vmatprep.mubr.f32.mxu0 0.0
    %2496 = vmatmul.mubr.f32.gmra.mrb[0].mxu0 %v2398
    %v2497 = vpop.f32.mrb[0].mxu0
    %v2498 = vadd.f32 0.0, %v2497
    %v2499 = vpop.f32.mrb[0].mxu0
    %2500 = vmatprep.mubr.f32.mxu0 0.0
    %2501 = vmatmul.mubr.f32.gmra.mrb[0].mxu0 %v2399
    %v2502 = vpop.f32.mrb[0].mxu0
    %v2503 = vadd.f32 0.0, %v2502
    %v2504 = vpop.f32.mrb[0].mxu0
    %2505 = vmatprep.mubr.f32.mxu0 0.0
    %2506 = vmatmul.mubr.f32.gmra.mrb[0].mxu0 %v2400
    %v2507 = vpop.f32.mrb[0].mxu0
    %v2508 = vadd.f32 0.0, %v2507
    %v2509 = vpop.f32.mrb[0].mxu0
    %2510 = vmatprep.mubr.f32.mxu0 0.0
    %2511 = vmatmul.mubr.f32.gmra.mrb[0].mxu0 %v2401
    %v2512 = vpop.f32.mrb[0].mxu0
    %v2513 = vadd.f32 0.0, %v2512
    %v2514 = vpop.f32.mrb[0].mxu0
    %2515 = vmatprep.mubr.f32.mxu0 0.0
    %2516 = vmatmul.mubr.f32.gmra.mrb[0].mxu0 %v2402
    %v2517 = vpop.f32.mrb[0].mxu0
    %v2518 = vadd.f32 0.0, %v2517
    %v2519 = vpop.f32.mrb[0].mxu0
    %2520 = vmatprep.mubr.f32.mxu0 0.0
    %2521 = vmatmul.mubr.f32.gmra.mrb[0].mxu0 %v2403
    %v2522 = vpop.f32.mrb[0].mxu0
    %v2523 = vadd.f32 0.0, %v2522
    %v2524 = vpop.f32.mrb[0].mxu0
    %2525 = vmatprep.mubr.f32.mxu0 0.0
    %2526 = vmatmul.mubr.f32.gmra.mrb[0].mxu0 %v2404
    %v2527 = vpop.f32.mrb[0].mxu0
    %v2528 = vadd.f32 0.0, %v2527
    %v2529 = vpop.f32.mrb[0].mxu0
    %2530 = vmatprep.mubr.f32.mxu0 0.0
    %2531 = vmatmul.mubr.f32.gmra.mrb[0].mxu0 %v2405
    %v2532 = vpop.f32.mrb[0].mxu0
    %v2533 = vadd.f32 0.0, %v2532
    %v2534 = vpop.f32.mrb[0].mxu0
    %2535 = vmatprep.mubr.f32.mxu0 0.0
    %2536 = vmatmul.mubr.f32.gmra.mrb[0].mxu0 %v2406
    %v2537 = vpop.f32.mrb[0].mxu0
    %v2538 = vadd.f32 0.0, %v2537
    %v2539 = vpop.f32.mrb[0].mxu0
    %2540 = vmatprep.mubr.f32.mxu0 0.0
    %2541 = vmatmul.mubr.f32.gmra.mrb[0].mxu0 %v2407
    %v2542 = vpop.f32.mrb[0].mxu0
    %v2543 = vadd.f32 0.0, %v2542
    %v2544 = vpop.f32.mrb[0].mxu0
    %2545 = vmatprep.mubr.f32.mxu0 0.0
    %2546 = vmatmul.mubr.f32.gmra.mrb[0].mxu0 %v2408
    %v2547 = vpop.f32.mrb[0].mxu0
    %v2548 = vadd.f32 0.0, %v2547
    %v2549 = vpop.f32.mrb[0].mxu0
    %2550 = vmatprep.mubr.f32.mxu0 0.0
    %2551 = vmatmul.mubr.f32.gmra.mrb[0].mxu0 %v2409
    %v2552 = vpop.f32.mrb[0].mxu0
    %v2553 = vadd.f32 0.0, %v2552
    %v2554 = vpop.f32.mrb[0].mxu0
    %2555 = vmatprep.mubr.f32.mxu0 0.0
    %2556 = vmatmul.mubr.f32.gmra.mrb[0].mxu0 %v2410
    %v2557 = vpop.f32.mrb[0].mxu0
    %v2558 = vadd.f32 0.0, %v2557
    %v2559 = vpop.f32.mrb[0].mxu0
    %2560 = vmatprep.mubr.f32.mxu0 0.0
    %2561 = vmatmul.mubr.f32.gmra.mrb[0].mxu0 %v2411
    %v2562 = vpop.f32.mrb[0].mxu0
    %v2563 = vadd.f32 0.0, %v2562
    %v2564 = vpop.f32.mrb[0].mxu0
    %2565 = vmatprep.mubr.f32.mxu0 0.0
    %2566 = vmatmul.mubr.f32.gmra.mrb[0].mxu0 %v2412
    %v2567 = vpop.f32.mrb[0].mxu0
    %v2568 = vadd.f32 0.0, %v2567
    %v2569 = vpop.f32.mrb[0].mxu0
    %2570 = vmatprep.mubr.f32.mxu0 0.0
    %2571 = vmatmul.mubr.f32.gmra.mrb[0].mxu0 %v2413
    %v2572 = vpop.f32.mrb[0].mxu0
    %v2573 = vadd.f32 0.0, %v2572
    %v2574 = vpop.f32.mrb[0].mxu0
    %2575 = vdwg.mxu0
    %2576 = vmatprep.subr.mxu0 0.0
    %2577 = vmatpush1.msra.mxu0 %v2382
    %2578 = vmatprep.subr.mxu0 0.0
    %2579 = vmatpush1.msra.mxu0 %v2383
    %2580 = vmatprep.subr.mxu0 0.0
    %2581 = vmatpush1.msra.mxu0 %v2384
    %2582 = vmatprep.subr.mxu0 0.0
    %2583 = vmatpush1.msra.mxu0 %v2385
    %2584 = vmatprep.subr.mxu0 0.0
    %2585 = vmatpush1.msra.mxu0 %v2386
    %2586 = vmatprep.subr.mxu0 0.0
    %2587 = vmatpush1.msra.mxu0 %v2387
    %2588 = vmatprep.subr.mxu0 0.0
    %2589 = vmatpush1.msra.mxu0 %v2388
    %2590 = vmatprep.subr.mxu0 0.0
    %2591 = vmatpush1.msra.mxu0 %v2389
    %2592 = vmatprep.subr.mxu0 0.0
    %2593 = vmatpush1.msra.mxu0 %v2390
    %2594 = vmatprep.subr.mxu0 0.0
    %2595 = vmatpush1.msra.mxu0 %v2391
    %2596 = vmatprep.subr.mxu0 0.0
    %2597 = vmatpush1.msra.mxu0 %v2392
    %2598 = vmatprep.subr.mxu0 0.0
    %2599 = vmatpush1.msra.mxu0 %v2393
    %2600 = vmatprep.subr.mxu0 0.0
    %2601 = vmatpush1.msra.mxu0 %v2394
    %2602 = vmatprep.subr.mxu0 0.0
    %2603 = vmatpush1.msra.mxu0 %v2395
    %2604 = vmatprep.subr.mxu0 0.0
    %2605 = vmatpush1.msra.mxu0 %v2396
    %2606 = vmatprep.subr.mxu0 0.0
    %2607 = vmatpush1.msra.mxu0 %v2397
    %2608 = vmatprep.subr.mxu0 0.0
    %2609 = vmatpush1.msra.mxu0 0.0
    %2610 = vmatprep.subr.mxu0 0.0
    %2611 = vmatpush1.msra.mxu0 0.0
    %2612 = vmatprep.subr.mxu0 0.0
    %2613 = vmatpush1.msra.mxu0 0.0
    %2614 = vmatprep.subr.mxu0 0.0
    %2615 = vmatpush1.msra.mxu0 0.0
    %2616 = vmatprep.subr.mxu0 0.0
    %2617 = vmatpush1.msra.mxu0 0.0
    %2618 = vmatprep.subr.mxu0 0.0
    %2619 = vmatpush1.msra.mxu0 0.0
    %2620 = vmatprep.subr.mxu0 0.0
    %2621 = vmatpush1.msra.mxu0 0.0
    %2622 = vmatprep.subr.mxu0 0.0
    %2623 = vmatpush1.msra.mxu0 0.0
    %2624 = vmatprep.subr.mxu0 0.0
    %2625 = vmatpush1.msra.mxu0 0.0
    %2626 = vmatprep.subr.mxu0 0.0
    %2627 = vmatpush1.msra.mxu0 0.0
    %2628 = vmatprep.subr.mxu0 0.0
    %2629 = vmatpush1.msra.mxu0 0.0
    %2630 = vmatprep.subr.mxu0 0.0
    %2631 = vmatpush1.msra.mxu0 0.0
    %2632 = vmatprep.subr.mxu0 0.0
    %2633 = vmatpush1.msra.mxu0 0.0
    %2634 = vmatprep.subr.mxu0 0.0
    %2635 = vmatpush1.msra.mxu0 0.0
    %2636 = vmatprep.subr.mxu0 0.0
    %2637 = vmatpush1.msra.mxu0 0.0
    %2638 = vmatprep.subr.mxu0 0.0
    %2639 = vmatpush1.msra.mxu0 0.0
    %2640 = vmatprep.mubr.f32.mxu0 0.0
    %2641 = vmatmul.mubr.f32.gmra.mrb[0].mxu0 %v2366
    %v2642 = vpop.f32.mrb[0].mxu0
    %v2643 = vadd.f32 %v2498, %v2642
    %v2644 = vpop.f32.mrb[0].mxu0
    %2645 = vmatprep.mubr.f32.mxu0 0.0
    %2646 = vmatmul.mubr.f32.gmra.mrb[0].mxu0 %v2367
    %v2647 = vpop.f32.mrb[0].mxu0
    %v2648 = vadd.f32 %v2503, %v2647
    %v2649 = vpop.f32.mrb[0].mxu0
    %2650 = vmatprep.mubr.f32.mxu0 0.0
    %2651 = vmatmul.mubr.f32.gmra.mrb[0].mxu0 %v2368
    %v2652 = vpop.f32.mrb[0].mxu0
    %v2653 = vadd.f32 %v2508, %v2652
    %v2654 = vpop.f32.mrb[0].mxu0
    %2655 = vmatprep.mubr.f32.mxu0 0.0
    %2656 = vmatmul.mubr.f32.gmra.mrb[0].mxu0 %v2369
    %v2657 = vpop.f32.mrb[0].mxu0
    %v2658 = vadd.f32 %v2513, %v2657
    %v2659 = vpop.f32.mrb[0].mxu0
    %2660 = vmatprep.mubr.f32.mxu0 0.0
    %2661 = vmatmul.mubr.f32.gmra.mrb[0].mxu0 %v2370
    %v2662 = vpop.f32.mrb[0].mxu0
    %v2663 = vadd.f32 %v2518, %v2662
    %v2664 = vpop.f32.mrb[0].mxu0
    %2665 = vmatprep.mubr.f32.mxu0 0.0
    %2666 = vmatmul.mubr.f32.gmra.mrb[0].mxu0 %v2371
    %v2667 = vpop.f32.mrb[0].mxu0
    %v2668 = vadd.f32 %v2523, %v2667
    %v2669 = vpop.f32.mrb[0].mxu0
    %2670 = vmatprep.mubr.f32.mxu0 0.0
    %2671 = vmatmul.mubr.f32.gmra.mrb[0].mxu0 %v2372
    %v2672 = vpop.f32.mrb[0].mxu0
    %v2673 = vadd.f32 %v2528, %v2672
    %v2674 = vpop.f32.mrb[0].mxu0
    %2675 = vmatprep.mubr.f32.mxu0 0.0
    %2676 = vmatmul.mubr.f32.gmra.mrb[0].mxu0 %v2373
    %v2677 = vpop.f32.mrb[0].mxu0
    %v2678 = vadd.f32 %v2533, %v2677
    %v2679 = vpop.f32.mrb[0].mxu0
    %2680 = vmatprep.mubr.f32.mxu0 0.0
    %2681 = vmatmul.mubr.f32.gmra.mrb[0].mxu0 %v2374
    %v2682 = vpop.f32.mrb[0].mxu0
    %v2683 = vadd.f32 %v2538, %v2682
    %v2684 = vpop.f32.mrb[0].mxu0
    %2685 = vmatprep.mubr.f32.mxu0 0.0
    %2686 = vmatmul.mubr.f32.gmra.mrb[0].mxu0 %v2375
    %v2687 = vpop.f32.mrb[0].mxu0
    %v2688 = vadd.f32 %v2543, %v2687
    %v2689 = vpop.f32.mrb[0].mxu0
    %2690 = vmatprep.mubr.f32.mxu0 0.0
    %2691 = vmatmul.mubr.f32.gmra.mrb[0].mxu0 %v2376
    %v2692 = vpop.f32.mrb[0].mxu0
    %v2693 = vadd.f32 %v2548, %v2692
    %v2694 = vpop.f32.mrb[0].mxu0
    %2695 = vmatprep.mubr.f32.mxu0 0.0
    %2696 = vmatmul.mubr.f32.gmra.mrb[0].mxu0 %v2377
    %v2697 = vpop.f32.mrb[0].mxu0
    %v2698 = vadd.f32 %v2553, %v2697
    %v2699 = vpop.f32.mrb[0].mxu0
    %2700 = vmatprep.mubr.f32.mxu0 0.0
    %2701 = vmatmul.mubr.f32.gmra.mrb[0].mxu0 %v2378
    %v2702 = vpop.f32.mrb[0].mxu0
    %v2703 = vadd.f32 %v2558, %v2702
    %v2704 = vpop.f32.mrb[0].mxu0
    %2705 = vmatprep.mubr.f32.mxu0 0.0
    %2706 = vmatmul.mubr.f32.gmra.mrb[0].mxu0 %v2379
    %v2707 = vpop.f32.mrb[0].mxu0
    %v2708 = vadd.f32 %v2563, %v2707
    %v2709 = vpop.f32.mrb[0].mxu0
    %2710 = vmatprep.mubr.f32.mxu0 0.0
    %2711 = vmatmul.mubr.f32.gmra.mrb[0].mxu0 %v2380
    %v2712 = vpop.f32.mrb[0].mxu0
    %v2713 = vadd.f32 %v2568, %v2712
    %v2714 = vpop.f32.mrb[0].mxu0
    %2715 = vmatprep.mubr.f32.mxu0 0.0
    %2716 = vmatmul.mubr.f32.gmra.mrb[0].mxu0 %v2381
    %v2717 = vpop.f32.mrb[0].mxu0
    %v2718 = vadd.f32 %v2573, %v2717
    %v2719 = vpop.f32.mrb[0].mxu0
    %2720 = vdwg.mxu0
    %v2721 = vld [vmem:[#allocation4 + $0x2] sm:$0xff]
    %v2722 = vld [vmem:[#allocation4 + $0x12] sm:$0xff]
    %v2723 = vld [vmem:[#allocation4 + $0x22] sm:$0xff]
    %v2724 = vld [vmem:[#allocation4 + $0x32] sm:$0xff]
    %v2725 = vld [vmem:[#allocation4 + $0x42] sm:$0xff]
    %v2726 = vld [vmem:[#allocation4 + $0x52] sm:$0xff]
    %v2727 = vld [vmem:[#allocation4 + $0x62] sm:$0xff]
    %v2728 = vld [vmem:[#allocation4 + $0x72] sm:$0xff]
    %v2729 = vld [vmem:[#allocation4 + $0xc2] sm:$0xff]
    %v2730 = vld [vmem:[#allocation4 + $0xd2] sm:$0xff]
    %v2731 = vld [vmem:[#allocation4 + $0xe2] sm:$0xff]
    %v2732 = vld [vmem:[#allocation4 + $0xf2] sm:$0xff]
    %v2733 = vld [vmem:[#allocation4 + $0x102] sm:$0xff]
    %v2734 = vld [vmem:[#allocation4 + $0x112] sm:$0xff]
    %v2735 = vld [vmem:[#allocation4 + $0x122] sm:$0xff]
    %v2736 = vld [vmem:[#allocation4 + $0x132] sm:$0xff]
    %s2737 = scalar_lea.vmem %s3, 256
    %v2738 = vld [vmem:[%s2737] sm:$0xff]
    %v2739 = vld [vmem:[%s2737 + $0x8] sm:$0xff]
    %v2740 = vld [vmem:[%s2737 + $0x10] sm:$0xff]
    %v2741 = vld [vmem:[%s2737 + $0x18] sm:$0xff]
    %v2742 = vld [vmem:[%s2737 + $0x20] sm:$0xff]
    %v2743 = vld [vmem:[%s2737 + $0x28] sm:$0xff]
    %v2744 = vld [vmem:[%s2737 + $0x30] sm:$0xff]
    %v2745 = vld [vmem:[%s2737 + $0x38] sm:$0xff]
    %v2746 = vld [vmem:[%s2737 + $0x40] sm:$0xff]
    %v2747 = vld [vmem:[%s2737 + $0x48] sm:$0xff]
    %v2748 = vld [vmem:[%s2737 + $0x50] sm:$0xff]
    %v2749 = vld [vmem:[%s2737 + $0x58] sm:$0xff]
    %v2750 = vld [vmem:[%s2737 + $0x60] sm:$0xff]
    %v2751 = vld [vmem:[%s2737 + $0x68] sm:$0xff]
    %v2752 = vld [vmem:[%s2737 + $0x70] sm:$0xff]
    %v2753 = vld [vmem:[%s2737 + $0x78] sm:$0xff]
    %2754 = vmatprep.subr.mxu0 0.0
    %2755 = vmatpush1.msra.mxu0 %v2738
    %2756 = vmatprep.subr.mxu0 0.0
    %2757 = vmatpush1.msra.mxu0 %v2739
    %2758 = vmatprep.subr.mxu0 0.0
    %2759 = vmatpush1.msra.mxu0 %v2740
    %2760 = vmatprep.subr.mxu0 0.0
    %2761 = vmatpush1.msra.mxu0 %v2741
    %2762 = vmatprep.subr.mxu0 0.0
    %2763 = vmatpush1.msra.mxu0 %v2742
    %2764 = vmatprep.subr.mxu0 0.0
    %2765 = vmatpush1.msra.mxu0 %v2743
    %2766 = vmatprep.subr.mxu0 0.0
    %2767 = vmatpush1.msra.mxu0 %v2744
    %2768 = vmatprep.subr.mxu0 0.0
    %2769 = vmatpush1.msra.mxu0 %v2745
    %2770 = vmatprep.subr.mxu0 0.0
    %2771 = vmatpush1.msra.mxu0 %v2746
    %2772 = vmatprep.subr.mxu0 0.0
    %2773 = vmatpush1.msra.mxu0 %v2747
    %2774 = vmatprep.subr.mxu0 0.0
    %2775 = vmatpush1.msra.mxu0 %v2748
    %2776 = vmatprep.subr.mxu0 0.0
    %2777 = vmatpush1.msra.mxu0 %v2749
    %2778 = vmatprep.subr.mxu0 0.0
    %2779 = vmatpush1.msra.mxu0 %v2750
    %2780 = vmatprep.subr.mxu0 0.0
    %2781 = vmatpush1.msra.mxu0 %v2751
    %2782 = vmatprep.subr.mxu0 0.0
    %2783 = vmatpush1.msra.mxu0 %v2752
    %2784 = vmatprep.subr.mxu0 0.0
    %2785 = vmatpush1.msra.mxu0 %v2753
    %2786 = vmatprep.subr.mxu0 0.0
    %2787 = vmatpush1.msra.mxu0 0.0
    %2788 = vmatprep.subr.mxu0 0.0
    %2789 = vmatpush1.msra.mxu0 0.0
    %2790 = vmatprep.subr.mxu0 0.0
    %2791 = vmatpush1.msra.mxu0 0.0
    %2792 = vmatprep.subr.mxu0 0.0
    %2793 = vmatpush1.msra.mxu0 0.0
    %2794 = vmatprep.subr.mxu0 0.0
    %2795 = vmatpush1.msra.mxu0 0.0
    %2796 = vmatprep.subr.mxu0 0.0
    %2797 = vmatpush1.msra.mxu0 0.0
    %2798 = vmatprep.subr.mxu0 0.0
    %2799 = vmatpush1.msra.mxu0 0.0
    %2800 = vmatprep.subr.mxu0 0.0
    %2801 = vmatpush1.msra.mxu0 0.0
    %2802 = vmatprep.subr.mxu0 0.0
    %2803 = vmatpush1.msra.mxu0 0.0
    %2804 = vmatprep.subr.mxu0 0.0
    %2805 = vmatpush1.msra.mxu0 0.0
    %2806 = vmatprep.subr.mxu0 0.0
    %2807 = vmatpush1.msra.mxu0 0.0
    %2808 = vmatprep.subr.mxu0 0.0
    %2809 = vmatpush1.msra.mxu0 0.0
    %2810 = vmatprep.subr.mxu0 0.0
    %2811 = vmatpush1.msra.mxu0 0.0
    %2812 = vmatprep.subr.mxu0 0.0
    %2813 = vmatpush1.msra.mxu0 0.0
    %2814 = vmatprep.subr.mxu0 0.0
    %2815 = vmatpush1.msra.mxu0 0.0
    %2816 = vmatprep.subr.mxu0 0.0
    %2817 = vmatpush1.msra.mxu0 0.0
    %2818 = vmatprep.mubr.f32.mxu0 0.0
    %2819 = vmatmul.mubr.f32.gmra.mrb[0].mxu0 %v2721
    %v2820 = vpop.f32.mrb[0].mxu0
    %v2821 = vadd.f32 0.0, %v2820
    %v2822 = vpop.f32.mrb[0].mxu0
    %2823 = vmatprep.mubr.f32.mxu0 0.0
    %2824 = vmatmul.mubr.f32.gmra.mrb[0].mxu0 %v2722
    %v2825 = vpop.f32.mrb[0].mxu0
    %v2826 = vadd.f32 0.0, %v2825
    %v2827 = vpop.f32.mrb[0].mxu0
    %2828 = vmatprep.mubr.f32.mxu0 0.0
    %2829 = vmatmul.mubr.f32.gmra.mrb[0].mxu0 %v2723
    %v2830 = vpop.f32.mrb[0].mxu0
    %v2831 = vadd.f32 0.0, %v2830
    %v2832 = vpop.f32.mrb[0].mxu0
    %2833 = vmatprep.mubr.f32.mxu0 0.0
    %2834 = vmatmul.mubr.f32.gmra.mrb[0].mxu0 %v2724
    %v2835 = vpop.f32.mrb[0].mxu0
    %v2836 = vadd.f32 0.0, %v2835
    %v2837 = vpop.f32.mrb[0].mxu0
    %2838 = vmatprep.mubr.f32.mxu0 0.0
    %2839 = vmatmul.mubr.f32.gmra.mrb[0].mxu0 %v2725
    %v2840 = vpop.f32.mrb[0].mxu0
    %v2841 = vadd.f32 0.0, %v2840
    %v2842 = vpop.f32.mrb[0].mxu0
    %2843 = vmatprep.mubr.f32.mxu0 0.0
    %2844 = vmatmul.mubr.f32.gmra.mrb[0].mxu0 %v2726
    %v2845 = vpop.f32.mrb[0].mxu0
    %v2846 = vadd.f32 0.0, %v2845
    %v2847 = vpop.f32.mrb[0].mxu0
    %2848 = vmatprep.mubr.f32.mxu0 0.0
    %2849 = vmatmul.mubr.f32.gmra.mrb[0].mxu0 %v2727
    %v2850 = vpop.f32.mrb[0].mxu0
    %v2851 = vadd.f32 0.0, %v2850
    %v2852 = vpop.f32.mrb[0].mxu0
    %2853 = vmatprep.mubr.f32.mxu0 0.0
    %2854 = vmatmul.mubr.f32.gmra.mrb[0].mxu0 %v2728
    %v2855 = vpop.f32.mrb[0].mxu0
    %v2856 = vadd.f32 0.0, %v2855
    %v2857 = vpop.f32.mrb[0].mxu0
    %2858 = vmatprep.mubr.f32.mxu0 0.0
    %2859 = vmatmul.mubr.f32.gmra.mrb[0].mxu0 %v2729
    %v2860 = vpop.f32.mrb[0].mxu0
    %v2861 = vadd.f32 0.0, %v2860
    %v2862 = vpop.f32.mrb[0].mxu0
    %2863 = vmatprep.mubr.f32.mxu0 0.0
    %2864 = vmatmul.mubr.f32.gmra.mrb[0].mxu0 %v2730
    %v2865 = vpop.f32.mrb[0].mxu0
    %v2866 = vadd.f32 0.0, %v2865
    %v2867 = vpop.f32.mrb[0].mxu0
    %2868 = vmatprep.mubr.f32.mxu0 0.0
    %2869 = vmatmul.mubr.f32.gmra.mrb[0].mxu0 %v2731
    %v2870 = vpop.f32.mrb[0].mxu0
    %v2871 = vadd.f32 0.0, %v2870
    %v2872 = vpop.f32.mrb[0].mxu0
    %2873 = vmatprep.mubr.f32.mxu0 0.0
    %2874 = vmatmul.mubr.f32.gmra.mrb[0].mxu0 %v2732
    %v2875 = vpop.f32.mrb[0].mxu0
    %v2876 = vadd.f32 0.0, %v2875
    %v2877 = vpop.f32.mrb[0].mxu0
    %2878 = vmatprep.mubr.f32.mxu0 0.0
    %2879 = vmatmul.mubr.f32.gmra.mrb[0].mxu0 %v2733
    %v2880 = vpop.f32.mrb[0].mxu0
    %v2881 = vadd.f32 0.0, %v2880
    %v2882 = vpop.f32.mrb[0].mxu0
    %2883 = vmatprep.mubr.f32.mxu0 0.0
    %2884 = vmatmul.mubr.f32.gmra.mrb[0].mxu0 %v2734
    %v2885 = vpop.f32.mrb[0].mxu0
    %v2886 = vadd.f32 0.0, %v2885
    %v2887 = vpop.f32.mrb[0].mxu0
    %2888 = vmatprep.mubr.f32.mxu0 0.0
    %2889 = vmatmul.mubr.f32.gmra.mrb[0].mxu0 %v2735
    %v2890 = vpop.f32.mrb[0].mxu0
    %v2891 = vadd.f32 0.0, %v2890
    %v2892 = vpop.f32.mrb[0].mxu0
    %2893 = vmatprep.mubr.f32.mxu0 0.0
    %2894 = vmatmul.mubr.f32.gmra.mrb[0].mxu0 %v2736
    %v2895 = vpop.f32.mrb[0].mxu0
    %v2896 = vadd.f32 0.0, %v2895
    %v2897 = vpop.f32.mrb[0].mxu0
    %2898 = vdwg.mxu0
    %v2899 = vadd.f32 %v2643, %v2821
    %v2900 = vadd.f32 %v2648, %v2826
    %v2901 = vadd.f32 %v2653, %v2831
    %v2902 = vadd.f32 %v2658, %v2836
    %v2903 = vadd.f32 %v2663, %v2841
    %v2904 = vadd.f32 %v2668, %v2846
    %v2905 = vadd.f32 %v2673, %v2851
    %v2906 = vadd.f32 %v2678, %v2856
    %v2907 = vadd.f32 %v2683, %v2861
    %v2908 = vadd.f32 %v2688, %v2866
    %v2909 = vadd.f32 %v2693, %v2871
    %v2910 = vadd.f32 %v2698, %v2876
    %v2911 = vadd.f32 %v2703, %v2881
    %v2912 = vadd.f32 %v2708, %v2886
    %v2913 = vadd.f32 %v2713, %v2891
    %v2914 = vadd.f32 %v2718, %v2896
    %v2915 = vld [vmem:[#allocation4 + $0x3] sm:$0xff]
    %v2916 = vld [vmem:[#allocation4 + $0x13] sm:$0xff]
    %v2917 = vld [vmem:[#allocation4 + $0x23] sm:$0xff]
    %v2918 = vld [vmem:[#allocation4 + $0x33] sm:$0xff]
    %v2919 = vld [vmem:[#allocation4 + $0x43] sm:$0xff]
    %v2920 = vld [vmem:[#allocation4 + $0x53] sm:$0xff]
    %v2921 = vld [vmem:[#allocation4 + $0x63] sm:$0xff]
    %v2922 = vld [vmem:[#allocation4 + $0x73] sm:$0xff]
    %v2923 = vld [vmem:[#allocation4 + $0xc3] sm:$0xff]
    %v2924 = vld [vmem:[#allocation4 + $0xd3] sm:$0xff]
    %v2925 = vld [vmem:[#allocation4 + $0xe3] sm:$0xff]
    %v2926 = vld [vmem:[#allocation4 + $0xf3] sm:$0xff]
    %v2927 = vld [vmem:[#allocation4 + $0x103] sm:$0xff]
    %v2928 = vld [vmem:[#allocation4 + $0x113] sm:$0xff]
    %v2929 = vld [vmem:[#allocation4 + $0x123] sm:$0xff]
    %v2930 = vld [vmem:[#allocation4 + $0x133] sm:$0xff]
    %s2931 = scalar_lea.vmem %s3, 384
    %v2932 = vld [vmem:[%s2931] sm:$0xff]
    %v2933 = vld [vmem:[%s2931 + $0x8] sm:$0xff]
    %v2934 = vld [vmem:[%s2931 + $0x10] sm:$0xff]
    %v2935 = vld [vmem:[%s2931 + $0x18] sm:$0xff]
    %v2936 = vld [vmem:[%s2931 + $0x20] sm:$0xff]
    %v2937 = vld [vmem:[%s2931 + $0x28] sm:$0xff]
    %v2938 = vld [vmem:[%s2931 + $0x30] sm:$0xff]
    %v2939 = vld [vmem:[%s2931 + $0x38] sm:$0xff]
    %v2940 = vld [vmem:[%s2931 + $0x40] sm:$0xff]
    %v2941 = vld [vmem:[%s2931 + $0x48] sm:$0xff]
    %v2942 = vld [vmem:[%s2931 + $0x50] sm:$0xff]
    %v2943 = vld [vmem:[%s2931 + $0x58] sm:$0xff]
    %v2944 = vld [vmem:[%s2931 + $0x60] sm:$0xff]
    %v2945 = vld [vmem:[%s2931 + $0x68] sm:$0xff]
    %v2946 = vld [vmem:[%s2931 + $0x70] sm:$0xff]
    %v2947 = vld [vmem:[%s2931 + $0x78] sm:$0xff]
    %2948 = vmatprep.subr.mxu0 0.0
    %2949 = vmatpush1.msra.mxu0 %v2932
    %2950 = vmatprep.subr.mxu0 0.0
    %2951 = vmatpush1.msra.mxu0 %v2933
    %2952 = vmatprep.subr.mxu0 0.0
    %2953 = vmatpush1.msra.mxu0 %v2934
    %2954 = vmatprep.subr.mxu0 0.0
    %2955 = vmatpush1.msra.mxu0 %v2935
    %2956 = vmatprep.subr.mxu0 0.0
    %2957 = vmatpush1.msra.mxu0 %v2936
    %2958 = vmatprep.subr.mxu0 0.0
    %2959 = vmatpush1.msra.mxu0 %v2937
    %2960 = vmatprep.subr.mxu0 0.0
    %2961 = vmatpush1.msra.mxu0 %v2938
    %2962 = vmatprep.subr.mxu0 0.0
    %2963 = vmatpush1.msra.mxu0 %v2939
    %2964 = vmatprep.subr.mxu0 0.0
    %2965 = vmatpush1.msra.mxu0 %v2940
    %2966 = vmatprep.subr.mxu0 0.0
    %2967 = vmatpush1.msra.mxu0 %v2941
    %2968 = vmatprep.subr.mxu0 0.0
    %2969 = vmatpush1.msra.mxu0 %v2942
    %2970 = vmatprep.subr.mxu0 0.0
    %2971 = vmatpush1.msra.mxu0 %v2943
    %2972 = vmatprep.subr.mxu0 0.0
    %2973 = vmatpush1.msra.mxu0 %v2944
    %2974 = vmatprep.subr.mxu0 0.0
    %2975 = vmatpush1.msra.mxu0 %v2945
    %2976 = vmatprep.subr.mxu0 0.0
    %2977 = vmatpush1.msra.mxu0 %v2946
    %2978 = vmatprep.subr.mxu0 0.0
    %2979 = vmatpush1.msra.mxu0 %v2947
    %2980 = vmatprep.subr.mxu0 0.0
    %2981 = vmatpush1.msra.mxu0 0.0
    %2982 = vmatprep.subr.mxu0 0.0
    %2983 = vmatpush1.msra.mxu0 0.0
    %2984 = vmatprep.subr.mxu0 0.0
    %2985 = vmatpush1.msra.mxu0 0.0
    %2986 = vmatprep.subr.mxu0 0.0
    %2987 = vmatpush1.msra.mxu0 0.0
    %2988 = vmatprep.subr.mxu0 0.0
    %2989 = vmatpush1.msra.mxu0 0.0
    %2990 = vmatprep.subr.mxu0 0.0
    %2991 = vmatpush1.msra.mxu0 0.0
    %2992 = vmatprep.subr.mxu0 0.0
    %2993 = vmatpush1.msra.mxu0 0.0
    %2994 = vmatprep.subr.mxu0 0.0
    %2995 = vmatpush1.msra.mxu0 0.0
    %2996 = vmatprep.subr.mxu0 0.0
    %2997 = vmatpush1.msra.mxu0 0.0
    %2998 = vmatprep.subr.mxu0 0.0
    %2999 = vmatpush1.msra.mxu0 0.0
    %3000 = vmatprep.subr.mxu0 0.0
    %3001 = vmatpush1.msra.mxu0 0.0
    %3002 = vmatprep.subr.mxu0 0.0
    %3003 = vmatpush1.msra.mxu0 0.0
    %3004 = vmatprep.subr.mxu0 0.0
    %3005 = vmatpush1.msra.mxu0 0.0
    %3006 = vmatprep.subr.mxu0 0.0
    %3007 = vmatpush1.msra.mxu0 0.0
    %3008 = vmatprep.subr.mxu0 0.0
    %3009 = vmatpush1.msra.mxu0 0.0
    %3010 = vmatprep.subr.mxu0 0.0
    %3011 = vmatpush1.msra.mxu0 0.0
    %3012 = vmatprep.mubr.f32.mxu0 0.0
    %3013 = vmatmul.mubr.f32.gmra.mrb[0].mxu0 %v2915
    %v3014 = vpop.f32.mrb[0].mxu0
    %v3015 = vadd.f32 0.0, %v3014
    %v3016 = vpop.f32.mrb[0].mxu0
    %3017 = vmatprep.mubr.f32.mxu0 0.0
    %3018 = vmatmul.mubr.f32.gmra.mrb[0].mxu0 %v2916
    %v3019 = vpop.f32.mrb[0].mxu0
    %v3020 = vadd.f32 0.0, %v3019
    %v3021 = vpop.f32.mrb[0].mxu0
    %3022 = vmatprep.mubr.f32.mxu0 0.0
    %3023 = vmatmul.mubr.f32.gmra.mrb[0].mxu0 %v2917
    %v3024 = vpop.f32.mrb[0].mxu0
    %v3025 = vadd.f32 0.0, %v3024
    %v3026 = vpop.f32.mrb[0].mxu0
    %3027 = vmatprep.mubr.f32.mxu0 0.0
    %3028 = vmatmul.mubr.f32.gmra.mrb[0].mxu0 %v2918
    %v3029 = vpop.f32.mrb[0].mxu0
    %v3030 = vadd.f32 0.0, %v3029
    %v3031 = vpop.f32.mrb[0].mxu0
    %3032 = vmatprep.mubr.f32.mxu0 0.0
    %3033 = vmatmul.mubr.f32.gmra.mrb[0].mxu0 %v2919
    %v3034 = vpop.f32.mrb[0].mxu0
    %v3035 = vadd.f32 0.0, %v3034
    %v3036 = vpop.f32.mrb[0].mxu0
    %3037 = vmatprep.mubr.f32.mxu0 0.0
    %3038 = vmatmul.mubr.f32.gmra.mrb[0].mxu0 %v2920
    %v3039 = vpop.f32.mrb[0].mxu0
    %v3040 = vadd.f32 0.0, %v3039
    %v3041 = vpop.f32.mrb[0].mxu0
    %3042 = vmatprep.mubr.f32.mxu0 0.0
    %3043 = vmatmul.mubr.f32.gmra.mrb[0].mxu0 %v2921
    %v3044 = vpop.f32.mrb[0].mxu0
    %v3045 = vadd.f32 0.0, %v3044
    %v3046 = vpop.f32.mrb[0].mxu0
    %3047 = vmatprep.mubr.f32.mxu0 0.0
    %3048 = vmatmul.mubr.f32.gmra.mrb[0].mxu0 %v2922
    %v3049 = vpop.f32.mrb[0].mxu0
    %v3050 = vadd.f32 0.0, %v3049
    %v3051 = vpop.f32.mrb[0].mxu0
    %3052 = vmatprep.mubr.f32.mxu0 0.0
    %3053 = vmatmul.mubr.f32.gmra.mrb[0].mxu0 %v2923
    %v3054 = vpop.f32.mrb[0].mxu0
    %v3055 = vadd.f32 0.0, %v3054
    %v3056 = vpop.f32.mrb[0].mxu0
    %3057 = vmatprep.mubr.f32.mxu0 0.0
    %3058 = vmatmul.mubr.f32.gmra.mrb[0].mxu0 %v2924
    %v3059 = vpop.f32.mrb[0].mxu0
    %v3060 = vadd.f32 0.0, %v3059
    %v3061 = vpop.f32.mrb[0].mxu0
    %3062 = vmatprep.mubr.f32.mxu0 0.0
    %3063 = vmatmul.mubr.f32.gmra.mrb[0].mxu0 %v2925
    %v3064 = vpop.f32.mrb[0].mxu0
    %v3065 = vadd.f32 0.0, %v3064
    %v3066 = vpop.f32.mrb[0].mxu0
    %3067 = vmatprep.mubr.f32.mxu0 0.0
    %3068 = vmatmul.mubr.f32.gmra.mrb[0].mxu0 %v2926
    %v3069 = vpop.f32.mrb[0].mxu0
    %v3070 = vadd.f32 0.0, %v3069
    %v3071 = vpop.f32.mrb[0].mxu0
    %3072 = vmatprep.mubr.f32.mxu0 0.0
    %3073 = vmatmul.mubr.f32.gmra.mrb[0].mxu0 %v2927
    %v3074 = vpop.f32.mrb[0].mxu0
    %v3075 = vadd.f32 0.0, %v3074
    %v3076 = vpop.f32.mrb[0].mxu0
    %3077 = vmatprep.mubr.f32.mxu0 0.0
    %3078 = vmatmul.mubr.f32.gmra.mrb[0].mxu0 %v2928
    %v3079 = vpop.f32.mrb[0].mxu0
    %v3080 = vadd.f32 0.0, %v3079
    %v3081 = vpop.f32.mrb[0].mxu0
    %3082 = vmatprep.mubr.f32.mxu0 0.0
    %3083 = vmatmul.mubr.f32.gmra.mrb[0].mxu0 %v2929
    %v3084 = vpop.f32.mrb[0].mxu0
    %v3085 = vadd.f32 0.0, %v3084
    %v3086 = vpop.f32.mrb[0].mxu0
    %3087 = vmatprep.mubr.f32.mxu0 0.0
    %3088 = vmatmul.mubr.f32.gmra.mrb[0].mxu0 %v2930
    %v3089 = vpop.f32.mrb[0].mxu0
    %v3090 = vadd.f32 0.0, %v3089
    %v3091 = vpop.f32.mrb[0].mxu0
    %3092 = vdwg.mxu0
    %v3093 = vadd.f32 %v2899, %v3015
    %v3094 = vadd.f32 %v2900, %v3020
    %v3095 = vadd.f32 %v2901, %v3025
    %v3096 = vadd.f32 %v2902, %v3030
    %v3097 = vadd.f32 %v2903, %v3035
    %v3098 = vadd.f32 %v2904, %v3040
    %v3099 = vadd.f32 %v2905, %v3045
    %v3100 = vadd.f32 %v2906, %v3050
    %v3101 = vadd.f32 %v2907, %v3055
    %v3102 = vadd.f32 %v2908, %v3060
    %v3103 = vadd.f32 %v2909, %v3065
    %v3104 = vadd.f32 %v2910, %v3070
    %v3105 = vadd.f32 %v2911, %v3075
    %v3106 = vadd.f32 %v2912, %v3080
    %v3107 = vadd.f32 %v2913, %v3085
    %v3108 = vadd.f32 %v2914, %v3090
    %v3109 = vld [vmem:[#allocation4 + $0x4] sm:$0xff]
    %v3110 = vld [vmem:[#allocation4 + $0x14] sm:$0xff]
    %v3111 = vld [vmem:[#allocation4 + $0x24] sm:$0xff]
    %v3112 = vld [vmem:[#allocation4 + $0x34] sm:$0xff]
    %v3113 = vld [vmem:[#allocation4 + $0x44] sm:$0xff]
    %v3114 = vld [vmem:[#allocation4 + $0x54] sm:$0xff]
    %v3115 = vld [vmem:[#allocation4 + $0x64] sm:$0xff]
    %v3116 = vld [vmem:[#allocation4 + $0x74] sm:$0xff]
    %v3117 = vld [vmem:[#allocation4 + $0xc4] sm:$0xff]
    %v3118 = vld [vmem:[#allocation4 + $0xd4] sm:$0xff]
    %v3119 = vld [vmem:[#allocation4 + $0xe4] sm:$0xff]
    %v3120 = vld [vmem:[#allocation4 + $0xf4] sm:$0xff]
    %v3121 = vld [vmem:[#allocation4 + $0x104] sm:$0xff]
    %v3122 = vld [vmem:[#allocation4 + $0x114] sm:$0xff]
    %v3123 = vld [vmem:[#allocation4 + $0x124] sm:$0xff]
    %v3124 = vld [vmem:[#allocation4 + $0x134] sm:$0xff]
    %s3125 = scalar_lea.vmem %s3, 512
    %v3126 = vld [vmem:[%s3125] sm:$0xff]
    %v3127 = vld [vmem:[%s3125 + $0x8] sm:$0xff]
    %v3128 = vld [vmem:[%s3125 + $0x10] sm:$0xff]
    %v3129 = vld [vmem:[%s3125 + $0x18] sm:$0xff]
    %v3130 = vld [vmem:[%s3125 + $0x20] sm:$0xff]
    %v3131 = vld [vmem:[%s3125 + $0x28] sm:$0xff]
    %v3132 = vld [vmem:[%s3125 + $0x30] sm:$0xff]
    %v3133 = vld [vmem:[%s3125 + $0x38] sm:$0xff]
    %v3134 = vld [vmem:[%s3125 + $0x40] sm:$0xff]
    %v3135 = vld [vmem:[%s3125 + $0x48] sm:$0xff]
    %v3136 = vld [vmem:[%s3125 + $0x50] sm:$0xff]
    %v3137 = vld [vmem:[%s3125 + $0x58] sm:$0xff]
    %v3138 = vld [vmem:[%s3125 + $0x60] sm:$0xff]
    %v3139 = vld [vmem:[%s3125 + $0x68] sm:$0xff]
    %v3140 = vld [vmem:[%s3125 + $0x70] sm:$0xff]
    %v3141 = vld [vmem:[%s3125 + $0x78] sm:$0xff]
    %3142 = vmatprep.subr.mxu0 0.0
    %3143 = vmatpush1.msra.mxu0 %v3126
    %3144 = vmatprep.subr.mxu0 0.0
    %3145 = vmatpush1.msra.mxu0 %v3127
    %3146 = vmatprep.subr.mxu0 0.0
    %3147 = vmatpush1.msra.mxu0 %v3128
    %3148 = vmatprep.subr.mxu0 0.0
    %3149 = vmatpush1.msra.mxu0 %v3129
    %3150 = vmatprep.subr.mxu0 0.0
    %3151 = vmatpush1.msra.mxu0 %v3130
    %3152 = vmatprep.subr.mxu0 0.0
    %3153 = vmatpush1.msra.mxu0 %v3131
    %3154 = vmatprep.subr.mxu0 0.0
    %3155 = vmatpush1.msra.mxu0 %v3132
    %3156 = vmatprep.subr.mxu0 0.0
    %3157 = vmatpush1.msra.mxu0 %v3133
    %3158 = vmatprep.subr.mxu0 0.0
    %3159 = vmatpush1.msra.mxu0 %v3134
    %3160 = vmatprep.subr.mxu0 0.0
    %3161 = vmatpush1.msra.mxu0 %v3135
    %3162 = vmatprep.subr.mxu0 0.0
    %3163 = vmatpush1.msra.mxu0 %v3136
    %3164 = vmatprep.subr.mxu0 0.0
    %3165 = vmatpush1.msra.mxu0 %v3137
    %3166 = vmatprep.subr.mxu0 0.0
    %3167 = vmatpush1.msra.mxu0 %v3138
    %3168 = vmatprep.subr.mxu0 0.0
    %3169 = vmatpush1.msra.mxu0 %v3139
    %3170 = vmatprep.subr.mxu0 0.0
    %3171 = vmatpush1.msra.mxu0 %v3140
    %3172 = vmatprep.subr.mxu0 0.0
    %3173 = vmatpush1.msra.mxu0 %v3141
    %3174 = vmatprep.subr.mxu0 0.0
    %3175 = vmatpush1.msra.mxu0 0.0
    %3176 = vmatprep.subr.mxu0 0.0
    %3177 = vmatpush1.msra.mxu0 0.0
    %3178 = vmatprep.subr.mxu0 0.0
    %3179 = vmatpush1.msra.mxu0 0.0
    %3180 = vmatprep.subr.mxu0 0.0
    %3181 = vmatpush1.msra.mxu0 0.0
    %3182 = vmatprep.subr.mxu0 0.0
    %3183 = vmatpush1.msra.mxu0 0.0
    %3184 = vmatprep.subr.mxu0 0.0
    %3185 = vmatpush1.msra.mxu0 0.0
    %3186 = vmatprep.subr.mxu0 0.0
    %3187 = vmatpush1.msra.mxu0 0.0
    %3188 = vmatprep.subr.mxu0 0.0
    %3189 = vmatpush1.msra.mxu0 0.0
    %3190 = vmatprep.subr.mxu0 0.0
    %3191 = vmatpush1.msra.mxu0 0.0
    %3192 = vmatprep.subr.mxu0 0.0
    %3193 = vmatpush1.msra.mxu0 0.0
    %3194 = vmatprep.subr.mxu0 0.0
    %3195 = vmatpush1.msra.mxu0 0.0
    %3196 = vmatprep.subr.mxu0 0.0
    %3197 = vmatpush1.msra.mxu0 0.0
    %3198 = vmatprep.subr.mxu0 0.0
    %3199 = vmatpush1.msra.mxu0 0.0
    %3200 = vmatprep.subr.mxu0 0.0
    %3201 = vmatpush1.msra.mxu0 0.0
    %3202 = vmatprep.subr.mxu0 0.0
    %3203 = vmatpush1.msra.mxu0 0.0
    %3204 = vmatprep.subr.mxu0 0.0
    %3205 = vmatpush1.msra.mxu0 0.0
    %3206 = vmatprep.mubr.f32.mxu0 0.0
    %3207 = vmatmul.mubr.f32.gmra.mrb[0].mxu0 %v3109
    %v3208 = vpop.f32.mrb[0].mxu0
    %v3209 = vadd.f32 0.0, %v3208
    %v3210 = vpop.f32.mrb[0].mxu0
    %3211 = vmatprep.mubr.f32.mxu0 0.0
    %3212 = vmatmul.mubr.f32.gmra.mrb[0].mxu0 %v3110
    %v3213 = vpop.f32.mrb[0].mxu0
    %v3214 = vadd.f32 0.0, %v3213
    %v3215 = vpop.f32.mrb[0].mxu0
    %3216 = vmatprep.mubr.f32.mxu0 0.0
    %3217 = vmatmul.mubr.f32.gmra.mrb[0].mxu0 %v3111
    %v3218 = vpop.f32.mrb[0].mxu0
    %v3219 = vadd.f32 0.0, %v3218
    %v3220 = vpop.f32.mrb[0].mxu0
    %3221 = vmatprep.mubr.f32.mxu0 0.0
    %3222 = vmatmul.mubr.f32.gmra.mrb[0].mxu0 %v3112
    %v3223 = vpop.f32.mrb[0].mxu0
    %v3224 = vadd.f32 0.0, %v3223
    %v3225 = vpop.f32.mrb[0].mxu0
    %3226 = vmatprep.mubr.f32.mxu0 0.0
    %3227 = vmatmul.mubr.f32.gmra.mrb[0].mxu0 %v3113
    %v3228 = vpop.f32.mrb[0].mxu0
    %v3229 = vadd.f32 0.0, %v3228
    %v3230 = vpop.f32.mrb[0].mxu0
    %3231 = vmatprep.mubr.f32.mxu0 0.0
    %3232 = vmatmul.mubr.f32.gmra.mrb[0].mxu0 %v3114
    %v3233 = vpop.f32.mrb[0].mxu0
    %v3234 = vadd.f32 0.0, %v3233
    %v3235 = vpop.f32.mrb[0].mxu0
    %3236 = vmatprep.mubr.f32.mxu0 0.0
    %3237 = vmatmul.mubr.f32.gmra.mrb[0].mxu0 %v3115
    %v3238 = vpop.f32.mrb[0].mxu0
    %v3239 = vadd.f32 0.0, %v3238
    %v3240 = vpop.f32.mrb[0].mxu0
    %3241 = vmatprep.mubr.f32.mxu0 0.0
    %3242 = vmatmul.mubr.f32.gmra.mrb[0].mxu0 %v3116
    %v3243 = vpop.f32.mrb[0].mxu0
    %v3244 = vadd.f32 0.0, %v3243
    %v3245 = vpop.f32.mrb[0].mxu0
    %3246 = vmatprep.mubr.f32.mxu0 0.0
    %3247 = vmatmul.mubr.f32.gmra.mrb[0].mxu0 %v3117
    %v3248 = vpop.f32.mrb[0].mxu0
    %v3249 = vadd.f32 0.0, %v3248
    %v3250 = vpop.f32.mrb[0].mxu0
    %3251 = vmatprep.mubr.f32.mxu0 0.0
    %3252 = vmatmul.mubr.f32.gmra.mrb[0].mxu0 %v3118
    %v3253 = vpop.f32.mrb[0].mxu0
    %v3254 = vadd.f32 0.0, %v3253
    %v3255 = vpop.f32.mrb[0].mxu0
    %3256 = vmatprep.mubr.f32.mxu0 0.0
    %3257 = vmatmul.mubr.f32.gmra.mrb[0].mxu0 %v3119
    %v3258 = vpop.f32.mrb[0].mxu0
    %v3259 = vadd.f32 0.0, %v3258
    %v3260 = vpop.f32.mrb[0].mxu0
    %3261 = vmatprep.mubr.f32.mxu0 0.0
    %3262 = vmatmul.mubr.f32.gmra.mrb[0].mxu0 %v3120
    %v3263 = vpop.f32.mrb[0].mxu0
    %v3264 = vadd.f32 0.0, %v3263
    %v3265 = vpop.f32.mrb[0].mxu0
    %3266 = vmatprep.mubr.f32.mxu0 0.0
    %3267 = vmatmul.mubr.f32.gmra.mrb[0].mxu0 %v3121
    %v3268 = vpop.f32.mrb[0].mxu0
    %v3269 = vadd.f32 0.0, %v3268
    %v3270 = vpop.f32.mrb[0].mxu0
    %3271 = vmatprep.mubr.f32.mxu0 0.0
    %3272 = vmatmul.mubr.f32.gmra.mrb[0].mxu0 %v3122
    %v3273 = vpop.f32.mrb[0].mxu0
    %v3274 = vadd.f32 0.0, %v3273
    %v3275 = vpop.f32.mrb[0].mxu0
    %3276 = vmatprep.mubr.f32.mxu0 0.0
    %3277 = vmatmul.mubr.f32.gmra.mrb[0].mxu0 %v3123
    %v3278 = vpop.f32.mrb[0].mxu0
    %v3279 = vadd.f32 0.0, %v3278
    %v3280 = vpop.f32.mrb[0].mxu0
    %3281 = vmatprep.mubr.f32.mxu0 0.0
    %3282 = vmatmul.mubr.f32.gmra.mrb[0].mxu0 %v3124
    %v3283 = vpop.f32.mrb[0].mxu0
    %v3284 = vadd.f32 0.0, %v3283
    %v3285 = vpop.f32.mrb[0].mxu0
    %3286 = vdwg.mxu0
    %v3287 = vadd.f32 %v3093, %v3209
    %v3288 = vadd.f32 %v3094, %v3214
    %v3289 = vadd.f32 %v3095, %v3219
    %v3290 = vadd.f32 %v3096, %v3224
    %v3291 = vadd.f32 %v3097, %v3229
    %v3292 = vadd.f32 %v3098, %v3234
    %v3293 = vadd.f32 %v3099, %v3239
    %v3294 = vadd.f32 %v3100, %v3244
    %v3295 = vadd.f32 %v3101, %v3249
    %v3296 = vadd.f32 %v3102, %v3254
    %v3297 = vadd.f32 %v3103, %v3259
    %v3298 = vadd.f32 %v3104, %v3264
    %v3299 = vadd.f32 %v3105, %v3269
    %v3300 = vadd.f32 %v3106, %v3274
    %v3301 = vadd.f32 %v3107, %v3279
    %v3302 = vadd.f32 %v3108, %v3284
    %s3303 = scalar_lea.vmem [#allocation4], 16
    %v3304 = vld [vmem:[%s3303] sm:$0xff]
    %v3305 = vld [vmem:[%s3303 + $0x10] sm:$0xff]
    %v3306 = vld [vmem:[%s3303 + $0x20] sm:$0xff]
    %v3307 = vld [vmem:[%s3303 + $0x30] sm:$0xff]
    %v3308 = vld [vmem:[%s3303 + $0x40] sm:$0xff]
    %v3309 = vld [vmem:[%s3303 + $0x50] sm:$0xff]
    %v3310 = vld [vmem:[%s3303 + $0x60] sm:$0xff]
    %v3311 = vld [vmem:[%s3303 + $0x70] sm:$0xff]
    %v3312 = vld [vmem:[%s3303 + $0xc0] sm:$0xff]
    %v3313 = vld [vmem:[%s3303 + $0xd0] sm:$0xff]
    %v3314 = vld [vmem:[%s3303 + $0xe0] sm:$0xff]
    %v3315 = vld [vmem:[%s3303 + $0xf0] sm:$0xff]
    %v3316 = vld [vmem:[%s3303 + $0x100] sm:$0xff]
    %v3317 = vld [vmem:[%s3303 + $0x110] sm:$0xff]
    %v3318 = vld [vmem:[%s3303 + $0x120] sm:$0xff]
    %v3319 = vld [vmem:[%s3303 + $0x130] sm:$0xff]
    %s3320 = scalar_lea.vmem %s3, 640
    %v3321 = vld [vmem:[%s3320] sm:$0xff]
    %v3322 = vld [vmem:[%s3320 + $0x8] sm:$0xff]
    %v3323 = vld [vmem:[%s3320 + $0x10] sm:$0xff]
    %v3324 = vld [vmem:[%s3320 + $0x18] sm:$0xff]
    %v3325 = vld [vmem:[%s3320 + $0x20] sm:$0xff]
    %v3326 = vld [vmem:[%s3320 + $0x28] sm:$0xff]
    %v3327 = vld [vmem:[%s3320 + $0x30] sm:$0xff]
    %v3328 = vld [vmem:[%s3320 + $0x38] sm:$0xff]
    %v3329 = vld [vmem:[%s3320 + $0x40] sm:$0xff]
    %v3330 = vld [vmem:[%s3320 + $0x48] sm:$0xff]
    %v3331 = vld [vmem:[%s3320 + $0x50] sm:$0xff]
    %v3332 = vld [vmem:[%s3320 + $0x58] sm:$0xff]
    %v3333 = vld [vmem:[%s3320 + $0x60] sm:$0xff]
    %v3334 = vld [vmem:[%s3320 + $0x68] sm:$0xff]
    %v3335 = vld [vmem:[%s3320 + $0x70] sm:$0xff]
    %v3336 = vld [vmem:[%s3320 + $0x78] sm:$0xff]
    %3337 = vmatprep.subr.mxu0 0.0
    %3338 = vmatpush1.msra.mxu0 %v3321
    %3339 = vmatprep.subr.mxu0 0.0
    %3340 = vmatpush1.msra.mxu0 %v3322
    %3341 = vmatprep.subr.mxu0 0.0
    %3342 = vmatpush1.msra.mxu0 %v3323
    %3343 = vmatprep.subr.mxu0 0.0
    %3344 = vmatpush1.msra.mxu0 %v3324
    %3345 = vmatprep.subr.mxu0 0.0
    %3346 = vmatpush1.msra.mxu0 %v3325
    %3347 = vmatprep.subr.mxu0 0.0
    %3348 = vmatpush1.msra.mxu0 %v3326
    %3349 = vmatprep.subr.mxu0 0.0
    %3350 = vmatpush1.msra.mxu0 %v3327
    %3351 = vmatprep.subr.mxu0 0.0
    %3352 = vmatpush1.msra.mxu0 %v3328
    %3353 = vmatprep.subr.mxu0 0.0
    %3354 = vmatpush1.msra.mxu0 %v3329
    %3355 = vmatprep.subr.mxu0 0.0
    %3356 = vmatpush1.msra.mxu0 %v3330
    %3357 = vmatprep.subr.mxu0 0.0
    %3358 = vmatpush1.msra.mxu0 %v3331
    %3359 = vmatprep.subr.mxu0 0.0
    %3360 = vmatpush1.msra.mxu0 %v3332
    %3361 = vmatprep.subr.mxu0 0.0
    %3362 = vmatpush1.msra.mxu0 %v3333
    %3363 = vmatprep.subr.mxu0 0.0
    %3364 = vmatpush1.msra.mxu0 %v3334
    %3365 = vmatprep.subr.mxu0 0.0
    %3366 = vmatpush1.msra.mxu0 %v3335
    %3367 = vmatprep.subr.mxu0 0.0
    %3368 = vmatpush1.msra.mxu0 %v3336
    %3369 = vmatprep.subr.mxu0 0.0
    %3370 = vmatpush1.msra.mxu0 0.0
    %3371 = vmatprep.subr.mxu0 0.0
    %3372 = vmatpush1.msra.mxu0 0.0
    %3373 = vmatprep.subr.mxu0 0.0
    %3374 = vmatpush1.msra.mxu0 0.0
    %3375 = vmatprep.subr.mxu0 0.0
    %3376 = vmatpush1.msra.mxu0 0.0
    %3377 = vmatprep.subr.mxu0 0.0
    %3378 = vmatpush1.msra.mxu0 0.0
    %3379 = vmatprep.subr.mxu0 0.0
    %3380 = vmatpush1.msra.mxu0 0.0
    %3381 = vmatprep.subr.mxu0 0.0
    %3382 = vmatpush1.msra.mxu0 0.0
    %3383 = vmatprep.subr.mxu0 0.0
    %3384 = vmatpush1.msra.mxu0 0.0
    %3385 = vmatprep.subr.mxu0 0.0
    %3386 = vmatpush1.msra.mxu0 0.0
    %3387 = vmatprep.subr.mxu0 0.0
    %3388 = vmatpush1.msra.mxu0 0.0
    %3389 = vmatprep.subr.mxu0 0.0
    %3390 = vmatpush1.msra.mxu0 0.0
    %3391 = vmatprep.subr.mxu0 0.0
    %3392 = vmatpush1.msra.mxu0 0.0
    %3393 = vmatprep.subr.mxu0 0.0
    %3394 = vmatpush1.msra.mxu0 0.0
    %3395 = vmatprep.subr.mxu0 0.0
    %3396 = vmatpush1.msra.mxu0 0.0
    %3397 = vmatprep.subr.mxu0 0.0
    %3398 = vmatpush1.msra.mxu0 0.0
    %3399 = vmatprep.subr.mxu0 0.0
    %3400 = vmatpush1.msra.mxu0 0.0
    %3401 = vmatprep.mubr.f32.mxu0 0.0
    %3402 = vmatmul.mubr.f32.gmra.mrb[0].mxu0 %v3304
    %v3403 = vpop.f32.mrb[0].mxu0
    %v3404 = vadd.f32 0.0, %v3403
    %v3405 = vpop.f32.mrb[0].mxu0
    %3406 = vmatprep.mubr.f32.mxu0 0.0
    %3407 = vmatmul.mubr.f32.gmra.mrb[0].mxu0 %v3305
    %v3408 = vpop.f32.mrb[0].mxu0
    %v3409 = vadd.f32 0.0, %v3408
    %v3410 = vpop.f32.mrb[0].mxu0
    %3411 = vmatprep.mubr.f32.mxu0 0.0
    %3412 = vmatmul.mubr.f32.gmra.mrb[0].mxu0 %v3306
    %v3413 = vpop.f32.mrb[0].mxu0
    %v3414 = vadd.f32 0.0, %v3413
    %v3415 = vpop.f32.mrb[0].mxu0
    %3416 = vmatprep.mubr.f32.mxu0 0.0
    %3417 = vmatmul.mubr.f32.gmra.mrb[0].mxu0 %v3307
    %v3418 = vpop.f32.mrb[0].mxu0
    %v3419 = vadd.f32 0.0, %v3418
    %v3420 = vpop.f32.mrb[0].mxu0
    %3421 = vmatprep.mubr.f32.mxu0 0.0
    %3422 = vmatmul.mubr.f32.gmra.mrb[0].mxu0 %v3308
    %v3423 = vpop.f32.mrb[0].mxu0
    %v3424 = vadd.f32 0.0, %v3423
    %v3425 = vpop.f32.mrb[0].mxu0
    %3426 = vmatprep.mubr.f32.mxu0 0.0
    %3427 = vmatmul.mubr.f32.gmra.mrb[0].mxu0 %v3309
    %v3428 = vpop.f32.mrb[0].mxu0
    %v3429 = vadd.f32 0.0, %v3428
    %v3430 = vpop.f32.mrb[0].mxu0
    %3431 = vmatprep.mubr.f32.mxu0 0.0
    %3432 = vmatmul.mubr.f32.gmra.mrb[0].mxu0 %v3310
    %v3433 = vpop.f32.mrb[0].mxu0
    %v3434 = vadd.f32 0.0, %v3433
    %v3435 = vpop.f32.mrb[0].mxu0
    %3436 = vmatprep.mubr.f32.mxu0 0.0
    %3437 = vmatmul.mubr.f32.gmra.mrb[0].mxu0 %v3311
    %v3438 = vpop.f32.mrb[0].mxu0
    %v3439 = vadd.f32 0.0, %v3438
    %v3440 = vpop.f32.mrb[0].mxu0
    %3441 = vmatprep.mubr.f32.mxu0 0.0
    %3442 = vmatmul.mubr.f32.gmra.mrb[0].mxu0 %v3312
    %v3443 = vpop.f32.mrb[0].mxu0
    %v3444 = vadd.f32 0.0, %v3443
    %v3445 = vpop.f32.mrb[0].mxu0
    %3446 = vmatprep.mubr.f32.mxu0 0.0
    %3447 = vmatmul.mubr.f32.gmra.mrb[0].mxu0 %v3313
    %v3448 = vpop.f32.mrb[0].mxu0
    %v3449 = vadd.f32 0.0, %v3448
    %v3450 = vpop.f32.mrb[0].mxu0
    %3451 = vmatprep.mubr.f32.mxu0 0.0
    %3452 = vmatmul.mubr.f32.gmra.mrb[0].mxu0 %v3314
    %v3453 = vpop.f32.mrb[0].mxu0
    %v3454 = vadd.f32 0.0, %v3453
    %v3455 = vpop.f32.mrb[0].mxu0
    %3456 = vmatprep.mubr.f32.mxu0 0.0
    %3457 = vmatmul.mubr.f32.gmra.mrb[0].mxu0 %v3315
    %v3458 = vpop.f32.mrb[0].mxu0
    %v3459 = vadd.f32 0.0, %v3458
    %v3460 = vpop.f32.mrb[0].mxu0
    %3461 = vmatprep.mubr.f32.mxu0 0.0
    %3462 = vmatmul.mubr.f32.gmra.mrb[0].mxu0 %v3316
    %v3463 = vpop.f32.mrb[0].mxu0
    %v3464 = vadd.f32 0.0, %v3463
    %v3465 = vpop.f32.mrb[0].mxu0
    %3466 = vmatprep.mubr.f32.mxu0 0.0
    %3467 = vmatmul.mubr.f32.gmra.mrb[0].mxu0 %v3317
    %v3468 = vpop.f32.mrb[0].mxu0
    %v3469 = vadd.f32 0.0, %v3468
    %v3470 = vpop.f32.mrb[0].mxu0
    %3471 = vmatprep.mubr.f32.mxu0 0.0
    %3472 = vmatmul.mubr.f32.gmra.mrb[0].mxu0 %v3318
    %v3473 = vpop.f32.mrb[0].mxu0
    %v3474 = vadd.f32 0.0, %v3473
    %v3475 = vpop.f32.mrb[0].mxu0
    %3476 = vmatprep.mubr.f32.mxu0 0.0
    %3477 = vmatmul.mubr.f32.gmra.mrb[0].mxu0 %v3319
    %v3478 = vpop.f32.mrb[0].mxu0
    %v3479 = vadd.f32 0.0, %v3478
    %v3480 = vpop.f32.mrb[0].mxu0
    %3481 = vdwg.mxu0
    %v3482 = vadd.f32 %v3287, %v3404
    %v3483 = vadd.f32 %v3288, %v3409
    %v3484 = vadd.f32 %v3289, %v3414
    %v3485 = vadd.f32 %v3290, %v3419
    %v3486 = vadd.f32 %v3291, %v3424
    %v3487 = vadd.f32 %v3292, %v3429
    %v3488 = vadd.f32 %v3293, %v3434
    %v3489 = vadd.f32 %v3294, %v3439
    %v3490 = vadd.f32 %v3295, %v3444
    %v3491 = vadd.f32 %v3296, %v3449
    %v3492 = vadd.f32 %v3297, %v3454
    %v3493 = vadd.f32 %v3298, %v3459
    %v3494 = vadd.f32 %v3299, %v3464
    %v3495 = vadd.f32 %v3300, %v3469
    %v3496 = vadd.f32 %v3301, %v3474
    %v3497 = vadd.f32 %v3302, %v3479
    %v3498 = vld [vmem:[%s3303 + $0x1] sm:$0xff]
    %v3499 = vld [vmem:[%s3303 + $0x11] sm:$0xff]
    %v3500 = vld [vmem:[%s3303 + $0x21] sm:$0xff]
    %v3501 = vld [vmem:[%s3303 + $0x31] sm:$0xff]
    %v3502 = vld [vmem:[%s3303 + $0x41] sm:$0xff]
    %v3503 = vld [vmem:[%s3303 + $0x51] sm:$0xff]
    %v3504 = vld [vmem:[%s3303 + $0x61] sm:$0xff]
    %v3505 = vld [vmem:[%s3303 + $0x71] sm:$0xff]
    %v3506 = vld [vmem:[%s3303 + $0xc1] sm:$0xff]
    %v3507 = vld [vmem:[%s3303 + $0xd1] sm:$0xff]
    %v3508 = vld [vmem:[%s3303 + $0xe1] sm:$0xff]
    %v3509 = vld [vmem:[%s3303 + $0xf1] sm:$0xff]
    %v3510 = vld [vmem:[%s3303 + $0x101] sm:$0xff]
    %v3511 = vld [vmem:[%s3303 + $0x111] sm:$0xff]
    %v3512 = vld [vmem:[%s3303 + $0x121] sm:$0xff]
    %v3513 = vld [vmem:[%s3303 + $0x131] sm:$0xff]
    %s3514 = scalar_lea.vmem %s3, 768
    %v3515 = vld [vmem:[%s3514] sm:$0xff]
    %v3516 = vld [vmem:[%s3514 + $0x8] sm:$0xff]
    %v3517 = vld [vmem:[%s3514 + $0x10] sm:$0xff]
    %v3518 = vld [vmem:[%s3514 + $0x18] sm:$0xff]
    %v3519 = vld [vmem:[%s3514 + $0x20] sm:$0xff]
    %v3520 = vld [vmem:[%s3514 + $0x28] sm:$0xff]
    %v3521 = vld [vmem:[%s3514 + $0x30] sm:$0xff]
    %v3522 = vld [vmem:[%s3514 + $0x38] sm:$0xff]
    %v3523 = vld [vmem:[%s3514 + $0x40] sm:$0xff]
    %v3524 = vld [vmem:[%s3514 + $0x48] sm:$0xff]
    %v3525 = vld [vmem:[%s3514 + $0x50] sm:$0xff]
    %v3526 = vld [vmem:[%s3514 + $0x58] sm:$0xff]
    %v3527 = vld [vmem:[%s3514 + $0x60] sm:$0xff]
    %v3528 = vld [vmem:[%s3514 + $0x68] sm:$0xff]
    %v3529 = vld [vmem:[%s3514 + $0x70] sm:$0xff]
    %v3530 = vld [vmem:[%s3514 + $0x78] sm:$0xff]
    %3531 = vmatprep.subr.mxu0 0.0
    %3532 = vmatpush1.msra.mxu0 %v3515
    %3533 = vmatprep.subr.mxu0 0.0
    %3534 = vmatpush1.msra.mxu0 %v3516
    %3535 = vmatprep.subr.mxu0 0.0
    %3536 = vmatpush1.msra.mxu0 %v3517
    %3537 = vmatprep.subr.mxu0 0.0
    %3538 = vmatpush1.msra.mxu0 %v3518
    %3539 = vmatprep.subr.mxu0 0.0
    %3540 = vmatpush1.msra.mxu0 %v3519
    %3541 = vmatprep.subr.mxu0 0.0
    %3542 = vmatpush1.msra.mxu0 %v3520
    %3543 = vmatprep.subr.mxu0 0.0
    %3544 = vmatpush1.msra.mxu0 %v3521
    %3545 = vmatprep.subr.mxu0 0.0
    %3546 = vmatpush1.msra.mxu0 %v3522
    %3547 = vmatprep.subr.mxu0 0.0
    %3548 = vmatpush1.msra.mxu0 %v3523
    %3549 = vmatprep.subr.mxu0 0.0
    %3550 = vmatpush1.msra.mxu0 %v3524
    %3551 = vmatprep.subr.mxu0 0.0
    %3552 = vmatpush1.msra.mxu0 %v3525
    %3553 = vmatprep.subr.mxu0 0.0
    %3554 = vmatpush1.msra.mxu0 %v3526
    %3555 = vmatprep.subr.mxu0 0.0
    %3556 = vmatpush1.msra.mxu0 %v3527
    %3557 = vmatprep.subr.mxu0 0.0
    %3558 = vmatpush1.msra.mxu0 %v3528
    %3559 = vmatprep.subr.mxu0 0.0
    %3560 = vmatpush1.msra.mxu0 %v3529
    %3561 = vmatprep.subr.mxu0 0.0
    %3562 = vmatpush1.msra.mxu0 %v3530
    %3563 = vmatprep.subr.mxu0 0.0
    %3564 = vmatpush1.msra.mxu0 0.0
    %3565 = vmatprep.subr.mxu0 0.0
    %3566 = vmatpush1.msra.mxu0 0.0
    %3567 = vmatprep.subr.mxu0 0.0
    %3568 = vmatpush1.msra.mxu0 0.0
    %3569 = vmatprep.subr.mxu0 0.0
    %3570 = vmatpush1.msra.mxu0 0.0
    %3571 = vmatprep.subr.mxu0 0.0
    %3572 = vmatpush1.msra.mxu0 0.0
    %3573 = vmatprep.subr.mxu0 0.0
    %3574 = vmatpush1.msra.mxu0 0.0
    %3575 = vmatprep.subr.mxu0 0.0
    %3576 = vmatpush1.msra.mxu0 0.0
    %3577 = vmatprep.subr.mxu0 0.0
    %3578 = vmatpush1.msra.mxu0 0.0
    %3579 = vmatprep.subr.mxu0 0.0
    %3580 = vmatpush1.msra.mxu0 0.0
    %3581 = vmatprep.subr.mxu0 0.0
    %3582 = vmatpush1.msra.mxu0 0.0
    %3583 = vmatprep.subr.mxu0 0.0
    %3584 = vmatpush1.msra.mxu0 0.0
    %3585 = vmatprep.subr.mxu0 0.0
    %3586 = vmatpush1.msra.mxu0 0.0
    %3587 = vmatprep.subr.mxu0 0.0
    %3588 = vmatpush1.msra.mxu0 0.0
    %3589 = vmatprep.subr.mxu0 0.0
    %3590 = vmatpush1.msra.mxu0 0.0
    %3591 = vmatprep.subr.mxu0 0.0
    %3592 = vmatpush1.msra.mxu0 0.0
    %3593 = vmatprep.subr.mxu0 0.0
    %3594 = vmatpush1.msra.mxu0 0.0
    %3595 = vmatprep.mubr.f32.mxu0 0.0
    %3596 = vmatmul.mubr.f32.gmra.mrb[0].mxu0 %v3498
    %v3597 = vpop.f32.mrb[0].mxu0
    %v3598 = vadd.f32 0.0, %v3597
    %v3599 = vpop.f32.mrb[0].mxu0
    %3600 = vmatprep.mubr.f32.mxu0 0.0
    %3601 = vmatmul.mubr.f32.gmra.mrb[0].mxu0 %v3499
    %v3602 = vpop.f32.mrb[0].mxu0
    %v3603 = vadd.f32 0.0, %v3602
    %v3604 = vpop.f32.mrb[0].mxu0
    %3605 = vmatprep.mubr.f32.mxu0 0.0
    %3606 = vmatmul.mubr.f32.gmra.mrb[0].mxu0 %v3500
    %v3607 = vpop.f32.mrb[0].mxu0
    %v3608 = vadd.f32 0.0, %v3607
    %v3609 = vpop.f32.mrb[0].mxu0
    %3610 = vmatprep.mubr.f32.mxu0 0.0
    %3611 = vmatmul.mubr.f32.gmra.mrb[0].mxu0 %v3501
    %v3612 = vpop.f32.mrb[0].mxu0
    %v3613 = vadd.f32 0.0, %v3612
    %v3614 = vpop.f32.mrb[0].mxu0
    %3615 = vmatprep.mubr.f32.mxu0 0.0
    %3616 = vmatmul.mubr.f32.gmra.mrb[0].mxu0 %v3502
    %v3617 = vpop.f32.mrb[0].mxu0
    %v3618 = vadd.f32 0.0, %v3617
    %v3619 = vpop.f32.mrb[0].mxu0
    %3620 = vmatprep.mubr.f32.mxu0 0.0
    %3621 = vmatmul.mubr.f32.gmra.mrb[0].mxu0 %v3503
    %v3622 = vpop.f32.mrb[0].mxu0
    %v3623 = vadd.f32 0.0, %v3622
    %v3624 = vpop.f32.mrb[0].mxu0
    %3625 = vmatprep.mubr.f32.mxu0 0.0
    %3626 = vmatmul.mubr.f32.gmra.mrb[0].mxu0 %v3504
    %v3627 = vpop.f32.mrb[0].mxu0
    %v3628 = vadd.f32 0.0, %v3627
    %v3629 = vpop.f32.mrb[0].mxu0
    %3630 = vmatprep.mubr.f32.mxu0 0.0
    %3631 = vmatmul.mubr.f32.gmra.mrb[0].mxu0 %v3505
    %v3632 = vpop.f32.mrb[0].mxu0
    %v3633 = vadd.f32 0.0, %v3632
    %v3634 = vpop.f32.mrb[0].mxu0
    %3635 = vmatprep.mubr.f32.mxu0 0.0
    %3636 = vmatmul.mubr.f32.gmra.mrb[0].mxu0 %v3506
    %v3637 = vpop.f32.mrb[0].mxu0
    %v3638 = vadd.f32 0.0, %v3637
    %v3639 = vpop.f32.mrb[0].mxu0
    %3640 = vmatprep.mubr.f32.mxu0 0.0
    %3641 = vmatmul.mubr.f32.gmra.mrb[0].mxu0 %v3507
    %v3642 = vpop.f32.mrb[0].mxu0
    %v3643 = vadd.f32 0.0, %v3642
    %v3644 = vpop.f32.mrb[0].mxu0
    %3645 = vmatprep.mubr.f32.mxu0 0.0
    %3646 = vmatmul.mubr.f32.gmra.mrb[0].mxu0 %v3508
    %v3647 = vpop.f32.mrb[0].mxu0
    %v3648 = vadd.f32 0.0, %v3647
    %v3649 = vpop.f32.mrb[0].mxu0
    %3650 = vmatprep.mubr.f32.mxu0 0.0
    %3651 = vmatmul.mubr.f32.gmra.mrb[0].mxu0 %v3509
    %v3652 = vpop.f32.mrb[0].mxu0
    %v3653 = vadd.f32 0.0, %v3652
    %v3654 = vpop.f32.mrb[0].mxu0
    %3655 = vmatprep.mubr.f32.mxu0 0.0
    %3656 = vmatmul.mubr.f32.gmra.mrb[0].mxu0 %v3510
    %v3657 = vpop.f32.mrb[0].mxu0
    %v3658 = vadd.f32 0.0, %v3657
    %v3659 = vpop.f32.mrb[0].mxu0
    %3660 = vmatprep.mubr.f32.mxu0 0.0
    %3661 = vmatmul.mubr.f32.gmra.mrb[0].mxu0 %v3511
    %v3662 = vpop.f32.mrb[0].mxu0
    %v3663 = vadd.f32 0.0, %v3662
    %v3664 = vpop.f32.mrb[0].mxu0
    %3665 = vmatprep.mubr.f32.mxu0 0.0
    %3666 = vmatmul.mubr.f32.gmra.mrb[0].mxu0 %v3512
    %v3667 = vpop.f32.mrb[0].mxu0
    %v3668 = vadd.f32 0.0, %v3667
    %v3669 = vpop.f32.mrb[0].mxu0
    %3670 = vmatprep.mubr.f32.mxu0 0.0
    %3671 = vmatmul.mubr.f32.gmra.mrb[0].mxu0 %v3513
    %v3672 = vpop.f32.mrb[0].mxu0
    %v3673 = vadd.f32 0.0, %v3672
    %v3674 = vpop.f32.mrb[0].mxu0
    %3675 = vdwg.mxu0
    %v3676 = vadd.f32 %v3482, %v3598
    %v3677 = vadd.f32 %v3483, %v3603
    %v3678 = vadd.f32 %v3484, %v3608
    %v3679 = vadd.f32 %v3485, %v3613
    %v3680 = vadd.f32 %v3486, %v3618
    %v3681 = vadd.f32 %v3487, %v3623
    %v3682 = vadd.f32 %v3488, %v3628
    %v3683 = vadd.f32 %v3489, %v3633
    %v3684 = vadd.f32 %v3490, %v3638
    %v3685 = vadd.f32 %v3491, %v3643
    %v3686 = vadd.f32 %v3492, %v3648
    %v3687 = vadd.f32 %v3493, %v3653
    %v3688 = vadd.f32 %v3494, %v3658
    %v3689 = vadd.f32 %v3495, %v3663
    %v3690 = vadd.f32 %v3496, %v3668
    %v3691 = vadd.f32 %v3497, %v3673
    %v3692 = vld [vmem:[%s3303 + $0x2] sm:$0xff]
    %v3693 = vld [vmem:[%s3303 + $0x12] sm:$0xff]
    %v3694 = vld [vmem:[%s3303 + $0x22] sm:$0xff]
    %v3695 = vld [vmem:[%s3303 + $0x32] sm:$0xff]
    %v3696 = vld [vmem:[%s3303 + $0x42] sm:$0xff]
    %v3697 = vld [vmem:[%s3303 + $0x52] sm:$0xff]
    %v3698 = vld [vmem:[%s3303 + $0x62] sm:$0xff]
    %v3699 = vld [vmem:[%s3303 + $0x72] sm:$0xff]
    %v3700 = vld [vmem:[%s3303 + $0xc2] sm:$0xff]
    %v3701 = vld [vmem:[%s3303 + $0xd2] sm:$0xff]
    %v3702 = vld [vmem:[%s3303 + $0xe2] sm:$0xff]
    %v3703 = vld [vmem:[%s3303 + $0xf2] sm:$0xff]
    %v3704 = vld [vmem:[%s3303 + $0x102] sm:$0xff]
    %v3705 = vld [vmem:[%s3303 + $0x112] sm:$0xff]
    %v3706 = vld [vmem:[%s3303 + $0x122] sm:$0xff]
    %v3707 = vld [vmem:[%s3303 + $0x132] sm:$0xff]
    %s3708 = scalar_lea.vmem %s3, 896
    %v3709 = vld [vmem:[%s3708] sm:$0xff]
    %v3710 = vld [vmem:[%s3708 + $0x8] sm:$0xff]
    %v3711 = vld [vmem:[%s3708 + $0x10] sm:$0xff]
    %v3712 = vld [vmem:[%s3708 + $0x18] sm:$0xff]
    %v3713 = vld [vmem:[%s3708 + $0x20] sm:$0xff]
    %v3714 = vld [vmem:[%s3708 + $0x28] sm:$0xff]
    %v3715 = vld [vmem:[%s3708 + $0x30] sm:$0xff]
    %v3716 = vld [vmem:[%s3708 + $0x38] sm:$0xff]
    %v3717 = vld [vmem:[%s3708 + $0x40] sm:$0xff]
    %v3718 = vld [vmem:[%s3708 + $0x48] sm:$0xff]
    %v3719 = vld [vmem:[%s3708 + $0x50] sm:$0xff]
    %v3720 = vld [vmem:[%s3708 + $0x58] sm:$0xff]
    %v3721 = vld [vmem:[%s3708 + $0x60] sm:$0xff]
    %v3722 = vld [vmem:[%s3708 + $0x68] sm:$0xff]
    %v3723 = vld [vmem:[%s3708 + $0x70] sm:$0xff]
    %v3724 = vld [vmem:[%s3708 + $0x78] sm:$0xff]
    %3725 = vmatprep.subr.mxu0 0.0
    %3726 = vmatpush1.msra.mxu0 %v3709
    %3727 = vmatprep.subr.mxu0 0.0
    %3728 = vmatpush1.msra.mxu0 %v3710
    %3729 = vmatprep.subr.mxu0 0.0
    %3730 = vmatpush1.msra.mxu0 %v3711
    %3731 = vmatprep.subr.mxu0 0.0
    %3732 = vmatpush1.msra.mxu0 %v3712
    %3733 = vmatprep.subr.mxu0 0.0
    %3734 = vmatpush1.msra.mxu0 %v3713
    %3735 = vmatprep.subr.mxu0 0.0
    %3736 = vmatpush1.msra.mxu0 %v3714
    %3737 = vmatprep.subr.mxu0 0.0
    %3738 = vmatpush1.msra.mxu0 %v3715
    %3739 = vmatprep.subr.mxu0 0.0
    %3740 = vmatpush1.msra.mxu0 %v3716
    %3741 = vmatprep.subr.mxu0 0.0
    %3742 = vmatpush1.msra.mxu0 %v3717
    %3743 = vmatprep.subr.mxu0 0.0
    %3744 = vmatpush1.msra.mxu0 %v3718
    %3745 = vmatprep.subr.mxu0 0.0
    %3746 = vmatpush1.msra.mxu0 %v3719
    %3747 = vmatprep.subr.mxu0 0.0
    %3748 = vmatpush1.msra.mxu0 %v3720
    %3749 = vmatprep.subr.mxu0 0.0
    %3750 = vmatpush1.msra.mxu0 %v3721
    %3751 = vmatprep.subr.mxu0 0.0
    %3752 = vmatpush1.msra.mxu0 %v3722
    %3753 = vmatprep.subr.mxu0 0.0
    %3754 = vmatpush1.msra.mxu0 %v3723
    %3755 = vmatprep.subr.mxu0 0.0
    %3756 = vmatpush1.msra.mxu0 %v3724
    %3757 = vmatprep.subr.mxu0 0.0
    %3758 = vmatpush1.msra.mxu0 0.0
    %3759 = vmatprep.subr.mxu0 0.0
    %3760 = vmatpush1.msra.mxu0 0.0
    %3761 = vmatprep.subr.mxu0 0.0
    %3762 = vmatpush1.msra.mxu0 0.0
    %3763 = vmatprep.subr.mxu0 0.0
    %3764 = vmatpush1.msra.mxu0 0.0
    %3765 = vmatprep.subr.mxu0 0.0
    %3766 = vmatpush1.msra.mxu0 0.0
    %3767 = vmatprep.subr.mxu0 0.0
    %3768 = vmatpush1.msra.mxu0 0.0
    %3769 = vmatprep.subr.mxu0 0.0
    %3770 = vmatpush1.msra.mxu0 0.0
    %3771 = vmatprep.subr.mxu0 0.0
    %3772 = vmatpush1.msra.mxu0 0.0
    %3773 = vmatprep.subr.mxu0 0.0
    %3774 = vmatpush1.msra.mxu0 0.0
    %3775 = vmatprep.subr.mxu0 0.0
    %3776 = vmatpush1.msra.mxu0 0.0
    %3777 = vmatprep.subr.mxu0 0.0
    %3778 = vmatpush1.msra.mxu0 0.0
    %3779 = vmatprep.subr.mxu0 0.0
    %3780 = vmatpush1.msra.mxu0 0.0
    %3781 = vmatprep.subr.mxu0 0.0
    %3782 = vmatpush1.msra.mxu0 0.0
    %3783 = vmatprep.subr.mxu0 0.0
    %3784 = vmatpush1.msra.mxu0 0.0
    %3785 = vmatprep.subr.mxu0 0.0
    %3786 = vmatpush1.msra.mxu0 0.0
    %3787 = vmatprep.subr.mxu0 0.0
    %3788 = vmatpush1.msra.mxu0 0.0
    %3789 = vmatprep.mubr.f32.mxu0 0.0
    %3790 = vmatmul.mubr.f32.gmra.mrb[0].mxu0 %v3692
    %v3791 = vpop.f32.mrb[0].mxu0
    %v3792 = vadd.f32 0.0, %v3791
    %v3793 = vpop.f32.mrb[0].mxu0
    %3794 = vmatprep.mubr.f32.mxu0 0.0
    %3795 = vmatmul.mubr.f32.gmra.mrb[0].mxu0 %v3693
    %v3796 = vpop.f32.mrb[0].mxu0
    %v3797 = vadd.f32 0.0, %v3796
    %v3798 = vpop.f32.mrb[0].mxu0
    %3799 = vmatprep.mubr.f32.mxu0 0.0
    %3800 = vmatmul.mubr.f32.gmra.mrb[0].mxu0 %v3694
    %v3801 = vpop.f32.mrb[0].mxu0
    %v3802 = vadd.f32 0.0, %v3801
    %v3803 = vpop.f32.mrb[0].mxu0
    %3804 = vmatprep.mubr.f32.mxu0 0.0
    %3805 = vmatmul.mubr.f32.gmra.mrb[0].mxu0 %v3695
    %v3806 = vpop.f32.mrb[0].mxu0
    %v3807 = vadd.f32 0.0, %v3806
    %v3808 = vpop.f32.mrb[0].mxu0
    %3809 = vmatprep.mubr.f32.mxu0 0.0
    %3810 = vmatmul.mubr.f32.gmra.mrb[0].mxu0 %v3696
    %v3811 = vpop.f32.mrb[0].mxu0
    %v3812 = vadd.f32 0.0, %v3811
    %v3813 = vpop.f32.mrb[0].mxu0
    %3814 = vmatprep.mubr.f32.mxu0 0.0
    %3815 = vmatmul.mubr.f32.gmra.mrb[0].mxu0 %v3697
    %v3816 = vpop.f32.mrb[0].mxu0
    %v3817 = vadd.f32 0.0, %v3816
    %v3818 = vpop.f32.mrb[0].mxu0
    %3819 = vmatprep.mubr.f32.mxu0 0.0
    %3820 = vmatmul.mubr.f32.gmra.mrb[0].mxu0 %v3698
    %v3821 = vpop.f32.mrb[0].mxu0
    %v3822 = vadd.f32 0.0, %v3821
    %v3823 = vpop.f32.mrb[0].mxu0
    %3824 = vmatprep.mubr.f32.mxu0 0.0
    %3825 = vmatmul.mubr.f32.gmra.mrb[0].mxu0 %v3699
    %v3826 = vpop.f32.mrb[0].mxu0
    %v3827 = vadd.f32 0.0, %v3826
    %v3828 = vpop.f32.mrb[0].mxu0
    %3829 = vmatprep.mubr.f32.mxu0 0.0
    %3830 = vmatmul.mubr.f32.gmra.mrb[0].mxu0 %v3700
    %v3831 = vpop.f32.mrb[0].mxu0
    %v3832 = vadd.f32 0.0, %v3831
    %v3833 = vpop.f32.mrb[0].mxu0
    %3834 = vmatprep.mubr.f32.mxu0 0.0
    %3835 = vmatmul.mubr.f32.gmra.mrb[0].mxu0 %v3701
    %v3836 = vpop.f32.mrb[0].mxu0
    %v3837 = vadd.f32 0.0, %v3836
    %v3838 = vpop.f32.mrb[0].mxu0
    %3839 = vmatprep.mubr.f32.mxu0 0.0
    %3840 = vmatmul.mubr.f32.gmra.mrb[0].mxu0 %v3702
    %v3841 = vpop.f32.mrb[0].mxu0
    %v3842 = vadd.f32 0.0, %v3841
    %v3843 = vpop.f32.mrb[0].mxu0
    %3844 = vmatprep.mubr.f32.mxu0 0.0
    %3845 = vmatmul.mubr.f32.gmra.mrb[0].mxu0 %v3703
    %v3846 = vpop.f32.mrb[0].mxu0
    %v3847 = vadd.f32 0.0, %v3846
    %v3848 = vpop.f32.mrb[0].mxu0
    %3849 = vmatprep.mubr.f32.mxu0 0.0
    %3850 = vmatmul.mubr.f32.gmra.mrb[0].mxu0 %v3704
    %v3851 = vpop.f32.mrb[0].mxu0
    %v3852 = vadd.f32 0.0, %v3851
    %v3853 = vpop.f32.mrb[0].mxu0
    %3854 = vmatprep.mubr.f32.mxu0 0.0
    %3855 = vmatmul.mubr.f32.gmra.mrb[0].mxu0 %v3705
    %v3856 = vpop.f32.mrb[0].mxu0
    %v3857 = vadd.f32 0.0, %v3856
    %v3858 = vpop.f32.mrb[0].mxu0
    %3859 = vmatprep.mubr.f32.mxu0 0.0
    %3860 = vmatmul.mubr.f32.gmra.mrb[0].mxu0 %v3706
    %v3861 = vpop.f32.mrb[0].mxu0
    %v3862 = vadd.f32 0.0, %v3861
    %v3863 = vpop.f32.mrb[0].mxu0
    %3864 = vmatprep.mubr.f32.mxu0 0.0
    %3865 = vmatmul.mubr.f32.gmra.mrb[0].mxu0 %v3707
    %v3866 = vpop.f32.mrb[0].mxu0
    %v3867 = vadd.f32 0.0, %v3866
    %v3868 = vpop.f32.mrb[0].mxu0
    %3869 = vdwg.mxu0
    %v3870 = vadd.f32 %v3676, %v3792
    %v3871 = vadd.f32 %v3677, %v3797
    %v3872 = vadd.f32 %v3678, %v3802
    %v3873 = vadd.f32 %v3679, %v3807
    %v3874 = vadd.f32 %v3680, %v3812
    %v3875 = vadd.f32 %v3681, %v3817
    %v3876 = vadd.f32 %v3682, %v3822
    %v3877 = vadd.f32 %v3683, %v3827
    %v3878 = vadd.f32 %v3684, %v3832
    %v3879 = vadd.f32 %v3685, %v3837
    %v3880 = vadd.f32 %v3686, %v3842
    %v3881 = vadd.f32 %v3687, %v3847
    %v3882 = vadd.f32 %v3688, %v3852
    %v3883 = vadd.f32 %v3689, %v3857
    %v3884 = vadd.f32 %v3690, %v3862
    %v3885 = vadd.f32 %v3691, %v3867
    %v3886 = vld [vmem:[%s3303 + $0x3] sm:$0xff]
    %v3887 = vld [vmem:[%s3303 + $0x13] sm:$0xff]
    %v3888 = vld [vmem:[%s3303 + $0x23] sm:$0xff]
    %v3889 = vld [vmem:[%s3303 + $0x33] sm:$0xff]
    %v3890 = vld [vmem:[%s3303 + $0x43] sm:$0xff]
    %v3891 = vld [vmem:[%s3303 + $0x53] sm:$0xff]
    %v3892 = vld [vmem:[%s3303 + $0x63] sm:$0xff]
    %v3893 = vld [vmem:[%s3303 + $0x73] sm:$0xff]
    %v3894 = vld [vmem:[%s3303 + $0xc3] sm:$0xff]
    %v3895 = vld [vmem:[%s3303 + $0xd3] sm:$0xff]
    %v3896 = vld [vmem:[%s3303 + $0xe3] sm:$0xff]
    %v3897 = vld [vmem:[%s3303 + $0xf3] sm:$0xff]
    %v3898 = vld [vmem:[%s3303 + $0x103] sm:$0xff]
    %v3899 = vld [vmem:[%s3303 + $0x113] sm:$0xff]
    %v3900 = vld [vmem:[%s3303 + $0x123] sm:$0xff]
    %v3901 = vld [vmem:[%s3303 + $0x133] sm:$0xff]
    %s3902 = scalar_lea.vmem %s3, 1024
    %v3903 = vld [vmem:[%s3902] sm:$0xff]
    %v3904 = vld [vmem:[%s3902 + $0x8] sm:$0xff]
    %v3905 = vld [vmem:[%s3902 + $0x10] sm:$0xff]
    %v3906 = vld [vmem:[%s3902 + $0x18] sm:$0xff]
    %v3907 = vld [vmem:[%s3902 + $0x20] sm:$0xff]
    %v3908 = vld [vmem:[%s3902 + $0x28] sm:$0xff]
    %v3909 = vld [vmem:[%s3902 + $0x30] sm:$0xff]
    %v3910 = vld [vmem:[%s3902 + $0x38] sm:$0xff]
    %v3911 = vld [vmem:[%s3902 + $0x40] sm:$0xff]
    %v3912 = vld [vmem:[%s3902 + $0x48] sm:$0xff]
    %v3913 = vld [vmem:[%s3902 + $0x50] sm:$0xff]
    %v3914 = vld [vmem:[%s3902 + $0x58] sm:$0xff]
    %v3915 = vld [vmem:[%s3902 + $0x60] sm:$0xff]
    %v3916 = vld [vmem:[%s3902 + $0x68] sm:$0xff]
    %v3917 = vld [vmem:[%s3902 + $0x70] sm:$0xff]
    %v3918 = vld [vmem:[%s3902 + $0x78] sm:$0xff]
    %3919 = vmatprep.subr.mxu0 0.0
    %3920 = vmatpush1.msra.mxu0 %v3903
    %3921 = vmatprep.subr.mxu0 0.0
    %3922 = vmatpush1.msra.mxu0 %v3904
    %3923 = vmatprep.subr.mxu0 0.0
    %3924 = vmatpush1.msra.mxu0 %v3905
    %3925 = vmatprep.subr.mxu0 0.0
    %3926 = vmatpush1.msra.mxu0 %v3906
    %3927 = vmatprep.subr.mxu0 0.0
    %3928 = vmatpush1.msra.mxu0 %v3907
    %3929 = vmatprep.subr.mxu0 0.0
    %3930 = vmatpush1.msra.mxu0 %v3908
    %3931 = vmatprep.subr.mxu0 0.0
    %3932 = vmatpush1.msra.mxu0 %v3909
    %3933 = vmatprep.subr.mxu0 0.0
    %3934 = vmatpush1.msra.mxu0 %v3910
    %3935 = vmatprep.subr.mxu0 0.0
    %3936 = vmatpush1.msra.mxu0 %v3911
    %3937 = vmatprep.subr.mxu0 0.0
    %3938 = vmatpush1.msra.mxu0 %v3912
    %3939 = vmatprep.subr.mxu0 0.0
    %3940 = vmatpush1.msra.mxu0 %v3913
    %3941 = vmatprep.subr.mxu0 0.0
    %3942 = vmatpush1.msra.mxu0 %v3914
    %3943 = vmatprep.subr.mxu0 0.0
    %3944 = vmatpush1.msra.mxu0 %v3915
    %3945 = vmatprep.subr.mxu0 0.0
    %3946 = vmatpush1.msra.mxu0 %v3916
    %3947 = vmatprep.subr.mxu0 0.0
    %3948 = vmatpush1.msra.mxu0 %v3917
    %3949 = vmatprep.subr.mxu0 0.0
    %3950 = vmatpush1.msra.mxu0 %v3918
    %3951 = vmatprep.subr.mxu0 0.0
    %3952 = vmatpush1.msra.mxu0 0.0
    %3953 = vmatprep.subr.mxu0 0.0
    %3954 = vmatpush1.msra.mxu0 0.0
    %3955 = vmatprep.subr.mxu0 0.0
    %3956 = vmatpush1.msra.mxu0 0.0
    %3957 = vmatprep.subr.mxu0 0.0
    %3958 = vmatpush1.msra.mxu0 0.0
    %3959 = vmatprep.subr.mxu0 0.0
    %3960 = vmatpush1.msra.mxu0 0.0
    %3961 = vmatprep.subr.mxu0 0.0
    %3962 = vmatpush1.msra.mxu0 0.0
    %3963 = vmatprep.subr.mxu0 0.0
    %3964 = vmatpush1.msra.mxu0 0.0
    %3965 = vmatprep.subr.mxu0 0.0
    %3966 = vmatpush1.msra.mxu0 0.0
    %3967 = vmatprep.subr.mxu0 0.0
    %3968 = vmatpush1.msra.mxu0 0.0
    %3969 = vmatprep.subr.mxu0 0.0
    %3970 = vmatpush1.msra.mxu0 0.0
    %3971 = vmatprep.subr.mxu0 0.0
    %3972 = vmatpush1.msra.mxu0 0.0
    %3973 = vmatprep.subr.mxu0 0.0
    %3974 = vmatpush1.msra.mxu0 0.0
    %3975 = vmatprep.subr.mxu0 0.0
    %3976 = vmatpush1.msra.mxu0 0.0
    %3977 = vmatprep.subr.mxu0 0.0
    %3978 = vmatpush1.msra.mxu0 0.0
    %3979 = vmatprep.subr.mxu0 0.0
    %3980 = vmatpush1.msra.mxu0 0.0
    %3981 = vmatprep.subr.mxu0 0.0
    %3982 = vmatpush1.msra.mxu0 0.0
    %3983 = vmatprep.mubr.f32.mxu0 0.0
    %3984 = vmatmul.mubr.f32.gmra.mrb[0].mxu0 %v3886
    %v3985 = vpop.f32.mrb[0].mxu0
    %v3986 = vadd.f32 0.0, %v3985
    %v3987 = vpop.f32.mrb[0].mxu0
    %3988 = vmatprep.mubr.f32.mxu0 0.0
    %3989 = vmatmul.mubr.f32.gmra.mrb[0].mxu0 %v3887
    %v3990 = vpop.f32.mrb[0].mxu0
    %v3991 = vadd.f32 0.0, %v3990
    %v3992 = vpop.f32.mrb[0].mxu0
    %3993 = vmatprep.mubr.f32.mxu0 0.0
    %3994 = vmatmul.mubr.f32.gmra.mrb[0].mxu0 %v3888
    %v3995 = vpop.f32.mrb[0].mxu0
    %v3996 = vadd.f32 0.0, %v3995
    %v3997 = vpop.f32.mrb[0].mxu0
    %3998 = vmatprep.mubr.f32.mxu0 0.0
    %3999 = vmatmul.mubr.f32.gmra.mrb[0].mxu0 %v3889
    %v4000 = vpop.f32.mrb[0].mxu0
    %v4001 = vadd.f32 0.0, %v4000
    %v4002 = vpop.f32.mrb[0].mxu0
    %4003 = vmatprep.mubr.f32.mxu0 0.0
    %4004 = vmatmul.mubr.f32.gmra.mrb[0].mxu0 %v3890
    %v4005 = vpop.f32.mrb[0].mxu0
    %v4006 = vadd.f32 0.0, %v4005
    %v4007 = vpop.f32.mrb[0].mxu0
    %4008 = vmatprep.mubr.f32.mxu0 0.0
    %4009 = vmatmul.mubr.f32.gmra.mrb[0].mxu0 %v3891
    %v4010 = vpop.f32.mrb[0].mxu0
    %v4011 = vadd.f32 0.0, %v4010
    %v4012 = vpop.f32.mrb[0].mxu0
    %4013 = vmatprep.mubr.f32.mxu0 0.0
    %4014 = vmatmul.mubr.f32.gmra.mrb[0].mxu0 %v3892
    %v4015 = vpop.f32.mrb[0].mxu0
    %v4016 = vadd.f32 0.0, %v4015
    %v4017 = vpop.f32.mrb[0].mxu0
    %4018 = vmatprep.mubr.f32.mxu0 0.0
    %4019 = vmatmul.mubr.f32.gmra.mrb[0].mxu0 %v3893
    %v4020 = vpop.f32.mrb[0].mxu0
    %v4021 = vadd.f32 0.0, %v4020
    %v4022 = vpop.f32.mrb[0].mxu0
    %4023 = vmatprep.mubr.f32.mxu0 0.0
    %4024 = vmatmul.mubr.f32.gmra.mrb[0].mxu0 %v3894
    %v4025 = vpop.f32.mrb[0].mxu0
    %v4026 = vadd.f32 0.0, %v4025
    %v4027 = vpop.f32.mrb[0].mxu0
    %4028 = vmatprep.mubr.f32.mxu0 0.0
    %4029 = vmatmul.mubr.f32.gmra.mrb[0].mxu0 %v3895
    %v4030 = vpop.f32.mrb[0].mxu0
    %v4031 = vadd.f32 0.0, %v4030
    %v4032 = vpop.f32.mrb[0].mxu0
    %4033 = vmatprep.mubr.f32.mxu0 0.0
    %4034 = vmatmul.mubr.f32.gmra.mrb[0].mxu0 %v3896
    %v4035 = vpop.f32.mrb[0].mxu0
    %v4036 = vadd.f32 0.0, %v4035
    %v4037 = vpop.f32.mrb[0].mxu0
    %4038 = vmatprep.mubr.f32.mxu0 0.0
    %4039 = vmatmul.mubr.f32.gmra.mrb[0].mxu0 %v3897
    %v4040 = vpop.f32.mrb[0].mxu0
    %v4041 = vadd.f32 0.0, %v4040
    %v4042 = vpop.f32.mrb[0].mxu0
    %4043 = vmatprep.mubr.f32.mxu0 0.0
    %4044 = vmatmul.mubr.f32.gmra.mrb[0].mxu0 %v3898
    %v4045 = vpop.f32.mrb[0].mxu0
    %v4046 = vadd.f32 0.0, %v4045
    %v4047 = vpop.f32.mrb[0].mxu0
    %4048 = vmatprep.mubr.f32.mxu0 0.0
    %4049 = vmatmul.mubr.f32.gmra.mrb[0].mxu0 %v3899
    %v4050 = vpop.f32.mrb[0].mxu0
    %v4051 = vadd.f32 0.0, %v4050
    %v4052 = vpop.f32.mrb[0].mxu0
    %4053 = vmatprep.mubr.f32.mxu0 0.0
    %4054 = vmatmul.mubr.f32.gmra.mrb[0].mxu0 %v3900
    %v4055 = vpop.f32.mrb[0].mxu0
    %v4056 = vadd.f32 0.0, %v4055
    %v4057 = vpop.f32.mrb[0].mxu0
    %4058 = vmatprep.mubr.f32.mxu0 0.0
    %4059 = vmatmul.mubr.f32.gmra.mrb[0].mxu0 %v3901
    %v4060 = vpop.f32.mrb[0].mxu0
    %v4061 = vadd.f32 0.0, %v4060
    %v4062 = vpop.f32.mrb[0].mxu0
    %4063 = vdwg.mxu0
    %v4064 = vadd.f32 %v3870, %v3986
    %v4065 = vadd.f32 %v3871, %v3991
    %v4066 = vadd.f32 %v3872, %v3996
    %v4067 = vadd.f32 %v3873, %v4001
    %v4068 = vadd.f32 %v3874, %v4006
    %v4069 = vadd.f32 %v3875, %v4011
    %v4070 = vadd.f32 %v3876, %v4016
    %v4071 = vadd.f32 %v3877, %v4021
    %v4072 = vadd.f32 %v3878, %v4026
    %v4073 = vadd.f32 %v3879, %v4031
    %v4074 = vadd.f32 %v3880, %v4036
    %v4075 = vadd.f32 %v3881, %v4041
    %v4076 = vadd.f32 %v3882, %v4046
    %v4077 = vadd.f32 %v3883, %v4051
    %v4078 = vadd.f32 %v3884, %v4056
    %v4079 = vadd.f32 %v3885, %v4061
    %v4080 = vld [vmem:[%s3303 + $0x4] sm:$0xff]
    %v4081 = vld [vmem:[%s3303 + $0x14] sm:$0xff]
    %v4082 = vld [vmem:[%s3303 + $0x24] sm:$0xff]
    %v4083 = vld [vmem:[%s3303 + $0x34] sm:$0xff]
    %v4084 = vld [vmem:[%s3303 + $0x44] sm:$0xff]
    %v4085 = vld [vmem:[%s3303 + $0x54] sm:$0xff]
    %v4086 = vld [vmem:[%s3303 + $0x64] sm:$0xff]
    %v4087 = vld [vmem:[%s3303 + $0x74] sm:$0xff]
    %v4088 = vld [vmem:[%s3303 + $0xc4] sm:$0xff]
    %v4089 = vld [vmem:[%s3303 + $0xd4] sm:$0xff]
    %v4090 = vld [vmem:[%s3303 + $0xe4] sm:$0xff]
    %v4091 = vld [vmem:[%s3303 + $0xf4] sm:$0xff]
    %v4092 = vld [vmem:[%s3303 + $0x104] sm:$0xff]
    %v4093 = vld [vmem:[%s3303 + $0x114] sm:$0xff]
    %v4094 = vld [vmem:[%s3303 + $0x124] sm:$0xff]
    %v4095 = vld [vmem:[%s3303 + $0x134] sm:$0xff]
    %s4096 = scalar_lea.vmem %s3, 1152
    %v4097 = vld [vmem:[%s4096] sm:$0xff]
    %v4098 = vld [vmem:[%s4096 + $0x8] sm:$0xff]
    %v4099 = vld [vmem:[%s4096 + $0x10] sm:$0xff]
    %v4100 = vld [vmem:[%s4096 + $0x18] sm:$0xff]
    %v4101 = vld [vmem:[%s4096 + $0x20] sm:$0xff]
    %v4102 = vld [vmem:[%s4096 + $0x28] sm:$0xff]
    %v4103 = vld [vmem:[%s4096 + $0x30] sm:$0xff]
    %v4104 = vld [vmem:[%s4096 + $0x38] sm:$0xff]
    %v4105 = vld [vmem:[%s4096 + $0x40] sm:$0xff]
    %v4106 = vld [vmem:[%s4096 + $0x48] sm:$0xff]
    %v4107 = vld [vmem:[%s4096 + $0x50] sm:$0xff]
    %v4108 = vld [vmem:[%s4096 + $0x58] sm:$0xff]
    %v4109 = vld [vmem:[%s4096 + $0x60] sm:$0xff]
    %v4110 = vld [vmem:[%s4096 + $0x68] sm:$0xff]
    %v4111 = vld [vmem:[%s4096 + $0x70] sm:$0xff]
    %v4112 = vld [vmem:[%s4096 + $0x78] sm:$0xff]
    %4113 = vmatprep.subr.mxu0 0.0
    %4114 = vmatpush1.msra.mxu0 %v4097
    %4115 = vmatprep.subr.mxu0 0.0
    %4116 = vmatpush1.msra.mxu0 %v4098
    %4117 = vmatprep.subr.mxu0 0.0
    %4118 = vmatpush1.msra.mxu0 %v4099
    %4119 = vmatprep.subr.mxu0 0.0
    %4120 = vmatpush1.msra.mxu0 %v4100
    %4121 = vmatprep.subr.mxu0 0.0
    %4122 = vmatpush1.msra.mxu0 %v4101
    %4123 = vmatprep.subr.mxu0 0.0
    %4124 = vmatpush1.msra.mxu0 %v4102
    %4125 = vmatprep.subr.mxu0 0.0
    %4126 = vmatpush1.msra.mxu0 %v4103
    %4127 = vmatprep.subr.mxu0 0.0
    %4128 = vmatpush1.msra.mxu0 %v4104
    %4129 = vmatprep.subr.mxu0 0.0
    %4130 = vmatpush1.msra.mxu0 %v4105
    %4131 = vmatprep.subr.mxu0 0.0
    %4132 = vmatpush1.msra.mxu0 %v4106
    %4133 = vmatprep.subr.mxu0 0.0
    %4134 = vmatpush1.msra.mxu0 %v4107
    %4135 = vmatprep.subr.mxu0 0.0
    %4136 = vmatpush1.msra.mxu0 %v4108
    %4137 = vmatprep.subr.mxu0 0.0
    %4138 = vmatpush1.msra.mxu0 %v4109
    %4139 = vmatprep.subr.mxu0 0.0
    %4140 = vmatpush1.msra.mxu0 %v4110
    %4141 = vmatprep.subr.mxu0 0.0
    %4142 = vmatpush1.msra.mxu0 %v4111
    %4143 = vmatprep.subr.mxu0 0.0
    %4144 = vmatpush1.msra.mxu0 %v4112
    %4145 = vmatprep.subr.mxu0 0.0
    %4146 = vmatpush1.msra.mxu0 0.0
    %4147 = vmatprep.subr.mxu0 0.0
    %4148 = vmatpush1.msra.mxu0 0.0
    %4149 = vmatprep.subr.mxu0 0.0
    %4150 = vmatpush1.msra.mxu0 0.0
    %4151 = vmatprep.subr.mxu0 0.0
    %4152 = vmatpush1.msra.mxu0 0.0
    %4153 = vmatprep.subr.mxu0 0.0
    %4154 = vmatpush1.msra.mxu0 0.0
    %4155 = vmatprep.subr.mxu0 0.0
    %4156 = vmatpush1.msra.mxu0 0.0
    %4157 = vmatprep.subr.mxu0 0.0
    %4158 = vmatpush1.msra.mxu0 0.0
    %4159 = vmatprep.subr.mxu0 0.0
    %4160 = vmatpush1.msra.mxu0 0.0
    %4161 = vmatprep.subr.mxu0 0.0
    %4162 = vmatpush1.msra.mxu0 0.0
    %4163 = vmatprep.subr.mxu0 0.0
    %4164 = vmatpush1.msra.mxu0 0.0
    %4165 = vmatprep.subr.mxu0 0.0
    %4166 = vmatpush1.msra.mxu0 0.0
    %4167 = vmatprep.subr.mxu0 0.0
    %4168 = vmatpush1.msra.mxu0 0.0
    %4169 = vmatprep.subr.mxu0 0.0
    %4170 = vmatpush1.msra.mxu0 0.0
    %4171 = vmatprep.subr.mxu0 0.0
    %4172 = vmatpush1.msra.mxu0 0.0
    %4173 = vmatprep.subr.mxu0 0.0
    %4174 = vmatpush1.msra.mxu0 0.0
    %4175 = vmatprep.subr.mxu0 0.0
    %4176 = vmatpush1.msra.mxu0 0.0
    %4177 = vmatprep.mubr.f32.mxu0 0.0
    %4178 = vmatmul.mubr.f32.gmra.mrb[0].mxu0 %v4080
    %v4179 = vpop.f32.mrb[0].mxu0
    %v4180 = vadd.f32 0.0, %v4179
    %v4181 = vpop.f32.mrb[0].mxu0
    %4182 = vmatprep.mubr.f32.mxu0 0.0
    %4183 = vmatmul.mubr.f32.gmra.mrb[0].mxu0 %v4081
    %v4184 = vpop.f32.mrb[0].mxu0
    %v4185 = vadd.f32 0.0, %v4184
    %v4186 = vpop.f32.mrb[0].mxu0
    %4187 = vmatprep.mubr.f32.mxu0 0.0
    %4188 = vmatmul.mubr.f32.gmra.mrb[0].mxu0 %v4082
    %v4189 = vpop.f32.mrb[0].mxu0
    %v4190 = vadd.f32 0.0, %v4189
    %v4191 = vpop.f32.mrb[0].mxu0
    %4192 = vmatprep.mubr.f32.mxu0 0.0
    %4193 = vmatmul.mubr.f32.gmra.mrb[0].mxu0 %v4083
    %v4194 = vpop.f32.mrb[0].mxu0
    %v4195 = vadd.f32 0.0, %v4194
    %v4196 = vpop.f32.mrb[0].mxu0
    %4197 = vmatprep.mubr.f32.mxu0 0.0
    %4198 = vmatmul.mubr.f32.gmra.mrb[0].mxu0 %v4084
    %v4199 = vpop.f32.mrb[0].mxu0
    %v4200 = vadd.f32 0.0, %v4199
    %v4201 = vpop.f32.mrb[0].mxu0
    %4202 = vmatprep.mubr.f32.mxu0 0.0
    %4203 = vmatmul.mubr.f32.gmra.mrb[0].mxu0 %v4085
    %v4204 = vpop.f32.mrb[0].mxu0
    %v4205 = vadd.f32 0.0, %v4204
    %v4206 = vpop.f32.mrb[0].mxu0
    %4207 = vmatprep.mubr.f32.mxu0 0.0
    %4208 = vmatmul.mubr.f32.gmra.mrb[0].mxu0 %v4086
    %v4209 = vpop.f32.mrb[0].mxu0
    %v4210 = vadd.f32 0.0, %v4209
    %v4211 = vpop.f32.mrb[0].mxu0
    %4212 = vmatprep.mubr.f32.mxu0 0.0
    %4213 = vmatmul.mubr.f32.gmra.mrb[0].mxu0 %v4087
    %v4214 = vpop.f32.mrb[0].mxu0
    %v4215 = vadd.f32 0.0, %v4214
    %v4216 = vpop.f32.mrb[0].mxu0
    %4217 = vmatprep.mubr.f32.mxu0 0.0
    %4218 = vmatmul.mubr.f32.gmra.mrb[0].mxu0 %v4088
    %v4219 = vpop.f32.mrb[0].mxu0
    %v4220 = vadd.f32 0.0, %v4219
    %v4221 = vpop.f32.mrb[0].mxu0
    %4222 = vmatprep.mubr.f32.mxu0 0.0
    %4223 = vmatmul.mubr.f32.gmra.mrb[0].mxu0 %v4089
    %v4224 = vpop.f32.mrb[0].mxu0
    %v4225 = vadd.f32 0.0, %v4224
    %v4226 = vpop.f32.mrb[0].mxu0
    %4227 = vmatprep.mubr.f32.mxu0 0.0
    %4228 = vmatmul.mubr.f32.gmra.mrb[0].mxu0 %v4090
    %v4229 = vpop.f32.mrb[0].mxu0
    %v4230 = vadd.f32 0.0, %v4229
    %v4231 = vpop.f32.mrb[0].mxu0
    %4232 = vmatprep.mubr.f32.mxu0 0.0
    %4233 = vmatmul.mubr.f32.gmra.mrb[0].mxu0 %v4091
    %v4234 = vpop.f32.mrb[0].mxu0
    %v4235 = vadd.f32 0.0, %v4234
    %v4236 = vpop.f32.mrb[0].mxu0
    %4237 = vmatprep.mubr.f32.mxu0 0.0
    %4238 = vmatmul.mubr.f32.gmra.mrb[0].mxu0 %v4092
    %v4239 = vpop.f32.mrb[0].mxu0
    %v4240 = vadd.f32 0.0, %v4239
    %v4241 = vpop.f32.mrb[0].mxu0
    %4242 = vmatprep.mubr.f32.mxu0 0.0
    %4243 = vmatmul.mubr.f32.gmra.mrb[0].mxu0 %v4093
    %v4244 = vpop.f32.mrb[0].mxu0
    %v4245 = vadd.f32 0.0, %v4244
    %v4246 = vpop.f32.mrb[0].mxu0
    %4247 = vmatprep.mubr.f32.mxu0 0.0
    %4248 = vmatmul.mubr.f32.gmra.mrb[0].mxu0 %v4094
    %v4249 = vpop.f32.mrb[0].mxu0
    %v4250 = vadd.f32 0.0, %v4249
    %v4251 = vpop.f32.mrb[0].mxu0
    %4252 = vmatprep.mubr.f32.mxu0 0.0
    %4253 = vmatmul.mubr.f32.gmra.mrb[0].mxu0 %v4095
    %v4254 = vpop.f32.mrb[0].mxu0
    %v4255 = vadd.f32 0.0, %v4254
    %v4256 = vpop.f32.mrb[0].mxu0
    %4257 = vdwg.mxu0
    %v4258 = vadd.f32 %v4064, %v4180
    %v4259 = vadd.f32 %v4065, %v4185
    %v4260 = vadd.f32 %v4066, %v4190
    %v4261 = vadd.f32 %v4067, %v4195
    %v4262 = vadd.f32 %v4068, %v4200
    %v4263 = vadd.f32 %v4069, %v4205
    %v4264 = vadd.f32 %v4070, %v4210
    %v4265 = vadd.f32 %v4071, %v4215
    %v4266 = vadd.f32 %v4072, %v4220
    %v4267 = vadd.f32 %v4073, %v4225
    %v4268 = vadd.f32 %v4074, %v4230
    %v4269 = vadd.f32 %v4075, %v4235
    %v4270 = vadd.f32 %v4076, %v4240
    %v4271 = vadd.f32 %v4077, %v4245
    %v4272 = vadd.f32 %v4078, %v4250
    %v4273 = vadd.f32 %v4079, %v4255
    %s4274 = scalar_lea.vmem [#allocation4], 32
    %v4275 = vld [vmem:[%s4274] sm:$0xff]
    %v4276 = vld [vmem:[%s4274 + $0x10] sm:$0xff]
    %v4277 = vld [vmem:[%s4274 + $0x20] sm:$0xff]
    %v4278 = vld [vmem:[%s4274 + $0x30] sm:$0xff]
    %v4279 = vld [vmem:[%s4274 + $0x40] sm:$0xff]
    %v4280 = vld [vmem:[%s4274 + $0x50] sm:$0xff]
    %v4281 = vld [vmem:[%s4274 + $0x60] sm:$0xff]
    %v4282 = vld [vmem:[%s4274 + $0x70] sm:$0xff]
    %v4283 = vld [vmem:[%s4274 + $0xc0] sm:$0xff]
    %v4284 = vld [vmem:[%s4274 + $0xd0] sm:$0xff]
    %v4285 = vld [vmem:[%s4274 + $0xe0] sm:$0xff]
    %v4286 = vld [vmem:[%s4274 + $0xf0] sm:$0xff]
    %v4287 = vld [vmem:[%s4274 + $0x100] sm:$0xff]
    %v4288 = vld [vmem:[%s4274 + $0x110] sm:$0xff]
    %v4289 = vld [vmem:[%s4274 + $0x120] sm:$0xff]
    %v4290 = vld [vmem:[%s4274 + $0x130] sm:$0xff]
    %s4291 = scalar_lea.vmem %s3, 1280
    %v4292 = vld [vmem:[%s4291] sm:$0xff]
    %v4293 = vld [vmem:[%s4291 + $0x8] sm:$0xff]
    %v4294 = vld [vmem:[%s4291 + $0x10] sm:$0xff]
    %v4295 = vld [vmem:[%s4291 + $0x18] sm:$0xff]
    %v4296 = vld [vmem:[%s4291 + $0x20] sm:$0xff]
    %v4297 = vld [vmem:[%s4291 + $0x28] sm:$0xff]
    %v4298 = vld [vmem:[%s4291 + $0x30] sm:$0xff]
    %v4299 = vld [vmem:[%s4291 + $0x38] sm:$0xff]
    %v4300 = vld [vmem:[%s4291 + $0x40] sm:$0xff]
    %v4301 = vld [vmem:[%s4291 + $0x48] sm:$0xff]
    %v4302 = vld [vmem:[%s4291 + $0x50] sm:$0xff]
    %v4303 = vld [vmem:[%s4291 + $0x58] sm:$0xff]
    %v4304 = vld [vmem:[%s4291 + $0x60] sm:$0xff]
    %v4305 = vld [vmem:[%s4291 + $0x68] sm:$0xff]
    %v4306 = vld [vmem:[%s4291 + $0x70] sm:$0xff]
    %v4307 = vld [vmem:[%s4291 + $0x78] sm:$0xff]
    %4308 = vmatprep.subr.mxu0 0.0
    %4309 = vmatpush1.msra.mxu0 %v4292
    %4310 = vmatprep.subr.mxu0 0.0
    %4311 = vmatpush1.msra.mxu0 %v4293
    %4312 = vmatprep.subr.mxu0 0.0
    %4313 = vmatpush1.msra.mxu0 %v4294
    %4314 = vmatprep.subr.mxu0 0.0
    %4315 = vmatpush1.msra.mxu0 %v4295
    %4316 = vmatprep.subr.mxu0 0.0
    %4317 = vmatpush1.msra.mxu0 %v4296
    %4318 = vmatprep.subr.mxu0 0.0
    %4319 = vmatpush1.msra.mxu0 %v4297
    %4320 = vmatprep.subr.mxu0 0.0
    %4321 = vmatpush1.msra.mxu0 %v4298
    %4322 = vmatprep.subr.mxu0 0.0
    %4323 = vmatpush1.msra.mxu0 %v4299
    %4324 = vmatprep.subr.mxu0 0.0
    %4325 = vmatpush1.msra.mxu0 %v4300
    %4326 = vmatprep.subr.mxu0 0.0
    %4327 = vmatpush1.msra.mxu0 %v4301
    %4328 = vmatprep.subr.mxu0 0.0
    %4329 = vmatpush1.msra.mxu0 %v4302
    %4330 = vmatprep.subr.mxu0 0.0
    %4331 = vmatpush1.msra.mxu0 %v4303
    %4332 = vmatprep.subr.mxu0 0.0
    %4333 = vmatpush1.msra.mxu0 %v4304
    %4334 = vmatprep.subr.mxu0 0.0
    %4335 = vmatpush1.msra.mxu0 %v4305
    %4336 = vmatprep.subr.mxu0 0.0
    %4337 = vmatpush1.msra.mxu0 %v4306
    %4338 = vmatprep.subr.mxu0 0.0
    %4339 = vmatpush1.msra.mxu0 %v4307
    %4340 = vmatprep.subr.mxu0 0.0
    %4341 = vmatpush1.msra.mxu0 0.0
    %4342 = vmatprep.subr.mxu0 0.0
    %4343 = vmatpush1.msra.mxu0 0.0
    %4344 = vmatprep.subr.mxu0 0.0
    %4345 = vmatpush1.msra.mxu0 0.0
    %4346 = vmatprep.subr.mxu0 0.0
    %4347 = vmatpush1.msra.mxu0 0.0
    %4348 = vmatprep.subr.mxu0 0.0
    %4349 = vmatpush1.msra.mxu0 0.0
    %4350 = vmatprep.subr.mxu0 0.0
    %4351 = vmatpush1.msra.mxu0 0.0
    %4352 = vmatprep.subr.mxu0 0.0
    %4353 = vmatpush1.msra.mxu0 0.0
    %4354 = vmatprep.subr.mxu0 0.0
    %4355 = vmatpush1.msra.mxu0 0.0
    %4356 = vmatprep.subr.mxu0 0.0
    %4357 = vmatpush1.msra.mxu0 0.0
    %4358 = vmatprep.subr.mxu0 0.0
    %4359 = vmatpush1.msra.mxu0 0.0
    %4360 = vmatprep.subr.mxu0 0.0
    %4361 = vmatpush1.msra.mxu0 0.0
    %4362 = vmatprep.subr.mxu0 0.0
    %4363 = vmatpush1.msra.mxu0 0.0
    %4364 = vmatprep.subr.mxu0 0.0
    %4365 = vmatpush1.msra.mxu0 0.0
    %4366 = vmatprep.subr.mxu0 0.0
    %4367 = vmatpush1.msra.mxu0 0.0
    %4368 = vmatprep.subr.mxu0 0.0
    %4369 = vmatpush1.msra.mxu0 0.0
    %4370 = vmatprep.subr.mxu0 0.0
    %4371 = vmatpush1.msra.mxu0 0.0
    %4372 = vmatprep.mubr.f32.mxu0 0.0
    %4373 = vmatmul.mubr.f32.gmra.mrb[0].mxu0 %v4275
    %v4374 = vpop.f32.mrb[0].mxu0
    %v4375 = vadd.f32 0.0, %v4374
    %v4376 = vpop.f32.mrb[0].mxu0
    %4377 = vmatprep.mubr.f32.mxu0 0.0
    %4378 = vmatmul.mubr.f32.gmra.mrb[0].mxu0 %v4276
    %v4379 = vpop.f32.mrb[0].mxu0
    %v4380 = vadd.f32 0.0, %v4379
    %v4381 = vpop.f32.mrb[0].mxu0
    %4382 = vmatprep.mubr.f32.mxu0 0.0
    %4383 = vmatmul.mubr.f32.gmra.mrb[0].mxu0 %v4277
    %v4384 = vpop.f32.mrb[0].mxu0
    %v4385 = vadd.f32 0.0, %v4384
    %v4386 = vpop.f32.mrb[0].mxu0
    %4387 = vmatprep.mubr.f32.mxu0 0.0
    %4388 = vmatmul.mubr.f32.gmra.mrb[0].mxu0 %v4278
    %v4389 = vpop.f32.mrb[0].mxu0
    %v4390 = vadd.f32 0.0, %v4389
    %v4391 = vpop.f32.mrb[0].mxu0
    %4392 = vmatprep.mubr.f32.mxu0 0.0
    %4393 = vmatmul.mubr.f32.gmra.mrb[0].mxu0 %v4279
    %v4394 = vpop.f32.mrb[0].mxu0
    %v4395 = vadd.f32 0.0, %v4394
    %v4396 = vpop.f32.mrb[0].mxu0
    %4397 = vmatprep.mubr.f32.mxu0 0.0
    %4398 = vmatmul.mubr.f32.gmra.mrb[0].mxu0 %v4280
    %v4399 = vpop.f32.mrb[0].mxu0
    %v4400 = vadd.f32 0.0, %v4399
    %v4401 = vpop.f32.mrb[0].mxu0
    %4402 = vmatprep.mubr.f32.mxu0 0.0
    %4403 = vmatmul.mubr.f32.gmra.mrb[0].mxu0 %v4281
    %v4404 = vpop.f32.mrb[0].mxu0
    %v4405 = vadd.f32 0.0, %v4404
    %v4406 = vpop.f32.mrb[0].mxu0
    %4407 = vmatprep.mubr.f32.mxu0 0.0
    %4408 = vmatmul.mubr.f32.gmra.mrb[0].mxu0 %v4282
    %v4409 = vpop.f32.mrb[0].mxu0
    %v4410 = vadd.f32 0.0, %v4409
    %v4411 = vpop.f32.mrb[0].mxu0
    %4412 = vmatprep.mubr.f32.mxu0 0.0
    %4413 = vmatmul.mubr.f32.gmra.mrb[0].mxu0 %v4283
    %v4414 = vpop.f32.mrb[0].mxu0
    %v4415 = vadd.f32 0.0, %v4414
    %v4416 = vpop.f32.mrb[0].mxu0
    %4417 = vmatprep.mubr.f32.mxu0 0.0
    %4418 = vmatmul.mubr.f32.gmra.mrb[0].mxu0 %v4284
    %v4419 = vpop.f32.mrb[0].mxu0
    %v4420 = vadd.f32 0.0, %v4419
    %v4421 = vpop.f32.mrb[0].mxu0
    %4422 = vmatprep.mubr.f32.mxu0 0.0
    %4423 = vmatmul.mubr.f32.gmra.mrb[0].mxu0 %v4285
    %v4424 = vpop.f32.mrb[0].mxu0
    %v4425 = vadd.f32 0.0, %v4424
    %v4426 = vpop.f32.mrb[0].mxu0
    %4427 = vmatprep.mubr.f32.mxu0 0.0
    %4428 = vmatmul.mubr.f32.gmra.mrb[0].mxu0 %v4286
    %v4429 = vpop.f32.mrb[0].mxu0
    %v4430 = vadd.f32 0.0, %v4429
    %v4431 = vpop.f32.mrb[0].mxu0
    %4432 = vmatprep.mubr.f32.mxu0 0.0
    %4433 = vmatmul.mubr.f32.gmra.mrb[0].mxu0 %v4287
    %v4434 = vpop.f32.mrb[0].mxu0
    %v4435 = vadd.f32 0.0, %v4434
    %v4436 = vpop.f32.mrb[0].mxu0
    %4437 = vmatprep.mubr.f32.mxu0 0.0
    %4438 = vmatmul.mubr.f32.gmra.mrb[0].mxu0 %v4288
    %v4439 = vpop.f32.mrb[0].mxu0
    %v4440 = vadd.f32 0.0, %v4439
    %v4441 = vpop.f32.mrb[0].mxu0
    %4442 = vmatprep.mubr.f32.mxu0 0.0
    %4443 = vmatmul.mubr.f32.gmra.mrb[0].mxu0 %v4289
    %v4444 = vpop.f32.mrb[0].mxu0
    %v4445 = vadd.f32 0.0, %v4444
    %v4446 = vpop.f32.mrb[0].mxu0
    %4447 = vmatprep.mubr.f32.mxu0 0.0
    %4448 = vmatmul.mubr.f32.gmra.mrb[0].mxu0 %v4290
    %v4449 = vpop.f32.mrb[0].mxu0
    %v4450 = vadd.f32 0.0, %v4449
    %v4451 = vpop.f32.mrb[0].mxu0
    %4452 = vdwg.mxu0
    %v4453 = vadd.f32 %v4258, %v4375
    %v4454 = vadd.f32 %v4259, %v4380
    %v4455 = vadd.f32 %v4260, %v4385
    %v4456 = vadd.f32 %v4261, %v4390
    %v4457 = vadd.f32 %v4262, %v4395
    %v4458 = vadd.f32 %v4263, %v4400
    %v4459 = vadd.f32 %v4264, %v4405
    %v4460 = vadd.f32 %v4265, %v4410
    %v4461 = vadd.f32 %v4266, %v4415
    %v4462 = vadd.f32 %v4267, %v4420
    %v4463 = vadd.f32 %v4268, %v4425
    %v4464 = vadd.f32 %v4269, %v4430
    %v4465 = vadd.f32 %v4270, %v4435
    %v4466 = vadd.f32 %v4271, %v4440
    %v4467 = vadd.f32 %v4272, %v4445
    %v4468 = vadd.f32 %v4273, %v4450
    %v4469 = vld [vmem:[%s4274 + $0x1] sm:$0xff]
    %v4470 = vld [vmem:[%s4274 + $0x11] sm:$0xff]
    %v4471 = vld [vmem:[%s4274 + $0x21] sm:$0xff]
    %v4472 = vld [vmem:[%s4274 + $0x31] sm:$0xff]
    %v4473 = vld [vmem:[%s4274 + $0x41] sm:$0xff]
    %v4474 = vld [vmem:[%s4274 + $0x51] sm:$0xff]
    %v4475 = vld [vmem:[%s4274 + $0x61] sm:$0xff]
    %v4476 = vld [vmem:[%s4274 + $0x71] sm:$0xff]
    %v4477 = vld [vmem:[%s4274 + $0xc1] sm:$0xff]
    %v4478 = vld [vmem:[%s4274 + $0xd1] sm:$0xff]
    %v4479 = vld [vmem:[%s4274 + $0xe1] sm:$0xff]
    %v4480 = vld [vmem:[%s4274 + $0xf1] sm:$0xff]
    %v4481 = vld [vmem:[%s4274 + $0x101] sm:$0xff]
    %v4482 = vld [vmem:[%s4274 + $0x111] sm:$0xff]
    %v4483 = vld [vmem:[%s4274 + $0x121] sm:$0xff]
    %v4484 = vld [vmem:[%s4274 + $0x131] sm:$0xff]
    %s4485 = scalar_lea.vmem %s3, 1408
    %v4486 = vld [vmem:[%s4485] sm:$0xff]
    %v4487 = vld [vmem:[%s4485 + $0x8] sm:$0xff]
    %v4488 = vld [vmem:[%s4485 + $0x10] sm:$0xff]
    %v4489 = vld [vmem:[%s4485 + $0x18] sm:$0xff]
    %v4490 = vld [vmem:[%s4485 + $0x20] sm:$0xff]
    %v4491 = vld [vmem:[%s4485 + $0x28] sm:$0xff]
    %v4492 = vld [vmem:[%s4485 + $0x30] sm:$0xff]
    %v4493 = vld [vmem:[%s4485 + $0x38] sm:$0xff]
    %v4494 = vld [vmem:[%s4485 + $0x40] sm:$0xff]
    %v4495 = vld [vmem:[%s4485 + $0x48] sm:$0xff]
    %v4496 = vld [vmem:[%s4485 + $0x50] sm:$0xff]
    %v4497 = vld [vmem:[%s4485 + $0x58] sm:$0xff]
    %v4498 = vld [vmem:[%s4485 + $0x60] sm:$0xff]
    %v4499 = vld [vmem:[%s4485 + $0x68] sm:$0xff]
    %v4500 = vld [vmem:[%s4485 + $0x70] sm:$0xff]
    %v4501 = vld [vmem:[%s4485 + $0x78] sm:$0xff]
    %4502 = vmatprep.subr.mxu0 0.0
    %4503 = vmatpush1.msra.mxu0 %v4486
    %4504 = vmatprep.subr.mxu0 0.0
    %4505 = vmatpush1.msra.mxu0 %v4487
    %4506 = vmatprep.subr.mxu0 0.0
    %4507 = vmatpush1.msra.mxu0 %v4488
    %4508 = vmatprep.subr.mxu0 0.0
    %4509 = vmatpush1.msra.mxu0 %v4489
    %4510 = vmatprep.subr.mxu0 0.0
    %4511 = vmatpush1.msra.mxu0 %v4490
    %4512 = vmatprep.subr.mxu0 0.0
    %4513 = vmatpush1.msra.mxu0 %v4491
    %4514 = vmatprep.subr.mxu0 0.0
    %4515 = vmatpush1.msra.mxu0 %v4492
    %4516 = vmatprep.subr.mxu0 0.0
    %4517 = vmatpush1.msra.mxu0 %v4493
    %4518 = vmatprep.subr.mxu0 0.0
    %4519 = vmatpush1.msra.mxu0 %v4494
    %4520 = vmatprep.subr.mxu0 0.0
    %4521 = vmatpush1.msra.mxu0 %v4495
    %4522 = vmatprep.subr.mxu0 0.0
    %4523 = vmatpush1.msra.mxu0 %v4496
    %4524 = vmatprep.subr.mxu0 0.0
    %4525 = vmatpush1.msra.mxu0 %v4497
    %4526 = vmatprep.subr.mxu0 0.0
    %4527 = vmatpush1.msra.mxu0 %v4498
    %4528 = vmatprep.subr.mxu0 0.0
    %4529 = vmatpush1.msra.mxu0 %v4499
    %4530 = vmatprep.subr.mxu0 0.0
    %4531 = vmatpush1.msra.mxu0 %v4500
    %4532 = vmatprep.subr.mxu0 0.0
    %4533 = vmatpush1.msra.mxu0 %v4501
    %4534 = vmatprep.subr.mxu0 0.0
    %4535 = vmatpush1.msra.mxu0 0.0
    %4536 = vmatprep.subr.mxu0 0.0
    %4537 = vmatpush1.msra.mxu0 0.0
    %4538 = vmatprep.subr.mxu0 0.0
    %4539 = vmatpush1.msra.mxu0 0.0
    %4540 = vmatprep.subr.mxu0 0.0
    %4541 = vmatpush1.msra.mxu0 0.0
    %4542 = vmatprep.subr.mxu0 0.0
    %4543 = vmatpush1.msra.mxu0 0.0
    %4544 = vmatprep.subr.mxu0 0.0
    %4545 = vmatpush1.msra.mxu0 0.0
    %4546 = vmatprep.subr.mxu0 0.0
    %4547 = vmatpush1.msra.mxu0 0.0
    %4548 = vmatprep.subr.mxu0 0.0
    %4549 = vmatpush1.msra.mxu0 0.0
    %4550 = vmatprep.subr.mxu0 0.0
    %4551 = vmatpush1.msra.mxu0 0.0
    %4552 = vmatprep.subr.mxu0 0.0
    %4553 = vmatpush1.msra.mxu0 0.0
    %4554 = vmatprep.subr.mxu0 0.0
    %4555 = vmatpush1.msra.mxu0 0.0
    %4556 = vmatprep.subr.mxu0 0.0
    %4557 = vmatpush1.msra.mxu0 0.0
    %4558 = vmatprep.subr.mxu0 0.0
    %4559 = vmatpush1.msra.mxu0 0.0
    %4560 = vmatprep.subr.mxu0 0.0
    %4561 = vmatpush1.msra.mxu0 0.0
    %4562 = vmatprep.subr.mxu0 0.0
    %4563 = vmatpush1.msra.mxu0 0.0
    %4564 = vmatprep.subr.mxu0 0.0
    %4565 = vmatpush1.msra.mxu0 0.0
    %4566 = vmatprep.mubr.f32.mxu0 0.0
    %4567 = vmatmul.mubr.f32.gmra.mrb[0].mxu0 %v4469
    %v4568 = vpop.f32.mrb[0].mxu0
    %v4569 = vadd.f32 0.0, %v4568
    %v4570 = vpop.f32.mrb[0].mxu0
    %4571 = vmatprep.mubr.f32.mxu0 0.0
    %4572 = vmatmul.mubr.f32.gmra.mrb[0].mxu0 %v4470
    %v4573 = vpop.f32.mrb[0].mxu0
    %v4574 = vadd.f32 0.0, %v4573
    %v4575 = vpop.f32.mrb[0].mxu0
    %4576 = vmatprep.mubr.f32.mxu0 0.0
    %4577 = vmatmul.mubr.f32.gmra.mrb[0].mxu0 %v4471
    %v4578 = vpop.f32.mrb[0].mxu0
    %v4579 = vadd.f32 0.0, %v4578
    %v4580 = vpop.f32.mrb[0].mxu0
    %4581 = vmatprep.mubr.f32.mxu0 0.0
    %4582 = vmatmul.mubr.f32.gmra.mrb[0].mxu0 %v4472
    %v4583 = vpop.f32.mrb[0].mxu0
    %v4584 = vadd.f32 0.0, %v4583
    %v4585 = vpop.f32.mrb[0].mxu0
    %4586 = vmatprep.mubr.f32.mxu0 0.0
    %4587 = vmatmul.mubr.f32.gmra.mrb[0].mxu0 %v4473
    %v4588 = vpop.f32.mrb[0].mxu0
    %v4589 = vadd.f32 0.0, %v4588
    %v4590 = vpop.f32.mrb[0].mxu0
    %4591 = vmatprep.mubr.f32.mxu0 0.0
    %4592 = vmatmul.mubr.f32.gmra.mrb[0].mxu0 %v4474
    %v4593 = vpop.f32.mrb[0].mxu0
    %v4594 = vadd.f32 0.0, %v4593
    %v4595 = vpop.f32.mrb[0].mxu0
    %4596 = vmatprep.mubr.f32.mxu0 0.0
    %4597 = vmatmul.mubr.f32.gmra.mrb[0].mxu0 %v4475
    %v4598 = vpop.f32.mrb[0].mxu0
    %v4599 = vadd.f32 0.0, %v4598
    %v4600 = vpop.f32.mrb[0].mxu0
    %4601 = vmatprep.mubr.f32.mxu0 0.0
    %4602 = vmatmul.mubr.f32.gmra.mrb[0].mxu0 %v4476
    %v4603 = vpop.f32.mrb[0].mxu0
    %v4604 = vadd.f32 0.0, %v4603
    %v4605 = vpop.f32.mrb[0].mxu0
    %4606 = vmatprep.mubr.f32.mxu0 0.0
    %4607 = vmatmul.mubr.f32.gmra.mrb[0].mxu0 %v4477
    %v4608 = vpop.f32.mrb[0].mxu0
    %v4609 = vadd.f32 0.0, %v4608
    %v4610 = vpop.f32.mrb[0].mxu0
    %4611 = vmatprep.mubr.f32.mxu0 0.0
    %4612 = vmatmul.mubr.f32.gmra.mrb[0].mxu0 %v4478
    %v4613 = vpop.f32.mrb[0].mxu0
    %v4614 = vadd.f32 0.0, %v4613
    %v4615 = vpop.f32.mrb[0].mxu0
    %4616 = vmatprep.mubr.f32.mxu0 0.0
    %4617 = vmatmul.mubr.f32.gmra.mrb[0].mxu0 %v4479
    %v4618 = vpop.f32.mrb[0].mxu0
    %v4619 = vadd.f32 0.0, %v4618
    %v4620 = vpop.f32.mrb[0].mxu0
    %4621 = vmatprep.mubr.f32.mxu0 0.0
    %4622 = vmatmul.mubr.f32.gmra.mrb[0].mxu0 %v4480
    %v4623 = vpop.f32.mrb[0].mxu0
    %v4624 = vadd.f32 0.0, %v4623
    %v4625 = vpop.f32.mrb[0].mxu0
    %4626 = vmatprep.mubr.f32.mxu0 0.0
    %4627 = vmatmul.mubr.f32.gmra.mrb[0].mxu0 %v4481
    %v4628 = vpop.f32.mrb[0].mxu0
    %v4629 = vadd.f32 0.0, %v4628
    %v4630 = vpop.f32.mrb[0].mxu0
    %4631 = vmatprep.mubr.f32.mxu0 0.0
    %4632 = vmatmul.mubr.f32.gmra.mrb[0].mxu0 %v4482
    %v4633 = vpop.f32.mrb[0].mxu0
    %v4634 = vadd.f32 0.0, %v4633
    %v4635 = vpop.f32.mrb[0].mxu0
    %4636 = vmatprep.mubr.f32.mxu0 0.0
    %4637 = vmatmul.mubr.f32.gmra.mrb[0].mxu0 %v4483
    %v4638 = vpop.f32.mrb[0].mxu0
    %v4639 = vadd.f32 0.0, %v4638
    %v4640 = vpop.f32.mrb[0].mxu0
    %4641 = vmatprep.mubr.f32.mxu0 0.0
    %4642 = vmatmul.mubr.f32.gmra.mrb[0].mxu0 %v4484
    %v4643 = vpop.f32.mrb[0].mxu0
    %v4644 = vadd.f32 0.0, %v4643
    %v4645 = vpop.f32.mrb[0].mxu0
    %4646 = vdwg.mxu0
    %v4647 = vadd.f32 %v4453, %v4569
    %v4648 = vadd.f32 %v4454, %v4574
    %v4649 = vadd.f32 %v4455, %v4579
    %v4650 = vadd.f32 %v4456, %v4584
    %v4651 = vadd.f32 %v4457, %v4589
    %v4652 = vadd.f32 %v4458, %v4594
    %v4653 = vadd.f32 %v4459, %v4599
    %v4654 = vadd.f32 %v4460, %v4604
    %v4655 = vadd.f32 %v4461, %v4609
    %v4656 = vadd.f32 %v4462, %v4614
    %v4657 = vadd.f32 %v4463, %v4619
    %v4658 = vadd.f32 %v4464, %v4624
    %v4659 = vadd.f32 %v4465, %v4629
    %v4660 = vadd.f32 %v4466, %v4634
    %v4661 = vadd.f32 %v4467, %v4639
    %v4662 = vadd.f32 %v4468, %v4644
    %v4663 = vld [vmem:[%s4274 + $0x2] sm:$0xff]
    %v4664 = vld [vmem:[%s4274 + $0x12] sm:$0xff]
    %v4665 = vld [vmem:[%s4274 + $0x22] sm:$0xff]
    %v4666 = vld [vmem:[%s4274 + $0x32] sm:$0xff]
    %v4667 = vld [vmem:[%s4274 + $0x42] sm:$0xff]
    %v4668 = vld [vmem:[%s4274 + $0x52] sm:$0xff]
    %v4669 = vld [vmem:[%s4274 + $0x62] sm:$0xff]
    %v4670 = vld [vmem:[%s4274 + $0x72] sm:$0xff]
    %v4671 = vld [vmem:[%s4274 + $0xc2] sm:$0xff]
    %v4672 = vld [vmem:[%s4274 + $0xd2] sm:$0xff]
    %v4673 = vld [vmem:[%s4274 + $0xe2] sm:$0xff]
    %v4674 = vld [vmem:[%s4274 + $0xf2] sm:$0xff]
    %v4675 = vld [vmem:[%s4274 + $0x102] sm:$0xff]
    %v4676 = vld [vmem:[%s4274 + $0x112] sm:$0xff]
    %v4677 = vld [vmem:[%s4274 + $0x122] sm:$0xff]
    %v4678 = vld [vmem:[%s4274 + $0x132] sm:$0xff]
    %s4679 = scalar_lea.vmem %s3, 1536
    %v4680 = vld [vmem:[%s4679] sm:$0xff]
    %v4681 = vld [vmem:[%s4679 + $0x8] sm:$0xff]
    %v4682 = vld [vmem:[%s4679 + $0x10] sm:$0xff]
    %v4683 = vld [vmem:[%s4679 + $0x18] sm:$0xff]
    %v4684 = vld [vmem:[%s4679 + $0x20] sm:$0xff]
    %v4685 = vld [vmem:[%s4679 + $0x28] sm:$0xff]
    %v4686 = vld [vmem:[%s4679 + $0x30] sm:$0xff]
    %v4687 = vld [vmem:[%s4679 + $0x38] sm:$0xff]
    %v4688 = vld [vmem:[%s4679 + $0x40] sm:$0xff]
    %v4689 = vld [vmem:[%s4679 + $0x48] sm:$0xff]
    %v4690 = vld [vmem:[%s4679 + $0x50] sm:$0xff]
    %v4691 = vld [vmem:[%s4679 + $0x58] sm:$0xff]
    %v4692 = vld [vmem:[%s4679 + $0x60] sm:$0xff]
    %v4693 = vld [vmem:[%s4679 + $0x68] sm:$0xff]
    %v4694 = vld [vmem:[%s4679 + $0x70] sm:$0xff]
    %v4695 = vld [vmem:[%s4679 + $0x78] sm:$0xff]
    %4696 = vmatprep.subr.mxu0 0.0
    %4697 = vmatpush1.msra.mxu0 %v4680
    %4698 = vmatprep.subr.mxu0 0.0
    %4699 = vmatpush1.msra.mxu0 %v4681
    %4700 = vmatprep.subr.mxu0 0.0
    %4701 = vmatpush1.msra.mxu0 %v4682
    %4702 = vmatprep.subr.mxu0 0.0
    %4703 = vmatpush1.msra.mxu0 %v4683
    %4704 = vmatprep.subr.mxu0 0.0
    %4705 = vmatpush1.msra.mxu0 %v4684
    %4706 = vmatprep.subr.mxu0 0.0
    %4707 = vmatpush1.msra.mxu0 %v4685
    %4708 = vmatprep.subr.mxu0 0.0
    %4709 = vmatpush1.msra.mxu0 %v4686
    %4710 = vmatprep.subr.mxu0 0.0
    %4711 = vmatpush1.msra.mxu0 %v4687
    %4712 = vmatprep.subr.mxu0 0.0
    %4713 = vmatpush1.msra.mxu0 %v4688
    %4714 = vmatprep.subr.mxu0 0.0
    %4715 = vmatpush1.msra.mxu0 %v4689
    %4716 = vmatprep.subr.mxu0 0.0
    %4717 = vmatpush1.msra.mxu0 %v4690
    %4718 = vmatprep.subr.mxu0 0.0
    %4719 = vmatpush1.msra.mxu0 %v4691
    %4720 = vmatprep.subr.mxu0 0.0
    %4721 = vmatpush1.msra.mxu0 %v4692
    %4722 = vmatprep.subr.mxu0 0.0
    %4723 = vmatpush1.msra.mxu0 %v4693
    %4724 = vmatprep.subr.mxu0 0.0
    %4725 = vmatpush1.msra.mxu0 %v4694
    %4726 = vmatprep.subr.mxu0 0.0
    %4727 = vmatpush1.msra.mxu0 %v4695
    %4728 = vmatprep.subr.mxu0 0.0
    %4729 = vmatpush1.msra.mxu0 0.0
    %4730 = vmatprep.subr.mxu0 0.0
    %4731 = vmatpush1.msra.mxu0 0.0
    %4732 = vmatprep.subr.mxu0 0.0
    %4733 = vmatpush1.msra.mxu0 0.0
    %4734 = vmatprep.subr.mxu0 0.0
    %4735 = vmatpush1.msra.mxu0 0.0
    %4736 = vmatprep.subr.mxu0 0.0
    %4737 = vmatpush1.msra.mxu0 0.0
    %4738 = vmatprep.subr.mxu0 0.0
    %4739 = vmatpush1.msra.mxu0 0.0
    %4740 = vmatprep.subr.mxu0 0.0
    %4741 = vmatpush1.msra.mxu0 0.0
    %4742 = vmatprep.subr.mxu0 0.0
    %4743 = vmatpush1.msra.mxu0 0.0
    %4744 = vmatprep.subr.mxu0 0.0
    %4745 = vmatpush1.msra.mxu0 0.0
    %4746 = vmatprep.subr.mxu0 0.0
    %4747 = vmatpush1.msra.mxu0 0.0
    %4748 = vmatprep.subr.mxu0 0.0
    %4749 = vmatpush1.msra.mxu0 0.0
    %4750 = vmatprep.subr.mxu0 0.0
    %4751 = vmatpush1.msra.mxu0 0.0
    %4752 = vmatprep.subr.mxu0 0.0
    %4753 = vmatpush1.msra.mxu0 0.0
    %4754 = vmatprep.subr.mxu0 0.0
    %4755 = vmatpush1.msra.mxu0 0.0
    %4756 = vmatprep.subr.mxu0 0.0
    %4757 = vmatpush1.msra.mxu0 0.0
    %4758 = vmatprep.subr.mxu0 0.0
    %4759 = vmatpush1.msra.mxu0 0.0
    %4760 = vmatprep.mubr.f32.mxu0 0.0
    %4761 = vmatmul.mubr.f32.gmra.mrb[0].mxu0 %v4663
    %v4762 = vpop.f32.mrb[0].mxu0
    %v4763 = vadd.f32 0.0, %v4762
    %v4764 = vpop.f32.mrb[0].mxu0
    %4765 = vmatprep.mubr.f32.mxu0 0.0
    %4766 = vmatmul.mubr.f32.gmra.mrb[0].mxu0 %v4664
    %v4767 = vpop.f32.mrb[0].mxu0
    %v4768 = vadd.f32 0.0, %v4767
    %v4769 = vpop.f32.mrb[0].mxu0
    %4770 = vmatprep.mubr.f32.mxu0 0.0
    %4771 = vmatmul.mubr.f32.gmra.mrb[0].mxu0 %v4665
    %v4772 = vpop.f32.mrb[0].mxu0
    %v4773 = vadd.f32 0.0, %v4772
    %v4774 = vpop.f32.mrb[0].mxu0
    %4775 = vmatprep.mubr.f32.mxu0 0.0
    %4776 = vmatmul.mubr.f32.gmra.mrb[0].mxu0 %v4666
    %v4777 = vpop.f32.mrb[0].mxu0
    %v4778 = vadd.f32 0.0, %v4777
    %v4779 = vpop.f32.mrb[0].mxu0
    %4780 = vmatprep.mubr.f32.mxu0 0.0
    %4781 = vmatmul.mubr.f32.gmra.mrb[0].mxu0 %v4667
    %v4782 = vpop.f32.mrb[0].mxu0
    %v4783 = vadd.f32 0.0, %v4782
    %v4784 = vpop.f32.mrb[0].mxu0
    %4785 = vmatprep.mubr.f32.mxu0 0.0
    %4786 = vmatmul.mubr.f32.gmra.mrb[0].mxu0 %v4668
    %v4787 = vpop.f32.mrb[0].mxu0
    %v4788 = vadd.f32 0.0, %v4787
    %v4789 = vpop.f32.mrb[0].mxu0
    %4790 = vmatprep.mubr.f32.mxu0 0.0
    %4791 = vmatmul.mubr.f32.gmra.mrb[0].mxu0 %v4669
    %v4792 = vpop.f32.mrb[0].mxu0
    %v4793 = vadd.f32 0.0, %v4792
    %v4794 = vpop.f32.mrb[0].mxu0
    %4795 = vmatprep.mubr.f32.mxu0 0.0
    %4796 = vmatmul.mubr.f32.gmra.mrb[0].mxu0 %v4670
    %v4797 = vpop.f32.mrb[0].mxu0
    %v4798 = vadd.f32 0.0, %v4797
    %v4799 = vpop.f32.mrb[0].mxu0
    %4800 = vmatprep.mubr.f32.mxu0 0.0
    %4801 = vmatmul.mubr.f32.gmra.mrb[0].mxu0 %v4671
    %v4802 = vpop.f32.mrb[0].mxu0
    %v4803 = vadd.f32 0.0, %v4802
    %v4804 = vpop.f32.mrb[0].mxu0
    %4805 = vmatprep.mubr.f32.mxu0 0.0
    %4806 = vmatmul.mubr.f32.gmra.mrb[0].mxu0 %v4672
    %v4807 = vpop.f32.mrb[0].mxu0
    %v4808 = vadd.f32 0.0, %v4807
    %v4809 = vpop.f32.mrb[0].mxu0
    %4810 = vmatprep.mubr.f32.mxu0 0.0
    %4811 = vmatmul.mubr.f32.gmra.mrb[0].mxu0 %v4673
    %v4812 = vpop.f32.mrb[0].mxu0
    %v4813 = vadd.f32 0.0, %v4812
    %v4814 = vpop.f32.mrb[0].mxu0
    %4815 = vmatprep.mubr.f32.mxu0 0.0
    %4816 = vmatmul.mubr.f32.gmra.mrb[0].mxu0 %v4674
    %v4817 = vpop.f32.mrb[0].mxu0
    %v4818 = vadd.f32 0.0, %v4817
    %v4819 = vpop.f32.mrb[0].mxu0
    %4820 = vmatprep.mubr.f32.mxu0 0.0
    %4821 = vmatmul.mubr.f32.gmra.mrb[0].mxu0 %v4675
    %v4822 = vpop.f32.mrb[0].mxu0
    %v4823 = vadd.f32 0.0, %v4822
    %v4824 = vpop.f32.mrb[0].mxu0
    %4825 = vmatprep.mubr.f32.mxu0 0.0
    %4826 = vmatmul.mubr.f32.gmra.mrb[0].mxu0 %v4676
    %v4827 = vpop.f32.mrb[0].mxu0
    %v4828 = vadd.f32 0.0, %v4827
    %v4829 = vpop.f32.mrb[0].mxu0
    %4830 = vmatprep.mubr.f32.mxu0 0.0
    %4831 = vmatmul.mubr.f32.gmra.mrb[0].mxu0 %v4677
    %v4832 = vpop.f32.mrb[0].mxu0
    %v4833 = vadd.f32 0.0, %v4832
    %v4834 = vpop.f32.mrb[0].mxu0
    %4835 = vmatprep.mubr.f32.mxu0 0.0
    %4836 = vmatmul.mubr.f32.gmra.mrb[0].mxu0 %v4678
    %v4837 = vpop.f32.mrb[0].mxu0
    %v4838 = vadd.f32 0.0, %v4837
    %v4839 = vpop.f32.mrb[0].mxu0
    %4840 = vdwg.mxu0
    %v4841 = vadd.f32 %v4647, %v4763
    %v4842 = vadd.f32 %v4648, %v4768
    %v4843 = vadd.f32 %v4649, %v4773
    %v4844 = vadd.f32 %v4650, %v4778
    %v4845 = vadd.f32 %v4651, %v4783
    %v4846 = vadd.f32 %v4652, %v4788
    %v4847 = vadd.f32 %v4653, %v4793
    %v4848 = vadd.f32 %v4654, %v4798
    %v4849 = vadd.f32 %v4655, %v4803
    %v4850 = vadd.f32 %v4656, %v4808
    %v4851 = vadd.f32 %v4657, %v4813
    %v4852 = vadd.f32 %v4658, %v4818
    %v4853 = vadd.f32 %v4659, %v4823
    %v4854 = vadd.f32 %v4660, %v4828
    %v4855 = vadd.f32 %v4661, %v4833
    %v4856 = vadd.f32 %v4662, %v4838
    %v4857 = vld [vmem:[%s4274 + $0x3] sm:$0xff]
    %v4858 = vld [vmem:[%s4274 + $0x13] sm:$0xff]
    %v4859 = vld [vmem:[%s4274 + $0x23] sm:$0xff]
    %v4860 = vld [vmem:[%s4274 + $0x33] sm:$0xff]
    %v4861 = vld [vmem:[%s4274 + $0x43] sm:$0xff]
    %v4862 = vld [vmem:[%s4274 + $0x53] sm:$0xff]
    %v4863 = vld [vmem:[%s4274 + $0x63] sm:$0xff]
    %v4864 = vld [vmem:[%s4274 + $0x73] sm:$0xff]
    %v4865 = vld [vmem:[%s4274 + $0xc3] sm:$0xff]
    %v4866 = vld [vmem:[%s4274 + $0xd3] sm:$0xff]
    %v4867 = vld [vmem:[%s4274 + $0xe3] sm:$0xff]
    %v4868 = vld [vmem:[%s4274 + $0xf3] sm:$0xff]
    %v4869 = vld [vmem:[%s4274 + $0x103] sm:$0xff]
    %v4870 = vld [vmem:[%s4274 + $0x113] sm:$0xff]
    %v4871 = vld [vmem:[%s4274 + $0x123] sm:$0xff]
    %v4872 = vld [vmem:[%s4274 + $0x133] sm:$0xff]
    %s4873 = scalar_lea.vmem %s3, 1664
    %v4874 = vld [vmem:[%s4873] sm:$0xff]
    %v4875 = vld [vmem:[%s4873 + $0x8] sm:$0xff]
    %v4876 = vld [vmem:[%s4873 + $0x10] sm:$0xff]
    %v4877 = vld [vmem:[%s4873 + $0x18] sm:$0xff]
    %v4878 = vld [vmem:[%s4873 + $0x20] sm:$0xff]
    %v4879 = vld [vmem:[%s4873 + $0x28] sm:$0xff]
    %v4880 = vld [vmem:[%s4873 + $0x30] sm:$0xff]
    %v4881 = vld [vmem:[%s4873 + $0x38] sm:$0xff]
    %v4882 = vld [vmem:[%s4873 + $0x40] sm:$0xff]
    %v4883 = vld [vmem:[%s4873 + $0x48] sm:$0xff]
    %v4884 = vld [vmem:[%s4873 + $0x50] sm:$0xff]
    %v4885 = vld [vmem:[%s4873 + $0x58] sm:$0xff]
    %v4886 = vld [vmem:[%s4873 + $0x60] sm:$0xff]
    %v4887 = vld [vmem:[%s4873 + $0x68] sm:$0xff]
    %v4888 = vld [vmem:[%s4873 + $0x70] sm:$0xff]
    %v4889 = vld [vmem:[%s4873 + $0x78] sm:$0xff]
    %4890 = vmatprep.subr.mxu0 0.0
    %4891 = vmatpush1.msra.mxu0 %v4874
    %4892 = vmatprep.subr.mxu0 0.0
    %4893 = vmatpush1.msra.mxu0 %v4875
    %4894 = vmatprep.subr.mxu0 0.0
    %4895 = vmatpush1.msra.mxu0 %v4876
    %4896 = vmatprep.subr.mxu0 0.0
    %4897 = vmatpush1.msra.mxu0 %v4877
    %4898 = vmatprep.subr.mxu0 0.0
    %4899 = vmatpush1.msra.mxu0 %v4878
    %4900 = vmatprep.subr.mxu0 0.0
    %4901 = vmatpush1.msra.mxu0 %v4879
    %4902 = vmatprep.subr.mxu0 0.0
    %4903 = vmatpush1.msra.mxu0 %v4880
    %4904 = vmatprep.subr.mxu0 0.0
    %4905 = vmatpush1.msra.mxu0 %v4881
    %4906 = vmatprep.subr.mxu0 0.0
    %4907 = vmatpush1.msra.mxu0 %v4882
    %4908 = vmatprep.subr.mxu0 0.0
    %4909 = vmatpush1.msra.mxu0 %v4883
    %4910 = vmatprep.subr.mxu0 0.0
    %4911 = vmatpush1.msra.mxu0 %v4884
    %4912 = vmatprep.subr.mxu0 0.0
    %4913 = vmatpush1.msra.mxu0 %v4885
    %4914 = vmatprep.subr.mxu0 0.0
    %4915 = vmatpush1.msra.mxu0 %v4886
    %4916 = vmatprep.subr.mxu0 0.0
    %4917 = vmatpush1.msra.mxu0 %v4887
    %4918 = vmatprep.subr.mxu0 0.0
    %4919 = vmatpush1.msra.mxu0 %v4888
    %4920 = vmatprep.subr.mxu0 0.0
    %4921 = vmatpush1.msra.mxu0 %v4889
    %4922 = vmatprep.subr.mxu0 0.0
    %4923 = vmatpush1.msra.mxu0 0.0
    %4924 = vmatprep.subr.mxu0 0.0
    %4925 = vmatpush1.msra.mxu0 0.0
    %4926 = vmatprep.subr.mxu0 0.0
    %4927 = vmatpush1.msra.mxu0 0.0
    %4928 = vmatprep.subr.mxu0 0.0
    %4929 = vmatpush1.msra.mxu0 0.0
    %4930 = vmatprep.subr.mxu0 0.0
    %4931 = vmatpush1.msra.mxu0 0.0
    %4932 = vmatprep.subr.mxu0 0.0
    %4933 = vmatpush1.msra.mxu0 0.0
    %4934 = vmatprep.subr.mxu0 0.0
    %4935 = vmatpush1.msra.mxu0 0.0
    %4936 = vmatprep.subr.mxu0 0.0
    %4937 = vmatpush1.msra.mxu0 0.0
    %4938 = vmatprep.subr.mxu0 0.0
    %4939 = vmatpush1.msra.mxu0 0.0
    %4940 = vmatprep.subr.mxu0 0.0
    %4941 = vmatpush1.msra.mxu0 0.0
    %4942 = vmatprep.subr.mxu0 0.0
    %4943 = vmatpush1.msra.mxu0 0.0
    %4944 = vmatprep.subr.mxu0 0.0
    %4945 = vmatpush1.msra.mxu0 0.0
    %4946 = vmatprep.subr.mxu0 0.0
    %4947 = vmatpush1.msra.mxu0 0.0
    %4948 = vmatprep.subr.mxu0 0.0
    %4949 = vmatpush1.msra.mxu0 0.0
    %4950 = vmatprep.subr.mxu0 0.0
    %4951 = vmatpush1.msra.mxu0 0.0
    %4952 = vmatprep.subr.mxu0 0.0
    %4953 = vmatpush1.msra.mxu0 0.0
    %4954 = vmatprep.mubr.f32.mxu0 0.0
    %4955 = vmatmul.mubr.f32.gmra.mrb[0].mxu0 %v4857
    %v4956 = vpop.f32.mrb[0].mxu0
    %v4957 = vadd.f32 0.0, %v4956
    %v4958 = vpop.f32.mrb[0].mxu0
    %4959 = vmatprep.mubr.f32.mxu0 0.0
    %4960 = vmatmul.mubr.f32.gmra.mrb[0].mxu0 %v4858
    %v4961 = vpop.f32.mrb[0].mxu0
    %v4962 = vadd.f32 0.0, %v4961
    %v4963 = vpop.f32.mrb[0].mxu0
    %4964 = vmatprep.mubr.f32.mxu0 0.0
    %4965 = vmatmul.mubr.f32.gmra.mrb[0].mxu0 %v4859
    %v4966 = vpop.f32.mrb[0].mxu0
    %v4967 = vadd.f32 0.0, %v4966
    %v4968 = vpop.f32.mrb[0].mxu0
    %4969 = vmatprep.mubr.f32.mxu0 0.0
    %4970 = vmatmul.mubr.f32.gmra.mrb[0].mxu0 %v4860
    %v4971 = vpop.f32.mrb[0].mxu0
    %v4972 = vadd.f32 0.0, %v4971
    %v4973 = vpop.f32.mrb[0].mxu0
    %4974 = vmatprep.mubr.f32.mxu0 0.0
    %4975 = vmatmul.mubr.f32.gmra.mrb[0].mxu0 %v4861
    %v4976 = vpop.f32.mrb[0].mxu0
    %v4977 = vadd.f32 0.0, %v4976
    %v4978 = vpop.f32.mrb[0].mxu0
    %4979 = vmatprep.mubr.f32.mxu0 0.0
    %4980 = vmatmul.mubr.f32.gmra.mrb[0].mxu0 %v4862
    %v4981 = vpop.f32.mrb[0].mxu0
    %v4982 = vadd.f32 0.0, %v4981
    %v4983 = vpop.f32.mrb[0].mxu0
    %4984 = vmatprep.mubr.f32.mxu0 0.0
    %4985 = vmatmul.mubr.f32.gmra.mrb[0].mxu0 %v4863
    %v4986 = vpop.f32.mrb[0].mxu0
    %v4987 = vadd.f32 0.0, %v4986
    %v4988 = vpop.f32.mrb[0].mxu0
    %4989 = vmatprep.mubr.f32.mxu0 0.0
    %4990 = vmatmul.mubr.f32.gmra.mrb[0].mxu0 %v4864
    %v4991 = vpop.f32.mrb[0].mxu0
    %v4992 = vadd.f32 0.0, %v4991
    %v4993 = vpop.f32.mrb[0].mxu0
    %4994 = vmatprep.mubr.f32.mxu0 0.0
    %4995 = vmatmul.mubr.f32.gmra.mrb[0].mxu0 %v4865
    %v4996 = vpop.f32.mrb[0].mxu0
    %v4997 = vadd.f32 0.0, %v4996
    %v4998 = vpop.f32.mrb[0].mxu0
    %4999 = vmatprep.mubr.f32.mxu0 0.0
    %5000 = vmatmul.mubr.f32.gmra.mrb[0].mxu0 %v4866
    %v5001 = vpop.f32.mrb[0].mxu0
    %v5002 = vadd.f32 0.0, %v5001
    %v5003 = vpop.f32.mrb[0].mxu0
    %5004 = vmatprep.mubr.f32.mxu0 0.0
    %5005 = vmatmul.mubr.f32.gmra.mrb[0].mxu0 %v4867
    %v5006 = vpop.f32.mrb[0].mxu0
    %v5007 = vadd.f32 0.0, %v5006
    %v5008 = vpop.f32.mrb[0].mxu0
    %5009 = vmatprep.mubr.f32.mxu0 0.0
    %5010 = vmatmul.mubr.f32.gmra.mrb[0].mxu0 %v4868
    %v5011 = vpop.f32.mrb[0].mxu0
    %v5012 = vadd.f32 0.0, %v5011
    %v5013 = vpop.f32.mrb[0].mxu0
    %5014 = vmatprep.mubr.f32.mxu0 0.0
    %5015 = vmatmul.mubr.f32.gmra.mrb[0].mxu0 %v4869
    %v5016 = vpop.f32.mrb[0].mxu0
    %v5017 = vadd.f32 0.0, %v5016
    %v5018 = vpop.f32.mrb[0].mxu0
    %5019 = vmatprep.mubr.f32.mxu0 0.0
    %5020 = vmatmul.mubr.f32.gmra.mrb[0].mxu0 %v4870
    %v5021 = vpop.f32.mrb[0].mxu0
    %v5022 = vadd.f32 0.0, %v5021
    %v5023 = vpop.f32.mrb[0].mxu0
    %5024 = vmatprep.mubr.f32.mxu0 0.0
    %5025 = vmatmul.mubr.f32.gmra.mrb[0].mxu0 %v4871
    %v5026 = vpop.f32.mrb[0].mxu0
    %v5027 = vadd.f32 0.0, %v5026
    %v5028 = vpop.f32.mrb[0].mxu0
    %5029 = vmatprep.mubr.f32.mxu0 0.0
    %5030 = vmatmul.mubr.f32.gmra.mrb[0].mxu0 %v4872
    %v5031 = vpop.f32.mrb[0].mxu0
    %v5032 = vadd.f32 0.0, %v5031
    %v5033 = vpop.f32.mrb[0].mxu0
    %5034 = vdwg.mxu0
    %v5035 = vadd.f32 %v4841, %v4957
    %v5036 = vadd.f32 %v4842, %v4962
    %v5037 = vadd.f32 %v4843, %v4967
    %v5038 = vadd.f32 %v4844, %v4972
    %v5039 = vadd.f32 %v4845, %v4977
    %v5040 = vadd.f32 %v4846, %v4982
    %v5041 = vadd.f32 %v4847, %v4987
    %v5042 = vadd.f32 %v4848, %v4992
    %v5043 = vadd.f32 %v4849, %v4997
    %v5044 = vadd.f32 %v4850, %v5002
    %v5045 = vadd.f32 %v4851, %v5007
    %v5046 = vadd.f32 %v4852, %v5012
    %v5047 = vadd.f32 %v4853, %v5017
    %v5048 = vadd.f32 %v4854, %v5022
    %v5049 = vadd.f32 %v4855, %v5027
    %v5050 = vadd.f32 %v4856, %v5032
    %v5051 = vld [vmem:[%s4274 + $0x4] sm:$0xff]
    %v5052 = vld [vmem:[%s4274 + $0x14] sm:$0xff]
    %v5053 = vld [vmem:[%s4274 + $0x24] sm:$0xff]
    %v5054 = vld [vmem:[%s4274 + $0x34] sm:$0xff]
    %v5055 = vld [vmem:[%s4274 + $0x44] sm:$0xff]
    %v5056 = vld [vmem:[%s4274 + $0x54] sm:$0xff]
    %v5057 = vld [vmem:[%s4274 + $0x64] sm:$0xff]
    %v5058 = vld [vmem:[%s4274 + $0x74] sm:$0xff]
    %v5059 = vld [vmem:[%s4274 + $0xc4] sm:$0xff]
    %v5060 = vld [vmem:[%s4274 + $0xd4] sm:$0xff]
    %v5061 = vld [vmem:[%s4274 + $0xe4] sm:$0xff]
    %v5062 = vld [vmem:[%s4274 + $0xf4] sm:$0xff]
    %v5063 = vld [vmem:[%s4274 + $0x104] sm:$0xff]
    %v5064 = vld [vmem:[%s4274 + $0x114] sm:$0xff]
    %v5065 = vld [vmem:[%s4274 + $0x124] sm:$0xff]
    %v5066 = vld [vmem:[%s4274 + $0x134] sm:$0xff]
    %s5067 = scalar_lea.vmem %s3, 1792
    %v5068 = vld [vmem:[%s5067] sm:$0xff]
    %v5069 = vld [vmem:[%s5067 + $0x8] sm:$0xff]
    %v5070 = vld [vmem:[%s5067 + $0x10] sm:$0xff]
    %v5071 = vld [vmem:[%s5067 + $0x18] sm:$0xff]
    %v5072 = vld [vmem:[%s5067 + $0x20] sm:$0xff]
    %v5073 = vld [vmem:[%s5067 + $0x28] sm:$0xff]
    %v5074 = vld [vmem:[%s5067 + $0x30] sm:$0xff]
    %v5075 = vld [vmem:[%s5067 + $0x38] sm:$0xff]
    %v5076 = vld [vmem:[%s5067 + $0x40] sm:$0xff]
    %v5077 = vld [vmem:[%s5067 + $0x48] sm:$0xff]
    %v5078 = vld [vmem:[%s5067 + $0x50] sm:$0xff]
    %v5079 = vld [vmem:[%s5067 + $0x58] sm:$0xff]
    %v5080 = vld [vmem:[%s5067 + $0x60] sm:$0xff]
    %v5081 = vld [vmem:[%s5067 + $0x68] sm:$0xff]
    %v5082 = vld [vmem:[%s5067 + $0x70] sm:$0xff]
    %v5083 = vld [vmem:[%s5067 + $0x78] sm:$0xff]
    %5084 = vmatprep.subr.mxu0 0.0
    %5085 = vmatpush1.msra.mxu0 %v5068
    %5086 = vmatprep.subr.mxu0 0.0
    %5087 = vmatpush1.msra.mxu0 %v5069
    %5088 = vmatprep.subr.mxu0 0.0
    %5089 = vmatpush1.msra.mxu0 %v5070
    %5090 = vmatprep.subr.mxu0 0.0
    %5091 = vmatpush1.msra.mxu0 %v5071
    %5092 = vmatprep.subr.mxu0 0.0
    %5093 = vmatpush1.msra.mxu0 %v5072
    %5094 = vmatprep.subr.mxu0 0.0
    %5095 = vmatpush1.msra.mxu0 %v5073
    %5096 = vmatprep.subr.mxu0 0.0
    %5097 = vmatpush1.msra.mxu0 %v5074
    %5098 = vmatprep.subr.mxu0 0.0
    %5099 = vmatpush1.msra.mxu0 %v5075
    %5100 = vmatprep.subr.mxu0 0.0
    %5101 = vmatpush1.msra.mxu0 %v5076
    %5102 = vmatprep.subr.mxu0 0.0
    %5103 = vmatpush1.msra.mxu0 %v5077
    %5104 = vmatprep.subr.mxu0 0.0
    %5105 = vmatpush1.msra.mxu0 %v5078
    %5106 = vmatprep.subr.mxu0 0.0
    %5107 = vmatpush1.msra.mxu0 %v5079
    %5108 = vmatprep.subr.mxu0 0.0
    %5109 = vmatpush1.msra.mxu0 %v5080
    %5110 = vmatprep.subr.mxu0 0.0
    %5111 = vmatpush1.msra.mxu0 %v5081
    %5112 = vmatprep.subr.mxu0 0.0
    %5113 = vmatpush1.msra.mxu0 %v5082
    %5114 = vmatprep.subr.mxu0 0.0
    %5115 = vmatpush1.msra.mxu0 %v5083
    %5116 = vmatprep.subr.mxu0 0.0
    %5117 = vmatpush1.msra.mxu0 0.0
    %5118 = vmatprep.subr.mxu0 0.0
    %5119 = vmatpush1.msra.mxu0 0.0
    %5120 = vmatprep.subr.mxu0 0.0
    %5121 = vmatpush1.msra.mxu0 0.0
    %5122 = vmatprep.subr.mxu0 0.0
    %5123 = vmatpush1.msra.mxu0 0.0
    %5124 = vmatprep.subr.mxu0 0.0
    %5125 = vmatpush1.msra.mxu0 0.0
    %5126 = vmatprep.subr.mxu0 0.0
    %5127 = vmatpush1.msra.mxu0 0.0
    %5128 = vmatprep.subr.mxu0 0.0
    %5129 = vmatpush1.msra.mxu0 0.0
    %5130 = vmatprep.subr.mxu0 0.0
    %5131 = vmatpush1.msra.mxu0 0.0
    %5132 = vmatprep.subr.mxu0 0.0
    %5133 = vmatpush1.msra.mxu0 0.0
    %5134 = vmatprep.subr.mxu0 0.0
    %5135 = vmatpush1.msra.mxu0 0.0
    %5136 = vmatprep.subr.mxu0 0.0
    %5137 = vmatpush1.msra.mxu0 0.0
    %5138 = vmatprep.subr.mxu0 0.0
    %5139 = vmatpush1.msra.mxu0 0.0
    %5140 = vmatprep.subr.mxu0 0.0
    %5141 = vmatpush1.msra.mxu0 0.0
    %5142 = vmatprep.subr.mxu0 0.0
    %5143 = vmatpush1.msra.mxu0 0.0
    %5144 = vmatprep.subr.mxu0 0.0
    %5145 = vmatpush1.msra.mxu0 0.0
    %5146 = vmatprep.subr.mxu0 0.0
    %5147 = vmatpush1.msra.mxu0 0.0
    %5148 = vmatprep.mubr.f32.mxu0 0.0
    %5149 = vmatmul.mubr.f32.gmra.mrb[0].mxu0 %v5051
    %v5150 = vpop.f32.mrb[0].mxu0
    %v5151 = vadd.f32 0.0, %v5150
    %v5152 = vpop.f32.mrb[0].mxu0
    %5153 = vmatprep.mubr.f32.mxu0 0.0
    %5154 = vmatmul.mubr.f32.gmra.mrb[0].mxu0 %v5052
    %v5155 = vpop.f32.mrb[0].mxu0
    %v5156 = vadd.f32 0.0, %v5155
    %v5157 = vpop.f32.mrb[0].mxu0
    %5158 = vmatprep.mubr.f32.mxu0 0.0
    %5159 = vmatmul.mubr.f32.gmra.mrb[0].mxu0 %v5053
    %v5160 = vpop.f32.mrb[0].mxu0
    %v5161 = vadd.f32 0.0, %v5160
    %v5162 = vpop.f32.mrb[0].mxu0
    %5163 = vmatprep.mubr.f32.mxu0 0.0
    %5164 = vmatmul.mubr.f32.gmra.mrb[0].mxu0 %v5054
    %v5165 = vpop.f32.mrb[0].mxu0
    %v5166 = vadd.f32 0.0, %v5165
    %v5167 = vpop.f32.mrb[0].mxu0
    %5168 = vmatprep.mubr.f32.mxu0 0.0
    %5169 = vmatmul.mubr.f32.gmra.mrb[0].mxu0 %v5055
    %v5170 = vpop.f32.mrb[0].mxu0
    %v5171 = vadd.f32 0.0, %v5170
    %v5172 = vpop.f32.mrb[0].mxu0
    %5173 = vmatprep.mubr.f32.mxu0 0.0
    %5174 = vmatmul.mubr.f32.gmra.mrb[0].mxu0 %v5056
    %v5175 = vpop.f32.mrb[0].mxu0
    %v5176 = vadd.f32 0.0, %v5175
    %v5177 = vpop.f32.mrb[0].mxu0
    %5178 = vmatprep.mubr.f32.mxu0 0.0
    %5179 = vmatmul.mubr.f32.gmra.mrb[0].mxu0 %v5057
    %v5180 = vpop.f32.mrb[0].mxu0
    %v5181 = vadd.f32 0.0, %v5180
    %v5182 = vpop.f32.mrb[0].mxu0
    %5183 = vmatprep.mubr.f32.mxu0 0.0
    %5184 = vmatmul.mubr.f32.gmra.mrb[0].mxu0 %v5058
    %v5185 = vpop.f32.mrb[0].mxu0
    %v5186 = vadd.f32 0.0, %v5185
    %v5187 = vpop.f32.mrb[0].mxu0
    %5188 = vmatprep.mubr.f32.mxu0 0.0
    %5189 = vmatmul.mubr.f32.gmra.mrb[0].mxu0 %v5059
    %v5190 = vpop.f32.mrb[0].mxu0
    %v5191 = vadd.f32 0.0, %v5190
    %v5192 = vpop.f32.mrb[0].mxu0
    %5193 = vmatprep.mubr.f32.mxu0 0.0
    %5194 = vmatmul.mubr.f32.gmra.mrb[0].mxu0 %v5060
    %v5195 = vpop.f32.mrb[0].mxu0
    %v5196 = vadd.f32 0.0, %v5195
    %v5197 = vpop.f32.mrb[0].mxu0
    %5198 = vmatprep.mubr.f32.mxu0 0.0
    %5199 = vmatmul.mubr.f32.gmra.mrb[0].mxu0 %v5061
    %v5200 = vpop.f32.mrb[0].mxu0
    %v5201 = vadd.f32 0.0, %v5200
    %v5202 = vpop.f32.mrb[0].mxu0
    %5203 = vmatprep.mubr.f32.mxu0 0.0
    %5204 = vmatmul.mubr.f32.gmra.mrb[0].mxu0 %v5062
    %v5205 = vpop.f32.mrb[0].mxu0
    %v5206 = vadd.f32 0.0, %v5205
    %v5207 = vpop.f32.mrb[0].mxu0
    %5208 = vmatprep.mubr.f32.mxu0 0.0
    %5209 = vmatmul.mubr.f32.gmra.mrb[0].mxu0 %v5063
    %v5210 = vpop.f32.mrb[0].mxu0
    %v5211 = vadd.f32 0.0, %v5210
    %v5212 = vpop.f32.mrb[0].mxu0
    %5213 = vmatprep.mubr.f32.mxu0 0.0
    %5214 = vmatmul.mubr.f32.gmra.mrb[0].mxu0 %v5064
    %v5215 = vpop.f32.mrb[0].mxu0
    %v5216 = vadd.f32 0.0, %v5215
    %v5217 = vpop.f32.mrb[0].mxu0
    %5218 = vmatprep.mubr.f32.mxu0 0.0
    %5219 = vmatmul.mubr.f32.gmra.mrb[0].mxu0 %v5065
    %v5220 = vpop.f32.mrb[0].mxu0
    %v5221 = vadd.f32 0.0, %v5220
    %v5222 = vpop.f32.mrb[0].mxu0
    %5223 = vmatprep.mubr.f32.mxu0 0.0
    %5224 = vmatmul.mubr.f32.gmra.mrb[0].mxu0 %v5066
    %v5225 = vpop.f32.mrb[0].mxu0
    %v5226 = vadd.f32 0.0, %v5225
    %v5227 = vpop.f32.mrb[0].mxu0
    %5228 = vdwg.mxu0
    %v5229 = vadd.f32 %v5035, %v5151
    %v5230 = vadd.f32 %v5036, %v5156
    %v5231 = vadd.f32 %v5037, %v5161
    %v5232 = vadd.f32 %v5038, %v5166
    %v5233 = vadd.f32 %v5039, %v5171
    %v5234 = vadd.f32 %v5040, %v5176
    %v5235 = vadd.f32 %v5041, %v5181
    %v5236 = vadd.f32 %v5042, %v5186
    %v5237 = vadd.f32 %v5043, %v5191
    %v5238 = vadd.f32 %v5044, %v5196
    %v5239 = vadd.f32 %v5045, %v5201
    %v5240 = vadd.f32 %v5046, %v5206
    %v5241 = vadd.f32 %v5047, %v5211
    %v5242 = vadd.f32 %v5048, %v5216
    %v5243 = vadd.f32 %v5049, %v5221
    %v5244 = vadd.f32 %v5050, %v5226
    %s5245 = scalar_lea.vmem [#allocation4], 48
    %v5246 = vld [vmem:[%s5245] sm:$0xff]
    %v5247 = vld [vmem:[%s5245 + $0x10] sm:$0xff]
    %v5248 = vld [vmem:[%s5245 + $0x20] sm:$0xff]
    %v5249 = vld [vmem:[%s5245 + $0x30] sm:$0xff]
    %v5250 = vld [vmem:[%s5245 + $0x40] sm:$0xff]
    %v5251 = vld [vmem:[%s5245 + $0x50] sm:$0xff]
    %v5252 = vld [vmem:[%s5245 + $0x60] sm:$0xff]
    %v5253 = vld [vmem:[%s5245 + $0x70] sm:$0xff]
    %v5254 = vld [vmem:[%s5245 + $0xc0] sm:$0xff]
    %v5255 = vld [vmem:[%s5245 + $0xd0] sm:$0xff]
    %v5256 = vld [vmem:[%s5245 + $0xe0] sm:$0xff]
    %v5257 = vld [vmem:[%s5245 + $0xf0] sm:$0xff]
    %v5258 = vld [vmem:[%s5245 + $0x100] sm:$0xff]
    %v5259 = vld [vmem:[%s5245 + $0x110] sm:$0xff]
    %v5260 = vld [vmem:[%s5245 + $0x120] sm:$0xff]
    %v5261 = vld [vmem:[%s5245 + $0x130] sm:$0xff]
    %s5262 = scalar_lea.vmem %s3, 1920
    %v5263 = vld [vmem:[%s5262] sm:$0xff]
    %v5264 = vld [vmem:[%s5262 + $0x8] sm:$0xff]
    %v5265 = vld [vmem:[%s5262 + $0x10] sm:$0xff]
    %v5266 = vld [vmem:[%s5262 + $0x18] sm:$0xff]
    %v5267 = vld [vmem:[%s5262 + $0x20] sm:$0xff]
    %v5268 = vld [vmem:[%s5262 + $0x28] sm:$0xff]
    %v5269 = vld [vmem:[%s5262 + $0x30] sm:$0xff]
    %v5270 = vld [vmem:[%s5262 + $0x38] sm:$0xff]
    %v5271 = vld [vmem:[%s5262 + $0x40] sm:$0xff]
    %v5272 = vld [vmem:[%s5262 + $0x48] sm:$0xff]
    %v5273 = vld [vmem:[%s5262 + $0x50] sm:$0xff]
    %v5274 = vld [vmem:[%s5262 + $0x58] sm:$0xff]
    %v5275 = vld [vmem:[%s5262 + $0x60] sm:$0xff]
    %v5276 = vld [vmem:[%s5262 + $0x68] sm:$0xff]
    %v5277 = vld [vmem:[%s5262 + $0x70] sm:$0xff]
    %v5278 = vld [vmem:[%s5262 + $0x78] sm:$0xff]
    %5279 = vmatprep.subr.mxu0 0.0
    %5280 = vmatpush1.msra.mxu0 %v5263
    %5281 = vmatprep.subr.mxu0 0.0
    %5282 = vmatpush1.msra.mxu0 %v5264
    %5283 = vmatprep.subr.mxu0 0.0
    %5284 = vmatpush1.msra.mxu0 %v5265
    %5285 = vmatprep.subr.mxu0 0.0
    %5286 = vmatpush1.msra.mxu0 %v5266
    %5287 = vmatprep.subr.mxu0 0.0
    %5288 = vmatpush1.msra.mxu0 %v5267
    %5289 = vmatprep.subr.mxu0 0.0
    %5290 = vmatpush1.msra.mxu0 %v5268
    %5291 = vmatprep.subr.mxu0 0.0
    %5292 = vmatpush1.msra.mxu0 %v5269
    %5293 = vmatprep.subr.mxu0 0.0
    %5294 = vmatpush1.msra.mxu0 %v5270
    %5295 = vmatprep.subr.mxu0 0.0
    %5296 = vmatpush1.msra.mxu0 %v5271
    %5297 = vmatprep.subr.mxu0 0.0
    %5298 = vmatpush1.msra.mxu0 %v5272
    %5299 = vmatprep.subr.mxu0 0.0
    %5300 = vmatpush1.msra.mxu0 %v5273
    %5301 = vmatprep.subr.mxu0 0.0
    %5302 = vmatpush1.msra.mxu0 %v5274
    %5303 = vmatprep.subr.mxu0 0.0
    %5304 = vmatpush1.msra.mxu0 %v5275
    %5305 = vmatprep.subr.mxu0 0.0
    %5306 = vmatpush1.msra.mxu0 %v5276
    %5307 = vmatprep.subr.mxu0 0.0
    %5308 = vmatpush1.msra.mxu0 %v5277
    %5309 = vmatprep.subr.mxu0 0.0
    %5310 = vmatpush1.msra.mxu0 %v5278
    %5311 = vmatprep.subr.mxu0 0.0
    %5312 = vmatpush1.msra.mxu0 0.0
    %5313 = vmatprep.subr.mxu0 0.0
    %5314 = vmatpush1.msra.mxu0 0.0
    %5315 = vmatprep.subr.mxu0 0.0
    %5316 = vmatpush1.msra.mxu0 0.0
    %5317 = vmatprep.subr.mxu0 0.0
    %5318 = vmatpush1.msra.mxu0 0.0
    %5319 = vmatprep.subr.mxu0 0.0
    %5320 = vmatpush1.msra.mxu0 0.0
    %5321 = vmatprep.subr.mxu0 0.0
    %5322 = vmatpush1.msra.mxu0 0.0
    %5323 = vmatprep.subr.mxu0 0.0
    %5324 = vmatpush1.msra.mxu0 0.0
    %5325 = vmatprep.subr.mxu0 0.0
    %5326 = vmatpush1.msra.mxu0 0.0
    %5327 = vmatprep.subr.mxu0 0.0
    %5328 = vmatpush1.msra.mxu0 0.0
    %5329 = vmatprep.subr.mxu0 0.0
    %5330 = vmatpush1.msra.mxu0 0.0
    %5331 = vmatprep.subr.mxu0 0.0
    %5332 = vmatpush1.msra.mxu0 0.0
    %5333 = vmatprep.subr.mxu0 0.0
    %5334 = vmatpush1.msra.mxu0 0.0
    %5335 = vmatprep.subr.mxu0 0.0
    %5336 = vmatpush1.msra.mxu0 0.0
    %5337 = vmatprep.subr.mxu0 0.0
    %5338 = vmatpush1.msra.mxu0 0.0
    %5339 = vmatprep.subr.mxu0 0.0
    %5340 = vmatpush1.msra.mxu0 0.0
    %5341 = vmatprep.subr.mxu0 0.0
    %5342 = vmatpush1.msra.mxu0 0.0
    %5343 = vmatprep.mubr.f32.mxu0 0.0
    %5344 = vmatmul.mubr.f32.gmra.mrb[0].mxu0 %v5246
    %v5345 = vpop.f32.mrb[0].mxu0
    %v5346 = vadd.f32 0.0, %v5345
    %v5347 = vpop.f32.mrb[0].mxu0
    %5348 = vmatprep.mubr.f32.mxu0 0.0
    %5349 = vmatmul.mubr.f32.gmra.mrb[0].mxu0 %v5247
    %v5350 = vpop.f32.mrb[0].mxu0
    %v5351 = vadd.f32 0.0, %v5350
    %v5352 = vpop.f32.mrb[0].mxu0
    %5353 = vmatprep.mubr.f32.mxu0 0.0
    %5354 = vmatmul.mubr.f32.gmra.mrb[0].mxu0 %v5248
    %v5355 = vpop.f32.mrb[0].mxu0
    %v5356 = vadd.f32 0.0, %v5355
    %v5357 = vpop.f32.mrb[0].mxu0
    %5358 = vmatprep.mubr.f32.mxu0 0.0
    %5359 = vmatmul.mubr.f32.gmra.mrb[0].mxu0 %v5249
    %v5360 = vpop.f32.mrb[0].mxu0
    %v5361 = vadd.f32 0.0, %v5360
    %v5362 = vpop.f32.mrb[0].mxu0
    %5363 = vmatprep.mubr.f32.mxu0 0.0
    %5364 = vmatmul.mubr.f32.gmra.mrb[0].mxu0 %v5250
    %v5365 = vpop.f32.mrb[0].mxu0
    %v5366 = vadd.f32 0.0, %v5365
    %v5367 = vpop.f32.mrb[0].mxu0
    %5368 = vmatprep.mubr.f32.mxu0 0.0
    %5369 = vmatmul.mubr.f32.gmra.mrb[0].mxu0 %v5251
    %v5370 = vpop.f32.mrb[0].mxu0
    %v5371 = vadd.f32 0.0, %v5370
    %v5372 = vpop.f32.mrb[0].mxu0
    %5373 = vmatprep.mubr.f32.mxu0 0.0
    %5374 = vmatmul.mubr.f32.gmra.mrb[0].mxu0 %v5252
    %v5375 = vpop.f32.mrb[0].mxu0
    %v5376 = vadd.f32 0.0, %v5375
    %v5377 = vpop.f32.mrb[0].mxu0
    %5378 = vmatprep.mubr.f32.mxu0 0.0
    %5379 = vmatmul.mubr.f32.gmra.mrb[0].mxu0 %v5253
    %v5380 = vpop.f32.mrb[0].mxu0
    %v5381 = vadd.f32 0.0, %v5380
    %v5382 = vpop.f32.mrb[0].mxu0
    %5383 = vmatprep.mubr.f32.mxu0 0.0
    %5384 = vmatmul.mubr.f32.gmra.mrb[0].mxu0 %v5254
    %v5385 = vpop.f32.mrb[0].mxu0
    %v5386 = vadd.f32 0.0, %v5385
    %v5387 = vpop.f32.mrb[0].mxu0
    %5388 = vmatprep.mubr.f32.mxu0 0.0
    %5389 = vmatmul.mubr.f32.gmra.mrb[0].mxu0 %v5255
    %v5390 = vpop.f32.mrb[0].mxu0
    %v5391 = vadd.f32 0.0, %v5390
    %v5392 = vpop.f32.mrb[0].mxu0
    %5393 = vmatprep.mubr.f32.mxu0 0.0
    %5394 = vmatmul.mubr.f32.gmra.mrb[0].mxu0 %v5256
    %v5395 = vpop.f32.mrb[0].mxu0
    %v5396 = vadd.f32 0.0, %v5395
    %v5397 = vpop.f32.mrb[0].mxu0
    %5398 = vmatprep.mubr.f32.mxu0 0.0
    %5399 = vmatmul.mubr.f32.gmra.mrb[0].mxu0 %v5257
    %v5400 = vpop.f32.mrb[0].mxu0
    %v5401 = vadd.f32 0.0, %v5400
    %v5402 = vpop.f32.mrb[0].mxu0
    %5403 = vmatprep.mubr.f32.mxu0 0.0
    %5404 = vmatmul.mubr.f32.gmra.mrb[0].mxu0 %v5258
    %v5405 = vpop.f32.mrb[0].mxu0
    %v5406 = vadd.f32 0.0, %v5405
    %v5407 = vpop.f32.mrb[0].mxu0
    %5408 = vmatprep.mubr.f32.mxu0 0.0
    %5409 = vmatmul.mubr.f32.gmra.mrb[0].mxu0 %v5259
    %v5410 = vpop.f32.mrb[0].mxu0
    %v5411 = vadd.f32 0.0, %v5410
    %v5412 = vpop.f32.mrb[0].mxu0
    %5413 = vmatprep.mubr.f32.mxu0 0.0
    %5414 = vmatmul.mubr.f32.gmra.mrb[0].mxu0 %v5260
    %v5415 = vpop.f32.mrb[0].mxu0
    %v5416 = vadd.f32 0.0, %v5415
    %v5417 = vpop.f32.mrb[0].mxu0
    %5418 = vmatprep.mubr.f32.mxu0 0.0
    %5419 = vmatmul.mubr.f32.gmra.mrb[0].mxu0 %v5261
    %v5420 = vpop.f32.mrb[0].mxu0
    %v5421 = vadd.f32 0.0, %v5420
    %v5422 = vpop.f32.mrb[0].mxu0
    %5423 = vdwg.mxu0
    %v5424 = vadd.f32 %v5229, %v5346
    %v5425 = vadd.f32 %v5230, %v5351
    %v5426 = vadd.f32 %v5231, %v5356
    %v5427 = vadd.f32 %v5232, %v5361
    %v5428 = vadd.f32 %v5233, %v5366
    %v5429 = vadd.f32 %v5234, %v5371
    %v5430 = vadd.f32 %v5235, %v5376
    %v5431 = vadd.f32 %v5236, %v5381
    %v5432 = vadd.f32 %v5237, %v5386
    %v5433 = vadd.f32 %v5238, %v5391
    %v5434 = vadd.f32 %v5239, %v5396
    %v5435 = vadd.f32 %v5240, %v5401
    %v5436 = vadd.f32 %v5241, %v5406
    %v5437 = vadd.f32 %v5242, %v5411
    %v5438 = vadd.f32 %v5243, %v5416
    %v5439 = vadd.f32 %v5244, %v5421
    %v5440 = vld [vmem:[%s5245 + $0x1] sm:$0xff]
    %v5441 = vld [vmem:[%s5245 + $0x11] sm:$0xff]
    %v5442 = vld [vmem:[%s5245 + $0x21] sm:$0xff]
    %v5443 = vld [vmem:[%s5245 + $0x31] sm:$0xff]
    %v5444 = vld [vmem:[%s5245 + $0x41] sm:$0xff]
    %v5445 = vld [vmem:[%s5245 + $0x51] sm:$0xff]
    %v5446 = vld [vmem:[%s5245 + $0x61] sm:$0xff]
    %v5447 = vld [vmem:[%s5245 + $0x71] sm:$0xff]
    %v5448 = vld [vmem:[%s5245 + $0xc1] sm:$0xff]
    %v5449 = vld [vmem:[%s5245 + $0xd1] sm:$0xff]
    %v5450 = vld [vmem:[%s5245 + $0xe1] sm:$0xff]
    %v5451 = vld [vmem:[%s5245 + $0xf1] sm:$0xff]
    %v5452 = vld [vmem:[%s5245 + $0x101] sm:$0xff]
    %v5453 = vld [vmem:[%s5245 + $0x111] sm:$0xff]
    %v5454 = vld [vmem:[%s5245 + $0x121] sm:$0xff]
    %v5455 = vld [vmem:[%s5245 + $0x131] sm:$0xff]
    %s5456 = scalar_lea.vmem %s3, 2048
    %v5457 = vld [vmem:[%s5456] sm:$0xff]
    %v5458 = vld [vmem:[%s5456 + $0x8] sm:$0xff]
    %v5459 = vld [vmem:[%s5456 + $0x10] sm:$0xff]
    %v5460 = vld [vmem:[%s5456 + $0x18] sm:$0xff]
    %v5461 = vld [vmem:[%s5456 + $0x20] sm:$0xff]
    %v5462 = vld [vmem:[%s5456 + $0x28] sm:$0xff]
    %v5463 = vld [vmem:[%s5456 + $0x30] sm:$0xff]
    %v5464 = vld [vmem:[%s5456 + $0x38] sm:$0xff]
    %v5465 = vld [vmem:[%s5456 + $0x40] sm:$0xff]
    %v5466 = vld [vmem:[%s5456 + $0x48] sm:$0xff]
    %v5467 = vld [vmem:[%s5456 + $0x50] sm:$0xff]
    %v5468 = vld [vmem:[%s5456 + $0x58] sm:$0xff]
    %v5469 = vld [vmem:[%s5456 + $0x60] sm:$0xff]
    %v5470 = vld [vmem:[%s5456 + $0x68] sm:$0xff]
    %v5471 = vld [vmem:[%s5456 + $0x70] sm:$0xff]
    %v5472 = vld [vmem:[%s5456 + $0x78] sm:$0xff]
    %5473 = vmatprep.subr.mxu0 0.0
    %5474 = vmatpush1.msra.mxu0 %v5457
    %5475 = vmatprep.subr.mxu0 0.0
    %5476 = vmatpush1.msra.mxu0 %v5458
    %5477 = vmatprep.subr.mxu0 0.0
    %5478 = vmatpush1.msra.mxu0 %v5459
    %5479 = vmatprep.subr.mxu0 0.0
    %5480 = vmatpush1.msra.mxu0 %v5460
    %5481 = vmatprep.subr.mxu0 0.0
    %5482 = vmatpush1.msra.mxu0 %v5461
    %5483 = vmatprep.subr.mxu0 0.0
    %5484 = vmatpush1.msra.mxu0 %v5462
    %5485 = vmatprep.subr.mxu0 0.0
    %5486 = vmatpush1.msra.mxu0 %v5463
    %5487 = vmatprep.subr.mxu0 0.0
    %5488 = vmatpush1.msra.mxu0 %v5464
    %5489 = vmatprep.subr.mxu0 0.0
    %5490 = vmatpush1.msra.mxu0 %v5465
    %5491 = vmatprep.subr.mxu0 0.0
    %5492 = vmatpush1.msra.mxu0 %v5466
    %5493 = vmatprep.subr.mxu0 0.0
    %5494 = vmatpush1.msra.mxu0 %v5467
    %5495 = vmatprep.subr.mxu0 0.0
    %5496 = vmatpush1.msra.mxu0 %v5468
    %5497 = vmatprep.subr.mxu0 0.0
    %5498 = vmatpush1.msra.mxu0 %v5469
    %5499 = vmatprep.subr.mxu0 0.0
    %5500 = vmatpush1.msra.mxu0 %v5470
    %5501 = vmatprep.subr.mxu0 0.0
    %5502 = vmatpush1.msra.mxu0 %v5471
    %5503 = vmatprep.subr.mxu0 0.0
    %5504 = vmatpush1.msra.mxu0 %v5472
    %5505 = vmatprep.subr.mxu0 0.0
    %5506 = vmatpush1.msra.mxu0 0.0
    %5507 = vmatprep.subr.mxu0 0.0
    %5508 = vmatpush1.msra.mxu0 0.0
    %5509 = vmatprep.subr.mxu0 0.0
    %5510 = vmatpush1.msra.mxu0 0.0
    %5511 = vmatprep.subr.mxu0 0.0
    %5512 = vmatpush1.msra.mxu0 0.0
    %5513 = vmatprep.subr.mxu0 0.0
    %5514 = vmatpush1.msra.mxu0 0.0
    %5515 = vmatprep.subr.mxu0 0.0
    %5516 = vmatpush1.msra.mxu0 0.0
    %5517 = vmatprep.subr.mxu0 0.0
    %5518 = vmatpush1.msra.mxu0 0.0
    %5519 = vmatprep.subr.mxu0 0.0
    %5520 = vmatpush1.msra.mxu0 0.0
    %5521 = vmatprep.subr.mxu0 0.0
    %5522 = vmatpush1.msra.mxu0 0.0
    %5523 = vmatprep.subr.mxu0 0.0
    %5524 = vmatpush1.msra.mxu0 0.0
    %5525 = vmatprep.subr.mxu0 0.0
    %5526 = vmatpush1.msra.mxu0 0.0
    %5527 = vmatprep.subr.mxu0 0.0
    %5528 = vmatpush1.msra.mxu0 0.0
    %5529 = vmatprep.subr.mxu0 0.0
    %5530 = vmatpush1.msra.mxu0 0.0
    %5531 = vmatprep.subr.mxu0 0.0
    %5532 = vmatpush1.msra.mxu0 0.0
    %5533 = vmatprep.subr.mxu0 0.0
    %5534 = vmatpush1.msra.mxu0 0.0
    %5535 = vmatprep.subr.mxu0 0.0
    %5536 = vmatpush1.msra.mxu0 0.0
    %5537 = vmatprep.mubr.f32.mxu0 0.0
    %5538 = vmatmul.mubr.f32.gmra.mrb[0].mxu0 %v5440
    %v5539 = vpop.f32.mrb[0].mxu0
    %v5540 = vadd.f32 0.0, %v5539
    %v5541 = vpop.f32.mrb[0].mxu0
    %5542 = vmatprep.mubr.f32.mxu0 0.0
    %5543 = vmatmul.mubr.f32.gmra.mrb[0].mxu0 %v5441
    %v5544 = vpop.f32.mrb[0].mxu0
    %v5545 = vadd.f32 0.0, %v5544
    %v5546 = vpop.f32.mrb[0].mxu0
    %5547 = vmatprep.mubr.f32.mxu0 0.0
    %5548 = vmatmul.mubr.f32.gmra.mrb[0].mxu0 %v5442
    %v5549 = vpop.f32.mrb[0].mxu0
    %v5550 = vadd.f32 0.0, %v5549
    %v5551 = vpop.f32.mrb[0].mxu0
    %5552 = vmatprep.mubr.f32.mxu0 0.0
    %5553 = vmatmul.mubr.f32.gmra.mrb[0].mxu0 %v5443
    %v5554 = vpop.f32.mrb[0].mxu0
    %v5555 = vadd.f32 0.0, %v5554
    %v5556 = vpop.f32.mrb[0].mxu0
    %5557 = vmatprep.mubr.f32.mxu0 0.0
    %5558 = vmatmul.mubr.f32.gmra.mrb[0].mxu0 %v5444
    %v5559 = vpop.f32.mrb[0].mxu0
    %v5560 = vadd.f32 0.0, %v5559
    %v5561 = vpop.f32.mrb[0].mxu0
    %5562 = vmatprep.mubr.f32.mxu0 0.0
    %5563 = vmatmul.mubr.f32.gmra.mrb[0].mxu0 %v5445
    %v5564 = vpop.f32.mrb[0].mxu0
    %v5565 = vadd.f32 0.0, %v5564
    %v5566 = vpop.f32.mrb[0].mxu0
    %5567 = vmatprep.mubr.f32.mxu0 0.0
    %5568 = vmatmul.mubr.f32.gmra.mrb[0].mxu0 %v5446
    %v5569 = vpop.f32.mrb[0].mxu0
    %v5570 = vadd.f32 0.0, %v5569
    %v5571 = vpop.f32.mrb[0].mxu0
    %5572 = vmatprep.mubr.f32.mxu0 0.0
    %5573 = vmatmul.mubr.f32.gmra.mrb[0].mxu0 %v5447
    %v5574 = vpop.f32.mrb[0].mxu0
    %v5575 = vadd.f32 0.0, %v5574
    %v5576 = vpop.f32.mrb[0].mxu0
    %5577 = vmatprep.mubr.f32.mxu0 0.0
    %5578 = vmatmul.mubr.f32.gmra.mrb[0].mxu0 %v5448
    %v5579 = vpop.f32.mrb[0].mxu0
    %v5580 = vadd.f32 0.0, %v5579
    %v5581 = vpop.f32.mrb[0].mxu0
    %5582 = vmatprep.mubr.f32.mxu0 0.0
    %5583 = vmatmul.mubr.f32.gmra.mrb[0].mxu0 %v5449
    %v5584 = vpop.f32.mrb[0].mxu0
    %v5585 = vadd.f32 0.0, %v5584
    %v5586 = vpop.f32.mrb[0].mxu0
    %5587 = vmatprep.mubr.f32.mxu0 0.0
    %5588 = vmatmul.mubr.f32.gmra.mrb[0].mxu0 %v5450
    %v5589 = vpop.f32.mrb[0].mxu0
    %v5590 = vadd.f32 0.0, %v5589
    %v5591 = vpop.f32.mrb[0].mxu0
    %5592 = vmatprep.mubr.f32.mxu0 0.0
    %5593 = vmatmul.mubr.f32.gmra.mrb[0].mxu0 %v5451
    %v5594 = vpop.f32.mrb[0].mxu0
    %v5595 = vadd.f32 0.0, %v5594
    %v5596 = vpop.f32.mrb[0].mxu0
    %5597 = vmatprep.mubr.f32.mxu0 0.0
    %5598 = vmatmul.mubr.f32.gmra.mrb[0].mxu0 %v5452
    %v5599 = vpop.f32.mrb[0].mxu0
    %v5600 = vadd.f32 0.0, %v5599
    %v5601 = vpop.f32.mrb[0].mxu0
    %5602 = vmatprep.mubr.f32.mxu0 0.0
    %5603 = vmatmul.mubr.f32.gmra.mrb[0].mxu0 %v5453
    %v5604 = vpop.f32.mrb[0].mxu0
    %v5605 = vadd.f32 0.0, %v5604
    %v5606 = vpop.f32.mrb[0].mxu0
    %5607 = vmatprep.mubr.f32.mxu0 0.0
    %5608 = vmatmul.mubr.f32.gmra.mrb[0].mxu0 %v5454
    %v5609 = vpop.f32.mrb[0].mxu0
    %v5610 = vadd.f32 0.0, %v5609
    %v5611 = vpop.f32.mrb[0].mxu0
    %5612 = vmatprep.mubr.f32.mxu0 0.0
    %5613 = vmatmul.mubr.f32.gmra.mrb[0].mxu0 %v5455
    %v5614 = vpop.f32.mrb[0].mxu0
    %v5615 = vadd.f32 0.0, %v5614
    %v5616 = vpop.f32.mrb[0].mxu0
    %5617 = vdwg.mxu0
    %v5618 = vadd.f32 %v5424, %v5540
    %v5619 = vadd.f32 %v5425, %v5545
    %v5620 = vadd.f32 %v5426, %v5550
    %v5621 = vadd.f32 %v5427, %v5555
    %v5622 = vadd.f32 %v5428, %v5560
    %v5623 = vadd.f32 %v5429, %v5565
    %v5624 = vadd.f32 %v5430, %v5570
    %v5625 = vadd.f32 %v5431, %v5575
    %v5626 = vadd.f32 %v5432, %v5580
    %v5627 = vadd.f32 %v5433, %v5585
    %v5628 = vadd.f32 %v5434, %v5590
    %v5629 = vadd.f32 %v5435, %v5595
    %v5630 = vadd.f32 %v5436, %v5600
    %v5631 = vadd.f32 %v5437, %v5605
    %v5632 = vadd.f32 %v5438, %v5610
    %v5633 = vadd.f32 %v5439, %v5615
    %v5634 = vld [vmem:[%s5245 + $0x2] sm:$0xff]
    %v5635 = vld [vmem:[%s5245 + $0x12] sm:$0xff]
    %v5636 = vld [vmem:[%s5245 + $0x22] sm:$0xff]
    %v5637 = vld [vmem:[%s5245 + $0x32] sm:$0xff]
    %v5638 = vld [vmem:[%s5245 + $0x42] sm:$0xff]
    %v5639 = vld [vmem:[%s5245 + $0x52] sm:$0xff]
    %v5640 = vld [vmem:[%s5245 + $0x62] sm:$0xff]
    %v5641 = vld [vmem:[%s5245 + $0x72] sm:$0xff]
    %v5642 = vld [vmem:[%s5245 + $0xc2] sm:$0xff]
    %v5643 = vld [vmem:[%s5245 + $0xd2] sm:$0xff]
    %v5644 = vld [vmem:[%s5245 + $0xe2] sm:$0xff]
    %v5645 = vld [vmem:[%s5245 + $0xf2] sm:$0xff]
    %v5646 = vld [vmem:[%s5245 + $0x102] sm:$0xff]
    %v5647 = vld [vmem:[%s5245 + $0x112] sm:$0xff]
    %v5648 = vld [vmem:[%s5245 + $0x122] sm:$0xff]
    %v5649 = vld [vmem:[%s5245 + $0x132] sm:$0xff]
    %s5650 = scalar_lea.vmem %s3, 2176
    %v5651 = vld [vmem:[%s5650] sm:$0xff]
    %v5652 = vld [vmem:[%s5650 + $0x8] sm:$0xff]
    %v5653 = vld [vmem:[%s5650 + $0x10] sm:$0xff]
    %v5654 = vld [vmem:[%s5650 + $0x18] sm:$0xff]
    %v5655 = vld [vmem:[%s5650 + $0x20] sm:$0xff]
    %v5656 = vld [vmem:[%s5650 + $0x28] sm:$0xff]
    %v5657 = vld [vmem:[%s5650 + $0x30] sm:$0xff]
    %v5658 = vld [vmem:[%s5650 + $0x38] sm:$0xff]
    %v5659 = vld [vmem:[%s5650 + $0x40] sm:$0xff]
    %v5660 = vld [vmem:[%s5650 + $0x48] sm:$0xff]
    %v5661 = vld [vmem:[%s5650 + $0x50] sm:$0xff]
    %v5662 = vld [vmem:[%s5650 + $0x58] sm:$0xff]
    %v5663 = vld [vmem:[%s5650 + $0x60] sm:$0xff]
    %v5664 = vld [vmem:[%s5650 + $0x68] sm:$0xff]
    %v5665 = vld [vmem:[%s5650 + $0x70] sm:$0xff]
    %v5666 = vld [vmem:[%s5650 + $0x78] sm:$0xff]
    %5667 = vmatprep.subr.mxu0 0.0
    %5668 = vmatpush1.msra.mxu0 %v5651
    %5669 = vmatprep.subr.mxu0 0.0
    %5670 = vmatpush1.msra.mxu0 %v5652
    %5671 = vmatprep.subr.mxu0 0.0
    %5672 = vmatpush1.msra.mxu0 %v5653
    %5673 = vmatprep.subr.mxu0 0.0
    %5674 = vmatpush1.msra.mxu0 %v5654
    %5675 = vmatprep.subr.mxu0 0.0
    %5676 = vmatpush1.msra.mxu0 %v5655
    %5677 = vmatprep.subr.mxu0 0.0
    %5678 = vmatpush1.msra.mxu0 %v5656
    %5679 = vmatprep.subr.mxu0 0.0
    %5680 = vmatpush1.msra.mxu0 %v5657
    %5681 = vmatprep.subr.mxu0 0.0
    %5682 = vmatpush1.msra.mxu0 %v5658
    %5683 = vmatprep.subr.mxu0 0.0
    %5684 = vmatpush1.msra.mxu0 %v5659
    %5685 = vmatprep.subr.mxu0 0.0
    %5686 = vmatpush1.msra.mxu0 %v5660
    %5687 = vmatprep.subr.mxu0 0.0
    %5688 = vmatpush1.msra.mxu0 %v5661
    %5689 = vmatprep.subr.mxu0 0.0
    %5690 = vmatpush1.msra.mxu0 %v5662
    %5691 = vmatprep.subr.mxu0 0.0
    %5692 = vmatpush1.msra.mxu0 %v5663
    %5693 = vmatprep.subr.mxu0 0.0
    %5694 = vmatpush1.msra.mxu0 %v5664
    %5695 = vmatprep.subr.mxu0 0.0
    %5696 = vmatpush1.msra.mxu0 %v5665
    %5697 = vmatprep.subr.mxu0 0.0
    %5698 = vmatpush1.msra.mxu0 %v5666
    %5699 = vmatprep.subr.mxu0 0.0
    %5700 = vmatpush1.msra.mxu0 0.0
    %5701 = vmatprep.subr.mxu0 0.0
    %5702 = vmatpush1.msra.mxu0 0.0
    %5703 = vmatprep.subr.mxu0 0.0
    %5704 = vmatpush1.msra.mxu0 0.0
    %5705 = vmatprep.subr.mxu0 0.0
    %5706 = vmatpush1.msra.mxu0 0.0
    %5707 = vmatprep.subr.mxu0 0.0
    %5708 = vmatpush1.msra.mxu0 0.0
    %5709 = vmatprep.subr.mxu0 0.0
    %5710 = vmatpush1.msra.mxu0 0.0
    %5711 = vmatprep.subr.mxu0 0.0
    %5712 = vmatpush1.msra.mxu0 0.0
    %5713 = vmatprep.subr.mxu0 0.0
    %5714 = vmatpush1.msra.mxu0 0.0
    %5715 = vmatprep.subr.mxu0 0.0
    %5716 = vmatpush1.msra.mxu0 0.0
    %5717 = vmatprep.subr.mxu0 0.0
    %5718 = vmatpush1.msra.mxu0 0.0
    %5719 = vmatprep.subr.mxu0 0.0
    %5720 = vmatpush1.msra.mxu0 0.0
    %5721 = vmatprep.subr.mxu0 0.0
    %5722 = vmatpush1.msra.mxu0 0.0
    %5723 = vmatprep.subr.mxu0 0.0
    %5724 = vmatpush1.msra.mxu0 0.0
    %5725 = vmatprep.subr.mxu0 0.0
    %5726 = vmatpush1.msra.mxu0 0.0
    %5727 = vmatprep.subr.mxu0 0.0
    %5728 = vmatpush1.msra.mxu0 0.0
    %5729 = vmatprep.subr.mxu0 0.0
    %5730 = vmatpush1.msra.mxu0 0.0
    %5731 = vmatprep.mubr.f32.mxu0 0.0
    %5732 = vmatmul.mubr.f32.gmra.mrb[0].mxu0 %v5634
    %v5733 = vpop.f32.mrb[0].mxu0
    %v5734 = vadd.f32 0.0, %v5733
    %v5735 = vpop.f32.mrb[0].mxu0
    %5736 = vmatprep.mubr.f32.mxu0 0.0
    %5737 = vmatmul.mubr.f32.gmra.mrb[0].mxu0 %v5635
    %v5738 = vpop.f32.mrb[0].mxu0
    %v5739 = vadd.f32 0.0, %v5738
    %v5740 = vpop.f32.mrb[0].mxu0
    %5741 = vmatprep.mubr.f32.mxu0 0.0
    %5742 = vmatmul.mubr.f32.gmra.mrb[0].mxu0 %v5636
    %v5743 = vpop.f32.mrb[0].mxu0
    %v5744 = vadd.f32 0.0, %v5743
    %v5745 = vpop.f32.mrb[0].mxu0
    %5746 = vmatprep.mubr.f32.mxu0 0.0
    %5747 = vmatmul.mubr.f32.gmra.mrb[0].mxu0 %v5637
    %v5748 = vpop.f32.mrb[0].mxu0
    %v5749 = vadd.f32 0.0, %v5748
    %v5750 = vpop.f32.mrb[0].mxu0
    %5751 = vmatprep.mubr.f32.mxu0 0.0
    %5752 = vmatmul.mubr.f32.gmra.mrb[0].mxu0 %v5638
    %v5753 = vpop.f32.mrb[0].mxu0
    %v5754 = vadd.f32 0.0, %v5753
    %v5755 = vpop.f32.mrb[0].mxu0
    %5756 = vmatprep.mubr.f32.mxu0 0.0
    %5757 = vmatmul.mubr.f32.gmra.mrb[0].mxu0 %v5639
    %v5758 = vpop.f32.mrb[0].mxu0
    %v5759 = vadd.f32 0.0, %v5758
    %v5760 = vpop.f32.mrb[0].mxu0
    %5761 = vmatprep.mubr.f32.mxu0 0.0
    %5762 = vmatmul.mubr.f32.gmra.mrb[0].mxu0 %v5640
    %v5763 = vpop.f32.mrb[0].mxu0
    %v5764 = vadd.f32 0.0, %v5763
    %v5765 = vpop.f32.mrb[0].mxu0
    %5766 = vmatprep.mubr.f32.mxu0 0.0
    %5767 = vmatmul.mubr.f32.gmra.mrb[0].mxu0 %v5641
    %v5768 = vpop.f32.mrb[0].mxu0
    %v5769 = vadd.f32 0.0, %v5768
    %v5770 = vpop.f32.mrb[0].mxu0
    %5771 = vmatprep.mubr.f32.mxu0 0.0
    %5772 = vmatmul.mubr.f32.gmra.mrb[0].mxu0 %v5642
    %v5773 = vpop.f32.mrb[0].mxu0
    %v5774 = vadd.f32 0.0, %v5773
    %v5775 = vpop.f32.mrb[0].mxu0
    %5776 = vmatprep.mubr.f32.mxu0 0.0
    %5777 = vmatmul.mubr.f32.gmra.mrb[0].mxu0 %v5643
    %v5778 = vpop.f32.mrb[0].mxu0
    %v5779 = vadd.f32 0.0, %v5778
    %v5780 = vpop.f32.mrb[0].mxu0
    %5781 = vmatprep.mubr.f32.mxu0 0.0
    %5782 = vmatmul.mubr.f32.gmra.mrb[0].mxu0 %v5644
    %v5783 = vpop.f32.mrb[0].mxu0
    %v5784 = vadd.f32 0.0, %v5783
    %v5785 = vpop.f32.mrb[0].mxu0
    %5786 = vmatprep.mubr.f32.mxu0 0.0
    %5787 = vmatmul.mubr.f32.gmra.mrb[0].mxu0 %v5645
    %v5788 = vpop.f32.mrb[0].mxu0
    %v5789 = vadd.f32 0.0, %v5788
    %v5790 = vpop.f32.mrb[0].mxu0
    %5791 = vmatprep.mubr.f32.mxu0 0.0
    %5792 = vmatmul.mubr.f32.gmra.mrb[0].mxu0 %v5646
    %v5793 = vpop.f32.mrb[0].mxu0
    %v5794 = vadd.f32 0.0, %v5793
    %v5795 = vpop.f32.mrb[0].mxu0
    %5796 = vmatprep.mubr.f32.mxu0 0.0
    %5797 = vmatmul.mubr.f32.gmra.mrb[0].mxu0 %v5647
    %v5798 = vpop.f32.mrb[0].mxu0
    %v5799 = vadd.f32 0.0, %v5798
    %v5800 = vpop.f32.mrb[0].mxu0
    %5801 = vmatprep.mubr.f32.mxu0 0.0
    %5802 = vmatmul.mubr.f32.gmra.mrb[0].mxu0 %v5648
    %v5803 = vpop.f32.mrb[0].mxu0
    %v5804 = vadd.f32 0.0, %v5803
    %v5805 = vpop.f32.mrb[0].mxu0
    %5806 = vmatprep.mubr.f32.mxu0 0.0
    %5807 = vmatmul.mubr.f32.gmra.mrb[0].mxu0 %v5649
    %v5808 = vpop.f32.mrb[0].mxu0
    %v5809 = vadd.f32 0.0, %v5808
    %v5810 = vpop.f32.mrb[0].mxu0
    %5811 = vdwg.mxu0
    %v5812 = vadd.f32 %v5618, %v5734
    %v5813 = vadd.f32 %v5619, %v5739
    %v5814 = vadd.f32 %v5620, %v5744
    %v5815 = vadd.f32 %v5621, %v5749
    %v5816 = vadd.f32 %v5622, %v5754
    %v5817 = vadd.f32 %v5623, %v5759
    %v5818 = vadd.f32 %v5624, %v5764
    %v5819 = vadd.f32 %v5625, %v5769
    %v5820 = vadd.f32 %v5626, %v5774
    %v5821 = vadd.f32 %v5627, %v5779
    %v5822 = vadd.f32 %v5628, %v5784
    %v5823 = vadd.f32 %v5629, %v5789
    %v5824 = vadd.f32 %v5630, %v5794
    %v5825 = vadd.f32 %v5631, %v5799
    %v5826 = vadd.f32 %v5632, %v5804
    %v5827 = vadd.f32 %v5633, %v5809
    %v5828 = vld [vmem:[%s5245 + $0x3] sm:$0xff]
    %v5829 = vld [vmem:[%s5245 + $0x13] sm:$0xff]
    %v5830 = vld [vmem:[%s5245 + $0x23] sm:$0xff]
    %v5831 = vld [vmem:[%s5245 + $0x33] sm:$0xff]
    %v5832 = vld [vmem:[%s5245 + $0x43] sm:$0xff]
    %v5833 = vld [vmem:[%s5245 + $0x53] sm:$0xff]
    %v5834 = vld [vmem:[%s5245 + $0x63] sm:$0xff]
    %v5835 = vld [vmem:[%s5245 + $0x73] sm:$0xff]
    %v5836 = vld [vmem:[%s5245 + $0xc3] sm:$0xff]
    %v5837 = vld [vmem:[%s5245 + $0xd3] sm:$0xff]
    %v5838 = vld [vmem:[%s5245 + $0xe3] sm:$0xff]
    %v5839 = vld [vmem:[%s5245 + $0xf3] sm:$0xff]
    %v5840 = vld [vmem:[%s5245 + $0x103] sm:$0xff]
    %v5841 = vld [vmem:[%s5245 + $0x113] sm:$0xff]
    %v5842 = vld [vmem:[%s5245 + $0x123] sm:$0xff]
    %v5843 = vld [vmem:[%s5245 + $0x133] sm:$0xff]
    %s5844 = scalar_lea.vmem %s3, 2304
    %v5845 = vld [vmem:[%s5844] sm:$0xff]
    %v5846 = vld [vmem:[%s5844 + $0x8] sm:$0xff]
    %v5847 = vld [vmem:[%s5844 + $0x10] sm:$0xff]
    %v5848 = vld [vmem:[%s5844 + $0x18] sm:$0xff]
    %v5849 = vld [vmem:[%s5844 + $0x20] sm:$0xff]
    %v5850 = vld [vmem:[%s5844 + $0x28] sm:$0xff]
    %v5851 = vld [vmem:[%s5844 + $0x30] sm:$0xff]
    %v5852 = vld [vmem:[%s5844 + $0x38] sm:$0xff]
    %v5853 = vld [vmem:[%s5844 + $0x40] sm:$0xff]
    %v5854 = vld [vmem:[%s5844 + $0x48] sm:$0xff]
    %v5855 = vld [vmem:[%s5844 + $0x50] sm:$0xff]
    %v5856 = vld [vmem:[%s5844 + $0x58] sm:$0xff]
    %v5857 = vld [vmem:[%s5844 + $0x60] sm:$0xff]
    %v5858 = vld [vmem:[%s5844 + $0x68] sm:$0xff]
    %v5859 = vld [vmem:[%s5844 + $0x70] sm:$0xff]
    %v5860 = vld [vmem:[%s5844 + $0x78] sm:$0xff]
    %5861 = vmatprep.subr.mxu0 0.0
    %5862 = vmatpush1.msra.mxu0 %v5845
    %5863 = vmatprep.subr.mxu0 0.0
    %5864 = vmatpush1.msra.mxu0 %v5846
    %5865 = vmatprep.subr.mxu0 0.0
    %5866 = vmatpush1.msra.mxu0 %v5847
    %5867 = vmatprep.subr.mxu0 0.0
    %5868 = vmatpush1.msra.mxu0 %v5848
    %5869 = vmatprep.subr.mxu0 0.0
    %5870 = vmatpush1.msra.mxu0 %v5849
    %5871 = vmatprep.subr.mxu0 0.0
    %5872 = vmatpush1.msra.mxu0 %v5850
    %5873 = vmatprep.subr.mxu0 0.0
    %5874 = vmatpush1.msra.mxu0 %v5851
    %5875 = vmatprep.subr.mxu0 0.0
    %5876 = vmatpush1.msra.mxu0 %v5852
    %5877 = vmatprep.subr.mxu0 0.0
    %5878 = vmatpush1.msra.mxu0 %v5853
    %5879 = vmatprep.subr.mxu0 0.0
    %5880 = vmatpush1.msra.mxu0 %v5854
    %5881 = vmatprep.subr.mxu0 0.0
    %5882 = vmatpush1.msra.mxu0 %v5855
    %5883 = vmatprep.subr.mxu0 0.0
    %5884 = vmatpush1.msra.mxu0 %v5856
    %5885 = vmatprep.subr.mxu0 0.0
    %5886 = vmatpush1.msra.mxu0 %v5857
    %5887 = vmatprep.subr.mxu0 0.0
    %5888 = vmatpush1.msra.mxu0 %v5858
    %5889 = vmatprep.subr.mxu0 0.0
    %5890 = vmatpush1.msra.mxu0 %v5859
    %5891 = vmatprep.subr.mxu0 0.0
    %5892 = vmatpush1.msra.mxu0 %v5860
    %5893 = vmatprep.subr.mxu0 0.0
    %5894 = vmatpush1.msra.mxu0 0.0
    %5895 = vmatprep.subr.mxu0 0.0
    %5896 = vmatpush1.msra.mxu0 0.0
    %5897 = vmatprep.subr.mxu0 0.0
    %5898 = vmatpush1.msra.mxu0 0.0
    %5899 = vmatprep.subr.mxu0 0.0
    %5900 = vmatpush1.msra.mxu0 0.0
    %5901 = vmatprep.subr.mxu0 0.0
    %5902 = vmatpush1.msra.mxu0 0.0
    %5903 = vmatprep.subr.mxu0 0.0
    %5904 = vmatpush1.msra.mxu0 0.0
    %5905 = vmatprep.subr.mxu0 0.0
    %5906 = vmatpush1.msra.mxu0 0.0
    %5907 = vmatprep.subr.mxu0 0.0
    %5908 = vmatpush1.msra.mxu0 0.0
    %5909 = vmatprep.subr.mxu0 0.0
    %5910 = vmatpush1.msra.mxu0 0.0
    %5911 = vmatprep.subr.mxu0 0.0
    %5912 = vmatpush1.msra.mxu0 0.0
    %5913 = vmatprep.subr.mxu0 0.0
    %5914 = vmatpush1.msra.mxu0 0.0
    %5915 = vmatprep.subr.mxu0 0.0
    %5916 = vmatpush1.msra.mxu0 0.0
    %5917 = vmatprep.subr.mxu0 0.0
    %5918 = vmatpush1.msra.mxu0 0.0
    %5919 = vmatprep.subr.mxu0 0.0
    %5920 = vmatpush1.msra.mxu0 0.0
    %5921 = vmatprep.subr.mxu0 0.0
    %5922 = vmatpush1.msra.mxu0 0.0
    %5923 = vmatprep.subr.mxu0 0.0
    %5924 = vmatpush1.msra.mxu0 0.0
    %5925 = vmatprep.mubr.f32.mxu0 0.0
    %5926 = vmatmul.mubr.f32.gmra.mrb[0].mxu0 %v5828
    %v5927 = vpop.f32.mrb[0].mxu0
    %v5928 = vadd.f32 0.0, %v5927
    %v5929 = vpop.f32.mrb[0].mxu0
    %5930 = vmatprep.mubr.f32.mxu0 0.0
    %5931 = vmatmul.mubr.f32.gmra.mrb[0].mxu0 %v5829
    %v5932 = vpop.f32.mrb[0].mxu0
    %v5933 = vadd.f32 0.0, %v5932
    %v5934 = vpop.f32.mrb[0].mxu0
    %5935 = vmatprep.mubr.f32.mxu0 0.0
    %5936 = vmatmul.mubr.f32.gmra.mrb[0].mxu0 %v5830
    %v5937 = vpop.f32.mrb[0].mxu0
    %v5938 = vadd.f32 0.0, %v5937
    %v5939 = vpop.f32.mrb[0].mxu0
    %5940 = vmatprep.mubr.f32.mxu0 0.0
    %5941 = vmatmul.mubr.f32.gmra.mrb[0].mxu0 %v5831
    %v5942 = vpop.f32.mrb[0].mxu0
    %v5943 = vadd.f32 0.0, %v5942
    %v5944 = vpop.f32.mrb[0].mxu0
    %5945 = vmatprep.mubr.f32.mxu0 0.0
    %5946 = vmatmul.mubr.f32.gmra.mrb[0].mxu0 %v5832
    %v5947 = vpop.f32.mrb[0].mxu0
    %v5948 = vadd.f32 0.0, %v5947
    %v5949 = vpop.f32.mrb[0].mxu0
    %5950 = vmatprep.mubr.f32.mxu0 0.0
    %5951 = vmatmul.mubr.f32.gmra.mrb[0].mxu0 %v5833
    %v5952 = vpop.f32.mrb[0].mxu0
    %v5953 = vadd.f32 0.0, %v5952
    %v5954 = vpop.f32.mrb[0].mxu0
    %5955 = vmatprep.mubr.f32.mxu0 0.0
    %5956 = vmatmul.mubr.f32.gmra.mrb[0].mxu0 %v5834
    %v5957 = vpop.f32.mrb[0].mxu0
    %v5958 = vadd.f32 0.0, %v5957
    %v5959 = vpop.f32.mrb[0].mxu0
    %5960 = vmatprep.mubr.f32.mxu0 0.0
    %5961 = vmatmul.mubr.f32.gmra.mrb[0].mxu0 %v5835
    %v5962 = vpop.f32.mrb[0].mxu0
    %v5963 = vadd.f32 0.0, %v5962
    %v5964 = vpop.f32.mrb[0].mxu0
    %5965 = vmatprep.mubr.f32.mxu0 0.0
    %5966 = vmatmul.mubr.f32.gmra.mrb[0].mxu0 %v5836
    %v5967 = vpop.f32.mrb[0].mxu0
    %v5968 = vadd.f32 0.0, %v5967
    %v5969 = vpop.f32.mrb[0].mxu0
    %5970 = vmatprep.mubr.f32.mxu0 0.0
    %5971 = vmatmul.mubr.f32.gmra.mrb[0].mxu0 %v5837
    %v5972 = vpop.f32.mrb[0].mxu0
    %v5973 = vadd.f32 0.0, %v5972
    %v5974 = vpop.f32.mrb[0].mxu0
    %5975 = vmatprep.mubr.f32.mxu0 0.0
    %5976 = vmatmul.mubr.f32.gmra.mrb[0].mxu0 %v5838
    %v5977 = vpop.f32.mrb[0].mxu0
    %v5978 = vadd.f32 0.0, %v5977
    %v5979 = vpop.f32.mrb[0].mxu0
    %5980 = vmatprep.mubr.f32.mxu0 0.0
    %5981 = vmatmul.mubr.f32.gmra.mrb[0].mxu0 %v5839
    %v5982 = vpop.f32.mrb[0].mxu0
    %v5983 = vadd.f32 0.0, %v5982
    %v5984 = vpop.f32.mrb[0].mxu0
    %5985 = vmatprep.mubr.f32.mxu0 0.0
    %5986 = vmatmul.mubr.f32.gmra.mrb[0].mxu0 %v5840
    %v5987 = vpop.f32.mrb[0].mxu0
    %v5988 = vadd.f32 0.0, %v5987
    %v5989 = vpop.f32.mrb[0].mxu0
    %5990 = vmatprep.mubr.f32.mxu0 0.0
    %5991 = vmatmul.mubr.f32.gmra.mrb[0].mxu0 %v5841
    %v5992 = vpop.f32.mrb[0].mxu0
    %v5993 = vadd.f32 0.0, %v5992
    %v5994 = vpop.f32.mrb[0].mxu0
    %5995 = vmatprep.mubr.f32.mxu0 0.0
    %5996 = vmatmul.mubr.f32.gmra.mrb[0].mxu0 %v5842
    %v5997 = vpop.f32.mrb[0].mxu0
    %v5998 = vadd.f32 0.0, %v5997
    %v5999 = vpop.f32.mrb[0].mxu0
    %6000 = vmatprep.mubr.f32.mxu0 0.0
    %6001 = vmatmul.mubr.f32.gmra.mrb[0].mxu0 %v5843
    %v6002 = vpop.f32.mrb[0].mxu0
    %v6003 = vadd.f32 0.0, %v6002
    %v6004 = vpop.f32.mrb[0].mxu0
    %6005 = vdwg.mxu0
    %v6006 = vadd.f32 %v5812, %v5928
    %v6007 = vadd.f32 %v5813, %v5933
    %v6008 = vadd.f32 %v5814, %v5938
    %v6009 = vadd.f32 %v5815, %v5943
    %v6010 = vadd.f32 %v5816, %v5948
    %v6011 = vadd.f32 %v5817, %v5953
    %v6012 = vadd.f32 %v5818, %v5958
    %v6013 = vadd.f32 %v5819, %v5963
    %v6014 = vadd.f32 %v5820, %v5968
    %v6015 = vadd.f32 %v5821, %v5973
    %v6016 = vadd.f32 %v5822, %v5978
    %v6017 = vadd.f32 %v5823, %v5983
    %v6018 = vadd.f32 %v5824, %v5988
    %v6019 = vadd.f32 %v5825, %v5993
    %v6020 = vadd.f32 %v5826, %v5998
    %v6021 = vadd.f32 %v5827, %v6003
    %v6022 = vld [vmem:[%s5245 + $0x4] sm:$0xff]
    %v6023 = vld [vmem:[%s5245 + $0x14] sm:$0xff]
    %v6024 = vld [vmem:[%s5245 + $0x24] sm:$0xff]
    %v6025 = vld [vmem:[%s5245 + $0x34] sm:$0xff]
    %v6026 = vld [vmem:[%s5245 + $0x44] sm:$0xff]
    %v6027 = vld [vmem:[%s5245 + $0x54] sm:$0xff]
    %v6028 = vld [vmem:[%s5245 + $0x64] sm:$0xff]
    %v6029 = vld [vmem:[%s5245 + $0x74] sm:$0xff]
    %v6030 = vld [vmem:[%s5245 + $0xc4] sm:$0xff]
    %v6031 = vld [vmem:[%s5245 + $0xd4] sm:$0xff]
    %v6032 = vld [vmem:[%s5245 + $0xe4] sm:$0xff]
    %v6033 = vld [vmem:[%s5245 + $0xf4] sm:$0xff]
    %v6034 = vld [vmem:[%s5245 + $0x104] sm:$0xff]
    %v6035 = vld [vmem:[%s5245 + $0x114] sm:$0xff]
    %v6036 = vld [vmem:[%s5245 + $0x124] sm:$0xff]
    %v6037 = vld [vmem:[%s5245 + $0x134] sm:$0xff]
    %s6038 = scalar_lea.vmem %s3, 2432
    %v6039 = vld [vmem:[%s6038] sm:$0xff]
    %v6040 = vld [vmem:[%s6038 + $0x8] sm:$0xff]
    %v6041 = vld [vmem:[%s6038 + $0x10] sm:$0xff]
    %v6042 = vld [vmem:[%s6038 + $0x18] sm:$0xff]
    %v6043 = vld [vmem:[%s6038 + $0x20] sm:$0xff]
    %v6044 = vld [vmem:[%s6038 + $0x28] sm:$0xff]
    %v6045 = vld [vmem:[%s6038 + $0x30] sm:$0xff]
    %v6046 = vld [vmem:[%s6038 + $0x38] sm:$0xff]
    %v6047 = vld [vmem:[%s6038 + $0x40] sm:$0xff]
    %v6048 = vld [vmem:[%s6038 + $0x48] sm:$0xff]
    %v6049 = vld [vmem:[%s6038 + $0x50] sm:$0xff]
    %v6050 = vld [vmem:[%s6038 + $0x58] sm:$0xff]
    %v6051 = vld [vmem:[%s6038 + $0x60] sm:$0xff]
    %v6052 = vld [vmem:[%s6038 + $0x68] sm:$0xff]
    %v6053 = vld [vmem:[%s6038 + $0x70] sm:$0xff]
    %v6054 = vld [vmem:[%s6038 + $0x78] sm:$0xff]
    %6055 = vmatprep.subr.mxu0 0.0
    %6056 = vmatpush1.msra.mxu0 %v6039
    %6057 = vmatprep.subr.mxu0 0.0
    %6058 = vmatpush1.msra.mxu0 %v6040
    %6059 = vmatprep.subr.mxu0 0.0
    %6060 = vmatpush1.msra.mxu0 %v6041
    %6061 = vmatprep.subr.mxu0 0.0
    %6062 = vmatpush1.msra.mxu0 %v6042
    %6063 = vmatprep.subr.mxu0 0.0
    %6064 = vmatpush1.msra.mxu0 %v6043
    %6065 = vmatprep.subr.mxu0 0.0
    %6066 = vmatpush1.msra.mxu0 %v6044
    %6067 = vmatprep.subr.mxu0 0.0
    %6068 = vmatpush1.msra.mxu0 %v6045
    %6069 = vmatprep.subr.mxu0 0.0
    %6070 = vmatpush1.msra.mxu0 %v6046
    %6071 = vmatprep.subr.mxu0 0.0
    %6072 = vmatpush1.msra.mxu0 %v6047
    %6073 = vmatprep.subr.mxu0 0.0
    %6074 = vmatpush1.msra.mxu0 %v6048
    %6075 = vmatprep.subr.mxu0 0.0
    %6076 = vmatpush1.msra.mxu0 %v6049
    %6077 = vmatprep.subr.mxu0 0.0
    %6078 = vmatpush1.msra.mxu0 %v6050
    %6079 = vmatprep.subr.mxu0 0.0
    %6080 = vmatpush1.msra.mxu0 %v6051
    %6081 = vmatprep.subr.mxu0 0.0
    %6082 = vmatpush1.msra.mxu0 %v6052
    %6083 = vmatprep.subr.mxu0 0.0
    %6084 = vmatpush1.msra.mxu0 %v6053
    %6085 = vmatprep.subr.mxu0 0.0
    %6086 = vmatpush1.msra.mxu0 %v6054
    %6087 = vmatprep.subr.mxu0 0.0
    %6088 = vmatpush1.msra.mxu0 0.0
    %6089 = vmatprep.subr.mxu0 0.0
    %6090 = vmatpush1.msra.mxu0 0.0
    %6091 = vmatprep.subr.mxu0 0.0
    %6092 = vmatpush1.msra.mxu0 0.0
    %6093 = vmatprep.subr.mxu0 0.0
    %6094 = vmatpush1.msra.mxu0 0.0
    %6095 = vmatprep.subr.mxu0 0.0
    %6096 = vmatpush1.msra.mxu0 0.0
    %6097 = vmatprep.subr.mxu0 0.0
    %6098 = vmatpush1.msra.mxu0 0.0
    %6099 = vmatprep.subr.mxu0 0.0
    %6100 = vmatpush1.msra.mxu0 0.0
    %6101 = vmatprep.subr.mxu0 0.0
    %6102 = vmatpush1.msra.mxu0 0.0
    %6103 = vmatprep.subr.mxu0 0.0
    %6104 = vmatpush1.msra.mxu0 0.0
    %6105 = vmatprep.subr.mxu0 0.0
    %6106 = vmatpush1.msra.mxu0 0.0
    %6107 = vmatprep.subr.mxu0 0.0
    %6108 = vmatpush1.msra.mxu0 0.0
    %6109 = vmatprep.subr.mxu0 0.0
    %6110 = vmatpush1.msra.mxu0 0.0
    %6111 = vmatprep.subr.mxu0 0.0
    %6112 = vmatpush1.msra.mxu0 0.0
    %6113 = vmatprep.subr.mxu0 0.0
    %6114 = vmatpush1.msra.mxu0 0.0
    %6115 = vmatprep.subr.mxu0 0.0
    %6116 = vmatpush1.msra.mxu0 0.0
    %6117 = vmatprep.subr.mxu0 0.0
    %6118 = vmatpush1.msra.mxu0 0.0
    %6119 = vmatprep.mubr.f32.mxu0 0.0
    %6120 = vmatmul.mubr.f32.gmra.mrb[0].mxu0 %v6022
    %v6121 = vpop.f32.mrb[0].mxu0
    %v6122 = vadd.f32 0.0, %v6121
    %v6123 = vpop.f32.mrb[0].mxu0
    %6124 = vmatprep.mubr.f32.mxu0 0.0
    %6125 = vmatmul.mubr.f32.gmra.mrb[0].mxu0 %v6023
    %v6126 = vpop.f32.mrb[0].mxu0
    %v6127 = vadd.f32 0.0, %v6126
    %v6128 = vpop.f32.mrb[0].mxu0
    %6129 = vmatprep.mubr.f32.mxu0 0.0
    %6130 = vmatmul.mubr.f32.gmra.mrb[0].mxu0 %v6024
    %v6131 = vpop.f32.mrb[0].mxu0
    %v6132 = vadd.f32 0.0, %v6131
    %v6133 = vpop.f32.mrb[0].mxu0
    %6134 = vmatprep.mubr.f32.mxu0 0.0
    %6135 = vmatmul.mubr.f32.gmra.mrb[0].mxu0 %v6025
    %v6136 = vpop.f32.mrb[0].mxu0
    %v6137 = vadd.f32 0.0, %v6136
    %v6138 = vpop.f32.mrb[0].mxu0
    %6139 = vmatprep.mubr.f32.mxu0 0.0
    %6140 = vmatmul.mubr.f32.gmra.mrb[0].mxu0 %v6026
    %v6141 = vpop.f32.mrb[0].mxu0
    %v6142 = vadd.f32 0.0, %v6141
    %v6143 = vpop.f32.mrb[0].mxu0
    %6144 = vmatprep.mubr.f32.mxu0 0.0
    %6145 = vmatmul.mubr.f32.gmra.mrb[0].mxu0 %v6027
    %v6146 = vpop.f32.mrb[0].mxu0
    %v6147 = vadd.f32 0.0, %v6146
    %v6148 = vpop.f32.mrb[0].mxu0
    %6149 = vmatprep.mubr.f32.mxu0 0.0
    %6150 = vmatmul.mubr.f32.gmra.mrb[0].mxu0 %v6028
    %v6151 = vpop.f32.mrb[0].mxu0
    %v6152 = vadd.f32 0.0, %v6151
    %v6153 = vpop.f32.mrb[0].mxu0
    %6154 = vmatprep.mubr.f32.mxu0 0.0
    %6155 = vmatmul.mubr.f32.gmra.mrb[0].mxu0 %v6029
    %v6156 = vpop.f32.mrb[0].mxu0
    %v6157 = vadd.f32 0.0, %v6156
    %v6158 = vpop.f32.mrb[0].mxu0
    %6159 = vmatprep.mubr.f32.mxu0 0.0
    %6160 = vmatmul.mubr.f32.gmra.mrb[0].mxu0 %v6030
    %v6161 = vpop.f32.mrb[0].mxu0
    %v6162 = vadd.f32 0.0, %v6161
    %v6163 = vpop.f32.mrb[0].mxu0
    %6164 = vmatprep.mubr.f32.mxu0 0.0
    %6165 = vmatmul.mubr.f32.gmra.mrb[0].mxu0 %v6031
    %v6166 = vpop.f32.mrb[0].mxu0
    %v6167 = vadd.f32 0.0, %v6166
    %v6168 = vpop.f32.mrb[0].mxu0
    %6169 = vmatprep.mubr.f32.mxu0 0.0
    %6170 = vmatmul.mubr.f32.gmra.mrb[0].mxu0 %v6032
    %v6171 = vpop.f32.mrb[0].mxu0
    %v6172 = vadd.f32 0.0, %v6171
    %v6173 = vpop.f32.mrb[0].mxu0
    %6174 = vmatprep.mubr.f32.mxu0 0.0
    %6175 = vmatmul.mubr.f32.gmra.mrb[0].mxu0 %v6033
    %v6176 = vpop.f32.mrb[0].mxu0
    %v6177 = vadd.f32 0.0, %v6176
    %v6178 = vpop.f32.mrb[0].mxu0
    %6179 = vmatprep.mubr.f32.mxu0 0.0
    %6180 = vmatmul.mubr.f32.gmra.mrb[0].mxu0 %v6034
    %v6181 = vpop.f32.mrb[0].mxu0
    %v6182 = vadd.f32 0.0, %v6181
    %v6183 = vpop.f32.mrb[0].mxu0
    %6184 = vmatprep.mubr.f32.mxu0 0.0
    %6185 = vmatmul.mubr.f32.gmra.mrb[0].mxu0 %v6035
    %v6186 = vpop.f32.mrb[0].mxu0
    %v6187 = vadd.f32 0.0, %v6186
    %v6188 = vpop.f32.mrb[0].mxu0
    %6189 = vmatprep.mubr.f32.mxu0 0.0
    %6190 = vmatmul.mubr.f32.gmra.mrb[0].mxu0 %v6036
    %v6191 = vpop.f32.mrb[0].mxu0
    %v6192 = vadd.f32 0.0, %v6191
    %v6193 = vpop.f32.mrb[0].mxu0
    %6194 = vmatprep.mubr.f32.mxu0 0.0
    %6195 = vmatmul.mubr.f32.gmra.mrb[0].mxu0 %v6037
    %v6196 = vpop.f32.mrb[0].mxu0
    %v6197 = vadd.f32 0.0, %v6196
    %v6198 = vpop.f32.mrb[0].mxu0
    %6199 = vdwg.mxu0
    %v6200 = vadd.f32 %v6006, %v6122
    %v6201 = vadd.f32 %v6007, %v6127
    %v6202 = vadd.f32 %v6008, %v6132
    %v6203 = vadd.f32 %v6009, %v6137
    %v6204 = vadd.f32 %v6010, %v6142
    %v6205 = vadd.f32 %v6011, %v6147
    %v6206 = vadd.f32 %v6012, %v6152
    %v6207 = vadd.f32 %v6013, %v6157
    %v6208 = vadd.f32 %v6014, %v6162
    %v6209 = vadd.f32 %v6015, %v6167
    %v6210 = vadd.f32 %v6016, %v6172
    %v6211 = vadd.f32 %v6017, %v6177
    %v6212 = vadd.f32 %v6018, %v6182
    %v6213 = vadd.f32 %v6019, %v6187
    %v6214 = vadd.f32 %v6020, %v6192
    %v6215 = vadd.f32 %v6021, %v6197
    %s6216 = scalar_lea.vmem [#allocation4], 64
    %v6217 = vld [vmem:[%s6216] sm:$0xff]
    %v6218 = vld [vmem:[%s6216 + $0x10] sm:$0xff]
    %v6219 = vld [vmem:[%s6216 + $0x20] sm:$0xff]
    %v6220 = vld [vmem:[%s6216 + $0x30] sm:$0xff]
    %v6221 = vld [vmem:[%s6216 + $0x40] sm:$0xff]
    %v6222 = vld [vmem:[%s6216 + $0x50] sm:$0xff]
    %v6223 = vld [vmem:[%s6216 + $0x60] sm:$0xff]
    %v6224 = vld [vmem:[%s6216 + $0x70] sm:$0xff]
    %v6225 = vld [vmem:[%s6216 + $0xc0] sm:$0xff]
    %v6226 = vld [vmem:[%s6216 + $0xd0] sm:$0xff]
    %v6227 = vld [vmem:[%s6216 + $0xe0] sm:$0xff]
    %v6228 = vld [vmem:[%s6216 + $0xf0] sm:$0xff]
    %v6229 = vld [vmem:[%s6216 + $0x100] sm:$0xff]
    %v6230 = vld [vmem:[%s6216 + $0x110] sm:$0xff]
    %v6231 = vld [vmem:[%s6216 + $0x120] sm:$0xff]
    %v6232 = vld [vmem:[%s6216 + $0x130] sm:$0xff]
    %s6233 = scalar_lea.vmem %s3, 2560
    %v6234 = vld [vmem:[%s6233] sm:$0xff]
    %v6235 = vld [vmem:[%s6233 + $0x8] sm:$0xff]
    %v6236 = vld [vmem:[%s6233 + $0x10] sm:$0xff]
    %v6237 = vld [vmem:[%s6233 + $0x18] sm:$0xff]
    %v6238 = vld [vmem:[%s6233 + $0x20] sm:$0xff]
    %v6239 = vld [vmem:[%s6233 + $0x28] sm:$0xff]
    %v6240 = vld [vmem:[%s6233 + $0x30] sm:$0xff]
    %v6241 = vld [vmem:[%s6233 + $0x38] sm:$0xff]
    %v6242 = vld [vmem:[%s6233 + $0x40] sm:$0xff]
    %v6243 = vld [vmem:[%s6233 + $0x48] sm:$0xff]
    %v6244 = vld [vmem:[%s6233 + $0x50] sm:$0xff]
    %v6245 = vld [vmem:[%s6233 + $0x58] sm:$0xff]
    %v6246 = vld [vmem:[%s6233 + $0x60] sm:$0xff]
    %v6247 = vld [vmem:[%s6233 + $0x68] sm:$0xff]
    %v6248 = vld [vmem:[%s6233 + $0x70] sm:$0xff]
    %v6249 = vld [vmem:[%s6233 + $0x78] sm:$0xff]
    %6250 = vmatprep.subr.mxu0 0.0
    %6251 = vmatpush1.msra.mxu0 %v6234
    %6252 = vmatprep.subr.mxu0 0.0
    %6253 = vmatpush1.msra.mxu0 %v6235
    %6254 = vmatprep.subr.mxu0 0.0
    %6255 = vmatpush1.msra.mxu0 %v6236
    %6256 = vmatprep.subr.mxu0 0.0
    %6257 = vmatpush1.msra.mxu0 %v6237
    %6258 = vmatprep.subr.mxu0 0.0
    %6259 = vmatpush1.msra.mxu0 %v6238
    %6260 = vmatprep.subr.mxu0 0.0
    %6261 = vmatpush1.msra.mxu0 %v6239
    %6262 = vmatprep.subr.mxu0 0.0
    %6263 = vmatpush1.msra.mxu0 %v6240
    %6264 = vmatprep.subr.mxu0 0.0
    %6265 = vmatpush1.msra.mxu0 %v6241
    %6266 = vmatprep.subr.mxu0 0.0
    %6267 = vmatpush1.msra.mxu0 %v6242
    %6268 = vmatprep.subr.mxu0 0.0
    %6269 = vmatpush1.msra.mxu0 %v6243
    %6270 = vmatprep.subr.mxu0 0.0
    %6271 = vmatpush1.msra.mxu0 %v6244
    %6272 = vmatprep.subr.mxu0 0.0
    %6273 = vmatpush1.msra.mxu0 %v6245
    %6274 = vmatprep.subr.mxu0 0.0
    %6275 = vmatpush1.msra.mxu0 %v6246
    %6276 = vmatprep.subr.mxu0 0.0
    %6277 = vmatpush1.msra.mxu0 %v6247
    %6278 = vmatprep.subr.mxu0 0.0
    %6279 = vmatpush1.msra.mxu0 %v6248
    %6280 = vmatprep.subr.mxu0 0.0
    %6281 = vmatpush1.msra.mxu0 %v6249
    %6282 = vmatprep.subr.mxu0 0.0
    %6283 = vmatpush1.msra.mxu0 0.0
    %6284 = vmatprep.subr.mxu0 0.0
    %6285 = vmatpush1.msra.mxu0 0.0
    %6286 = vmatprep.subr.mxu0 0.0
    %6287 = vmatpush1.msra.mxu0 0.0
    %6288 = vmatprep.subr.mxu0 0.0
    %6289 = vmatpush1.msra.mxu0 0.0
    %6290 = vmatprep.subr.mxu0 0.0
    %6291 = vmatpush1.msra.mxu0 0.0
    %6292 = vmatprep.subr.mxu0 0.0
    %6293 = vmatpush1.msra.mxu0 0.0
    %6294 = vmatprep.subr.mxu0 0.0
    %6295 = vmatpush1.msra.mxu0 0.0
    %6296 = vmatprep.subr.mxu0 0.0
    %6297 = vmatpush1.msra.mxu0 0.0
    %6298 = vmatprep.subr.mxu0 0.0
    %6299 = vmatpush1.msra.mxu0 0.0
    %6300 = vmatprep.subr.mxu0 0.0
    %6301 = vmatpush1.msra.mxu0 0.0
    %6302 = vmatprep.subr.mxu0 0.0
    %6303 = vmatpush1.msra.mxu0 0.0
    %6304 = vmatprep.subr.mxu0 0.0
    %6305 = vmatpush1.msra.mxu0 0.0
    %6306 = vmatprep.subr.mxu0 0.0
    %6307 = vmatpush1.msra.mxu0 0.0
    %6308 = vmatprep.subr.mxu0 0.0
    %6309 = vmatpush1.msra.mxu0 0.0
    %6310 = vmatprep.subr.mxu0 0.0
    %6311 = vmatpush1.msra.mxu0 0.0
    %6312 = vmatprep.subr.mxu0 0.0
    %6313 = vmatpush1.msra.mxu0 0.0
    %6314 = vmatprep.mubr.f32.mxu0 0.0
    %6315 = vmatmul.mubr.f32.gmra.mrb[0].mxu0 %v6217
    %v6316 = vpop.f32.mrb[0].mxu0
    %v6317 = vadd.f32 0.0, %v6316
    %v6318 = vpop.f32.mrb[0].mxu0
    %6319 = vmatprep.mubr.f32.mxu0 0.0
    %6320 = vmatmul.mubr.f32.gmra.mrb[0].mxu0 %v6218
    %v6321 = vpop.f32.mrb[0].mxu0
    %v6322 = vadd.f32 0.0, %v6321
    %v6323 = vpop.f32.mrb[0].mxu0
    %6324 = vmatprep.mubr.f32.mxu0 0.0
    %6325 = vmatmul.mubr.f32.gmra.mrb[0].mxu0 %v6219
    %v6326 = vpop.f32.mrb[0].mxu0
    %v6327 = vadd.f32 0.0, %v6326
    %v6328 = vpop.f32.mrb[0].mxu0
    %6329 = vmatprep.mubr.f32.mxu0 0.0
    %6330 = vmatmul.mubr.f32.gmra.mrb[0].mxu0 %v6220
    %v6331 = vpop.f32.mrb[0].mxu0
    %v6332 = vadd.f32 0.0, %v6331
    %v6333 = vpop.f32.mrb[0].mxu0
    %6334 = vmatprep.mubr.f32.mxu0 0.0
    %6335 = vmatmul.mubr.f32.gmra.mrb[0].mxu0 %v6221
    %v6336 = vpop.f32.mrb[0].mxu0
    %v6337 = vadd.f32 0.0, %v6336
    %v6338 = vpop.f32.mrb[0].mxu0
    %6339 = vmatprep.mubr.f32.mxu0 0.0
    %6340 = vmatmul.mubr.f32.gmra.mrb[0].mxu0 %v6222
    %v6341 = vpop.f32.mrb[0].mxu0
    %v6342 = vadd.f32 0.0, %v6341
    %v6343 = vpop.f32.mrb[0].mxu0
    %6344 = vmatprep.mubr.f32.mxu0 0.0
    %6345 = vmatmul.mubr.f32.gmra.mrb[0].mxu0 %v6223
    %v6346 = vpop.f32.mrb[0].mxu0
    %v6347 = vadd.f32 0.0, %v6346
    %v6348 = vpop.f32.mrb[0].mxu0
    %6349 = vmatprep.mubr.f32.mxu0 0.0
    %6350 = vmatmul.mubr.f32.gmra.mrb[0].mxu0 %v6224
    %v6351 = vpop.f32.mrb[0].mxu0
    %v6352 = vadd.f32 0.0, %v6351
    %v6353 = vpop.f32.mrb[0].mxu0
    %6354 = vmatprep.mubr.f32.mxu0 0.0
    %6355 = vmatmul.mubr.f32.gmra.mrb[0].mxu0 %v6225
    %v6356 = vpop.f32.mrb[0].mxu0
    %v6357 = vadd.f32 0.0, %v6356
    %v6358 = vpop.f32.mrb[0].mxu0
    %6359 = vmatprep.mubr.f32.mxu0 0.0
    %6360 = vmatmul.mubr.f32.gmra.mrb[0].mxu0 %v6226
    %v6361 = vpop.f32.mrb[0].mxu0
    %v6362 = vadd.f32 0.0, %v6361
    %v6363 = vpop.f32.mrb[0].mxu0
    %6364 = vmatprep.mubr.f32.mxu0 0.0
    %6365 = vmatmul.mubr.f32.gmra.mrb[0].mxu0 %v6227
    %v6366 = vpop.f32.mrb[0].mxu0
    %v6367 = vadd.f32 0.0, %v6366
    %v6368 = vpop.f32.mrb[0].mxu0
    %6369 = vmatprep.mubr.f32.mxu0 0.0
    %6370 = vmatmul.mubr.f32.gmra.mrb[0].mxu0 %v6228
    %v6371 = vpop.f32.mrb[0].mxu0
    %v6372 = vadd.f32 0.0, %v6371
    %v6373 = vpop.f32.mrb[0].mxu0
    %6374 = vmatprep.mubr.f32.mxu0 0.0
    %6375 = vmatmul.mubr.f32.gmra.mrb[0].mxu0 %v6229
    %v6376 = vpop.f32.mrb[0].mxu0
    %v6377 = vadd.f32 0.0, %v6376
    %v6378 = vpop.f32.mrb[0].mxu0
    %6379 = vmatprep.mubr.f32.mxu0 0.0
    %6380 = vmatmul.mubr.f32.gmra.mrb[0].mxu0 %v6230
    %v6381 = vpop.f32.mrb[0].mxu0
    %v6382 = vadd.f32 0.0, %v6381
    %v6383 = vpop.f32.mrb[0].mxu0
    %6384 = vmatprep.mubr.f32.mxu0 0.0
    %6385 = vmatmul.mubr.f32.gmra.mrb[0].mxu0 %v6231
    %v6386 = vpop.f32.mrb[0].mxu0
    %v6387 = vadd.f32 0.0, %v6386
    %v6388 = vpop.f32.mrb[0].mxu0
    %6389 = vmatprep.mubr.f32.mxu0 0.0
    %6390 = vmatmul.mubr.f32.gmra.mrb[0].mxu0 %v6232
    %v6391 = vpop.f32.mrb[0].mxu0
    %v6392 = vadd.f32 0.0, %v6391
    %v6393 = vpop.f32.mrb[0].mxu0
    %6394 = vdwg.mxu0
    %v6395 = vadd.f32 %v6200, %v6317
    %v6396 = vadd.f32 %v6201, %v6322
    %v6397 = vadd.f32 %v6202, %v6327
    %v6398 = vadd.f32 %v6203, %v6332
    %v6399 = vadd.f32 %v6204, %v6337
    %v6400 = vadd.f32 %v6205, %v6342
    %v6401 = vadd.f32 %v6206, %v6347
    %v6402 = vadd.f32 %v6207, %v6352
    %v6403 = vadd.f32 %v6208, %v6357
    %v6404 = vadd.f32 %v6209, %v6362
    %v6405 = vadd.f32 %v6210, %v6367
    %v6406 = vadd.f32 %v6211, %v6372
    %v6407 = vadd.f32 %v6212, %v6377
    %v6408 = vadd.f32 %v6213, %v6382
    %v6409 = vadd.f32 %v6214, %v6387
    %v6410 = vadd.f32 %v6215, %v6392
    %v6411 = vld [vmem:[%s6216 + $0x1] sm:$0xff]
    %v6412 = vld [vmem:[%s6216 + $0x11] sm:$0xff]
    %v6413 = vld [vmem:[%s6216 + $0x21] sm:$0xff]
    %v6414 = vld [vmem:[%s6216 + $0x31] sm:$0xff]
    %v6415 = vld [vmem:[%s6216 + $0x41] sm:$0xff]
    %v6416 = vld [vmem:[%s6216 + $0x51] sm:$0xff]
    %v6417 = vld [vmem:[%s6216 + $0x61] sm:$0xff]
    %v6418 = vld [vmem:[%s6216 + $0x71] sm:$0xff]
    %v6419 = vld [vmem:[%s6216 + $0xc1] sm:$0xff]
    %v6420 = vld [vmem:[%s6216 + $0xd1] sm:$0xff]
    %v6421 = vld [vmem:[%s6216 + $0xe1] sm:$0xff]
    %v6422 = vld [vmem:[%s6216 + $0xf1] sm:$0xff]
    %v6423 = vld [vmem:[%s6216 + $0x101] sm:$0xff]
    %v6424 = vld [vmem:[%s6216 + $0x111] sm:$0xff]
    %v6425 = vld [vmem:[%s6216 + $0x121] sm:$0xff]
    %v6426 = vld [vmem:[%s6216 + $0x131] sm:$0xff]
    %s6427 = scalar_lea.vmem %s3, 2688
    %v6428 = vld [vmem:[%s6427] sm:$0xff]
    %v6429 = vld [vmem:[%s6427 + $0x8] sm:$0xff]
    %v6430 = vld [vmem:[%s6427 + $0x10] sm:$0xff]
    %v6431 = vld [vmem:[%s6427 + $0x18] sm:$0xff]
    %v6432 = vld [vmem:[%s6427 + $0x20] sm:$0xff]
    %v6433 = vld [vmem:[%s6427 + $0x28] sm:$0xff]
    %v6434 = vld [vmem:[%s6427 + $0x30] sm:$0xff]
    %v6435 = vld [vmem:[%s6427 + $0x38] sm:$0xff]
    %v6436 = vld [vmem:[%s6427 + $0x40] sm:$0xff]
    %v6437 = vld [vmem:[%s6427 + $0x48] sm:$0xff]
    %v6438 = vld [vmem:[%s6427 + $0x50] sm:$0xff]
    %v6439 = vld [vmem:[%s6427 + $0x58] sm:$0xff]
    %v6440 = vld [vmem:[%s6427 + $0x60] sm:$0xff]
    %v6441 = vld [vmem:[%s6427 + $0x68] sm:$0xff]
    %v6442 = vld [vmem:[%s6427 + $0x70] sm:$0xff]
    %v6443 = vld [vmem:[%s6427 + $0x78] sm:$0xff]
    %6444 = vmatprep.subr.mxu0 0.0
    %6445 = vmatpush1.msra.mxu0 %v6428
    %6446 = vmatprep.subr.mxu0 0.0
    %6447 = vmatpush1.msra.mxu0 %v6429
    %6448 = vmatprep.subr.mxu0 0.0
    %6449 = vmatpush1.msra.mxu0 %v6430
    %6450 = vmatprep.subr.mxu0 0.0
    %6451 = vmatpush1.msra.mxu0 %v6431
    %6452 = vmatprep.subr.mxu0 0.0
    %6453 = vmatpush1.msra.mxu0 %v6432
    %6454 = vmatprep.subr.mxu0 0.0
    %6455 = vmatpush1.msra.mxu0 %v6433
    %6456 = vmatprep.subr.mxu0 0.0
    %6457 = vmatpush1.msra.mxu0 %v6434
    %6458 = vmatprep.subr.mxu0 0.0
    %6459 = vmatpush1.msra.mxu0 %v6435
    %6460 = vmatprep.subr.mxu0 0.0
    %6461 = vmatpush1.msra.mxu0 %v6436
    %6462 = vmatprep.subr.mxu0 0.0
    %6463 = vmatpush1.msra.mxu0 %v6437
    %6464 = vmatprep.subr.mxu0 0.0
    %6465 = vmatpush1.msra.mxu0 %v6438
    %6466 = vmatprep.subr.mxu0 0.0
    %6467 = vmatpush1.msra.mxu0 %v6439
    %6468 = vmatprep.subr.mxu0 0.0
    %6469 = vmatpush1.msra.mxu0 %v6440
    %6470 = vmatprep.subr.mxu0 0.0
    %6471 = vmatpush1.msra.mxu0 %v6441
    %6472 = vmatprep.subr.mxu0 0.0
    %6473 = vmatpush1.msra.mxu0 %v6442
    %6474 = vmatprep.subr.mxu0 0.0
    %6475 = vmatpush1.msra.mxu0 %v6443
    %6476 = vmatprep.subr.mxu0 0.0
    %6477 = vmatpush1.msra.mxu0 0.0
    %6478 = vmatprep.subr.mxu0 0.0
    %6479 = vmatpush1.msra.mxu0 0.0
    %6480 = vmatprep.subr.mxu0 0.0
    %6481 = vmatpush1.msra.mxu0 0.0
    %6482 = vmatprep.subr.mxu0 0.0
    %6483 = vmatpush1.msra.mxu0 0.0
    %6484 = vmatprep.subr.mxu0 0.0
    %6485 = vmatpush1.msra.mxu0 0.0
    %6486 = vmatprep.subr.mxu0 0.0
    %6487 = vmatpush1.msra.mxu0 0.0
    %6488 = vmatprep.subr.mxu0 0.0
    %6489 = vmatpush1.msra.mxu0 0.0
    %6490 = vmatprep.subr.mxu0 0.0
    %6491 = vmatpush1.msra.mxu0 0.0
    %6492 = vmatprep.subr.mxu0 0.0
    %6493 = vmatpush1.msra.mxu0 0.0
    %6494 = vmatprep.subr.mxu0 0.0
    %6495 = vmatpush1.msra.mxu0 0.0
    %6496 = vmatprep.subr.mxu0 0.0
    %6497 = vmatpush1.msra.mxu0 0.0
    %6498 = vmatprep.subr.mxu0 0.0
    %6499 = vmatpush1.msra.mxu0 0.0
    %6500 = vmatprep.subr.mxu0 0.0
    %6501 = vmatpush1.msra.mxu0 0.0
    %6502 = vmatprep.subr.mxu0 0.0
    %6503 = vmatpush1.msra.mxu0 0.0
    %6504 = vmatprep.subr.mxu0 0.0
    %6505 = vmatpush1.msra.mxu0 0.0
    %6506 = vmatprep.subr.mxu0 0.0
    %6507 = vmatpush1.msra.mxu0 0.0
    %6508 = vmatprep.mubr.f32.mxu0 0.0
    %6509 = vmatmul.mubr.f32.gmra.mrb[0].mxu0 %v6411
    %v6510 = vpop.f32.mrb[0].mxu0
    %v6511 = vadd.f32 0.0, %v6510
    %v6512 = vpop.f32.mrb[0].mxu0
    %6513 = vmatprep.mubr.f32.mxu0 0.0
    %6514 = vmatmul.mubr.f32.gmra.mrb[0].mxu0 %v6412
    %v6515 = vpop.f32.mrb[0].mxu0
    %v6516 = vadd.f32 0.0, %v6515
    %v6517 = vpop.f32.mrb[0].mxu0
    %6518 = vmatprep.mubr.f32.mxu0 0.0
    %6519 = vmatmul.mubr.f32.gmra.mrb[0].mxu0 %v6413
    %v6520 = vpop.f32.mrb[0].mxu0
    %v6521 = vadd.f32 0.0, %v6520
    %v6522 = vpop.f32.mrb[0].mxu0
    %6523 = vmatprep.mubr.f32.mxu0 0.0
    %6524 = vmatmul.mubr.f32.gmra.mrb[0].mxu0 %v6414
    %v6525 = vpop.f32.mrb[0].mxu0
    %v6526 = vadd.f32 0.0, %v6525
    %v6527 = vpop.f32.mrb[0].mxu0
    %6528 = vmatprep.mubr.f32.mxu0 0.0
    %6529 = vmatmul.mubr.f32.gmra.mrb[0].mxu0 %v6415
    %v6530 = vpop.f32.mrb[0].mxu0
    %v6531 = vadd.f32 0.0, %v6530
    %v6532 = vpop.f32.mrb[0].mxu0
    %6533 = vmatprep.mubr.f32.mxu0 0.0
    %6534 = vmatmul.mubr.f32.gmra.mrb[0].mxu0 %v6416
    %v6535 = vpop.f32.mrb[0].mxu0
    %v6536 = vadd.f32 0.0, %v6535
    %v6537 = vpop.f32.mrb[0].mxu0
    %6538 = vmatprep.mubr.f32.mxu0 0.0
    %6539 = vmatmul.mubr.f32.gmra.mrb[0].mxu0 %v6417
    %v6540 = vpop.f32.mrb[0].mxu0
    %v6541 = vadd.f32 0.0, %v6540
    %v6542 = vpop.f32.mrb[0].mxu0
    %6543 = vmatprep.mubr.f32.mxu0 0.0
    %6544 = vmatmul.mubr.f32.gmra.mrb[0].mxu0 %v6418
    %v6545 = vpop.f32.mrb[0].mxu0
    %v6546 = vadd.f32 0.0, %v6545
    %v6547 = vpop.f32.mrb[0].mxu0
    %6548 = vmatprep.mubr.f32.mxu0 0.0
    %6549 = vmatmul.mubr.f32.gmra.mrb[0].mxu0 %v6419
    %v6550 = vpop.f32.mrb[0].mxu0
    %v6551 = vadd.f32 0.0, %v6550
    %v6552 = vpop.f32.mrb[0].mxu0
    %6553 = vmatprep.mubr.f32.mxu0 0.0
    %6554 = vmatmul.mubr.f32.gmra.mrb[0].mxu0 %v6420
    %v6555 = vpop.f32.mrb[0].mxu0
    %v6556 = vadd.f32 0.0, %v6555
    %v6557 = vpop.f32.mrb[0].mxu0
    %6558 = vmatprep.mubr.f32.mxu0 0.0
    %6559 = vmatmul.mubr.f32.gmra.mrb[0].mxu0 %v6421
    %v6560 = vpop.f32.mrb[0].mxu0
    %v6561 = vadd.f32 0.0, %v6560
    %v6562 = vpop.f32.mrb[0].mxu0
    %6563 = vmatprep.mubr.f32.mxu0 0.0
    %6564 = vmatmul.mubr.f32.gmra.mrb[0].mxu0 %v6422
    %v6565 = vpop.f32.mrb[0].mxu0
    %v6566 = vadd.f32 0.0, %v6565
    %v6567 = vpop.f32.mrb[0].mxu0
    %6568 = vmatprep.mubr.f32.mxu0 0.0
    %6569 = vmatmul.mubr.f32.gmra.mrb[0].mxu0 %v6423
    %v6570 = vpop.f32.mrb[0].mxu0
    %v6571 = vadd.f32 0.0, %v6570
    %v6572 = vpop.f32.mrb[0].mxu0
    %6573 = vmatprep.mubr.f32.mxu0 0.0
    %6574 = vmatmul.mubr.f32.gmra.mrb[0].mxu0 %v6424
    %v6575 = vpop.f32.mrb[0].mxu0
    %v6576 = vadd.f32 0.0, %v6575
    %v6577 = vpop.f32.mrb[0].mxu0
    %6578 = vmatprep.mubr.f32.mxu0 0.0
    %6579 = vmatmul.mubr.f32.gmra.mrb[0].mxu0 %v6425
    %v6580 = vpop.f32.mrb[0].mxu0
    %v6581 = vadd.f32 0.0, %v6580
    %v6582 = vpop.f32.mrb[0].mxu0
    %6583 = vmatprep.mubr.f32.mxu0 0.0
    %6584 = vmatmul.mubr.f32.gmra.mrb[0].mxu0 %v6426
    %v6585 = vpop.f32.mrb[0].mxu0
    %v6586 = vadd.f32 0.0, %v6585
    %v6587 = vpop.f32.mrb[0].mxu0
    %6588 = vdwg.mxu0
    %v6589 = vadd.f32 %v6395, %v6511
    %v6590 = vadd.f32 %v6396, %v6516
    %v6591 = vadd.f32 %v6397, %v6521
    %v6592 = vadd.f32 %v6398, %v6526
    %v6593 = vadd.f32 %v6399, %v6531
    %v6594 = vadd.f32 %v6400, %v6536
    %v6595 = vadd.f32 %v6401, %v6541
    %v6596 = vadd.f32 %v6402, %v6546
    %v6597 = vadd.f32 %v6403, %v6551
    %v6598 = vadd.f32 %v6404, %v6556
    %v6599 = vadd.f32 %v6405, %v6561
    %v6600 = vadd.f32 %v6406, %v6566
    %v6601 = vadd.f32 %v6407, %v6571
    %v6602 = vadd.f32 %v6408, %v6576
    %v6603 = vadd.f32 %v6409, %v6581
    %v6604 = vadd.f32 %v6410, %v6586
    %v6605 = vld [vmem:[%s6216 + $0x2] sm:$0xff]
    %v6606 = vld [vmem:[%s6216 + $0x12] sm:$0xff]
    %v6607 = vld [vmem:[%s6216 + $0x22] sm:$0xff]
    %v6608 = vld [vmem:[%s6216 + $0x32] sm:$0xff]
    %v6609 = vld [vmem:[%s6216 + $0x42] sm:$0xff]
    %v6610 = vld [vmem:[%s6216 + $0x52] sm:$0xff]
    %v6611 = vld [vmem:[%s6216 + $0x62] sm:$0xff]
    %v6612 = vld [vmem:[%s6216 + $0x72] sm:$0xff]
    %v6613 = vld [vmem:[%s6216 + $0xc2] sm:$0xff]
    %v6614 = vld [vmem:[%s6216 + $0xd2] sm:$0xff]
    %v6615 = vld [vmem:[%s6216 + $0xe2] sm:$0xff]
    %v6616 = vld [vmem:[%s6216 + $0xf2] sm:$0xff]
    %v6617 = vld [vmem:[%s6216 + $0x102] sm:$0xff]
    %v6618 = vld [vmem:[%s6216 + $0x112] sm:$0xff]
    %v6619 = vld [vmem:[%s6216 + $0x122] sm:$0xff]
    %v6620 = vld [vmem:[%s6216 + $0x132] sm:$0xff]
    %s6621 = scalar_lea.vmem %s3, 2816
    %v6622 = vld [vmem:[%s6621] sm:$0xff]
    %v6623 = vld [vmem:[%s6621 + $0x8] sm:$0xff]
    %v6624 = vld [vmem:[%s6621 + $0x10] sm:$0xff]
    %v6625 = vld [vmem:[%s6621 + $0x18] sm:$0xff]
    %v6626 = vld [vmem:[%s6621 + $0x20] sm:$0xff]
    %v6627 = vld [vmem:[%s6621 + $0x28] sm:$0xff]
    %v6628 = vld [vmem:[%s6621 + $0x30] sm:$0xff]
    %v6629 = vld [vmem:[%s6621 + $0x38] sm:$0xff]
    %v6630 = vld [vmem:[%s6621 + $0x40] sm:$0xff]
    %v6631 = vld [vmem:[%s6621 + $0x48] sm:$0xff]
    %v6632 = vld [vmem:[%s6621 + $0x50] sm:$0xff]
    %v6633 = vld [vmem:[%s6621 + $0x58] sm:$0xff]
    %v6634 = vld [vmem:[%s6621 + $0x60] sm:$0xff]
    %v6635 = vld [vmem:[%s6621 + $0x68] sm:$0xff]
    %v6636 = vld [vmem:[%s6621 + $0x70] sm:$0xff]
    %v6637 = vld [vmem:[%s6621 + $0x78] sm:$0xff]
    %6638 = vmatprep.subr.mxu0 0.0
    %6639 = vmatpush1.msra.mxu0 %v6622
    %6640 = vmatprep.subr.mxu0 0.0
    %6641 = vmatpush1.msra.mxu0 %v6623
    %6642 = vmatprep.subr.mxu0 0.0
    %6643 = vmatpush1.msra.mxu0 %v6624
    %6644 = vmatprep.subr.mxu0 0.0
    %6645 = vmatpush1.msra.mxu0 %v6625
    %6646 = vmatprep.subr.mxu0 0.0
    %6647 = vmatpush1.msra.mxu0 %v6626
    %6648 = vmatprep.subr.mxu0 0.0
    %6649 = vmatpush1.msra.mxu0 %v6627
    %6650 = vmatprep.subr.mxu0 0.0
    %6651 = vmatpush1.msra.mxu0 %v6628
    %6652 = vmatprep.subr.mxu0 0.0
    %6653 = vmatpush1.msra.mxu0 %v6629
    %6654 = vmatprep.subr.mxu0 0.0
    %6655 = vmatpush1.msra.mxu0 %v6630
    %6656 = vmatprep.subr.mxu0 0.0
    %6657 = vmatpush1.msra.mxu0 %v6631
    %6658 = vmatprep.subr.mxu0 0.0
    %6659 = vmatpush1.msra.mxu0 %v6632
    %6660 = vmatprep.subr.mxu0 0.0
    %6661 = vmatpush1.msra.mxu0 %v6633
    %6662 = vmatprep.subr.mxu0 0.0
    %6663 = vmatpush1.msra.mxu0 %v6634
    %6664 = vmatprep.subr.mxu0 0.0
    %6665 = vmatpush1.msra.mxu0 %v6635
    %6666 = vmatprep.subr.mxu0 0.0
    %6667 = vmatpush1.msra.mxu0 %v6636
    %6668 = vmatprep.subr.mxu0 0.0
    %6669 = vmatpush1.msra.mxu0 %v6637
    %6670 = vmatprep.subr.mxu0 0.0
    %6671 = vmatpush1.msra.mxu0 0.0
    %6672 = vmatprep.subr.mxu0 0.0
    %6673 = vmatpush1.msra.mxu0 0.0
    %6674 = vmatprep.subr.mxu0 0.0
    %6675 = vmatpush1.msra.mxu0 0.0
    %6676 = vmatprep.subr.mxu0 0.0
    %6677 = vmatpush1.msra.mxu0 0.0
    %6678 = vmatprep.subr.mxu0 0.0
    %6679 = vmatpush1.msra.mxu0 0.0
    %6680 = vmatprep.subr.mxu0 0.0
    %6681 = vmatpush1.msra.mxu0 0.0
    %6682 = vmatprep.subr.mxu0 0.0
    %6683 = vmatpush1.msra.mxu0 0.0
    %6684 = vmatprep.subr.mxu0 0.0
    %6685 = vmatpush1.msra.mxu0 0.0
    %6686 = vmatprep.subr.mxu0 0.0
    %6687 = vmatpush1.msra.mxu0 0.0
    %6688 = vmatprep.subr.mxu0 0.0
    %6689 = vmatpush1.msra.mxu0 0.0
    %6690 = vmatprep.subr.mxu0 0.0
    %6691 = vmatpush1.msra.mxu0 0.0
    %6692 = vmatprep.subr.mxu0 0.0
    %6693 = vmatpush1.msra.mxu0 0.0
    %6694 = vmatprep.subr.mxu0 0.0
    %6695 = vmatpush1.msra.mxu0 0.0
    %6696 = vmatprep.subr.mxu0 0.0
    %6697 = vmatpush1.msra.mxu0 0.0
    %6698 = vmatprep.subr.mxu0 0.0
    %6699 = vmatpush1.msra.mxu0 0.0
    %6700 = vmatprep.subr.mxu0 0.0
    %6701 = vmatpush1.msra.mxu0 0.0
    %6702 = vmatprep.mubr.f32.mxu0 0.0
    %6703 = vmatmul.mubr.f32.gmra.mrb[0].mxu0 %v6605
    %v6704 = vpop.f32.mrb[0].mxu0
    %v6705 = vadd.f32 0.0, %v6704
    %v6706 = vpop.f32.mrb[0].mxu0
    %6707 = vmatprep.mubr.f32.mxu0 0.0
    %6708 = vmatmul.mubr.f32.gmra.mrb[0].mxu0 %v6606
    %v6709 = vpop.f32.mrb[0].mxu0
    %v6710 = vadd.f32 0.0, %v6709
    %v6711 = vpop.f32.mrb[0].mxu0
    %6712 = vmatprep.mubr.f32.mxu0 0.0
    %6713 = vmatmul.mubr.f32.gmra.mrb[0].mxu0 %v6607
    %v6714 = vpop.f32.mrb[0].mxu0
    %v6715 = vadd.f32 0.0, %v6714
    %v6716 = vpop.f32.mrb[0].mxu0
    %6717 = vmatprep.mubr.f32.mxu0 0.0
    %6718 = vmatmul.mubr.f32.gmra.mrb[0].mxu0 %v6608
    %v6719 = vpop.f32.mrb[0].mxu0
    %v6720 = vadd.f32 0.0, %v6719
    %v6721 = vpop.f32.mrb[0].mxu0
    %6722 = vmatprep.mubr.f32.mxu0 0.0
    %6723 = vmatmul.mubr.f32.gmra.mrb[0].mxu0 %v6609
    %v6724 = vpop.f32.mrb[0].mxu0
    %v6725 = vadd.f32 0.0, %v6724
    %v6726 = vpop.f32.mrb[0].mxu0
    %6727 = vmatprep.mubr.f32.mxu0 0.0
    %6728 = vmatmul.mubr.f32.gmra.mrb[0].mxu0 %v6610
    %v6729 = vpop.f32.mrb[0].mxu0
    %v6730 = vadd.f32 0.0, %v6729
    %v6731 = vpop.f32.mrb[0].mxu0
    %6732 = vmatprep.mubr.f32.mxu0 0.0
    %6733 = vmatmul.mubr.f32.gmra.mrb[0].mxu0 %v6611
    %v6734 = vpop.f32.mrb[0].mxu0
    %v6735 = vadd.f32 0.0, %v6734
    %v6736 = vpop.f32.mrb[0].mxu0
    %6737 = vmatprep.mubr.f32.mxu0 0.0
    %6738 = vmatmul.mubr.f32.gmra.mrb[0].mxu0 %v6612
    %v6739 = vpop.f32.mrb[0].mxu0
    %v6740 = vadd.f32 0.0, %v6739
    %v6741 = vpop.f32.mrb[0].mxu0
    %6742 = vmatprep.mubr.f32.mxu0 0.0
    %6743 = vmatmul.mubr.f32.gmra.mrb[0].mxu0 %v6613
    %v6744 = vpop.f32.mrb[0].mxu0
    %v6745 = vadd.f32 0.0, %v6744
    %v6746 = vpop.f32.mrb[0].mxu0
    %6747 = vmatprep.mubr.f32.mxu0 0.0
    %6748 = vmatmul.mubr.f32.gmra.mrb[0].mxu0 %v6614
    %v6749 = vpop.f32.mrb[0].mxu0
    %v6750 = vadd.f32 0.0, %v6749
    %v6751 = vpop.f32.mrb[0].mxu0
    %6752 = vmatprep.mubr.f32.mxu0 0.0
    %6753 = vmatmul.mubr.f32.gmra.mrb[0].mxu0 %v6615
    %v6754 = vpop.f32.mrb[0].mxu0
    %v6755 = vadd.f32 0.0, %v6754
    %v6756 = vpop.f32.mrb[0].mxu0
    %6757 = vmatprep.mubr.f32.mxu0 0.0
    %6758 = vmatmul.mubr.f32.gmra.mrb[0].mxu0 %v6616
    %v6759 = vpop.f32.mrb[0].mxu0
    %v6760 = vadd.f32 0.0, %v6759
    %v6761 = vpop.f32.mrb[0].mxu0
    %6762 = vmatprep.mubr.f32.mxu0 0.0
    %6763 = vmatmul.mubr.f32.gmra.mrb[0].mxu0 %v6617
    %v6764 = vpop.f32.mrb[0].mxu0
    %v6765 = vadd.f32 0.0, %v6764
    %v6766 = vpop.f32.mrb[0].mxu0
    %6767 = vmatprep.mubr.f32.mxu0 0.0
    %6768 = vmatmul.mubr.f32.gmra.mrb[0].mxu0 %v6618
    %v6769 = vpop.f32.mrb[0].mxu0
    %v6770 = vadd.f32 0.0, %v6769
    %v6771 = vpop.f32.mrb[0].mxu0
    %6772 = vmatprep.mubr.f32.mxu0 0.0
    %6773 = vmatmul.mubr.f32.gmra.mrb[0].mxu0 %v6619
    %v6774 = vpop.f32.mrb[0].mxu0
    %v6775 = vadd.f32 0.0, %v6774
    %v6776 = vpop.f32.mrb[0].mxu0
    %6777 = vmatprep.mubr.f32.mxu0 0.0
    %6778 = vmatmul.mubr.f32.gmra.mrb[0].mxu0 %v6620
    %v6779 = vpop.f32.mrb[0].mxu0
    %v6780 = vadd.f32 0.0, %v6779
    %v6781 = vpop.f32.mrb[0].mxu0
    %6782 = vdwg.mxu0
    %v6783 = vadd.f32 %v6589, %v6705
    %v6784 = vadd.f32 %v6590, %v6710
    %v6785 = vadd.f32 %v6591, %v6715
    %v6786 = vadd.f32 %v6592, %v6720
    %v6787 = vadd.f32 %v6593, %v6725
    %v6788 = vadd.f32 %v6594, %v6730
    %v6789 = vadd.f32 %v6595, %v6735
    %v6790 = vadd.f32 %v6596, %v6740
    %v6791 = vadd.f32 %v6597, %v6745
    %v6792 = vadd.f32 %v6598, %v6750
    %v6793 = vadd.f32 %v6599, %v6755
    %v6794 = vadd.f32 %v6600, %v6760
    %v6795 = vadd.f32 %v6601, %v6765
    %v6796 = vadd.f32 %v6602, %v6770
    %v6797 = vadd.f32 %v6603, %v6775
    %v6798 = vadd.f32 %v6604, %v6780
    %v6799 = vld [vmem:[%s6216 + $0x3] sm:$0xff]
    %v6800 = vld [vmem:[%s6216 + $0x13] sm:$0xff]
    %v6801 = vld [vmem:[%s6216 + $0x23] sm:$0xff]
    %v6802 = vld [vmem:[%s6216 + $0x33] sm:$0xff]
    %v6803 = vld [vmem:[%s6216 + $0x43] sm:$0xff]
    %v6804 = vld [vmem:[%s6216 + $0x53] sm:$0xff]
    %v6805 = vld [vmem:[%s6216 + $0x63] sm:$0xff]
    %v6806 = vld [vmem:[%s6216 + $0x73] sm:$0xff]
    %v6807 = vld [vmem:[%s6216 + $0xc3] sm:$0xff]
    %v6808 = vld [vmem:[%s6216 + $0xd3] sm:$0xff]
    %v6809 = vld [vmem:[%s6216 + $0xe3] sm:$0xff]
    %v6810 = vld [vmem:[%s6216 + $0xf3] sm:$0xff]
    %v6811 = vld [vmem:[%s6216 + $0x103] sm:$0xff]
    %v6812 = vld [vmem:[%s6216 + $0x113] sm:$0xff]
    %v6813 = vld [vmem:[%s6216 + $0x123] sm:$0xff]
    %v6814 = vld [vmem:[%s6216 + $0x133] sm:$0xff]
    %s6815 = scalar_lea.vmem %s3, 2944
    %v6816 = vld [vmem:[%s6815] sm:$0xff]
    %v6817 = vld [vmem:[%s6815 + $0x8] sm:$0xff]
    %v6818 = vld [vmem:[%s6815 + $0x10] sm:$0xff]
    %v6819 = vld [vmem:[%s6815 + $0x18] sm:$0xff]
    %v6820 = vld [vmem:[%s6815 + $0x20] sm:$0xff]
    %v6821 = vld [vmem:[%s6815 + $0x28] sm:$0xff]
    %v6822 = vld [vmem:[%s6815 + $0x30] sm:$0xff]
    %v6823 = vld [vmem:[%s6815 + $0x38] sm:$0xff]
    %v6824 = vld [vmem:[%s6815 + $0x40] sm:$0xff]
    %v6825 = vld [vmem:[%s6815 + $0x48] sm:$0xff]
    %v6826 = vld [vmem:[%s6815 + $0x50] sm:$0xff]
    %v6827 = vld [vmem:[%s6815 + $0x58] sm:$0xff]
    %v6828 = vld [vmem:[%s6815 + $0x60] sm:$0xff]
    %v6829 = vld [vmem:[%s6815 + $0x68] sm:$0xff]
    %v6830 = vld [vmem:[%s6815 + $0x70] sm:$0xff]
    %v6831 = vld [vmem:[%s6815 + $0x78] sm:$0xff]
    %6832 = vmatprep.subr.mxu0 0.0
    %6833 = vmatpush1.msra.mxu0 %v6816
    %6834 = vmatprep.subr.mxu0 0.0
    %6835 = vmatpush1.msra.mxu0 %v6817
    %6836 = vmatprep.subr.mxu0 0.0
    %6837 = vmatpush1.msra.mxu0 %v6818
    %6838 = vmatprep.subr.mxu0 0.0
    %6839 = vmatpush1.msra.mxu0 %v6819
    %6840 = vmatprep.subr.mxu0 0.0
    %6841 = vmatpush1.msra.mxu0 %v6820
    %6842 = vmatprep.subr.mxu0 0.0
    %6843 = vmatpush1.msra.mxu0 %v6821
    %6844 = vmatprep.subr.mxu0 0.0
    %6845 = vmatpush1.msra.mxu0 %v6822
    %6846 = vmatprep.subr.mxu0 0.0
    %6847 = vmatpush1.msra.mxu0 %v6823
    %6848 = vmatprep.subr.mxu0 0.0
    %6849 = vmatpush1.msra.mxu0 %v6824
    %6850 = vmatprep.subr.mxu0 0.0
    %6851 = vmatpush1.msra.mxu0 %v6825
    %6852 = vmatprep.subr.mxu0 0.0
    %6853 = vmatpush1.msra.mxu0 %v6826
    %6854 = vmatprep.subr.mxu0 0.0
    %6855 = vmatpush1.msra.mxu0 %v6827
    %6856 = vmatprep.subr.mxu0 0.0
    %6857 = vmatpush1.msra.mxu0 %v6828
    %6858 = vmatprep.subr.mxu0 0.0
    %6859 = vmatpush1.msra.mxu0 %v6829
    %6860 = vmatprep.subr.mxu0 0.0
    %6861 = vmatpush1.msra.mxu0 %v6830
    %6862 = vmatprep.subr.mxu0 0.0
    %6863 = vmatpush1.msra.mxu0 %v6831
    %6864 = vmatprep.subr.mxu0 0.0
    %6865 = vmatpush1.msra.mxu0 0.0
    %6866 = vmatprep.subr.mxu0 0.0
    %6867 = vmatpush1.msra.mxu0 0.0
    %6868 = vmatprep.subr.mxu0 0.0
    %6869 = vmatpush1.msra.mxu0 0.0
    %6870 = vmatprep.subr.mxu0 0.0
    %6871 = vmatpush1.msra.mxu0 0.0
    %6872 = vmatprep.subr.mxu0 0.0
    %6873 = vmatpush1.msra.mxu0 0.0
    %6874 = vmatprep.subr.mxu0 0.0
    %6875 = vmatpush1.msra.mxu0 0.0
    %6876 = vmatprep.subr.mxu0 0.0
    %6877 = vmatpush1.msra.mxu0 0.0
    %6878 = vmatprep.subr.mxu0 0.0
    %6879 = vmatpush1.msra.mxu0 0.0
    %6880 = vmatprep.subr.mxu0 0.0
    %6881 = vmatpush1.msra.mxu0 0.0
    %6882 = vmatprep.subr.mxu0 0.0
    %6883 = vmatpush1.msra.mxu0 0.0
    %6884 = vmatprep.subr.mxu0 0.0
    %6885 = vmatpush1.msra.mxu0 0.0
    %6886 = vmatprep.subr.mxu0 0.0
    %6887 = vmatpush1.msra.mxu0 0.0
    %6888 = vmatprep.subr.mxu0 0.0
    %6889 = vmatpush1.msra.mxu0 0.0
    %6890 = vmatprep.subr.mxu0 0.0
    %6891 = vmatpush1.msra.mxu0 0.0
    %6892 = vmatprep.subr.mxu0 0.0
    %6893 = vmatpush1.msra.mxu0 0.0
    %6894 = vmatprep.subr.mxu0 0.0
    %6895 = vmatpush1.msra.mxu0 0.0
    %6896 = vmatprep.mubr.f32.mxu0 0.0
    %6897 = vmatmul.mubr.f32.gmra.mrb[0].mxu0 %v6799
    %v6898 = vpop.f32.mrb[0].mxu0
    %v6899 = vadd.f32 0.0, %v6898
    %v6900 = vpop.f32.mrb[0].mxu0
    %6901 = vmatprep.mubr.f32.mxu0 0.0
    %6902 = vmatmul.mubr.f32.gmra.mrb[0].mxu0 %v6800
    %v6903 = vpop.f32.mrb[0].mxu0
    %v6904 = vadd.f32 0.0, %v6903
    %v6905 = vpop.f32.mrb[0].mxu0
    %6906 = vmatprep.mubr.f32.mxu0 0.0
    %6907 = vmatmul.mubr.f32.gmra.mrb[0].mxu0 %v6801
    %v6908 = vpop.f32.mrb[0].mxu0
    %v6909 = vadd.f32 0.0, %v6908
    %v6910 = vpop.f32.mrb[0].mxu0
    %6911 = vmatprep.mubr.f32.mxu0 0.0
    %6912 = vmatmul.mubr.f32.gmra.mrb[0].mxu0 %v6802
    %v6913 = vpop.f32.mrb[0].mxu0
    %v6914 = vadd.f32 0.0, %v6913
    %v6915 = vpop.f32.mrb[0].mxu0
    %6916 = vmatprep.mubr.f32.mxu0 0.0
    %6917 = vmatmul.mubr.f32.gmra.mrb[0].mxu0 %v6803
    %v6918 = vpop.f32.mrb[0].mxu0
    %v6919 = vadd.f32 0.0, %v6918
    %v6920 = vpop.f32.mrb[0].mxu0
    %6921 = vmatprep.mubr.f32.mxu0 0.0
    %6922 = vmatmul.mubr.f32.gmra.mrb[0].mxu0 %v6804
    %v6923 = vpop.f32.mrb[0].mxu0
    %v6924 = vadd.f32 0.0, %v6923
    %v6925 = vpop.f32.mrb[0].mxu0
    %6926 = vmatprep.mubr.f32.mxu0 0.0
    %6927 = vmatmul.mubr.f32.gmra.mrb[0].mxu0 %v6805
    %v6928 = vpop.f32.mrb[0].mxu0
    %v6929 = vadd.f32 0.0, %v6928
    %v6930 = vpop.f32.mrb[0].mxu0
    %6931 = vmatprep.mubr.f32.mxu0 0.0
    %6932 = vmatmul.mubr.f32.gmra.mrb[0].mxu0 %v6806
    %v6933 = vpop.f32.mrb[0].mxu0
    %v6934 = vadd.f32 0.0, %v6933
    %v6935 = vpop.f32.mrb[0].mxu0
    %6936 = vmatprep.mubr.f32.mxu0 0.0
    %6937 = vmatmul.mubr.f32.gmra.mrb[0].mxu0 %v6807
    %v6938 = vpop.f32.mrb[0].mxu0
    %v6939 = vadd.f32 0.0, %v6938
    %v6940 = vpop.f32.mrb[0].mxu0
    %6941 = vmatprep.mubr.f32.mxu0 0.0
    %6942 = vmatmul.mubr.f32.gmra.mrb[0].mxu0 %v6808
    %v6943 = vpop.f32.mrb[0].mxu0
    %v6944 = vadd.f32 0.0, %v6943
    %v6945 = vpop.f32.mrb[0].mxu0
    %6946 = vmatprep.mubr.f32.mxu0 0.0
    %6947 = vmatmul.mubr.f32.gmra.mrb[0].mxu0 %v6809
    %v6948 = vpop.f32.mrb[0].mxu0
    %v6949 = vadd.f32 0.0, %v6948
    %v6950 = vpop.f32.mrb[0].mxu0
    %6951 = vmatprep.mubr.f32.mxu0 0.0
    %6952 = vmatmul.mubr.f32.gmra.mrb[0].mxu0 %v6810
    %v6953 = vpop.f32.mrb[0].mxu0
    %v6954 = vadd.f32 0.0, %v6953
    %v6955 = vpop.f32.mrb[0].mxu0
    %6956 = vmatprep.mubr.f32.mxu0 0.0
    %6957 = vmatmul.mubr.f32.gmra.mrb[0].mxu0 %v6811
    %v6958 = vpop.f32.mrb[0].mxu0
    %v6959 = vadd.f32 0.0, %v6958
    %v6960 = vpop.f32.mrb[0].mxu0
    %6961 = vmatprep.mubr.f32.mxu0 0.0
    %6962 = vmatmul.mubr.f32.gmra.mrb[0].mxu0 %v6812
    %v6963 = vpop.f32.mrb[0].mxu0
    %v6964 = vadd.f32 0.0, %v6963
    %v6965 = vpop.f32.mrb[0].mxu0
    %6966 = vmatprep.mubr.f32.mxu0 0.0
    %6967 = vmatmul.mubr.f32.gmra.mrb[0].mxu0 %v6813
    %v6968 = vpop.f32.mrb[0].mxu0
    %v6969 = vadd.f32 0.0, %v6968
    %v6970 = vpop.f32.mrb[0].mxu0
    %6971 = vmatprep.mubr.f32.mxu0 0.0
    %6972 = vmatmul.mubr.f32.gmra.mrb[0].mxu0 %v6814
    %v6973 = vpop.f32.mrb[0].mxu0
    %v6974 = vadd.f32 0.0, %v6973
    %v6975 = vpop.f32.mrb[0].mxu0
    %6976 = vdwg.mxu0
    %v6977 = vadd.f32 %v6783, %v6899
    %v6978 = vadd.f32 %v6784, %v6904
    %v6979 = vadd.f32 %v6785, %v6909
    %v6980 = vadd.f32 %v6786, %v6914
    %v6981 = vadd.f32 %v6787, %v6919
    %v6982 = vadd.f32 %v6788, %v6924
    %v6983 = vadd.f32 %v6789, %v6929
    %v6984 = vadd.f32 %v6790, %v6934
    %v6985 = vadd.f32 %v6791, %v6939
    %v6986 = vadd.f32 %v6792, %v6944
    %v6987 = vadd.f32 %v6793, %v6949
    %v6988 = vadd.f32 %v6794, %v6954
    %v6989 = vadd.f32 %v6795, %v6959
    %v6990 = vadd.f32 %v6796, %v6964
    %v6991 = vadd.f32 %v6797, %v6969
    %v6992 = vadd.f32 %v6798, %v6974
    %v6993 = vld [vmem:[%s6216 + $0x4] sm:$0xff]
    %v6994 = vld [vmem:[%s6216 + $0x14] sm:$0xff]
    %v6995 = vld [vmem:[%s6216 + $0x24] sm:$0xff]
    %v6996 = vld [vmem:[%s6216 + $0x34] sm:$0xff]
    %v6997 = vld [vmem:[%s6216 + $0x44] sm:$0xff]
    %v6998 = vld [vmem:[%s6216 + $0x54] sm:$0xff]
    %v6999 = vld [vmem:[%s6216 + $0x64] sm:$0xff]
    %v7000 = vld [vmem:[%s6216 + $0x74] sm:$0xff]
    %v7001 = vld [vmem:[%s6216 + $0xc4] sm:$0xff]
    %v7002 = vld [vmem:[%s6216 + $0xd4] sm:$0xff]
    %v7003 = vld [vmem:[%s6216 + $0xe4] sm:$0xff]
    %v7004 = vld [vmem:[%s6216 + $0xf4] sm:$0xff]
    %v7005 = vld [vmem:[%s6216 + $0x104] sm:$0xff]
    %v7006 = vld [vmem:[%s6216 + $0x114] sm:$0xff]
    %v7007 = vld [vmem:[%s6216 + $0x124] sm:$0xff]
    %v7008 = vld [vmem:[%s6216 + $0x134] sm:$0xff]
    %s7009 = scalar_lea.vmem %s3, 3072
    %v7010 = vld [vmem:[%s7009] sm:$0xff]
    %v7011 = vld [vmem:[%s7009 + $0x8] sm:$0xff]
    %v7012 = vld [vmem:[%s7009 + $0x10] sm:$0xff]
    %v7013 = vld [vmem:[%s7009 + $0x18] sm:$0xff]
    %v7014 = vld [vmem:[%s7009 + $0x20] sm:$0xff]
    %v7015 = vld [vmem:[%s7009 + $0x28] sm:$0xff]
    %v7016 = vld [vmem:[%s7009 + $0x30] sm:$0xff]
    %v7017 = vld [vmem:[%s7009 + $0x38] sm:$0xff]
    %v7018 = vld [vmem:[%s7009 + $0x40] sm:$0xff]
    %v7019 = vld [vmem:[%s7009 + $0x48] sm:$0xff]
    %v7020 = vld [vmem:[%s7009 + $0x50] sm:$0xff]
    %v7021 = vld [vmem:[%s7009 + $0x58] sm:$0xff]
    %v7022 = vld [vmem:[%s7009 + $0x60] sm:$0xff]
    %v7023 = vld [vmem:[%s7009 + $0x68] sm:$0xff]
    %v7024 = vld [vmem:[%s7009 + $0x70] sm:$0xff]
    %v7025 = vld [vmem:[%s7009 + $0x78] sm:$0xff]
    %7026 = vmatprep.subr.mxu0 0.0
    %7027 = vmatpush1.msra.mxu0 %v7010
    %7028 = vmatprep.subr.mxu0 0.0
    %7029 = vmatpush1.msra.mxu0 %v7011
    %7030 = vmatprep.subr.mxu0 0.0
    %7031 = vmatpush1.msra.mxu0 %v7012
    %7032 = vmatprep.subr.mxu0 0.0
    %7033 = vmatpush1.msra.mxu0 %v7013
    %7034 = vmatprep.subr.mxu0 0.0
    %7035 = vmatpush1.msra.mxu0 %v7014
    %7036 = vmatprep.subr.mxu0 0.0
    %7037 = vmatpush1.msra.mxu0 %v7015
    %7038 = vmatprep.subr.mxu0 0.0
    %7039 = vmatpush1.msra.mxu0 %v7016
    %7040 = vmatprep.subr.mxu0 0.0
    %7041 = vmatpush1.msra.mxu0 %v7017
    %7042 = vmatprep.subr.mxu0 0.0
    %7043 = vmatpush1.msra.mxu0 %v7018
    %7044 = vmatprep.subr.mxu0 0.0
    %7045 = vmatpush1.msra.mxu0 %v7019
    %7046 = vmatprep.subr.mxu0 0.0
    %7047 = vmatpush1.msra.mxu0 %v7020
    %7048 = vmatprep.subr.mxu0 0.0
    %7049 = vmatpush1.msra.mxu0 %v7021
    %7050 = vmatprep.subr.mxu0 0.0
    %7051 = vmatpush1.msra.mxu0 %v7022
    %7052 = vmatprep.subr.mxu0 0.0
    %7053 = vmatpush1.msra.mxu0 %v7023
    %7054 = vmatprep.subr.mxu0 0.0
    %7055 = vmatpush1.msra.mxu0 %v7024
    %7056 = vmatprep.subr.mxu0 0.0
    %7057 = vmatpush1.msra.mxu0 %v7025
    %7058 = vmatprep.subr.mxu0 0.0
    %7059 = vmatpush1.msra.mxu0 0.0
    %7060 = vmatprep.subr.mxu0 0.0
    %7061 = vmatpush1.msra.mxu0 0.0
    %7062 = vmatprep.subr.mxu0 0.0
    %7063 = vmatpush1.msra.mxu0 0.0
    %7064 = vmatprep.subr.mxu0 0.0
    %7065 = vmatpush1.msra.mxu0 0.0
    %7066 = vmatprep.subr.mxu0 0.0
    %7067 = vmatpush1.msra.mxu0 0.0
    %7068 = vmatprep.subr.mxu0 0.0
    %7069 = vmatpush1.msra.mxu0 0.0
    %7070 = vmatprep.subr.mxu0 0.0
    %7071 = vmatpush1.msra.mxu0 0.0
    %7072 = vmatprep.subr.mxu0 0.0
    %7073 = vmatpush1.msra.mxu0 0.0
    %7074 = vmatprep.subr.mxu0 0.0
    %7075 = vmatpush1.msra.mxu0 0.0
    %7076 = vmatprep.subr.mxu0 0.0
    %7077 = vmatpush1.msra.mxu0 0.0
    %7078 = vmatprep.subr.mxu0 0.0
    %7079 = vmatpush1.msra.mxu0 0.0
    %7080 = vmatprep.subr.mxu0 0.0
    %7081 = vmatpush1.msra.mxu0 0.0
    %7082 = vmatprep.subr.mxu0 0.0
    %7083 = vmatpush1.msra.mxu0 0.0
    %7084 = vmatprep.subr.mxu0 0.0
    %7085 = vmatpush1.msra.mxu0 0.0
    %7086 = vmatprep.subr.mxu0 0.0
    %7087 = vmatpush1.msra.mxu0 0.0
    %7088 = vmatprep.subr.mxu0 0.0
    %7089 = vmatpush1.msra.mxu0 0.0
    %7090 = vmatprep.mubr.f32.mxu0 0.0
    %7091 = vmatmul.mubr.f32.gmra.mrb[0].mxu0 %v6993
    %v7092 = vpop.f32.mrb[0].mxu0
    %v7093 = vadd.f32 0.0, %v7092
    %v7094 = vpop.f32.mrb[0].mxu0
    %7095 = vmatprep.mubr.f32.mxu0 0.0
    %7096 = vmatmul.mubr.f32.gmra.mrb[0].mxu0 %v6994
    %v7097 = vpop.f32.mrb[0].mxu0
    %v7098 = vadd.f32 0.0, %v7097
    %v7099 = vpop.f32.mrb[0].mxu0
    %7100 = vmatprep.mubr.f32.mxu0 0.0
    %7101 = vmatmul.mubr.f32.gmra.mrb[0].mxu0 %v6995
    %v7102 = vpop.f32.mrb[0].mxu0
    %v7103 = vadd.f32 0.0, %v7102
    %v7104 = vpop.f32.mrb[0].mxu0
    %7105 = vmatprep.mubr.f32.mxu0 0.0
    %7106 = vmatmul.mubr.f32.gmra.mrb[0].mxu0 %v6996
    %v7107 = vpop.f32.mrb[0].mxu0
    %v7108 = vadd.f32 0.0, %v7107
    %v7109 = vpop.f32.mrb[0].mxu0
    %7110 = vmatprep.mubr.f32.mxu0 0.0
    %7111 = vmatmul.mubr.f32.gmra.mrb[0].mxu0 %v6997
    %v7112 = vpop.f32.mrb[0].mxu0
    %v7113 = vadd.f32 0.0, %v7112
    %v7114 = vpop.f32.mrb[0].mxu0
    %7115 = vmatprep.mubr.f32.mxu0 0.0
    %7116 = vmatmul.mubr.f32.gmra.mrb[0].mxu0 %v6998
    %v7117 = vpop.f32.mrb[0].mxu0
    %v7118 = vadd.f32 0.0, %v7117
    %v7119 = vpop.f32.mrb[0].mxu0
    %7120 = vmatprep.mubr.f32.mxu0 0.0
    %7121 = vmatmul.mubr.f32.gmra.mrb[0].mxu0 %v6999
    %v7122 = vpop.f32.mrb[0].mxu0
    %v7123 = vadd.f32 0.0, %v7122
    %v7124 = vpop.f32.mrb[0].mxu0
    %7125 = vmatprep.mubr.f32.mxu0 0.0
    %7126 = vmatmul.mubr.f32.gmra.mrb[0].mxu0 %v7000
    %v7127 = vpop.f32.mrb[0].mxu0
    %v7128 = vadd.f32 0.0, %v7127
    %v7129 = vpop.f32.mrb[0].mxu0
    %7130 = vmatprep.mubr.f32.mxu0 0.0
    %7131 = vmatmul.mubr.f32.gmra.mrb[0].mxu0 %v7001
    %v7132 = vpop.f32.mrb[0].mxu0
    %v7133 = vadd.f32 0.0, %v7132
    %v7134 = vpop.f32.mrb[0].mxu0
    %7135 = vmatprep.mubr.f32.mxu0 0.0
    %7136 = vmatmul.mubr.f32.gmra.mrb[0].mxu0 %v7002
    %v7137 = vpop.f32.mrb[0].mxu0
    %v7138 = vadd.f32 0.0, %v7137
    %v7139 = vpop.f32.mrb[0].mxu0
    %7140 = vmatprep.mubr.f32.mxu0 0.0
    %7141 = vmatmul.mubr.f32.gmra.mrb[0].mxu0 %v7003
    %v7142 = vpop.f32.mrb[0].mxu0
    %v7143 = vadd.f32 0.0, %v7142
    %v7144 = vpop.f32.mrb[0].mxu0
    %7145 = vmatprep.mubr.f32.mxu0 0.0
    %7146 = vmatmul.mubr.f32.gmra.mrb[0].mxu0 %v7004
    %v7147 = vpop.f32.mrb[0].mxu0
    %v7148 = vadd.f32 0.0, %v7147
    %v7149 = vpop.f32.mrb[0].mxu0
    %7150 = vmatprep.mubr.f32.mxu0 0.0
    %7151 = vmatmul.mubr.f32.gmra.mrb[0].mxu0 %v7005
    %v7152 = vpop.f32.mrb[0].mxu0
    %v7153 = vadd.f32 0.0, %v7152
    %v7154 = vpop.f32.mrb[0].mxu0
    %7155 = vmatprep.mubr.f32.mxu0 0.0
    %7156 = vmatmul.mubr.f32.gmra.mrb[0].mxu0 %v7006
    %v7157 = vpop.f32.mrb[0].mxu0
    %v7158 = vadd.f32 0.0, %v7157
    %v7159 = vpop.f32.mrb[0].mxu0
    %7160 = vmatprep.mubr.f32.mxu0 0.0
    %7161 = vmatmul.mubr.f32.gmra.mrb[0].mxu0 %v7007
    %v7162 = vpop.f32.mrb[0].mxu0
    %v7163 = vadd.f32 0.0, %v7162
    %v7164 = vpop.f32.mrb[0].mxu0
    %7165 = vmatprep.mubr.f32.mxu0 0.0
    %7166 = vmatmul.mubr.f32.gmra.mrb[0].mxu0 %v7008
    %v7167 = vpop.f32.mrb[0].mxu0
    %v7168 = vadd.f32 0.0, %v7167
    %v7169 = vpop.f32.mrb[0].mxu0
    %7170 = vdwg.mxu0
    %v7171 = vadd.f32 %v6977, %v7093
    %v7172 = vadd.f32 %v6978, %v7098
    %v7173 = vadd.f32 %v6979, %v7103
    %v7174 = vadd.f32 %v6980, %v7108
    %v7175 = vadd.f32 %v6981, %v7113
    %v7176 = vadd.f32 %v6982, %v7118
    %v7177 = vadd.f32 %v6983, %v7123
    %v7178 = vadd.f32 %v6984, %v7128
    %v7179 = vadd.f32 %v6985, %v7133
    %v7180 = vadd.f32 %v6986, %v7138
    %v7181 = vadd.f32 %v6987, %v7143
    %v7182 = vadd.f32 %v6988, %v7148
    %v7183 = vadd.f32 %v6989, %v7153
    %v7184 = vadd.f32 %v6990, %v7158
    %v7185 = vadd.f32 %v6991, %v7163
    %v7186 = vadd.f32 %v6992, %v7168
    %v7187 = vld [vmem:[%s4] sm:$0x1]
    %v7189 = vlaneseq
    %v7190 = vshrl.u32 %v7189, 7
    %v7191 = vsub.s32 0, %v7190
    %v7192 = vrot.slane %v7187, %v7191
    %v7194 = vadd.f32 %v7171, %v7192
    %v7195 = vadd.f32 %v7172, %v7192
    %v7196 = vadd.f32 %v7173, %v7192
    %v7197 = vadd.f32 %v7174, %v7192
    %v7198 = vadd.f32 %v7175, %v7192
    %v7199 = vadd.f32 %v7176, %v7192
    %v7200 = vadd.f32 %v7177, %v7192
    %v7201 = vadd.f32 %v7178, %v7192
    %v7202 = vadd.f32 %v7179, %v7192
    %v7203 = vadd.f32 %v7180, %v7192
    %v7204 = vadd.f32 %v7181, %v7192
    %v7205 = vadd.f32 %v7182, %v7192
    %v7206 = vadd.f32 %v7183, %v7192
    %v7207 = vadd.f32 %v7184, %v7192
    %v7208 = vadd.f32 %v7185, %v7192
    %v7209 = vadd.f32 %v7186, %v7192
    %7210 = vst [vmem:[#allocation5] sm:$0xff] %v7194
    %7211 = vst [vmem:[#allocation5 + $0x8] sm:$0xff] %v7195
    %7212 = vst [vmem:[#allocation5 + $0x10] sm:$0xff] %v7196
    %7213 = vst [vmem:[#allocation5 + $0x18] sm:$0xff] %v7197
    %7214 = vst [vmem:[#allocation5 + $0x20] sm:$0xff] %v7198
    %7215 = vst [vmem:[#allocation5 + $0x28] sm:$0xff] %v7199
    %7216 = vst [vmem:[#allocation5 + $0x30] sm:$0xff] %v7200
    %7217 = vst [vmem:[#allocation5 + $0x38] sm:$0xff] %v7201
    %7218 = vst [vmem:[#allocation5 + $0x40] sm:$0xff] %v7202
    %7219 = vst [vmem:[#allocation5 + $0x48] sm:$0xff] %v7203
    %7220 = vst [vmem:[#allocation5 + $0x50] sm:$0xff] %v7204
    %7221 = vst [vmem:[#allocation5 + $0x58] sm:$0xff] %v7205
    %7222 = vst [vmem:[#allocation5 + $0x60] sm:$0xff] %v7206
    %7223 = vst [vmem:[#allocation5 + $0x68] sm:$0xff] %v7207
    %7224 = vst [vmem:[#allocation5 + $0x70] sm:$0xff] %v7208
    %7225 = vst [vmem:[#allocation5 + $0x78] sm:$0xff] %v7209
    %v7226 = vld [vmem:[#allocation5] ss:$2 sm:$0xf]
    %s7227 = scalar_lea.vmem [#allocation5], 8
    %v7228 = vld [vmem:[%s7227] ss:$2 sm:$0xf]
    %s7229 = scalar_lea.vmem [#allocation5], 16
    %v7230 = vld [vmem:[%s7229] ss:$2 sm:$0xf]
    %s7231 = scalar_lea.vmem [#allocation5], 24
    %v7232 = vld [vmem:[%s7231] ss:$2 sm:$0xf]
    %s7233 = scalar_lea.vmem [#allocation5], 32
    %v7234 = vld [vmem:[%s7233] ss:$2 sm:$0xf]
    %s7235 = scalar_lea.vmem [#allocation5], 40
    %v7236 = vld [vmem:[%s7235] ss:$2 sm:$0xf]
    %s7237 = scalar_lea.vmem [#allocation5], 48
    %v7238 = vld [vmem:[%s7237] ss:$2 sm:$0xf]
    %s7239 = scalar_lea.vmem [#allocation5], 56
    %v7240 = vld [vmem:[%s7239] ss:$2 sm:$0xf]
    %s7241 = scalar_lea.vmem [#allocation5], 64
    %v7242 = vld [vmem:[%s7241] ss:$2 sm:$0xf]
    %s7243 = scalar_lea.vmem [#allocation5], 72
    %v7244 = vld [vmem:[%s7243] ss:$2 sm:$0xf]
    %s7245 = scalar_lea.vmem [#allocation5], 80
    %v7246 = vld [vmem:[%s7245] ss:$2 sm:$0xf]
    %s7247 = scalar_lea.vmem [#allocation5], 88
    %v7248 = vld [vmem:[%s7247] ss:$2 sm:$0xf]
    %s7249 = scalar_lea.vmem [#allocation5], 96
    %v7250 = vld [vmem:[%s7249] ss:$2 sm:$0xf]
    %s7251 = scalar_lea.vmem [#allocation5], 104
    %v7252 = vld [vmem:[%s7251] ss:$2 sm:$0xf]
    %s7253 = scalar_lea.vmem [#allocation5], 112
    %v7254 = vld [vmem:[%s7253] ss:$2 sm:$0xf]
    %s7255 = scalar_lea.vmem [#allocation5], 120
    %v7256 = vld [vmem:[%s7255] ss:$2 sm:$0xf]
    %s7257 = scalar_lea.vmem [#allocation5], 1
    %v7258 = vld [vmem:[%s7257] ss:$2 sm:$0xf]
    %s7259 = scalar_lea.vmem [#allocation5], 9
    %v7260 = vld [vmem:[%s7259] ss:$2 sm:$0xf]
    %s7261 = scalar_lea.vmem [#allocation5], 17
    %v7262 = vld [vmem:[%s7261] ss:$2 sm:$0xf]
    %s7263 = scalar_lea.vmem [#allocation5], 25
    %v7264 = vld [vmem:[%s7263] ss:$2 sm:$0xf]
    %s7265 = scalar_lea.vmem [#allocation5], 33
    %v7266 = vld [vmem:[%s7265] ss:$2 sm:$0xf]
    %s7267 = scalar_lea.vmem [#allocation5], 41
    %v7268 = vld [vmem:[%s7267] ss:$2 sm:$0xf]
    %s7269 = scalar_lea.vmem [#allocation5], 49
    %v7270 = vld [vmem:[%s7269] ss:$2 sm:$0xf]
    %s7271 = scalar_lea.vmem [#allocation5], 57
    %v7272 = vld [vmem:[%s7271] ss:$2 sm:$0xf]
    %s7273 = scalar_lea.vmem [#allocation5], 65
    %v7274 = vld [vmem:[%s7273] ss:$2 sm:$0xf]
    %s7275 = scalar_lea.vmem [#allocation5], 73
    %v7276 = vld [vmem:[%s7275] ss:$2 sm:$0xf]
    %s7277 = scalar_lea.vmem [#allocation5], 81
    %v7278 = vld [vmem:[%s7277] ss:$2 sm:$0xf]
    %s7279 = scalar_lea.vmem [#allocation5], 89
    %v7280 = vld [vmem:[%s7279] ss:$2 sm:$0xf]
    %s7281 = scalar_lea.vmem [#allocation5], 97
    %v7282 = vld [vmem:[%s7281] ss:$2 sm:$0xf]
    %s7283 = scalar_lea.vmem [#allocation5], 105
    %v7284 = vld [vmem:[%s7283] ss:$2 sm:$0xf]
    %s7285 = scalar_lea.vmem [#allocation5], 113
    %v7286 = vld [vmem:[%s7285] ss:$2 sm:$0xf]
    %s7287 = scalar_lea.vmem [#allocation5], 121
    %v7288 = vld [vmem:[%s7287] ss:$2 sm:$0xf]
    %v7289 = vmax.f32 %v7226, %v7258
    %v7290 = vmax.f32 %v7228, %v7260
    %v7291 = vmax.f32 %v7230, %v7262
    %v7292 = vmax.f32 %v7232, %v7264
    %v7293 = vmax.f32 %v7234, %v7266
    %v7294 = vmax.f32 %v7236, %v7268
    %v7295 = vmax.f32 %v7238, %v7270
    %v7296 = vmax.f32 %v7240, %v7272
    %v7297 = vmax.f32 %v7242, %v7274
    %v7298 = vmax.f32 %v7244, %v7276
    %v7299 = vmax.f32 %v7246, %v7278
    %v7300 = vmax.f32 %v7248, %v7280
    %v7301 = vmax.f32 %v7250, %v7282
    %v7302 = vmax.f32 %v7252, %v7284
    %v7303 = vmax.f32 %v7254, %v7286
    %v7304 = vmax.f32 %v7256, %v7288
    %7305 = vst [vmem:[#allocation6] sm:$0xf] %v7289
    %7306 = vst [vmem:[#allocation6 + $0x4] sm:$0xf] %v7290
    %7307 = vst [vmem:[#allocation6 + $0x8] sm:$0xf] %v7291
    %7308 = vst [vmem:[#allocation6 + $0xc] sm:$0xf] %v7292
    %7309 = vst [vmem:[#allocation6 + $0x10] sm:$0xf] %v7293
    %7310 = vst [vmem:[#allocation6 + $0x14] sm:$0xf] %v7294
    %7311 = vst [vmem:[#allocation6 + $0x18] sm:$0xf] %v7295
    %7312 = vst [vmem:[#allocation6 + $0x1c] sm:$0xf] %v7296
    %7313 = vst [vmem:[#allocation6 + $0x20] sm:$0xf] %v7297
    %7314 = vst [vmem:[#allocation6 + $0x24] sm:$0xf] %v7298
    %7315 = vst [vmem:[#allocation6 + $0x28] sm:$0xf] %v7299
    %7316 = vst [vmem:[#allocation6 + $0x2c] sm:$0xf] %v7300
    %7317 = vst [vmem:[#allocation6 + $0x30] sm:$0xf] %v7301
    %7318 = vst [vmem:[#allocation6 + $0x34] sm:$0xf] %v7302
    %7319 = vst [vmem:[#allocation6 + $0x38] sm:$0xf] %v7303
    %7320 = vst [vmem:[#allocation6 + $0x3c] sm:$0xf] %v7304
    %v7321 = vld [vmem:[#allocation6] sm:$0xf]
    %v7322 = vld [vmem:[#allocation6 + $0x8] sm:$0xf]
    %v7323 = vld [vmem:[#allocation6 + $0x10] sm:$0xf]
    %v7324 = vld [vmem:[#allocation6 + $0x18] sm:$0xf]
    %v7325 = vld [vmem:[#allocation6 + $0x20] sm:$0xf]
    %v7326 = vld [vmem:[#allocation6 + $0x28] sm:$0xf]
    %v7327 = vld [vmem:[#allocation6 + $0x30] sm:$0xf]
    %v7328 = vld [vmem:[#allocation6 + $0x38] sm:$0xf]
    %s7329 = scalar_lea.vmem [#allocation6], 4
    %v7330 = vld [vmem:[%s7329] sm:$0xf]
    %v7331 = vld [vmem:[%s7329 + $0x8] sm:$0xf]
    %v7332 = vld [vmem:[%s7329 + $0x10] sm:$0xf]
    %v7333 = vld [vmem:[%s7329 + $0x18] sm:$0xf]
    %v7334 = vld [vmem:[%s7329 + $0x20] sm:$0xf]
    %v7335 = vld [vmem:[%s7329 + $0x28] sm:$0xf]
    %v7336 = vld [vmem:[%s7329 + $0x30] sm:$0xf]
    %v7337 = vld [vmem:[%s7329 + $0x38] sm:$0xf]
    %v7338 = vmax.f32 %v7321, %v7330
    %v7339 = vmax.f32 %v7322, %v7331
    %v7340 = vmax.f32 %v7323, %v7332
    %v7341 = vmax.f32 %v7324, %v7333
    %v7342 = vmax.f32 %v7325, %v7334
    %v7343 = vmax.f32 %v7326, %v7335
    %v7344 = vmax.f32 %v7327, %v7336
    %v7345 = vmax.f32 %v7328, %v7337
    %v7346 = vmax.f32 %v7338, 0.0
    %v7347 = vmax.f32 %v7339, 0.0
    %v7348 = vmax.f32 %v7340, 0.0
    %v7349 = vmax.f32 %v7341, 0.0
    %v7350 = vmax.f32 %v7342, 0.0
    %v7351 = vmax.f32 %v7343, 0.0
    %v7352 = vmax.f32 %v7344, 0.0
    %v7353 = vmax.f32 %v7345, 0.0
    %7354 = vst [vmem:[#allocation7] sm:$0xf] %v7346
    %7355 = vst [vmem:[#allocation7 + $0x4] sm:$0xf] %v7347
    %7356 = vst [vmem:[#allocation7 + $0x8] sm:$0xf] %v7348
    %7357 = vst [vmem:[#allocation7 + $0xc] sm:$0xf] %v7349
    %7358 = vst [vmem:[#allocation7 + $0x10] sm:$0xf] %v7350
    %7359 = vst [vmem:[#allocation7 + $0x14] sm:$0xf] %v7351
    %7360 = vst [vmem:[#allocation7 + $0x18] sm:$0xf] %v7352
    %7361 = vst [vmem:[#allocation7 + $0x1c] sm:$0xf] %v7353
    %v7362 = vld [vmem:[#allocation7] sm:$0x1]
    %v7363 = vld [vmem:[#allocation7 + $0x10] sm:$0x1]
    %v7364 = vld [vmem:[%s5] sm:$0xff]
    %v7365 = vld [vmem:[%s5 + $0x8] sm:$0xff]
    %v7366 = vld [vmem:[%s5 + $0x10] sm:$0xff]
    %v7367 = vld [vmem:[%s5 + $0x18] sm:$0xff]
    %v7368 = vld [vmem:[%s5 + $0x20] sm:$0xff]
    %v7369 = vld [vmem:[%s5 + $0x28] sm:$0xff]
    %v7370 = vld [vmem:[%s5 + $0x30] sm:$0xff]
    %v7371 = vld [vmem:[%s5 + $0x38] sm:$0xff]
    %v7372 = vld [vmem:[%s5 + $0x40] sm:$0xff]
    %v7373 = vld [vmem:[%s5 + $0x48] sm:$0xff]
    %v7374 = vld [vmem:[%s5 + $0x50] sm:$0xff]
    %v7375 = vld [vmem:[%s5 + $0x58] sm:$0xff]
    %v7376 = vld [vmem:[%s5 + $0x60] sm:$0xff]
    %v7377 = vld [vmem:[%s5 + $0x68] sm:$0xff]
    %v7378 = vld [vmem:[%s5 + $0x70] sm:$0xff]
    %v7379 = vld [vmem:[%s5 + $0x78] sm:$0xff]
    %v7380 = vld [vmem:[#allocation7 + $0x1] sm:$0x1]
    %v7381 = vld [vmem:[#allocation7 + $0x11] sm:$0x1]
    %s7382 = scalar_lea.vmem %s5, 128
    %v7383 = vld [vmem:[%s7382] sm:$0xff]
    %v7384 = vld [vmem:[%s7382 + $0x8] sm:$0xff]
    %v7385 = vld [vmem:[%s7382 + $0x10] sm:$0xff]
    %v7386 = vld [vmem:[%s7382 + $0x18] sm:$0xff]
    %v7387 = vld [vmem:[%s7382 + $0x20] sm:$0xff]
    %v7388 = vld [vmem:[%s7382 + $0x28] sm:$0xff]
    %v7389 = vld [vmem:[%s7382 + $0x30] sm:$0xff]
    %v7390 = vld [vmem:[%s7382 + $0x38] sm:$0xff]
    %v7391 = vld [vmem:[%s7382 + $0x40] sm:$0xff]
    %v7392 = vld [vmem:[%s7382 + $0x48] sm:$0xff]
    %v7393 = vld [vmem:[%s7382 + $0x50] sm:$0xff]
    %v7394 = vld [vmem:[%s7382 + $0x58] sm:$0xff]
    %v7395 = vld [vmem:[%s7382 + $0x60] sm:$0xff]
    %v7396 = vld [vmem:[%s7382 + $0x68] sm:$0xff]
    %v7397 = vld [vmem:[%s7382 + $0x70] sm:$0xff]
    %v7398 = vld [vmem:[%s7382 + $0x78] sm:$0xff]
    %v7401 = vrot.slane %v7381, 7
    %vm7402 = vcmask 1041409
    %v7403 = vsel %vm7402, %v7401, %v7380
    %7405 = vmatprep.subr.mxu0 0.0
    %7406 = vmatpush1.msra.mxu0 %v7383
    %7407 = vmatprep.subr.mxu0 0.0
    %7408 = vmatpush1.msra.mxu0 %v7384
    %7409 = vmatprep.subr.mxu0 0.0
    %7410 = vmatpush1.msra.mxu0 %v7385
    %7411 = vmatprep.subr.mxu0 0.0
    %7412 = vmatpush1.msra.mxu0 %v7386
    %7413 = vmatprep.subr.mxu0 0.0
    %7414 = vmatpush1.msra.mxu0 %v7387
    %7415 = vmatprep.subr.mxu0 0.0
    %7416 = vmatpush1.msra.mxu0 %v7388
    %7417 = vmatprep.subr.mxu0 0.0
    %7418 = vmatpush1.msra.mxu0 %v7389
    %7419 = vmatprep.subr.mxu0 0.0
    %7420 = vmatpush1.msra.mxu0 %v7390
    %7421 = vmatprep.subr.mxu0 0.0
    %7422 = vmatpush1.msra.mxu0 %v7391
    %7423 = vmatprep.subr.mxu0 0.0
    %7424 = vmatpush1.msra.mxu0 %v7392
    %7425 = vmatprep.subr.mxu0 0.0
    %7426 = vmatpush1.msra.mxu0 %v7393
    %7427 = vmatprep.subr.mxu0 0.0
    %7428 = vmatpush1.msra.mxu0 %v7394
    %7429 = vmatprep.subr.mxu0 0.0
    %7430 = vmatpush1.msra.mxu0 %v7395
    %7431 = vmatprep.subr.mxu0 0.0
    %7432 = vmatpush1.msra.mxu0 %v7396
    %7433 = vmatprep.subr.mxu0 0.0
    %7434 = vmatpush1.msra.mxu0 %v7397
    %7435 = vmatprep.subr.mxu0 0.0
    %7436 = vmatpush1.msra.mxu0 %v7398
    %7437 = vmatprep.subr.mxu0 0.0
    %7438 = vmatpush1.msra.mxu0 0.0
    %7439 = vmatprep.subr.mxu0 0.0
    %7440 = vmatpush1.msra.mxu0 0.0
    %7441 = vmatprep.subr.mxu0 0.0
    %7442 = vmatpush1.msra.mxu0 0.0
    %7443 = vmatprep.subr.mxu0 0.0
    %7444 = vmatpush1.msra.mxu0 0.0
    %7445 = vmatprep.subr.mxu0 0.0
    %7446 = vmatpush1.msra.mxu0 0.0
    %7447 = vmatprep.subr.mxu0 0.0
    %7448 = vmatpush1.msra.mxu0 0.0
    %7449 = vmatprep.subr.mxu0 0.0
    %7450 = vmatpush1.msra.mxu0 0.0
    %7451 = vmatprep.subr.mxu0 0.0
    %7452 = vmatpush1.msra.mxu0 0.0
    %7453 = vmatprep.subr.mxu0 0.0
    %7454 = vmatpush1.msra.mxu0 0.0
    %7455 = vmatprep.subr.mxu0 0.0
    %7456 = vmatpush1.msra.mxu0 0.0
    %7457 = vmatprep.subr.mxu0 0.0
    %7458 = vmatpush1.msra.mxu0 0.0
    %7459 = vmatprep.subr.mxu0 0.0
    %7460 = vmatpush1.msra.mxu0 0.0
    %7461 = vmatprep.subr.mxu0 0.0
    %7462 = vmatpush1.msra.mxu0 0.0
    %7463 = vmatprep.subr.mxu0 0.0
    %7464 = vmatpush1.msra.mxu0 0.0
    %7465 = vmatprep.subr.mxu0 0.0
    %7466 = vmatpush1.msra.mxu0 0.0
    %7467 = vmatprep.subr.mxu0 0.0
    %7468 = vmatpush1.msra.mxu0 0.0
    %7469 = vmatprep.mubr.f32.mxu0 0.0
    %7470 = vmatmul.mubr.f32.gmra.mrb[0].mxu0 %v7403
    %v7471 = vpop.f32.mrb[0].mxu0
    %v7472 = vadd.f32 0.0, %v7471
    %v7473 = vpop.f32.mrb[0].mxu0
    %7474 = vdwg.mxu0
    %v7477 = vrot.slane %v7363, 7
    %v7478 = vsel %vm7402, %v7477, %v7362
    %7480 = vmatprep.subr.mxu0 0.0
    %7481 = vmatpush1.msra.mxu0 %v7364
    %7482 = vmatprep.subr.mxu0 0.0
    %7483 = vmatpush1.msra.mxu0 %v7365
    %7484 = vmatprep.subr.mxu0 0.0
    %7485 = vmatpush1.msra.mxu0 %v7366
    %7486 = vmatprep.subr.mxu0 0.0
    %7487 = vmatpush1.msra.mxu0 %v7367
    %7488 = vmatprep.subr.mxu0 0.0
    %7489 = vmatpush1.msra.mxu0 %v7368
    %7490 = vmatprep.subr.mxu0 0.0
    %7491 = vmatpush1.msra.mxu0 %v7369
    %7492 = vmatprep.subr.mxu0 0.0
    %7493 = vmatpush1.msra.mxu0 %v7370
    %7494 = vmatprep.subr.mxu0 0.0
    %7495 = vmatpush1.msra.mxu0 %v7371
    %7496 = vmatprep.subr.mxu0 0.0
    %7497 = vmatpush1.msra.mxu0 %v7372
    %7498 = vmatprep.subr.mxu0 0.0
    %7499 = vmatpush1.msra.mxu0 %v7373
    %7500 = vmatprep.subr.mxu0 0.0
    %7501 = vmatpush1.msra.mxu0 %v7374
    %7502 = vmatprep.subr.mxu0 0.0
    %7503 = vmatpush1.msra.mxu0 %v7375
    %7504 = vmatprep.subr.mxu0 0.0
    %7505 = vmatpush1.msra.mxu0 %v7376
    %7506 = vmatprep.subr.mxu0 0.0
    %7507 = vmatpush1.msra.mxu0 %v7377
    %7508 = vmatprep.subr.mxu0 0.0
    %7509 = vmatpush1.msra.mxu0 %v7378
    %7510 = vmatprep.subr.mxu0 0.0
    %7511 = vmatpush1.msra.mxu0 %v7379
    %7512 = vmatprep.subr.mxu0 0.0
    %7513 = vmatpush1.msra.mxu0 0.0
    %7514 = vmatprep.subr.mxu0 0.0
    %7515 = vmatpush1.msra.mxu0 0.0
    %7516 = vmatprep.subr.mxu0 0.0
    %7517 = vmatpush1.msra.mxu0 0.0
    %7518 = vmatprep.subr.mxu0 0.0
    %7519 = vmatpush1.msra.mxu0 0.0
    %7520 = vmatprep.subr.mxu0 0.0
    %7521 = vmatpush1.msra.mxu0 0.0
    %7522 = vmatprep.subr.mxu0 0.0
    %7523 = vmatpush1.msra.mxu0 0.0
    %7524 = vmatprep.subr.mxu0 0.0
    %7525 = vmatpush1.msra.mxu0 0.0
    %7526 = vmatprep.subr.mxu0 0.0
    %7527 = vmatpush1.msra.mxu0 0.0
    %7528 = vmatprep.subr.mxu0 0.0
    %7529 = vmatpush1.msra.mxu0 0.0
    %7530 = vmatprep.subr.mxu0 0.0
    %7531 = vmatpush1.msra.mxu0 0.0
    %7532 = vmatprep.subr.mxu0 0.0
    %7533 = vmatpush1.msra.mxu0 0.0
    %7534 = vmatprep.subr.mxu0 0.0
    %7535 = vmatpush1.msra.mxu0 0.0
    %7536 = vmatprep.subr.mxu0 0.0
    %7537 = vmatpush1.msra.mxu0 0.0
    %7538 = vmatprep.subr.mxu0 0.0
    %7539 = vmatpush1.msra.mxu0 0.0
    %7540 = vmatprep.subr.mxu0 0.0
    %7541 = vmatpush1.msra.mxu0 0.0
    %7542 = vmatprep.subr.mxu0 0.0
    %7543 = vmatpush1.msra.mxu0 0.0
    %7544 = vmatprep.mubr.f32.mxu0 0.0
    %7545 = vmatmul.mubr.f32.gmra.mrb[0].mxu0 %v7478
    %v7546 = vpop.f32.mrb[0].mxu0
    %v7547 = vadd.f32 %v7472, %v7546
    %v7548 = vpop.f32.mrb[0].mxu0
    %7549 = vdwg.mxu0
    %v7550 = vld [vmem:[#allocation7 + $0x2] sm:$0x1]
    %v7551 = vld [vmem:[#allocation7 + $0x12] sm:$0x1]
    %s7552 = scalar_lea.vmem %s5, 256
    %v7553 = vld [vmem:[%s7552] sm:$0xff]
    %v7554 = vld [vmem:[%s7552 + $0x8] sm:$0xff]
    %v7555 = vld [vmem:[%s7552 + $0x10] sm:$0xff]
    %v7556 = vld [vmem:[%s7552 + $0x18] sm:$0xff]
    %v7557 = vld [vmem:[%s7552 + $0x20] sm:$0xff]
    %v7558 = vld [vmem:[%s7552 + $0x28] sm:$0xff]
    %v7559 = vld [vmem:[%s7552 + $0x30] sm:$0xff]
    %v7560 = vld [vmem:[%s7552 + $0x38] sm:$0xff]
    %v7561 = vld [vmem:[%s7552 + $0x40] sm:$0xff]
    %v7562 = vld [vmem:[%s7552 + $0x48] sm:$0xff]
    %v7563 = vld [vmem:[%s7552 + $0x50] sm:$0xff]
    %v7564 = vld [vmem:[%s7552 + $0x58] sm:$0xff]
    %v7565 = vld [vmem:[%s7552 + $0x60] sm:$0xff]
    %v7566 = vld [vmem:[%s7552 + $0x68] sm:$0xff]
    %v7567 = vld [vmem:[%s7552 + $0x70] sm:$0xff]
    %v7568 = vld [vmem:[%s7552 + $0x78] sm:$0xff]
    %v7571 = vrot.slane %v7551, 7
    %v7572 = vsel %vm7402, %v7571, %v7550
    %7574 = vmatprep.subr.mxu0 0.0
    %7575 = vmatpush1.msra.mxu0 %v7553
    %7576 = vmatprep.subr.mxu0 0.0
    %7577 = vmatpush1.msra.mxu0 %v7554
    %7578 = vmatprep.subr.mxu0 0.0
    %7579 = vmatpush1.msra.mxu0 %v7555
    %7580 = vmatprep.subr.mxu0 0.0
    %7581 = vmatpush1.msra.mxu0 %v7556
    %7582 = vmatprep.subr.mxu0 0.0
    %7583 = vmatpush1.msra.mxu0 %v7557
    %7584 = vmatprep.subr.mxu0 0.0
    %7585 = vmatpush1.msra.mxu0 %v7558
    %7586 = vmatprep.subr.mxu0 0.0
    %7587 = vmatpush1.msra.mxu0 %v7559
    %7588 = vmatprep.subr.mxu0 0.0
    %7589 = vmatpush1.msra.mxu0 %v7560
    %7590 = vmatprep.subr.mxu0 0.0
    %7591 = vmatpush1.msra.mxu0 %v7561
    %7592 = vmatprep.subr.mxu0 0.0
    %7593 = vmatpush1.msra.mxu0 %v7562
    %7594 = vmatprep.subr.mxu0 0.0
    %7595 = vmatpush1.msra.mxu0 %v7563
    %7596 = vmatprep.subr.mxu0 0.0
    %7597 = vmatpush1.msra.mxu0 %v7564
    %7598 = vmatprep.subr.mxu0 0.0
    %7599 = vmatpush1.msra.mxu0 %v7565
    %7600 = vmatprep.subr.mxu0 0.0
    %7601 = vmatpush1.msra.mxu0 %v7566
    %7602 = vmatprep.subr.mxu0 0.0
    %7603 = vmatpush1.msra.mxu0 %v7567
    %7604 = vmatprep.subr.mxu0 0.0
    %7605 = vmatpush1.msra.mxu0 %v7568
    %7606 = vmatprep.subr.mxu0 0.0
    %7607 = vmatpush1.msra.mxu0 0.0
    %7608 = vmatprep.subr.mxu0 0.0
    %7609 = vmatpush1.msra.mxu0 0.0
    %7610 = vmatprep.subr.mxu0 0.0
    %7611 = vmatpush1.msra.mxu0 0.0
    %7612 = vmatprep.subr.mxu0 0.0
    %7613 = vmatpush1.msra.mxu0 0.0
    %7614 = vmatprep.subr.mxu0 0.0
    %7615 = vmatpush1.msra.mxu0 0.0
    %7616 = vmatprep.subr.mxu0 0.0
    %7617 = vmatpush1.msra.mxu0 0.0
    %7618 = vmatprep.subr.mxu0 0.0
    %7619 = vmatpush1.msra.mxu0 0.0
    %7620 = vmatprep.subr.mxu0 0.0
    %7621 = vmatpush1.msra.mxu0 0.0
    %7622 = vmatprep.subr.mxu0 0.0
    %7623 = vmatpush1.msra.mxu0 0.0
    %7624 = vmatprep.subr.mxu0 0.0
    %7625 = vmatpush1.msra.mxu0 0.0
    %7626 = vmatprep.subr.mxu0 0.0
    %7627 = vmatpush1.msra.mxu0 0.0
    %7628 = vmatprep.subr.mxu0 0.0
    %7629 = vmatpush1.msra.mxu0 0.0
    %7630 = vmatprep.subr.mxu0 0.0
    %7631 = vmatpush1.msra.mxu0 0.0
    %7632 = vmatprep.subr.mxu0 0.0
    %7633 = vmatpush1.msra.mxu0 0.0
    %7634 = vmatprep.subr.mxu0 0.0
    %7635 = vmatpush1.msra.mxu0 0.0
    %7636 = vmatprep.subr.mxu0 0.0
    %7637 = vmatpush1.msra.mxu0 0.0
    %7638 = vmatprep.mubr.f32.mxu0 0.0
    %7639 = vmatmul.mubr.f32.gmra.mrb[0].mxu0 %v7572
    %v7640 = vpop.f32.mrb[0].mxu0
    %v7641 = vadd.f32 0.0, %v7640
    %v7642 = vpop.f32.mrb[0].mxu0
    %7643 = vdwg.mxu0
    %v7644 = vadd.f32 %v7547, %v7641
    %v7645 = vld [vmem:[#allocation7 + $0x3] sm:$0x1]
    %v7646 = vld [vmem:[#allocation7 + $0x13] sm:$0x1]
    %s7647 = scalar_lea.vmem %s5, 384
    %v7648 = vld [vmem:[%s7647] sm:$0xff]
    %v7649 = vld [vmem:[%s7647 + $0x8] sm:$0xff]
    %v7650 = vld [vmem:[%s7647 + $0x10] sm:$0xff]
    %v7651 = vld [vmem:[%s7647 + $0x18] sm:$0xff]
    %v7652 = vld [vmem:[%s7647 + $0x20] sm:$0xff]
    %v7653 = vld [vmem:[%s7647 + $0x28] sm:$0xff]
    %v7654 = vld [vmem:[%s7647 + $0x30] sm:$0xff]
    %v7655 = vld [vmem:[%s7647 + $0x38] sm:$0xff]
    %v7656 = vld [vmem:[%s7647 + $0x40] sm:$0xff]
    %v7657 = vld [vmem:[%s7647 + $0x48] sm:$0xff]
    %v7658 = vld [vmem:[%s7647 + $0x50] sm:$0xff]
    %v7659 = vld [vmem:[%s7647 + $0x58] sm:$0xff]
    %v7660 = vld [vmem:[%s7647 + $0x60] sm:$0xff]
    %v7661 = vld [vmem:[%s7647 + $0x68] sm:$0xff]
    %v7662 = vld [vmem:[%s7647 + $0x70] sm:$0xff]
    %v7663 = vld [vmem:[%s7647 + $0x78] sm:$0xff]
    %v7666 = vrot.slane %v7646, 7
    %v7667 = vsel %vm7402, %v7666, %v7645
    %7669 = vmatprep.subr.mxu0 0.0
    %7670 = vmatpush1.msra.mxu0 %v7648
    %7671 = vmatprep.subr.mxu0 0.0
    %7672 = vmatpush1.msra.mxu0 %v7649
    %7673 = vmatprep.subr.mxu0 0.0
    %7674 = vmatpush1.msra.mxu0 %v7650
    %7675 = vmatprep.subr.mxu0 0.0
    %7676 = vmatpush1.msra.mxu0 %v7651
    %7677 = vmatprep.subr.mxu0 0.0
    %7678 = vmatpush1.msra.mxu0 %v7652
    %7679 = vmatprep.subr.mxu0 0.0
    %7680 = vmatpush1.msra.mxu0 %v7653
    %7681 = vmatprep.subr.mxu0 0.0
    %7682 = vmatpush1.msra.mxu0 %v7654
    %7683 = vmatprep.subr.mxu0 0.0
    %7684 = vmatpush1.msra.mxu0 %v7655
    %7685 = vmatprep.subr.mxu0 0.0
    %7686 = vmatpush1.msra.mxu0 %v7656
    %7687 = vmatprep.subr.mxu0 0.0
    %7688 = vmatpush1.msra.mxu0 %v7657
    %7689 = vmatprep.subr.mxu0 0.0
    %7690 = vmatpush1.msra.mxu0 %v7658
    %7691 = vmatprep.subr.mxu0 0.0
    %7692 = vmatpush1.msra.mxu0 %v7659
    %7693 = vmatprep.subr.mxu0 0.0
    %7694 = vmatpush1.msra.mxu0 %v7660
    %7695 = vmatprep.subr.mxu0 0.0
    %7696 = vmatpush1.msra.mxu0 %v7661
    %7697 = vmatprep.subr.mxu0 0.0
    %7698 = vmatpush1.msra.mxu0 %v7662
    %7699 = vmatprep.subr.mxu0 0.0
    %7700 = vmatpush1.msra.mxu0 %v7663
    %7701 = vmatprep.subr.mxu0 0.0
    %7702 = vmatpush1.msra.mxu0 0.0
    %7703 = vmatprep.subr.mxu0 0.0
    %7704 = vmatpush1.msra.mxu0 0.0
    %7705 = vmatprep.subr.mxu0 0.0
    %7706 = vmatpush1.msra.mxu0 0.0
    %7707 = vmatprep.subr.mxu0 0.0
    %7708 = vmatpush1.msra.mxu0 0.0
    %7709 = vmatprep.subr.mxu0 0.0
    %7710 = vmatpush1.msra.mxu0 0.0
    %7711 = vmatprep.subr.mxu0 0.0
    %7712 = vmatpush1.msra.mxu0 0.0
    %7713 = vmatprep.subr.mxu0 0.0
    %7714 = vmatpush1.msra.mxu0 0.0
    %7715 = vmatprep.subr.mxu0 0.0
    %7716 = vmatpush1.msra.mxu0 0.0
    %7717 = vmatprep.subr.mxu0 0.0
    %7718 = vmatpush1.msra.mxu0 0.0
    %7719 = vmatprep.subr.mxu0 0.0
    %7720 = vmatpush1.msra.mxu0 0.0
    %7721 = vmatprep.subr.mxu0 0.0
    %7722 = vmatpush1.msra.mxu0 0.0
    %7723 = vmatprep.subr.mxu0 0.0
    %7724 = vmatpush1.msra.mxu0 0.0
    %7725 = vmatprep.subr.mxu0 0.0
    %7726 = vmatpush1.msra.mxu0 0.0
    %7727 = vmatprep.subr.mxu0 0.0
    %7728 = vmatpush1.msra.mxu0 0.0
    %7729 = vmatprep.subr.mxu0 0.0
    %7730 = vmatpush1.msra.mxu0 0.0
    %7731 = vmatprep.subr.mxu0 0.0
    %7732 = vmatpush1.msra.mxu0 0.0
    %7733 = vmatprep.mubr.f32.mxu0 0.0
    %7734 = vmatmul.mubr.f32.gmra.mrb[0].mxu0 %v7667
    %v7735 = vpop.f32.mrb[0].mxu0
    %v7736 = vadd.f32 0.0, %v7735
    %v7737 = vpop.f32.mrb[0].mxu0
    %7738 = vdwg.mxu0
    %v7739 = vadd.f32 %v7644, %v7736
    %s7740 = scalar_lea.vmem [#allocation7], 4
    %v7741 = vld [vmem:[%s7740] sm:$0x1]
    %v7742 = vld [vmem:[%s7740 + $0x10] sm:$0x1]
    %s7743 = scalar_lea.vmem %s5, 512
    %v7744 = vld [vmem:[%s7743] sm:$0xff]
    %v7745 = vld [vmem:[%s7743 + $0x8] sm:$0xff]
    %v7746 = vld [vmem:[%s7743 + $0x10] sm:$0xff]
    %v7747 = vld [vmem:[%s7743 + $0x18] sm:$0xff]
    %v7748 = vld [vmem:[%s7743 + $0x20] sm:$0xff]
    %v7749 = vld [vmem:[%s7743 + $0x28] sm:$0xff]
    %v7750 = vld [vmem:[%s7743 + $0x30] sm:$0xff]
    %v7751 = vld [vmem:[%s7743 + $0x38] sm:$0xff]
    %v7752 = vld [vmem:[%s7743 + $0x40] sm:$0xff]
    %v7753 = vld [vmem:[%s7743 + $0x48] sm:$0xff]
    %v7754 = vld [vmem:[%s7743 + $0x50] sm:$0xff]
    %v7755 = vld [vmem:[%s7743 + $0x58] sm:$0xff]
    %v7756 = vld [vmem:[%s7743 + $0x60] sm:$0xff]
    %v7757 = vld [vmem:[%s7743 + $0x68] sm:$0xff]
    %v7758 = vld [vmem:[%s7743 + $0x70] sm:$0xff]
    %v7759 = vld [vmem:[%s7743 + $0x78] sm:$0xff]
    %v7762 = vrot.slane %v7742, 7
    %v7763 = vsel %vm7402, %v7762, %v7741
    %7765 = vmatprep.subr.mxu0 0.0
    %7766 = vmatpush1.msra.mxu0 %v7744
    %7767 = vmatprep.subr.mxu0 0.0
    %7768 = vmatpush1.msra.mxu0 %v7745
    %7769 = vmatprep.subr.mxu0 0.0
    %7770 = vmatpush1.msra.mxu0 %v7746
    %7771 = vmatprep.subr.mxu0 0.0
    %7772 = vmatpush1.msra.mxu0 %v7747
    %7773 = vmatprep.subr.mxu0 0.0
    %7774 = vmatpush1.msra.mxu0 %v7748
    %7775 = vmatprep.subr.mxu0 0.0
    %7776 = vmatpush1.msra.mxu0 %v7749
    %7777 = vmatprep.subr.mxu0 0.0
    %7778 = vmatpush1.msra.mxu0 %v7750
    %7779 = vmatprep.subr.mxu0 0.0
    %7780 = vmatpush1.msra.mxu0 %v7751
    %7781 = vmatprep.subr.mxu0 0.0
    %7782 = vmatpush1.msra.mxu0 %v7752
    %7783 = vmatprep.subr.mxu0 0.0
    %7784 = vmatpush1.msra.mxu0 %v7753
    %7785 = vmatprep.subr.mxu0 0.0
    %7786 = vmatpush1.msra.mxu0 %v7754
    %7787 = vmatprep.subr.mxu0 0.0
    %7788 = vmatpush1.msra.mxu0 %v7755
    %7789 = vmatprep.subr.mxu0 0.0
    %7790 = vmatpush1.msra.mxu0 %v7756
    %7791 = vmatprep.subr.mxu0 0.0
    %7792 = vmatpush1.msra.mxu0 %v7757
    %7793 = vmatprep.subr.mxu0 0.0
    %7794 = vmatpush1.msra.mxu0 %v7758
    %7795 = vmatprep.subr.mxu0 0.0
    %7796 = vmatpush1.msra.mxu0 %v7759
    %7797 = vmatprep.subr.mxu0 0.0
    %7798 = vmatpush1.msra.mxu0 0.0
    %7799 = vmatprep.subr.mxu0 0.0
    %7800 = vmatpush1.msra.mxu0 0.0
    %7801 = vmatprep.subr.mxu0 0.0
    %7802 = vmatpush1.msra.mxu0 0.0
    %7803 = vmatprep.subr.mxu0 0.0
    %7804 = vmatpush1.msra.mxu0 0.0
    %7805 = vmatprep.subr.mxu0 0.0
    %7806 = vmatpush1.msra.mxu0 0.0
    %7807 = vmatprep.subr.mxu0 0.0
    %7808 = vmatpush1.msra.mxu0 0.0
    %7809 = vmatprep.subr.mxu0 0.0
    %7810 = vmatpush1.msra.mxu0 0.0
    %7811 = vmatprep.subr.mxu0 0.0
    %7812 = vmatpush1.msra.mxu0 0.0
    %7813 = vmatprep.subr.mxu0 0.0
    %7814 = vmatpush1.msra.mxu0 0.0
    %7815 = vmatprep.subr.mxu0 0.0
    %7816 = vmatpush1.msra.mxu0 0.0
    %7817 = vmatprep.subr.mxu0 0.0
    %7818 = vmatpush1.msra.mxu0 0.0
    %7819 = vmatprep.subr.mxu0 0.0
    %7820 = vmatpush1.msra.mxu0 0.0
    %7821 = vmatprep.subr.mxu0 0.0
    %7822 = vmatpush1.msra.mxu0 0.0
    %7823 = vmatprep.subr.mxu0 0.0
    %7824 = vmatpush1.msra.mxu0 0.0
    %7825 = vmatprep.subr.mxu0 0.0
    %7826 = vmatpush1.msra.mxu0 0.0
    %7827 = vmatprep.subr.mxu0 0.0
    %7828 = vmatpush1.msra.mxu0 0.0
    %7829 = vmatprep.mubr.f32.mxu0 0.0
    %7830 = vmatmul.mubr.f32.gmra.mrb[0].mxu0 %v7763
    %v7831 = vpop.f32.mrb[0].mxu0
    %v7832 = vadd.f32 0.0, %v7831
    %v7833 = vpop.f32.mrb[0].mxu0
    %7834 = vdwg.mxu0
    %v7835 = vadd.f32 %v7739, %v7832
    %v7836 = vld [vmem:[%s7740 + $0x1] sm:$0x1]
    %v7837 = vld [vmem:[%s7740 + $0x11] sm:$0x1]
    %s7838 = scalar_lea.vmem %s5, 640
    %v7839 = vld [vmem:[%s7838] sm:$0xff]
    %v7840 = vld [vmem:[%s7838 + $0x8] sm:$0xff]
    %v7841 = vld [vmem:[%s7838 + $0x10] sm:$0xff]
    %v7842 = vld [vmem:[%s7838 + $0x18] sm:$0xff]
    %v7843 = vld [vmem:[%s7838 + $0x20] sm:$0xff]
    %v7844 = vld [vmem:[%s7838 + $0x28] sm:$0xff]
    %v7845 = vld [vmem:[%s7838 + $0x30] sm:$0xff]
    %v7846 = vld [vmem:[%s7838 + $0x38] sm:$0xff]
    %v7847 = vld [vmem:[%s7838 + $0x40] sm:$0xff]
    %v7848 = vld [vmem:[%s7838 + $0x48] sm:$0xff]
    %v7849 = vld [vmem:[%s7838 + $0x50] sm:$0xff]
    %v7850 = vld [vmem:[%s7838 + $0x58] sm:$0xff]
    %v7851 = vld [vmem:[%s7838 + $0x60] sm:$0xff]
    %v7852 = vld [vmem:[%s7838 + $0x68] sm:$0xff]
    %v7853 = vld [vmem:[%s7838 + $0x70] sm:$0xff]
    %v7854 = vld [vmem:[%s7838 + $0x78] sm:$0xff]
    %v7857 = vrot.slane %v7837, 7
    %v7858 = vsel %vm7402, %v7857, %v7836
    %7860 = vmatprep.subr.mxu0 0.0
    %7861 = vmatpush1.msra.mxu0 %v7839
    %7862 = vmatprep.subr.mxu0 0.0
    %7863 = vmatpush1.msra.mxu0 %v7840
    %7864 = vmatprep.subr.mxu0 0.0
    %7865 = vmatpush1.msra.mxu0 %v7841
    %7866 = vmatprep.subr.mxu0 0.0
    %7867 = vmatpush1.msra.mxu0 %v7842
    %7868 = vmatprep.subr.mxu0 0.0
    %7869 = vmatpush1.msra.mxu0 %v7843
    %7870 = vmatprep.subr.mxu0 0.0
    %7871 = vmatpush1.msra.mxu0 %v7844
    %7872 = vmatprep.subr.mxu0 0.0
    %7873 = vmatpush1.msra.mxu0 %v7845
    %7874 = vmatprep.subr.mxu0 0.0
    %7875 = vmatpush1.msra.mxu0 %v7846
    %7876 = vmatprep.subr.mxu0 0.0
    %7877 = vmatpush1.msra.mxu0 %v7847
    %7878 = vmatprep.subr.mxu0 0.0
    %7879 = vmatpush1.msra.mxu0 %v7848
    %7880 = vmatprep.subr.mxu0 0.0
    %7881 = vmatpush1.msra.mxu0 %v7849
    %7882 = vmatprep.subr.mxu0 0.0
    %7883 = vmatpush1.msra.mxu0 %v7850
    %7884 = vmatprep.subr.mxu0 0.0
    %7885 = vmatpush1.msra.mxu0 %v7851
    %7886 = vmatprep.subr.mxu0 0.0
    %7887 = vmatpush1.msra.mxu0 %v7852
    %7888 = vmatprep.subr.mxu0 0.0
    %7889 = vmatpush1.msra.mxu0 %v7853
    %7890 = vmatprep.subr.mxu0 0.0
    %7891 = vmatpush1.msra.mxu0 %v7854
    %7892 = vmatprep.subr.mxu0 0.0
    %7893 = vmatpush1.msra.mxu0 0.0
    %7894 = vmatprep.subr.mxu0 0.0
    %7895 = vmatpush1.msra.mxu0 0.0
    %7896 = vmatprep.subr.mxu0 0.0
    %7897 = vmatpush1.msra.mxu0 0.0
    %7898 = vmatprep.subr.mxu0 0.0
    %7899 = vmatpush1.msra.mxu0 0.0
    %7900 = vmatprep.subr.mxu0 0.0
    %7901 = vmatpush1.msra.mxu0 0.0
    %7902 = vmatprep.subr.mxu0 0.0
    %7903 = vmatpush1.msra.mxu0 0.0
    %7904 = vmatprep.subr.mxu0 0.0
    %7905 = vmatpush1.msra.mxu0 0.0
    %7906 = vmatprep.subr.mxu0 0.0
    %7907 = vmatpush1.msra.mxu0 0.0
    %7908 = vmatprep.subr.mxu0 0.0
    %7909 = vmatpush1.msra.mxu0 0.0
    %7910 = vmatprep.subr.mxu0 0.0
    %7911 = vmatpush1.msra.mxu0 0.0
    %7912 = vmatprep.subr.mxu0 0.0
    %7913 = vmatpush1.msra.mxu0 0.0
    %7914 = vmatprep.subr.mxu0 0.0
    %7915 = vmatpush1.msra.mxu0 0.0
    %7916 = vmatprep.subr.mxu0 0.0
    %7917 = vmatpush1.msra.mxu0 0.0
    %7918 = vmatprep.subr.mxu0 0.0
    %7919 = vmatpush1.msra.mxu0 0.0
    %7920 = vmatprep.subr.mxu0 0.0
    %7921 = vmatpush1.msra.mxu0 0.0
    %7922 = vmatprep.subr.mxu0 0.0
    %7923 = vmatpush1.msra.mxu0 0.0
    %7924 = vmatprep.mubr.f32.mxu0 0.0
    %7925 = vmatmul.mubr.f32.gmra.mrb[0].mxu0 %v7858
    %v7926 = vpop.f32.mrb[0].mxu0
    %v7927 = vadd.f32 0.0, %v7926
    %v7928 = vpop.f32.mrb[0].mxu0
    %7929 = vdwg.mxu0
    %v7930 = vadd.f32 %v7835, %v7927
    %v7931 = vld [vmem:[%s7740 + $0x2] sm:$0x1]
    %v7932 = vld [vmem:[%s7740 + $0x12] sm:$0x1]
    %s7933 = scalar_lea.vmem %s5, 768
    %v7934 = vld [vmem:[%s7933] sm:$0xff]
    %v7935 = vld [vmem:[%s7933 + $0x8] sm:$0xff]
    %v7936 = vld [vmem:[%s7933 + $0x10] sm:$0xff]
    %v7937 = vld [vmem:[%s7933 + $0x18] sm:$0xff]
    %v7938 = vld [vmem:[%s7933 + $0x20] sm:$0xff]
    %v7939 = vld [vmem:[%s7933 + $0x28] sm:$0xff]
    %v7940 = vld [vmem:[%s7933 + $0x30] sm:$0xff]
    %v7941 = vld [vmem:[%s7933 + $0x38] sm:$0xff]
    %v7942 = vld [vmem:[%s7933 + $0x40] sm:$0xff]
    %v7943 = vld [vmem:[%s7933 + $0x48] sm:$0xff]
    %v7944 = vld [vmem:[%s7933 + $0x50] sm:$0xff]
    %v7945 = vld [vmem:[%s7933 + $0x58] sm:$0xff]
    %v7946 = vld [vmem:[%s7933 + $0x60] sm:$0xff]
    %v7947 = vld [vmem:[%s7933 + $0x68] sm:$0xff]
    %v7948 = vld [vmem:[%s7933 + $0x70] sm:$0xff]
    %v7949 = vld [vmem:[%s7933 + $0x78] sm:$0xff]
    %v7952 = vrot.slane %v7932, 7
    %v7953 = vsel %vm7402, %v7952, %v7931
    %7955 = vmatprep.subr.mxu0 0.0
    %7956 = vmatpush1.msra.mxu0 %v7934
    %7957 = vmatprep.subr.mxu0 0.0
    %7958 = vmatpush1.msra.mxu0 %v7935
    %7959 = vmatprep.subr.mxu0 0.0
    %7960 = vmatpush1.msra.mxu0 %v7936
    %7961 = vmatprep.subr.mxu0 0.0
    %7962 = vmatpush1.msra.mxu0 %v7937
    %7963 = vmatprep.subr.mxu0 0.0
    %7964 = vmatpush1.msra.mxu0 %v7938
    %7965 = vmatprep.subr.mxu0 0.0
    %7966 = vmatpush1.msra.mxu0 %v7939
    %7967 = vmatprep.subr.mxu0 0.0
    %7968 = vmatpush1.msra.mxu0 %v7940
    %7969 = vmatprep.subr.mxu0 0.0
    %7970 = vmatpush1.msra.mxu0 %v7941
    %7971 = vmatprep.subr.mxu0 0.0
    %7972 = vmatpush1.msra.mxu0 %v7942
    %7973 = vmatprep.subr.mxu0 0.0
    %7974 = vmatpush1.msra.mxu0 %v7943
    %7975 = vmatprep.subr.mxu0 0.0
    %7976 = vmatpush1.msra.mxu0 %v7944
    %7977 = vmatprep.subr.mxu0 0.0
    %7978 = vmatpush1.msra.mxu0 %v7945
    %7979 = vmatprep.subr.mxu0 0.0
    %7980 = vmatpush1.msra.mxu0 %v7946
    %7981 = vmatprep.subr.mxu0 0.0
    %7982 = vmatpush1.msra.mxu0 %v7947
    %7983 = vmatprep.subr.mxu0 0.0
    %7984 = vmatpush1.msra.mxu0 %v7948
    %7985 = vmatprep.subr.mxu0 0.0
    %7986 = vmatpush1.msra.mxu0 %v7949
    %7987 = vmatprep.subr.mxu0 0.0
    %7988 = vmatpush1.msra.mxu0 0.0
    %7989 = vmatprep.subr.mxu0 0.0
    %7990 = vmatpush1.msra.mxu0 0.0
    %7991 = vmatprep.subr.mxu0 0.0
    %7992 = vmatpush1.msra.mxu0 0.0
    %7993 = vmatprep.subr.mxu0 0.0
    %7994 = vmatpush1.msra.mxu0 0.0
    %7995 = vmatprep.subr.mxu0 0.0
    %7996 = vmatpush1.msra.mxu0 0.0
    %7997 = vmatprep.subr.mxu0 0.0
    %7998 = vmatpush1.msra.mxu0 0.0
    %7999 = vmatprep.subr.mxu0 0.0
    %8000 = vmatpush1.msra.mxu0 0.0
    %8001 = vmatprep.subr.mxu0 0.0
    %8002 = vmatpush1.msra.mxu0 0.0
    %8003 = vmatprep.subr.mxu0 0.0
    %8004 = vmatpush1.msra.mxu0 0.0
    %8005 = vmatprep.subr.mxu0 0.0
    %8006 = vmatpush1.msra.mxu0 0.0
    %8007 = vmatprep.subr.mxu0 0.0
    %8008 = vmatpush1.msra.mxu0 0.0
    %8009 = vmatprep.subr.mxu0 0.0
    %8010 = vmatpush1.msra.mxu0 0.0
    %8011 = vmatprep.subr.mxu0 0.0
    %8012 = vmatpush1.msra.mxu0 0.0
    %8013 = vmatprep.subr.mxu0 0.0
    %8014 = vmatpush1.msra.mxu0 0.0
    %8015 = vmatprep.subr.mxu0 0.0
    %8016 = vmatpush1.msra.mxu0 0.0
    %8017 = vmatprep.subr.mxu0 0.0
    %8018 = vmatpush1.msra.mxu0 0.0
    %8019 = vmatprep.mubr.f32.mxu0 0.0
    %8020 = vmatmul.mubr.f32.gmra.mrb[0].mxu0 %v7953
    %v8021 = vpop.f32.mrb[0].mxu0
    %v8022 = vadd.f32 0.0, %v8021
    %v8023 = vpop.f32.mrb[0].mxu0
    %8024 = vdwg.mxu0
    %v8025 = vadd.f32 %v7930, %v8022
    %v8026 = vld [vmem:[%s7740 + $0x3] sm:$0x1]
    %v8027 = vld [vmem:[%s7740 + $0x13] sm:$0x1]
    %s8028 = scalar_lea.vmem %s5, 896
    %v8029 = vld [vmem:[%s8028] sm:$0xff]
    %v8030 = vld [vmem:[%s8028 + $0x8] sm:$0xff]
    %v8031 = vld [vmem:[%s8028 + $0x10] sm:$0xff]
    %v8032 = vld [vmem:[%s8028 + $0x18] sm:$0xff]
    %v8033 = vld [vmem:[%s8028 + $0x20] sm:$0xff]
    %v8034 = vld [vmem:[%s8028 + $0x28] sm:$0xff]
    %v8035 = vld [vmem:[%s8028 + $0x30] sm:$0xff]
    %v8036 = vld [vmem:[%s8028 + $0x38] sm:$0xff]
    %v8037 = vld [vmem:[%s8028 + $0x40] sm:$0xff]
    %v8038 = vld [vmem:[%s8028 + $0x48] sm:$0xff]
    %v8039 = vld [vmem:[%s8028 + $0x50] sm:$0xff]
    %v8040 = vld [vmem:[%s8028 + $0x58] sm:$0xff]
    %v8041 = vld [vmem:[%s8028 + $0x60] sm:$0xff]
    %v8042 = vld [vmem:[%s8028 + $0x68] sm:$0xff]
    %v8043 = vld [vmem:[%s8028 + $0x70] sm:$0xff]
    %v8044 = vld [vmem:[%s8028 + $0x78] sm:$0xff]
    %v8047 = vrot.slane %v8027, 7
    %v8048 = vsel %vm7402, %v8047, %v8026
    %8050 = vmatprep.subr.mxu0 0.0
    %8051 = vmatpush1.msra.mxu0 %v8029
    %8052 = vmatprep.subr.mxu0 0.0
    %8053 = vmatpush1.msra.mxu0 %v8030
    %8054 = vmatprep.subr.mxu0 0.0
    %8055 = vmatpush1.msra.mxu0 %v8031
    %8056 = vmatprep.subr.mxu0 0.0
    %8057 = vmatpush1.msra.mxu0 %v8032
    %8058 = vmatprep.subr.mxu0 0.0
    %8059 = vmatpush1.msra.mxu0 %v8033
    %8060 = vmatprep.subr.mxu0 0.0
    %8061 = vmatpush1.msra.mxu0 %v8034
    %8062 = vmatprep.subr.mxu0 0.0
    %8063 = vmatpush1.msra.mxu0 %v8035
    %8064 = vmatprep.subr.mxu0 0.0
    %8065 = vmatpush1.msra.mxu0 %v8036
    %8066 = vmatprep.subr.mxu0 0.0
    %8067 = vmatpush1.msra.mxu0 %v8037
    %8068 = vmatprep.subr.mxu0 0.0
    %8069 = vmatpush1.msra.mxu0 %v8038
    %8070 = vmatprep.subr.mxu0 0.0
    %8071 = vmatpush1.msra.mxu0 %v8039
    %8072 = vmatprep.subr.mxu0 0.0
    %8073 = vmatpush1.msra.mxu0 %v8040
    %8074 = vmatprep.subr.mxu0 0.0
    %8075 = vmatpush1.msra.mxu0 %v8041
    %8076 = vmatprep.subr.mxu0 0.0
    %8077 = vmatpush1.msra.mxu0 %v8042
    %8078 = vmatprep.subr.mxu0 0.0
    %8079 = vmatpush1.msra.mxu0 %v8043
    %8080 = vmatprep.subr.mxu0 0.0
    %8081 = vmatpush1.msra.mxu0 %v8044
    %8082 = vmatprep.subr.mxu0 0.0
    %8083 = vmatpush1.msra.mxu0 0.0
    %8084 = vmatprep.subr.mxu0 0.0
    %8085 = vmatpush1.msra.mxu0 0.0
    %8086 = vmatprep.subr.mxu0 0.0
    %8087 = vmatpush1.msra.mxu0 0.0
    %8088 = vmatprep.subr.mxu0 0.0
    %8089 = vmatpush1.msra.mxu0 0.0
    %8090 = vmatprep.subr.mxu0 0.0
    %8091 = vmatpush1.msra.mxu0 0.0
    %8092 = vmatprep.subr.mxu0 0.0
    %8093 = vmatpush1.msra.mxu0 0.0
    %8094 = vmatprep.subr.mxu0 0.0
    %8095 = vmatpush1.msra.mxu0 0.0
    %8096 = vmatprep.subr.mxu0 0.0
    %8097 = vmatpush1.msra.mxu0 0.0
    %8098 = vmatprep.subr.mxu0 0.0
    %8099 = vmatpush1.msra.mxu0 0.0
    %8100 = vmatprep.subr.mxu0 0.0
    %8101 = vmatpush1.msra.mxu0 0.0
    %8102 = vmatprep.subr.mxu0 0.0
    %8103 = vmatpush1.msra.mxu0 0.0
    %8104 = vmatprep.subr.mxu0 0.0
    %8105 = vmatpush1.msra.mxu0 0.0
    %8106 = vmatprep.subr.mxu0 0.0
    %8107 = vmatpush1.msra.mxu0 0.0
    %8108 = vmatprep.subr.mxu0 0.0
    %8109 = vmatpush1.msra.mxu0 0.0
    %8110 = vmatprep.subr.mxu0 0.0
    %8111 = vmatpush1.msra.mxu0 0.0
    %8112 = vmatprep.subr.mxu0 0.0
    %8113 = vmatpush1.msra.mxu0 0.0
    %8114 = vmatprep.mubr.f32.mxu0 0.0
    %8115 = vmatmul.mubr.f32.gmra.mrb[0].mxu0 %v8048
    %v8116 = vpop.f32.mrb[0].mxu0
    %v8117 = vadd.f32 0.0, %v8116
    %v8118 = vpop.f32.mrb[0].mxu0
    %8119 = vdwg.mxu0
    %v8120 = vadd.f32 %v8025, %v8117
    %s8121 = scalar_lea.vmem [#allocation7], 8
    %v8122 = vld [vmem:[%s8121] sm:$0x1]
    %v8123 = vld [vmem:[%s8121 + $0x10] sm:$0x1]
    %s8124 = scalar_lea.vmem %s5, 1024
    %v8125 = vld [vmem:[%s8124] sm:$0xff]
    %v8126 = vld [vmem:[%s8124 + $0x8] sm:$0xff]
    %v8127 = vld [vmem:[%s8124 + $0x10] sm:$0xff]
    %v8128 = vld [vmem:[%s8124 + $0x18] sm:$0xff]
    %v8129 = vld [vmem:[%s8124 + $0x20] sm:$0xff]
    %v8130 = vld [vmem:[%s8124 + $0x28] sm:$0xff]
    %v8131 = vld [vmem:[%s8124 + $0x30] sm:$0xff]
    %v8132 = vld [vmem:[%s8124 + $0x38] sm:$0xff]
    %v8133 = vld [vmem:[%s8124 + $0x40] sm:$0xff]
    %v8134 = vld [vmem:[%s8124 + $0x48] sm:$0xff]
    %v8135 = vld [vmem:[%s8124 + $0x50] sm:$0xff]
    %v8136 = vld [vmem:[%s8124 + $0x58] sm:$0xff]
    %v8137 = vld [vmem:[%s8124 + $0x60] sm:$0xff]
    %v8138 = vld [vmem:[%s8124 + $0x68] sm:$0xff]
    %v8139 = vld [vmem:[%s8124 + $0x70] sm:$0xff]
    %v8140 = vld [vmem:[%s8124 + $0x78] sm:$0xff]
    %v8143 = vrot.slane %v8123, 7
    %v8144 = vsel %vm7402, %v8143, %v8122
    %8146 = vmatprep.subr.mxu0 0.0
    %8147 = vmatpush1.msra.mxu0 %v8125
    %8148 = vmatprep.subr.mxu0 0.0
    %8149 = vmatpush1.msra.mxu0 %v8126
    %8150 = vmatprep.subr.mxu0 0.0
    %8151 = vmatpush1.msra.mxu0 %v8127
    %8152 = vmatprep.subr.mxu0 0.0
    %8153 = vmatpush1.msra.mxu0 %v8128
    %8154 = vmatprep.subr.mxu0 0.0
    %8155 = vmatpush1.msra.mxu0 %v8129
    %8156 = vmatprep.subr.mxu0 0.0
    %8157 = vmatpush1.msra.mxu0 %v8130
    %8158 = vmatprep.subr.mxu0 0.0
    %8159 = vmatpush1.msra.mxu0 %v8131
    %8160 = vmatprep.subr.mxu0 0.0
    %8161 = vmatpush1.msra.mxu0 %v8132
    %8162 = vmatprep.subr.mxu0 0.0
    %8163 = vmatpush1.msra.mxu0 %v8133
    %8164 = vmatprep.subr.mxu0 0.0
    %8165 = vmatpush1.msra.mxu0 %v8134
    %8166 = vmatprep.subr.mxu0 0.0
    %8167 = vmatpush1.msra.mxu0 %v8135
    %8168 = vmatprep.subr.mxu0 0.0
    %8169 = vmatpush1.msra.mxu0 %v8136
    %8170 = vmatprep.subr.mxu0 0.0
    %8171 = vmatpush1.msra.mxu0 %v8137
    %8172 = vmatprep.subr.mxu0 0.0
    %8173 = vmatpush1.msra.mxu0 %v8138
    %8174 = vmatprep.subr.mxu0 0.0
    %8175 = vmatpush1.msra.mxu0 %v8139
    %8176 = vmatprep.subr.mxu0 0.0
    %8177 = vmatpush1.msra.mxu0 %v8140
    %8178 = vmatprep.subr.mxu0 0.0
    %8179 = vmatpush1.msra.mxu0 0.0
    %8180 = vmatprep.subr.mxu0 0.0
    %8181 = vmatpush1.msra.mxu0 0.0
    %8182 = vmatprep.subr.mxu0 0.0
    %8183 = vmatpush1.msra.mxu0 0.0
    %8184 = vmatprep.subr.mxu0 0.0
    %8185 = vmatpush1.msra.mxu0 0.0
    %8186 = vmatprep.subr.mxu0 0.0
    %8187 = vmatpush1.msra.mxu0 0.0
    %8188 = vmatprep.subr.mxu0 0.0
    %8189 = vmatpush1.msra.mxu0 0.0
    %8190 = vmatprep.subr.mxu0 0.0
    %8191 = vmatpush1.msra.mxu0 0.0
    %8192 = vmatprep.subr.mxu0 0.0
    %8193 = vmatpush1.msra.mxu0 0.0
    %8194 = vmatprep.subr.mxu0 0.0
    %8195 = vmatpush1.msra.mxu0 0.0
    %8196 = vmatprep.subr.mxu0 0.0
    %8197 = vmatpush1.msra.mxu0 0.0
    %8198 = vmatprep.subr.mxu0 0.0
    %8199 = vmatpush1.msra.mxu0 0.0
    %8200 = vmatprep.subr.mxu0 0.0
    %8201 = vmatpush1.msra.mxu0 0.0
    %8202 = vmatprep.subr.mxu0 0.0
    %8203 = vmatpush1.msra.mxu0 0.0
    %8204 = vmatprep.subr.mxu0 0.0
    %8205 = vmatpush1.msra.mxu0 0.0
    %8206 = vmatprep.subr.mxu0 0.0
    %8207 = vmatpush1.msra.mxu0 0.0
    %8208 = vmatprep.subr.mxu0 0.0
    %8209 = vmatpush1.msra.mxu0 0.0
    %8210 = vmatprep.mubr.f32.mxu0 0.0
    %8211 = vmatmul.mubr.f32.gmra.mrb[0].mxu0 %v8144
    %v8212 = vpop.f32.mrb[0].mxu0
    %v8213 = vadd.f32 0.0, %v8212
    %v8214 = vpop.f32.mrb[0].mxu0
    %8215 = vdwg.mxu0
    %v8216 = vadd.f32 %v8120, %v8213
    %v8217 = vld [vmem:[%s8121 + $0x1] sm:$0x1]
    %v8218 = vld [vmem:[%s8121 + $0x11] sm:$0x1]
    %s8219 = scalar_lea.vmem %s5, 1152
    %v8220 = vld [vmem:[%s8219] sm:$0xff]
    %v8221 = vld [vmem:[%s8219 + $0x8] sm:$0xff]
    %v8222 = vld [vmem:[%s8219 + $0x10] sm:$0xff]
    %v8223 = vld [vmem:[%s8219 + $0x18] sm:$0xff]
    %v8224 = vld [vmem:[%s8219 + $0x20] sm:$0xff]
    %v8225 = vld [vmem:[%s8219 + $0x28] sm:$0xff]
    %v8226 = vld [vmem:[%s8219 + $0x30] sm:$0xff]
    %v8227 = vld [vmem:[%s8219 + $0x38] sm:$0xff]
    %v8228 = vld [vmem:[%s8219 + $0x40] sm:$0xff]
    %v8229 = vld [vmem:[%s8219 + $0x48] sm:$0xff]
    %v8230 = vld [vmem:[%s8219 + $0x50] sm:$0xff]
    %v8231 = vld [vmem:[%s8219 + $0x58] sm:$0xff]
    %v8232 = vld [vmem:[%s8219 + $0x60] sm:$0xff]
    %v8233 = vld [vmem:[%s8219 + $0x68] sm:$0xff]
    %v8234 = vld [vmem:[%s8219 + $0x70] sm:$0xff]
    %v8235 = vld [vmem:[%s8219 + $0x78] sm:$0xff]
    %v8238 = vrot.slane %v8218, 7
    %v8239 = vsel %vm7402, %v8238, %v8217
    %8241 = vmatprep.subr.mxu0 0.0
    %8242 = vmatpush1.msra.mxu0 %v8220
    %8243 = vmatprep.subr.mxu0 0.0
    %8244 = vmatpush1.msra.mxu0 %v8221
    %8245 = vmatprep.subr.mxu0 0.0
    %8246 = vmatpush1.msra.mxu0 %v8222
    %8247 = vmatprep.subr.mxu0 0.0
    %8248 = vmatpush1.msra.mxu0 %v8223
    %8249 = vmatprep.subr.mxu0 0.0
    %8250 = vmatpush1.msra.mxu0 %v8224
    %8251 = vmatprep.subr.mxu0 0.0
    %8252 = vmatpush1.msra.mxu0 %v8225
    %8253 = vmatprep.subr.mxu0 0.0
    %8254 = vmatpush1.msra.mxu0 %v8226
    %8255 = vmatprep.subr.mxu0 0.0
    %8256 = vmatpush1.msra.mxu0 %v8227
    %8257 = vmatprep.subr.mxu0 0.0
    %8258 = vmatpush1.msra.mxu0 %v8228
    %8259 = vmatprep.subr.mxu0 0.0
    %8260 = vmatpush1.msra.mxu0 %v8229
    %8261 = vmatprep.subr.mxu0 0.0
    %8262 = vmatpush1.msra.mxu0 %v8230
    %8263 = vmatprep.subr.mxu0 0.0
    %8264 = vmatpush1.msra.mxu0 %v8231
    %8265 = vmatprep.subr.mxu0 0.0
    %8266 = vmatpush1.msra.mxu0 %v8232
    %8267 = vmatprep.subr.mxu0 0.0
    %8268 = vmatpush1.msra.mxu0 %v8233
    %8269 = vmatprep.subr.mxu0 0.0
    %8270 = vmatpush1.msra.mxu0 %v8234
    %8271 = vmatprep.subr.mxu0 0.0
    %8272 = vmatpush1.msra.mxu0 %v8235
    %8273 = vmatprep.subr.mxu0 0.0
    %8274 = vmatpush1.msra.mxu0 0.0
    %8275 = vmatprep.subr.mxu0 0.0
    %8276 = vmatpush1.msra.mxu0 0.0
    %8277 = vmatprep.subr.mxu0 0.0
    %8278 = vmatpush1.msra.mxu0 0.0
    %8279 = vmatprep.subr.mxu0 0.0
    %8280 = vmatpush1.msra.mxu0 0.0
    %8281 = vmatprep.subr.mxu0 0.0
    %8282 = vmatpush1.msra.mxu0 0.0
    %8283 = vmatprep.subr.mxu0 0.0
    %8284 = vmatpush1.msra.mxu0 0.0
    %8285 = vmatprep.subr.mxu0 0.0
    %8286 = vmatpush1.msra.mxu0 0.0
    %8287 = vmatprep.subr.mxu0 0.0
    %8288 = vmatpush1.msra.mxu0 0.0
    %8289 = vmatprep.subr.mxu0 0.0
    %8290 = vmatpush1.msra.mxu0 0.0
    %8291 = vmatprep.subr.mxu0 0.0
    %8292 = vmatpush1.msra.mxu0 0.0
    %8293 = vmatprep.subr.mxu0 0.0
    %8294 = vmatpush1.msra.mxu0 0.0
    %8295 = vmatprep.subr.mxu0 0.0
    %8296 = vmatpush1.msra.mxu0 0.0
    %8297 = vmatprep.subr.mxu0 0.0
    %8298 = vmatpush1.msra.mxu0 0.0
    %8299 = vmatprep.subr.mxu0 0.0
    %8300 = vmatpush1.msra.mxu0 0.0
    %8301 = vmatprep.subr.mxu0 0.0
    %8302 = vmatpush1.msra.mxu0 0.0
    %8303 = vmatprep.subr.mxu0 0.0
    %8304 = vmatpush1.msra.mxu0 0.0
    %8305 = vmatprep.mubr.f32.mxu0 0.0
    %8306 = vmatmul.mubr.f32.gmra.mrb[0].mxu0 %v8239
    %v8307 = vpop.f32.mrb[0].mxu0
    %v8308 = vadd.f32 0.0, %v8307
    %v8309 = vpop.f32.mrb[0].mxu0
    %8310 = vdwg.mxu0
    %v8311 = vadd.f32 %v8216, %v8308
    %v8312 = vld [vmem:[%s8121 + $0x2] sm:$0x1]
    %v8313 = vld [vmem:[%s8121 + $0x12] sm:$0x1]
    %s8314 = scalar_lea.vmem %s5, 1280
    %v8315 = vld [vmem:[%s8314] sm:$0xff]
    %v8316 = vld [vmem:[%s8314 + $0x8] sm:$0xff]
    %v8317 = vld [vmem:[%s8314 + $0x10] sm:$0xff]
    %v8318 = vld [vmem:[%s8314 + $0x18] sm:$0xff]
    %v8319 = vld [vmem:[%s8314 + $0x20] sm:$0xff]
    %v8320 = vld [vmem:[%s8314 + $0x28] sm:$0xff]
    %v8321 = vld [vmem:[%s8314 + $0x30] sm:$0xff]
    %v8322 = vld [vmem:[%s8314 + $0x38] sm:$0xff]
    %v8323 = vld [vmem:[%s8314 + $0x40] sm:$0xff]
    %v8324 = vld [vmem:[%s8314 + $0x48] sm:$0xff]
    %v8325 = vld [vmem:[%s8314 + $0x50] sm:$0xff]
    %v8326 = vld [vmem:[%s8314 + $0x58] sm:$0xff]
    %v8327 = vld [vmem:[%s8314 + $0x60] sm:$0xff]
    %v8328 = vld [vmem:[%s8314 + $0x68] sm:$0xff]
    %v8329 = vld [vmem:[%s8314 + $0x70] sm:$0xff]
    %v8330 = vld [vmem:[%s8314 + $0x78] sm:$0xff]
    %v8333 = vrot.slane %v8313, 7
    %v8334 = vsel %vm7402, %v8333, %v8312
    %8336 = vmatprep.subr.mxu0 0.0
    %8337 = vmatpush1.msra.mxu0 %v8315
    %8338 = vmatprep.subr.mxu0 0.0
    %8339 = vmatpush1.msra.mxu0 %v8316
    %8340 = vmatprep.subr.mxu0 0.0
    %8341 = vmatpush1.msra.mxu0 %v8317
    %8342 = vmatprep.subr.mxu0 0.0
    %8343 = vmatpush1.msra.mxu0 %v8318
    %8344 = vmatprep.subr.mxu0 0.0
    %8345 = vmatpush1.msra.mxu0 %v8319
    %8346 = vmatprep.subr.mxu0 0.0
    %8347 = vmatpush1.msra.mxu0 %v8320
    %8348 = vmatprep.subr.mxu0 0.0
    %8349 = vmatpush1.msra.mxu0 %v8321
    %8350 = vmatprep.subr.mxu0 0.0
    %8351 = vmatpush1.msra.mxu0 %v8322
    %8352 = vmatprep.subr.mxu0 0.0
    %8353 = vmatpush1.msra.mxu0 %v8323
    %8354 = vmatprep.subr.mxu0 0.0
    %8355 = vmatpush1.msra.mxu0 %v8324
    %8356 = vmatprep.subr.mxu0 0.0
    %8357 = vmatpush1.msra.mxu0 %v8325
    %8358 = vmatprep.subr.mxu0 0.0
    %8359 = vmatpush1.msra.mxu0 %v8326
    %8360 = vmatprep.subr.mxu0 0.0
    %8361 = vmatpush1.msra.mxu0 %v8327
    %8362 = vmatprep.subr.mxu0 0.0
    %8363 = vmatpush1.msra.mxu0 %v8328
    %8364 = vmatprep.subr.mxu0 0.0
    %8365 = vmatpush1.msra.mxu0 %v8329
    %8366 = vmatprep.subr.mxu0 0.0
    %8367 = vmatpush1.msra.mxu0 %v8330
    %8368 = vmatprep.subr.mxu0 0.0
    %8369 = vmatpush1.msra.mxu0 0.0
    %8370 = vmatprep.subr.mxu0 0.0
    %8371 = vmatpush1.msra.mxu0 0.0
    %8372 = vmatprep.subr.mxu0 0.0
    %8373 = vmatpush1.msra.mxu0 0.0
    %8374 = vmatprep.subr.mxu0 0.0
    %8375 = vmatpush1.msra.mxu0 0.0
    %8376 = vmatprep.subr.mxu0 0.0
    %8377 = vmatpush1.msra.mxu0 0.0
    %8378 = vmatprep.subr.mxu0 0.0
    %8379 = vmatpush1.msra.mxu0 0.0
    %8380 = vmatprep.subr.mxu0 0.0
    %8381 = vmatpush1.msra.mxu0 0.0
    %8382 = vmatprep.subr.mxu0 0.0
    %8383 = vmatpush1.msra.mxu0 0.0
    %8384 = vmatprep.subr.mxu0 0.0
    %8385 = vmatpush1.msra.mxu0 0.0
    %8386 = vmatprep.subr.mxu0 0.0
    %8387 = vmatpush1.msra.mxu0 0.0
    %8388 = vmatprep.subr.mxu0 0.0
    %8389 = vmatpush1.msra.mxu0 0.0
    %8390 = vmatprep.subr.mxu0 0.0
    %8391 = vmatpush1.msra.mxu0 0.0
    %8392 = vmatprep.subr.mxu0 0.0
    %8393 = vmatpush1.msra.mxu0 0.0
    %8394 = vmatprep.subr.mxu0 0.0
    %8395 = vmatpush1.msra.mxu0 0.0
    %8396 = vmatprep.subr.mxu0 0.0
    %8397 = vmatpush1.msra.mxu0 0.0
    %8398 = vmatprep.subr.mxu0 0.0
    %8399 = vmatpush1.msra.mxu0 0.0
    %8400 = vmatprep.mubr.f32.mxu0 0.0
    %8401 = vmatmul.mubr.f32.gmra.mrb[0].mxu0 %v8334
    %v8402 = vpop.f32.mrb[0].mxu0
    %v8403 = vadd.f32 0.0, %v8402
    %v8404 = vpop.f32.mrb[0].mxu0
    %8405 = vdwg.mxu0
    %v8406 = vadd.f32 %v8311, %v8403
    %v8407 = vld [vmem:[%s8121 + $0x3] sm:$0x1]
    %v8408 = vld [vmem:[%s8121 + $0x13] sm:$0x1]
    %s8409 = scalar_lea.vmem %s5, 1408
    %v8410 = vld [vmem:[%s8409] sm:$0xff]
    %v8411 = vld [vmem:[%s8409 + $0x8] sm:$0xff]
    %v8412 = vld [vmem:[%s8409 + $0x10] sm:$0xff]
    %v8413 = vld [vmem:[%s8409 + $0x18] sm:$0xff]
    %v8414 = vld [vmem:[%s8409 + $0x20] sm:$0xff]
    %v8415 = vld [vmem:[%s8409 + $0x28] sm:$0xff]
    %v8416 = vld [vmem:[%s8409 + $0x30] sm:$0xff]
    %v8417 = vld [vmem:[%s8409 + $0x38] sm:$0xff]
    %v8418 = vld [vmem:[%s8409 + $0x40] sm:$0xff]
    %v8419 = vld [vmem:[%s8409 + $0x48] sm:$0xff]
    %v8420 = vld [vmem:[%s8409 + $0x50] sm:$0xff]
    %v8421 = vld [vmem:[%s8409 + $0x58] sm:$0xff]
    %v8422 = vld [vmem:[%s8409 + $0x60] sm:$0xff]
    %v8423 = vld [vmem:[%s8409 + $0x68] sm:$0xff]
    %v8424 = vld [vmem:[%s8409 + $0x70] sm:$0xff]
    %v8425 = vld [vmem:[%s8409 + $0x78] sm:$0xff]
    %v8428 = vrot.slane %v8408, 7
    %v8429 = vsel %vm7402, %v8428, %v8407
    %8431 = vmatprep.subr.mxu0 0.0
    %8432 = vmatpush1.msra.mxu0 %v8410
    %8433 = vmatprep.subr.mxu0 0.0
    %8434 = vmatpush1.msra.mxu0 %v8411
    %8435 = vmatprep.subr.mxu0 0.0
    %8436 = vmatpush1.msra.mxu0 %v8412
    %8437 = vmatprep.subr.mxu0 0.0
    %8438 = vmatpush1.msra.mxu0 %v8413
    %8439 = vmatprep.subr.mxu0 0.0
    %8440 = vmatpush1.msra.mxu0 %v8414
    %8441 = vmatprep.subr.mxu0 0.0
    %8442 = vmatpush1.msra.mxu0 %v8415
    %8443 = vmatprep.subr.mxu0 0.0
    %8444 = vmatpush1.msra.mxu0 %v8416
    %8445 = vmatprep.subr.mxu0 0.0
    %8446 = vmatpush1.msra.mxu0 %v8417
    %8447 = vmatprep.subr.mxu0 0.0
    %8448 = vmatpush1.msra.mxu0 %v8418
    %8449 = vmatprep.subr.mxu0 0.0
    %8450 = vmatpush1.msra.mxu0 %v8419
    %8451 = vmatprep.subr.mxu0 0.0
    %8452 = vmatpush1.msra.mxu0 %v8420
    %8453 = vmatprep.subr.mxu0 0.0
    %8454 = vmatpush1.msra.mxu0 %v8421
    %8455 = vmatprep.subr.mxu0 0.0
    %8456 = vmatpush1.msra.mxu0 %v8422
    %8457 = vmatprep.subr.mxu0 0.0
    %8458 = vmatpush1.msra.mxu0 %v8423
    %8459 = vmatprep.subr.mxu0 0.0
    %8460 = vmatpush1.msra.mxu0 %v8424
    %8461 = vmatprep.subr.mxu0 0.0
    %8462 = vmatpush1.msra.mxu0 %v8425
    %8463 = vmatprep.subr.mxu0 0.0
    %8464 = vmatpush1.msra.mxu0 0.0
    %8465 = vmatprep.subr.mxu0 0.0
    %8466 = vmatpush1.msra.mxu0 0.0
    %8467 = vmatprep.subr.mxu0 0.0
    %8468 = vmatpush1.msra.mxu0 0.0
    %8469 = vmatprep.subr.mxu0 0.0
    %8470 = vmatpush1.msra.mxu0 0.0
    %8471 = vmatprep.subr.mxu0 0.0
    %8472 = vmatpush1.msra.mxu0 0.0
    %8473 = vmatprep.subr.mxu0 0.0
    %8474 = vmatpush1.msra.mxu0 0.0
    %8475 = vmatprep.subr.mxu0 0.0
    %8476 = vmatpush1.msra.mxu0 0.0
    %8477 = vmatprep.subr.mxu0 0.0
    %8478 = vmatpush1.msra.mxu0 0.0
    %8479 = vmatprep.subr.mxu0 0.0
    %8480 = vmatpush1.msra.mxu0 0.0
    %8481 = vmatprep.subr.mxu0 0.0
    %8482 = vmatpush1.msra.mxu0 0.0
    %8483 = vmatprep.subr.mxu0 0.0
    %8484 = vmatpush1.msra.mxu0 0.0
    %8485 = vmatprep.subr.mxu0 0.0
    %8486 = vmatpush1.msra.mxu0 0.0
    %8487 = vmatprep.subr.mxu0 0.0
    %8488 = vmatpush1.msra.mxu0 0.0
    %8489 = vmatprep.subr.mxu0 0.0
    %8490 = vmatpush1.msra.mxu0 0.0
    %8491 = vmatprep.subr.mxu0 0.0
    %8492 = vmatpush1.msra.mxu0 0.0
    %8493 = vmatprep.subr.mxu0 0.0
    %8494 = vmatpush1.msra.mxu0 0.0
    %8495 = vmatprep.mubr.f32.mxu0 0.0
    %8496 = vmatmul.mubr.f32.gmra.mrb[0].mxu0 %v8429
    %v8497 = vpop.f32.mrb[0].mxu0
    %v8498 = vadd.f32 0.0, %v8497
    %v8499 = vpop.f32.mrb[0].mxu0
    %8500 = vdwg.mxu0
    %v8501 = vadd.f32 %v8406, %v8498
    %s8502 = scalar_lea.vmem [#allocation7], 12
    %v8503 = vld [vmem:[%s8502] sm:$0x1]
    %v8504 = vld [vmem:[%s8502 + $0x10] sm:$0x1]
    %s8505 = scalar_lea.vmem %s5, 1536
    %v8506 = vld [vmem:[%s8505] sm:$0xff]
    %v8507 = vld [vmem:[%s8505 + $0x8] sm:$0xff]
    %v8508 = vld [vmem:[%s8505 + $0x10] sm:$0xff]
    %v8509 = vld [vmem:[%s8505 + $0x18] sm:$0xff]
    %v8510 = vld [vmem:[%s8505 + $0x20] sm:$0xff]
    %v8511 = vld [vmem:[%s8505 + $0x28] sm:$0xff]
    %v8512 = vld [vmem:[%s8505 + $0x30] sm:$0xff]
    %v8513 = vld [vmem:[%s8505 + $0x38] sm:$0xff]
    %v8514 = vld [vmem:[%s8505 + $0x40] sm:$0xff]
    %v8515 = vld [vmem:[%s8505 + $0x48] sm:$0xff]
    %v8516 = vld [vmem:[%s8505 + $0x50] sm:$0xff]
    %v8517 = vld [vmem:[%s8505 + $0x58] sm:$0xff]
    %v8518 = vld [vmem:[%s8505 + $0x60] sm:$0xff]
    %v8519 = vld [vmem:[%s8505 + $0x68] sm:$0xff]
    %v8520 = vld [vmem:[%s8505 + $0x70] sm:$0xff]
    %v8521 = vld [vmem:[%s8505 + $0x78] sm:$0xff]
    %v8524 = vrot.slane %v8504, 7
    %v8525 = vsel %vm7402, %v8524, %v8503
    %8527 = vmatprep.subr.mxu0 0.0
    %8528 = vmatpush1.msra.mxu0 %v8506
    %8529 = vmatprep.subr.mxu0 0.0
    %8530 = vmatpush1.msra.mxu0 %v8507
    %8531 = vmatprep.subr.mxu0 0.0
    %8532 = vmatpush1.msra.mxu0 %v8508
    %8533 = vmatprep.subr.mxu0 0.0
    %8534 = vmatpush1.msra.mxu0 %v8509
    %8535 = vmatprep.subr.mxu0 0.0
    %8536 = vmatpush1.msra.mxu0 %v8510
    %8537 = vmatprep.subr.mxu0 0.0
    %8538 = vmatpush1.msra.mxu0 %v8511
    %8539 = vmatprep.subr.mxu0 0.0
    %8540 = vmatpush1.msra.mxu0 %v8512
    %8541 = vmatprep.subr.mxu0 0.0
    %8542 = vmatpush1.msra.mxu0 %v8513
    %8543 = vmatprep.subr.mxu0 0.0
    %8544 = vmatpush1.msra.mxu0 %v8514
    %8545 = vmatprep.subr.mxu0 0.0
    %8546 = vmatpush1.msra.mxu0 %v8515
    %8547 = vmatprep.subr.mxu0 0.0
    %8548 = vmatpush1.msra.mxu0 %v8516
    %8549 = vmatprep.subr.mxu0 0.0
    %8550 = vmatpush1.msra.mxu0 %v8517
    %8551 = vmatprep.subr.mxu0 0.0
    %8552 = vmatpush1.msra.mxu0 %v8518
    %8553 = vmatprep.subr.mxu0 0.0
    %8554 = vmatpush1.msra.mxu0 %v8519
    %8555 = vmatprep.subr.mxu0 0.0
    %8556 = vmatpush1.msra.mxu0 %v8520
    %8557 = vmatprep.subr.mxu0 0.0
    %8558 = vmatpush1.msra.mxu0 %v8521
    %8559 = vmatprep.subr.mxu0 0.0
    %8560 = vmatpush1.msra.mxu0 0.0
    %8561 = vmatprep.subr.mxu0 0.0
    %8562 = vmatpush1.msra.mxu0 0.0
    %8563 = vmatprep.subr.mxu0 0.0
    %8564 = vmatpush1.msra.mxu0 0.0
    %8565 = vmatprep.subr.mxu0 0.0
    %8566 = vmatpush1.msra.mxu0 0.0
    %8567 = vmatprep.subr.mxu0 0.0
    %8568 = vmatpush1.msra.mxu0 0.0
    %8569 = vmatprep.subr.mxu0 0.0
    %8570 = vmatpush1.msra.mxu0 0.0
    %8571 = vmatprep.subr.mxu0 0.0
    %8572 = vmatpush1.msra.mxu0 0.0
    %8573 = vmatprep.subr.mxu0 0.0
    %8574 = vmatpush1.msra.mxu0 0.0
    %8575 = vmatprep.subr.mxu0 0.0
    %8576 = vmatpush1.msra.mxu0 0.0
    %8577 = vmatprep.subr.mxu0 0.0
    %8578 = vmatpush1.msra.mxu0 0.0
    %8579 = vmatprep.subr.mxu0 0.0
    %8580 = vmatpush1.msra.mxu0 0.0
    %8581 = vmatprep.subr.mxu0 0.0
    %8582 = vmatpush1.msra.mxu0 0.0
    %8583 = vmatprep.subr.mxu0 0.0
    %8584 = vmatpush1.msra.mxu0 0.0
    %8585 = vmatprep.subr.mxu0 0.0
    %8586 = vmatpush1.msra.mxu0 0.0
    %8587 = vmatprep.subr.mxu0 0.0
    %8588 = vmatpush1.msra.mxu0 0.0
    %8589 = vmatprep.subr.mxu0 0.0
    %8590 = vmatpush1.msra.mxu0 0.0
    %8591 = vmatprep.mubr.f32.mxu0 0.0
    %8592 = vmatmul.mubr.f32.gmra.mrb[0].mxu0 %v8525
    %v8593 = vpop.f32.mrb[0].mxu0
    %v8594 = vadd.f32 0.0, %v8593
    %v8595 = vpop.f32.mrb[0].mxu0
    %8596 = vdwg.mxu0
    %v8597 = vadd.f32 %v8501, %v8594
    %v8598 = vld [vmem:[%s8502 + $0x1] sm:$0x1]
    %v8599 = vld [vmem:[%s8502 + $0x11] sm:$0x1]
    %s8600 = scalar_lea.vmem %s5, 1664
    %v8601 = vld [vmem:[%s8600] sm:$0xff]
    %v8602 = vld [vmem:[%s8600 + $0x8] sm:$0xff]
    %v8603 = vld [vmem:[%s8600 + $0x10] sm:$0xff]
    %v8604 = vld [vmem:[%s8600 + $0x18] sm:$0xff]
    %v8605 = vld [vmem:[%s8600 + $0x20] sm:$0xff]
    %v8606 = vld [vmem:[%s8600 + $0x28] sm:$0xff]
    %v8607 = vld [vmem:[%s8600 + $0x30] sm:$0xff]
    %v8608 = vld [vmem:[%s8600 + $0x38] sm:$0xff]
    %v8609 = vld [vmem:[%s8600 + $0x40] sm:$0xff]
    %v8610 = vld [vmem:[%s8600 + $0x48] sm:$0xff]
    %v8611 = vld [vmem:[%s8600 + $0x50] sm:$0xff]
    %v8612 = vld [vmem:[%s8600 + $0x58] sm:$0xff]
    %v8613 = vld [vmem:[%s8600 + $0x60] sm:$0xff]
    %v8614 = vld [vmem:[%s8600 + $0x68] sm:$0xff]
    %v8615 = vld [vmem:[%s8600 + $0x70] sm:$0xff]
    %v8616 = vld [vmem:[%s8600 + $0x78] sm:$0xff]
    %v8619 = vrot.slane %v8599, 7
    %v8620 = vsel %vm7402, %v8619, %v8598
    %8622 = vmatprep.subr.mxu0 0.0
    %8623 = vmatpush1.msra.mxu0 %v8601
    %8624 = vmatprep.subr.mxu0 0.0
    %8625 = vmatpush1.msra.mxu0 %v8602
    %8626 = vmatprep.subr.mxu0 0.0
    %8627 = vmatpush1.msra.mxu0 %v8603
    %8628 = vmatprep.subr.mxu0 0.0
    %8629 = vmatpush1.msra.mxu0 %v8604
    %8630 = vmatprep.subr.mxu0 0.0
    %8631 = vmatpush1.msra.mxu0 %v8605
    %8632 = vmatprep.subr.mxu0 0.0
    %8633 = vmatpush1.msra.mxu0 %v8606
    %8634 = vmatprep.subr.mxu0 0.0
    %8635 = vmatpush1.msra.mxu0 %v8607
    %8636 = vmatprep.subr.mxu0 0.0
    %8637 = vmatpush1.msra.mxu0 %v8608
    %8638 = vmatprep.subr.mxu0 0.0
    %8639 = vmatpush1.msra.mxu0 %v8609
    %8640 = vmatprep.subr.mxu0 0.0
    %8641 = vmatpush1.msra.mxu0 %v8610
    %8642 = vmatprep.subr.mxu0 0.0
    %8643 = vmatpush1.msra.mxu0 %v8611
    %8644 = vmatprep.subr.mxu0 0.0
    %8645 = vmatpush1.msra.mxu0 %v8612
    %8646 = vmatprep.subr.mxu0 0.0
    %8647 = vmatpush1.msra.mxu0 %v8613
    %8648 = vmatprep.subr.mxu0 0.0
    %8649 = vmatpush1.msra.mxu0 %v8614
    %8650 = vmatprep.subr.mxu0 0.0
    %8651 = vmatpush1.msra.mxu0 %v8615
    %8652 = vmatprep.subr.mxu0 0.0
    %8653 = vmatpush1.msra.mxu0 %v8616
    %8654 = vmatprep.subr.mxu0 0.0
    %8655 = vmatpush1.msra.mxu0 0.0
    %8656 = vmatprep.subr.mxu0 0.0
    %8657 = vmatpush1.msra.mxu0 0.0
    %8658 = vmatprep.subr.mxu0 0.0
    %8659 = vmatpush1.msra.mxu0 0.0
    %8660 = vmatprep.subr.mxu0 0.0
    %8661 = vmatpush1.msra.mxu0 0.0
    %8662 = vmatprep.subr.mxu0 0.0
    %8663 = vmatpush1.msra.mxu0 0.0
    %8664 = vmatprep.subr.mxu0 0.0
    %8665 = vmatpush1.msra.mxu0 0.0
    %8666 = vmatprep.subr.mxu0 0.0
    %8667 = vmatpush1.msra.mxu0 0.0
    %8668 = vmatprep.subr.mxu0 0.0
    %8669 = vmatpush1.msra.mxu0 0.0
    %8670 = vmatprep.subr.mxu0 0.0
    %8671 = vmatpush1.msra.mxu0 0.0
    %8672 = vmatprep.subr.mxu0 0.0
    %8673 = vmatpush1.msra.mxu0 0.0
    %8674 = vmatprep.subr.mxu0 0.0
    %8675 = vmatpush1.msra.mxu0 0.0
    %8676 = vmatprep.subr.mxu0 0.0
    %8677 = vmatpush1.msra.mxu0 0.0
    %8678 = vmatprep.subr.mxu0 0.0
    %8679 = vmatpush1.msra.mxu0 0.0
    %8680 = vmatprep.subr.mxu0 0.0
    %8681 = vmatpush1.msra.mxu0 0.0
    %8682 = vmatprep.subr.mxu0 0.0
    %8683 = vmatpush1.msra.mxu0 0.0
    %8684 = vmatprep.subr.mxu0 0.0
    %8685 = vmatpush1.msra.mxu0 0.0
    %8686 = vmatprep.mubr.f32.mxu0 0.0
    %8687 = vmatmul.mubr.f32.gmra.mrb[0].mxu0 %v8620
    %v8688 = vpop.f32.mrb[0].mxu0
    %v8689 = vadd.f32 0.0, %v8688
    %v8690 = vpop.f32.mrb[0].mxu0
    %8691 = vdwg.mxu0
    %v8692 = vadd.f32 %v8597, %v8689
    %v8693 = vld [vmem:[%s8502 + $0x2] sm:$0x1]
    %v8694 = vld [vmem:[%s8502 + $0x12] sm:$0x1]
    %s8695 = scalar_lea.vmem %s5, 1792
    %v8696 = vld [vmem:[%s8695] sm:$0xff]
    %v8697 = vld [vmem:[%s8695 + $0x8] sm:$0xff]
    %v8698 = vld [vmem:[%s8695 + $0x10] sm:$0xff]
    %v8699 = vld [vmem:[%s8695 + $0x18] sm:$0xff]
    %v8700 = vld [vmem:[%s8695 + $0x20] sm:$0xff]
    %v8701 = vld [vmem:[%s8695 + $0x28] sm:$0xff]
    %v8702 = vld [vmem:[%s8695 + $0x30] sm:$0xff]
    %v8703 = vld [vmem:[%s8695 + $0x38] sm:$0xff]
    %v8704 = vld [vmem:[%s8695 + $0x40] sm:$0xff]
    %v8705 = vld [vmem:[%s8695 + $0x48] sm:$0xff]
    %v8706 = vld [vmem:[%s8695 + $0x50] sm:$0xff]
    %v8707 = vld [vmem:[%s8695 + $0x58] sm:$0xff]
    %v8708 = vld [vmem:[%s8695 + $0x60] sm:$0xff]
    %v8709 = vld [vmem:[%s8695 + $0x68] sm:$0xff]
    %v8710 = vld [vmem:[%s8695 + $0x70] sm:$0xff]
    %v8711 = vld [vmem:[%s8695 + $0x78] sm:$0xff]
    %v8714 = vrot.slane %v8694, 7
    %v8715 = vsel %vm7402, %v8714, %v8693
    %8717 = vmatprep.subr.mxu0 0.0
    %8718 = vmatpush1.msra.mxu0 %v8696
    %8719 = vmatprep.subr.mxu0 0.0
    %8720 = vmatpush1.msra.mxu0 %v8697
    %8721 = vmatprep.subr.mxu0 0.0
    %8722 = vmatpush1.msra.mxu0 %v8698
    %8723 = vmatprep.subr.mxu0 0.0
    %8724 = vmatpush1.msra.mxu0 %v8699
    %8725 = vmatprep.subr.mxu0 0.0
    %8726 = vmatpush1.msra.mxu0 %v8700
    %8727 = vmatprep.subr.mxu0 0.0
    %8728 = vmatpush1.msra.mxu0 %v8701
    %8729 = vmatprep.subr.mxu0 0.0
    %8730 = vmatpush1.msra.mxu0 %v8702
    %8731 = vmatprep.subr.mxu0 0.0
    %8732 = vmatpush1.msra.mxu0 %v8703
    %8733 = vmatprep.subr.mxu0 0.0
    %8734 = vmatpush1.msra.mxu0 %v8704
    %8735 = vmatprep.subr.mxu0 0.0
    %8736 = vmatpush1.msra.mxu0 %v8705
    %8737 = vmatprep.subr.mxu0 0.0
    %8738 = vmatpush1.msra.mxu0 %v8706
    %8739 = vmatprep.subr.mxu0 0.0
    %8740 = vmatpush1.msra.mxu0 %v8707
    %8741 = vmatprep.subr.mxu0 0.0
    %8742 = vmatpush1.msra.mxu0 %v8708
    %8743 = vmatprep.subr.mxu0 0.0
    %8744 = vmatpush1.msra.mxu0 %v8709
    %8745 = vmatprep.subr.mxu0 0.0
    %8746 = vmatpush1.msra.mxu0 %v8710
    %8747 = vmatprep.subr.mxu0 0.0
    %8748 = vmatpush1.msra.mxu0 %v8711
    %8749 = vmatprep.subr.mxu0 0.0
    %8750 = vmatpush1.msra.mxu0 0.0
    %8751 = vmatprep.subr.mxu0 0.0
    %8752 = vmatpush1.msra.mxu0 0.0
    %8753 = vmatprep.subr.mxu0 0.0
    %8754 = vmatpush1.msra.mxu0 0.0
    %8755 = vmatprep.subr.mxu0 0.0
    %8756 = vmatpush1.msra.mxu0 0.0
    %8757 = vmatprep.subr.mxu0 0.0
    %8758 = vmatpush1.msra.mxu0 0.0
    %8759 = vmatprep.subr.mxu0 0.0
    %8760 = vmatpush1.msra.mxu0 0.0
    %8761 = vmatprep.subr.mxu0 0.0
    %8762 = vmatpush1.msra.mxu0 0.0
    %8763 = vmatprep.subr.mxu0 0.0
    %8764 = vmatpush1.msra.mxu0 0.0
    %8765 = vmatprep.subr.mxu0 0.0
    %8766 = vmatpush1.msra.mxu0 0.0
    %8767 = vmatprep.subr.mxu0 0.0
    %8768 = vmatpush1.msra.mxu0 0.0
    %8769 = vmatprep.subr.mxu0 0.0
    %8770 = vmatpush1.msra.mxu0 0.0
    %8771 = vmatprep.subr.mxu0 0.0
    %8772 = vmatpush1.msra.mxu0 0.0
    %8773 = vmatprep.subr.mxu0 0.0
    %8774 = vmatpush1.msra.mxu0 0.0
    %8775 = vmatprep.subr.mxu0 0.0
    %8776 = vmatpush1.msra.mxu0 0.0
    %8777 = vmatprep.subr.mxu0 0.0
    %8778 = vmatpush1.msra.mxu0 0.0
    %8779 = vmatprep.subr.mxu0 0.0
    %8780 = vmatpush1.msra.mxu0 0.0
    %8781 = vmatprep.mubr.f32.mxu0 0.0
    %8782 = vmatmul.mubr.f32.gmra.mrb[0].mxu0 %v8715
    %v8783 = vpop.f32.mrb[0].mxu0
    %v8784 = vadd.f32 0.0, %v8783
    %v8785 = vpop.f32.mrb[0].mxu0
    %8786 = vdwg.mxu0
    %v8787 = vadd.f32 %v8692, %v8784
    %v8788 = vld [vmem:[%s8502 + $0x3] sm:$0x1]
    %v8789 = vld [vmem:[%s8502 + $0x13] sm:$0x1]
    %s8790 = scalar_lea.vmem %s5, 1920
    %v8791 = vld [vmem:[%s8790] sm:$0xff]
    %v8792 = vld [vmem:[%s8790 + $0x8] sm:$0xff]
    %v8793 = vld [vmem:[%s8790 + $0x10] sm:$0xff]
    %v8794 = vld [vmem:[%s8790 + $0x18] sm:$0xff]
    %v8795 = vld [vmem:[%s8790 + $0x20] sm:$0xff]
    %v8796 = vld [vmem:[%s8790 + $0x28] sm:$0xff]
    %v8797 = vld [vmem:[%s8790 + $0x30] sm:$0xff]
    %v8798 = vld [vmem:[%s8790 + $0x38] sm:$0xff]
    %v8799 = vld [vmem:[%s8790 + $0x40] sm:$0xff]
    %v8800 = vld [vmem:[%s8790 + $0x48] sm:$0xff]
    %v8801 = vld [vmem:[%s8790 + $0x50] sm:$0xff]
    %v8802 = vld [vmem:[%s8790 + $0x58] sm:$0xff]
    %v8803 = vld [vmem:[%s8790 + $0x60] sm:$0xff]
    %v8804 = vld [vmem:[%s8790 + $0x68] sm:$0xff]
    %v8805 = vld [vmem:[%s8790 + $0x70] sm:$0xff]
    %v8806 = vld [vmem:[%s8790 + $0x78] sm:$0xff]
    %v8809 = vrot.slane %v8789, 7
    %v8810 = vsel %vm7402, %v8809, %v8788
    %8812 = vmatprep.subr.mxu0 0.0
    %8813 = vmatpush1.msra.mxu0 %v8791
    %8814 = vmatprep.subr.mxu0 0.0
    %8815 = vmatpush1.msra.mxu0 %v8792
    %8816 = vmatprep.subr.mxu0 0.0
    %8817 = vmatpush1.msra.mxu0 %v8793
    %8818 = vmatprep.subr.mxu0 0.0
    %8819 = vmatpush1.msra.mxu0 %v8794
    %8820 = vmatprep.subr.mxu0 0.0
    %8821 = vmatpush1.msra.mxu0 %v8795
    %8822 = vmatprep.subr.mxu0 0.0
    %8823 = vmatpush1.msra.mxu0 %v8796
    %8824 = vmatprep.subr.mxu0 0.0
    %8825 = vmatpush1.msra.mxu0 %v8797
    %8826 = vmatprep.subr.mxu0 0.0
    %8827 = vmatpush1.msra.mxu0 %v8798
    %8828 = vmatprep.subr.mxu0 0.0
    %8829 = vmatpush1.msra.mxu0 %v8799
    %8830 = vmatprep.subr.mxu0 0.0
    %8831 = vmatpush1.msra.mxu0 %v8800
    %8832 = vmatprep.subr.mxu0 0.0
    %8833 = vmatpush1.msra.mxu0 %v8801
    %8834 = vmatprep.subr.mxu0 0.0
    %8835 = vmatpush1.msra.mxu0 %v8802
    %8836 = vmatprep.subr.mxu0 0.0
    %8837 = vmatpush1.msra.mxu0 %v8803
    %8838 = vmatprep.subr.mxu0 0.0
    %8839 = vmatpush1.msra.mxu0 %v8804
    %8840 = vmatprep.subr.mxu0 0.0
    %8841 = vmatpush1.msra.mxu0 %v8805
    %8842 = vmatprep.subr.mxu0 0.0
    %8843 = vmatpush1.msra.mxu0 %v8806
    %8844 = vmatprep.subr.mxu0 0.0
    %8845 = vmatpush1.msra.mxu0 0.0
    %8846 = vmatprep.subr.mxu0 0.0
    %8847 = vmatpush1.msra.mxu0 0.0
    %8848 = vmatprep.subr.mxu0 0.0
    %8849 = vmatpush1.msra.mxu0 0.0
    %8850 = vmatprep.subr.mxu0 0.0
    %8851 = vmatpush1.msra.mxu0 0.0
    %8852 = vmatprep.subr.mxu0 0.0
    %8853 = vmatpush1.msra.mxu0 0.0
    %8854 = vmatprep.subr.mxu0 0.0
    %8855 = vmatpush1.msra.mxu0 0.0
    %8856 = vmatprep.subr.mxu0 0.0
    %8857 = vmatpush1.msra.mxu0 0.0
    %8858 = vmatprep.subr.mxu0 0.0
    %8859 = vmatpush1.msra.mxu0 0.0
    %8860 = vmatprep.subr.mxu0 0.0
    %8861 = vmatpush1.msra.mxu0 0.0
    %8862 = vmatprep.subr.mxu0 0.0
    %8863 = vmatpush1.msra.mxu0 0.0
    %8864 = vmatprep.subr.mxu0 0.0
    %8865 = vmatpush1.msra.mxu0 0.0
    %8866 = vmatprep.subr.mxu0 0.0
    %8867 = vmatpush1.msra.mxu0 0.0
    %8868 = vmatprep.subr.mxu0 0.0
    %8869 = vmatpush1.msra.mxu0 0.0
    %8870 = vmatprep.subr.mxu0 0.0
    %8871 = vmatpush1.msra.mxu0 0.0
    %8872 = vmatprep.subr.mxu0 0.0
    %8873 = vmatpush1.msra.mxu0 0.0
    %8874 = vmatprep.subr.mxu0 0.0
    %8875 = vmatpush1.msra.mxu0 0.0
    %8876 = vmatprep.mubr.f32.mxu0 0.0
    %8877 = vmatmul.mubr.f32.gmra.mrb[0].mxu0 %v8810
    %v8878 = vpop.f32.mrb[0].mxu0
    %v8879 = vadd.f32 0.0, %v8878
    %v8880 = vpop.f32.mrb[0].mxu0
    %8881 = vdwg.mxu0
    %v8882 = vadd.f32 %v8787, %v8879
    %v8883 = vld [vmem:[%s6] sm:$0x1]
    %v8885 = vlaneseq
    %v8886 = vshrl.u32 %v8885, 7
    %v8887 = vsub.s32 0, %v8886
    %v8888 = vrot.slane %v8883, %v8887
    %v8890 = vadd.f32 %v8882, %v8888
    %v8891 = vmax.f32 %v8890, 0.0
    %v8892 = vld [vmem:[%s7] sm:$0xff]
    %v8893 = vld [vmem:[%s7 + $0x8] sm:$0xff]
    %v8894 = vld [vmem:[%s7 + $0x10] sm:$0xff]
    %v8895 = vld [vmem:[%s7 + $0x18] sm:$0xff]
    %v8896 = vld [vmem:[%s7 + $0x20] sm:$0xff]
    %v8897 = vld [vmem:[%s7 + $0x28] sm:$0xff]
    %v8898 = vld [vmem:[%s7 + $0x30] sm:$0xff]
    %v8899 = vld [vmem:[%s7 + $0x38] sm:$0xff]
    %v8900 = vld [vmem:[%s7 + $0x40] sm:$0xff]
    %v8901 = vld [vmem:[%s7 + $0x48] sm:$0xff]
    %v8902 = vld [vmem:[%s7 + $0x50] sm:$0xff]
    %v8903 = vld [vmem:[%s7 + $0x58] sm:$0xff]
    %v8904 = vld [vmem:[%s7 + $0x60] sm:$0xff]
    %v8905 = vld [vmem:[%s7 + $0x68] sm:$0xff]
    %v8906 = vld [vmem:[%s7 + $0x70] sm:$0xff]
    %v8907 = vld [vmem:[%s7 + $0x78] sm:$0xff]
    %v8908 = vld [vmem:[%s8] sm:$0x1]
    %v8910 = vlaneseq
    %v8911 = vshrl.u32 %v8910, 7
    %v8912 = vsub.s32 0, %v8911
    %v8913 = vrot.slane %v8908, %v8912
    %8915 = vmatprep.subr.mxu0 0.0
    %8916 = vmatpush1.msra.mxu0 %v8892
    %8917 = vmatprep.subr.mxu0 0.0
    %8918 = vmatpush1.msra.mxu0 %v8893
    %8919 = vmatprep.subr.mxu0 0.0
    %8920 = vmatpush1.msra.mxu0 %v8894
    %8921 = vmatprep.subr.mxu0 0.0
    %8922 = vmatpush1.msra.mxu0 %v8895
    %8923 = vmatprep.subr.mxu0 0.0
    %8924 = vmatpush1.msra.mxu0 %v8896
    %8925 = vmatprep.subr.mxu0 0.0
    %8926 = vmatpush1.msra.mxu0 %v8897
    %8927 = vmatprep.subr.mxu0 0.0
    %8928 = vmatpush1.msra.mxu0 %v8898
    %8929 = vmatprep.subr.mxu0 0.0
    %8930 = vmatpush1.msra.mxu0 %v8899
    %8931 = vmatprep.subr.mxu0 0.0
    %8932 = vmatpush1.msra.mxu0 %v8900
    %8933 = vmatprep.subr.mxu0 0.0
    %8934 = vmatpush1.msra.mxu0 %v8901
    %8935 = vmatprep.subr.mxu0 0.0
    %8936 = vmatpush1.msra.mxu0 %v8902
    %8937 = vmatprep.subr.mxu0 0.0
    %8938 = vmatpush1.msra.mxu0 %v8903
    %8939 = vmatprep.subr.mxu0 0.0
    %8940 = vmatpush1.msra.mxu0 %v8904
    %8941 = vmatprep.subr.mxu0 0.0
    %8942 = vmatpush1.msra.mxu0 %v8905
    %8943 = vmatprep.subr.mxu0 0.0
    %8944 = vmatpush1.msra.mxu0 %v8906
    %8945 = vmatprep.subr.mxu0 0.0
    %8946 = vmatpush1.msra.mxu0 %v8907
    %8947 = vmatprep.subr.mxu0 0.0
    %8948 = vmatpush1.msra.mxu0 0.0
    %8949 = vmatprep.subr.mxu0 0.0
    %8950 = vmatpush1.msra.mxu0 0.0
    %8951 = vmatprep.subr.mxu0 0.0
    %8952 = vmatpush1.msra.mxu0 0.0
    %8953 = vmatprep.subr.mxu0 0.0
    %8954 = vmatpush1.msra.mxu0 0.0
    %8955 = vmatprep.subr.mxu0 0.0
    %8956 = vmatpush1.msra.mxu0 0.0
    %8957 = vmatprep.subr.mxu0 0.0
    %8958 = vmatpush1.msra.mxu0 0.0
    %8959 = vmatprep.subr.mxu0 0.0
    %8960 = vmatpush1.msra.mxu0 0.0
    %8961 = vmatprep.subr.mxu0 0.0
    %8962 = vmatpush1.msra.mxu0 0.0
    %8963 = vmatprep.subr.mxu0 0.0
    %8964 = vmatpush1.msra.mxu0 0.0
    %8965 = vmatprep.subr.mxu0 0.0
    %8966 = vmatpush1.msra.mxu0 0.0
    %8967 = vmatprep.subr.mxu0 0.0
    %8968 = vmatpush1.msra.mxu0 0.0
    %8969 = vmatprep.subr.mxu0 0.0
    %8970 = vmatpush1.msra.mxu0 0.0
    %8971 = vmatprep.subr.mxu0 0.0
    %8972 = vmatpush1.msra.mxu0 0.0
    %8973 = vmatprep.subr.mxu0 0.0
    %8974 = vmatpush1.msra.mxu0 0.0
    %8975 = vmatprep.subr.mxu0 0.0
    %8976 = vmatpush1.msra.mxu0 0.0
    %8977 = vmatprep.subr.mxu0 0.0
    %8978 = vmatpush1.msra.mxu0 0.0
    %8979 = vmatprep.mubr.f32.mxu0 0.0
    %8980 = vmatmul.mubr.f32.gmra.mrb[0].mxu0 %v8891
    %v8981 = vpop.f32.mrb[0].mxu0
    %v8982 = vadd.f32 %v8913, %v8981
    %v8983 = vpop.f32.mrb[0].mxu0
    %8984 = vdwg.mxu0
    %v8985 = vlaneseq
    %v8986 = vand.u32 %v8985, 127
    %vm8987 = vcmp.lt.s32.totalorder %v8986, 10
    %v8988 = vsel %vm8987, %v8982, -1e+30
    %vm8989 = vcmask 1041408
    %v8990 = vsel %vm8989, %v8988, -inf
    %8991 = vmax.xlane.f32.xlu0 %v8990
    %v8992 = vpop.xlane.xlu0 %8991
    %v8993 = vsub.f32 %v8988, %v8992
    %v8994 = vmul.f32 %v8993, 1.442695
    %v8995 = vpow.pop %v8994
    %v8996 = vsel %vm8989, %v8995, 0.0
    %8997 = vadd.xlane.f32.xlu0 %v8996
    %v8998 = vpop.xlane.xlu0 %8997
    %v8999 = vlog2.pop %v8998
    %v9000 = vmul.f32 %v8999, 0.6931472
    %v9001 = vsub.f32 %v8993, %v9000
    %9002 = vst [vmem:[#allocation8] sm:$0x3] %v9001
    // Predicated region
    $region38: #{net_forward.1} parent=1 // pred_check
      _
    $region39: #{net_forward.1} parent=1 // pred_check_branch
      %9004 = sbr.rel (0) target = $region41
    $region40: #{net_forward.1} parent=1 // pred_region
      %s9006 = ssub.s32 32, 32
      %9007 = vsyncadd [#allocation9], %s9006
      %s9009 = sshll.u32 [#allocation8], 4
      %s9010 = int_to_ptr.vmem [resolvable:$true] %s9009
      %9012 = dma.vmem_to_hbm [thread:$0]  %s9010, 32, %s9, [#allocation9]
    $region41: #{net_forward.1} parent=1 // pred_fallthru
      _
    // Predicated region
    $region42: #{net_forward.1} parent=1 // pred_check
      _
    $region43: #{net_forward.1} parent=1 // pred_check_branch
      %9014 = sbr.rel (0) target = $region45
    $region44: #{net_forward.1} parent=1 // pred_region
      %9015 = dma.done [#allocation9], 32
    $region45: #{net_forward.1} parent=1 // pred_fallthru
      _
    %9016 = vsyncpa [#allocation9], 1

</llo_original>
